<compile_context>
chip_gen: v6e
topology: v6e:2x2x1
jax: 0.10.0
libtpu: 0.0.40
codegen_flags: <defaults>
</compile_context>

<pallas_src>
import functools

import jax
import jax.numpy as jnp
from jax import lax
from jax.experimental import pallas as pl
from jax.experimental.pallas import tpu as pltpu


# On v6e/v7x, set to jnp.bfloat16 (and cast x / w1 in the wrapper to also
# halve the input DMA bytes) for ~2x MXU rate; relax the reference-check
# tolerance to ~1e-2 in that case.  Kept f32 here so the f32 lax.conv
# reference check stays tight and the epilogue is v5e-safe.
MXU_DTYPE = jnp.float32

_TAPS = tuple((dh, dw) for dh in range(3) for dw in range(3))


# ----------------------------- Pallas kernel ------------------------------ #

def _fused_decoder_kernel(x_ref, w1_ref, b1_ref, w2_ref, b2_ref, o_ref,
                          hid_ref, acc_ref, *, H, W, C_in, C_hid):
    """One batch image per grid step: conv3x3+ReLU -> conv3x3+tanh, fused.

    x_ref  : [1, H+2, W+2, C_in]   zero-padded NHWC input tile (1-px halo)
    w1_ref : [9, C_in, C_hid]      conv1 weights, tap-major
    b1_ref : [1, C_hid]
    w2_ref : [9, 1, C_hid]         conv2 weights, tap-major
    b2_ref : [1, 1]
    o_ref  : [1, H, W]             final spectrogram plane (lane-dense in W)
    hid_ref: [H+2, W+2, C_hid]     VMEM scratch: hidden activation + zero halo
    acc_ref: [H*W, C_hid]          VMEM scratch: conv1 accumulator
    """
    # ---- conv1: 9 shifted taps accumulated on the MXU, bias folded in ----
    acc_ref[...] = jnp.broadcast_to(b1_ref[...], (H * W, C_hid))
    for t, (dh, dw) in enumerate(_TAPS):
        xt = x_ref[0, dh:dh + H, dw:dw + W, :].reshape(H * W, C_in)
        w1t = w1_ref[t]                                    # [C_in, C_hid]
        acc_ref[...] += jnp.dot(xt.astype(MXU_DTYPE), w1t.astype(MXU_DTYPE),
                                preferred_element_type=jnp.float32)
    hidden = jnp.maximum(acc_ref[...], 0.0).reshape(H, W, C_hid)

    # Keep the hidden activation resident in VMEM with a zero 1-px halo so
    # conv2's 'same' padding is free; it is never written back to HBM.
    hid_ref[...] = jnp.zeros_like(hid_ref)
    hid_ref[1:H + 1, 1:W + 1, :] = hidden

    # ---- conv2: hidden -> 1 as VPU multiply + lane reduce per tap --------
    acc2 = jnp.zeros((H, W), jnp.float32)
    for t, (dh, dw) in enumerate(_TAPS):
        ht = hid_ref[dh:dh + H, dw:dw + W, :]              # [H, W, C_hid]
        acc2 = acc2 + jnp.sum(ht * w2_ref[t], axis=-1)     # [H, W]
    o_ref[0] = jnp.tanh(acc2 + b2_ref[...]).astype(o_ref.dtype)


# ------------------------------- JAX glue --------------------------------- #

def spec_dec_forward(x_nchw, params):
    """Pallas implementation of Spec_dec.forward == model.decode(x)."""
    B, C_in, H, W = x_nchw.shape
    C_hid = params["w1"].shape[0]

    x = jnp.transpose(x_nchw, (0, 2, 3, 1))                  # NCHW -> NHWC
    x_pad = jnp.pad(x, ((0, 0), (1, 1), (1, 1), (0, 0)))     # 1-px spatial halo

    # Tap-major weight layout [kh*kw, Cin, Cout], matching the in-kernel taps.
    w1 = jnp.transpose(params["w1"], (2, 3, 1, 0)).reshape(9, C_in, C_hid)
    b1 = params["b1"].reshape(1, C_hid).astype(jnp.float32)
    w2 = jnp.transpose(params["w2"], (2, 3, 0, 1)).reshape(9, 1, C_hid)
    b2 = params["b2"].reshape(1, 1).astype(jnp.float32)

    kernel = functools.partial(_fused_decoder_kernel,
                               H=H, W=W, C_in=C_in, C_hid=C_hid)

    flops = 2 * B * H * W * 9 * C_hid * (C_in + 1)
    bytes_accessed = 4 * (x_pad.size + w1.size + b1.size + w2.size + b2.size
                          + B * H * W)

    out = pl.pallas_call(
        kernel,
        out_shape=jax.ShapeDtypeStruct((B, H, W), jnp.float32),
        grid_spec=pltpu.PrefetchScalarGridSpec(
            num_scalar_prefetch=0,
            grid=(B,),
            in_specs=[
                pl.BlockSpec((1, H + 2, W + 2, C_in), lambda b: (b, 0, 0, 0)),
                pl.BlockSpec((9, C_in, C_hid), lambda b: (0, 0, 0)),
                pl.BlockSpec((1, C_hid), lambda b: (0, 0)),
                pl.BlockSpec((9, 1, C_hid), lambda b: (0, 0, 0)),
                pl.BlockSpec((1, 1), lambda b: (0, 0)),
            ],
            out_specs=pl.BlockSpec((1, H, W), lambda b: (b, 0, 0)),
            scratch_shapes=[
                pltpu.VMEM((H + 2, W + 2, C_hid), jnp.float32),
                pltpu.VMEM((H * W, C_hid), jnp.float32),
            ],
        ),
        compiler_params=pltpu.CompilerParams(
            dimension_semantics=("parallel",)),
        cost_estimate=pl.CostEstimate(
            flops=flops, transcendentals=B * H * W,
            bytes_accessed=bytes_accessed),
    )(x_pad, w1, b1, w2, b2)

    return out[:, None, :, :]                                # NCHW [B,1,H,W]


def spec_dec_reference(x_nchw, params):
    """Pure-JAX reference (lax.conv) used for a correctness check."""
    x = jnp.transpose(x_nchw, (0, 2, 3, 1))
    dn = ("NHWC", "HWIO", "NHWC")

    w1 = jnp.transpose(params["w1"], (2, 3, 1, 0))
    y = lax.conv_general_dilated(x, w1, (1, 1), "SAME", dimension_numbers=dn)
    y = jnp.maximum(y + params["b1"], 0.0)

    w2 = jnp.transpose(params["w2"], (2, 3, 1, 0))
    y = lax.conv_general_dilated(y, w2, (1, 1), "SAME", dimension_numbers=dn)
    y = jnp.tanh(y + params["b2"])
    return jnp.transpose(y, (0, 3, 1, 2))


# --------------------------------- main ------------------------------------ #

if __name__ == "__main__":
    B, Cin, H, W = 2, 4, 16, 16
    HIDDEN = 32

    key = jax.random.PRNGKey(0)
    k_x, k_w1, k_b1, k_w2, k_b2 = jax.random.split(key, 5)

    x = jax.random.normal(k_x, (B, Cin, H, W), dtype=jnp.float32)

    params = {
        # PyTorch Conv2d weight layout: [Cout, Cin, kh, kw]
        "w1": 0.1 * jax.random.normal(k_w1, (HIDDEN, Cin, 3, 3), jnp.float32),
        "b1": 0.01 * jax.random.normal(k_b1, (HIDDEN,), jnp.float32),
        "w2": 0.1 * jax.random.normal(k_w2, (1, HIDDEN, 3, 3), jnp.float32),
        "b2": 0.01 * jax.random.normal(k_b2, (1,), jnp.float32),
    }

    out = jax.jit(spec_dec_forward)(x, params)
    out = jax.block_until_ready(out)

    ref = jax.block_until_ready(spec_dec_reference(x, params))
    assert out.shape == (B, 1, H, W), out.shape
    assert jnp.allclose(out, ref, atol=1e-4, rtol=1e-4), (
        float(jnp.max(jnp.abs(out - ref))))

    print("KERNEL_OK")
</pallas_src>

<mosaic_0001>
module attributes {stable_mosaic.version = 11 : i64} {
  func.func @_fused_decoder_kernel(%arg0: i32, %arg1: memref<1x18x18x4xf32, #tpu.memory_space<vmem>>, %arg2: memref<9x4x32xf32, #tpu.memory_space<vmem>>, %arg3: memref<1x32xf32, #tpu.memory_space<vmem>>, %arg4: memref<9x1x32xf32, #tpu.memory_space<vmem>>, %arg5: memref<1x1xf32, #tpu.memory_space<vmem>>, %arg6: memref<1x16x16xf32, #tpu.memory_space<vmem>>, %arg7: memref<18x18x32xf32, #tpu.memory_space<vmem>>, %arg8: memref<256x32xf32, #tpu.memory_space<vmem>>) attributes {dimension_semantics = [#tpu.dimension_semantics<parallel>], iteration_bounds = array<i64: 2>, scalar_prefetch = 0 : i64, scratch_operands = 2 : i64, tpu.core_type = #tpu.core_type<tc>, window_params = [{transform_indices = @transform_0, window_bounds = array<i64: 1, 18, 18, 4>}, {pipeline_mode = #tpu.pipeline_mode<synchronous>, transform_indices = @transform_1, window_bounds = array<i64: 9, 4, 32>}, {pipeline_mode = #tpu.pipeline_mode<synchronous>, transform_indices = @transform_2, window_bounds = array<i64: 1, 32>}, {pipeline_mode = #tpu.pipeline_mode<synchronous>, transform_indices = @transform_3, window_bounds = array<i64: 9, 1, 32>}, {pipeline_mode = #tpu.pipeline_mode<synchronous>, transform_indices = @transform_4, window_bounds = array<i64: 1, 1>}, {transform_indices = @transform_5, window_bounds = array<i64: 1, 16, 16>}]} {
    %c0 = arith.constant 0 : index
    %c0_0 = arith.constant 0 : index
    %0 = vector.load %arg3[%c0, %c0_0] : memref<1x32xf32, #tpu.memory_space<vmem>>, vector<1x32xf32>
    %1 = vector.shape_cast %0 : vector<1x32xf32> to vector<1x32xf32>
    %2 = vector.broadcast %1 : vector<1x32xf32> to vector<256x32xf32>
    %c0_1 = arith.constant 0 : index
    %c0_2 = arith.constant 0 : index
    %3 = vector.load %arg8[%c0_1, %c0_2] : memref<256x32xf32, #tpu.memory_space<vmem>>, vector<256x32xf32>
    tpu.vector_store %arg8[%c0_1, %c0_2], %2 {strides = array<i32>} : memref<256x32xf32, #tpu.memory_space<vmem>>, vector<256x32xf32>,
    %c0_3 = arith.constant 0 : index
    %c0_4 = arith.constant 0 : index
    %c0_5 = arith.constant 0 : index
    %c0_6 = arith.constant 0 : index
    %4 = vector.load %arg1[%c0_3, %c0_4, %c0_5, %c0_6] : memref<1x18x18x4xf32, #tpu.memory_space<vmem>>, vector<1x16x16x4xf32>
    %5 = vector.shape_cast %4 : vector<1x16x16x4xf32> to vector<16x16x4xf32>
    %6 = vector.shape_cast %5 : vector<16x16x4xf32> to vector<256x4xf32>
    %c0_7 = arith.constant 0 : index
    %c0_8 = arith.constant 0 : index
    %c0_9 = arith.constant 0 : index
    %7 = vector.load %arg2[%c0_7, %c0_8, %c0_9] : memref<9x4x32xf32, #tpu.memory_space<vmem>>, vector<1x4x32xf32>
    %8 = vector.shape_cast %7 : vector<1x4x32xf32> to vector<4x32xf32>
    %c0_10 = arith.constant 0 : index
    %c0_11 = arith.constant 0 : index
    %9 = vector.load %arg8[%c0_10, %c0_11] : memref<256x32xf32, #tpu.memory_space<vmem>>, vector<256x32xf32>
    %cst = arith.constant dense<0.000000e+00> : vector<256x32xf32>
    %10 = tpu.matmul %6, %8, %cst {dimension_numbers = #tpu.dot_dimension_numbers<[1], [0], [0], [1], [0, 0, 1, 1], [], []>} : vector<256x4xf32>, vector<4x32xf32>, vector<256x32xf32> -> vector<256x32xf32>
    %11 = arith.addf %9, %10 : vector<256x32xf32>
    %c0_12 = arith.constant 0 : index
    %c0_13 = arith.constant 0 : index
    %12 = vector.load %arg8[%c0_12, %c0_13] : memref<256x32xf32, #tpu.memory_space<vmem>>, vector<256x32xf32>
    tpu.vector_store %arg8[%c0_12, %c0_13], %11 {strides = array<i32>} : memref<256x32xf32, #tpu.memory_space<vmem>>, vector<256x32xf32>,
    %c0_14 = arith.constant 0 : index
    %c0_15 = arith.constant 0 : index
    %c1 = arith.constant 1 : index
    %c0_16 = arith.constant 0 : index
    %13 = vector.load %arg1[%c0_14, %c0_15, %c1, %c0_16] : memref<1x18x18x4xf32, #tpu.memory_space<vmem>>, vector<1x16x16x4xf32>
    %14 = vector.shape_cast %13 : vector<1x16x16x4xf32> to vector<16x16x4xf32>
    %15 = vector.shape_cast %14 : vector<16x16x4xf32> to vector<256x4xf32>
    %c1_17 = arith.constant 1 : index
    %c0_18 = arith.constant 0 : index
    %c0_19 = arith.constant 0 : index
    %16 = vector.load %arg2[%c1_17, %c0_18, %c0_19] : memref<9x4x32xf32, #tpu.memory_space<vmem>>, vector<1x4x32xf32>
    %17 = vector.shape_cast %16 : vector<1x4x32xf32> to vector<4x32xf32>
    %c0_20 = arith.constant 0 : index
    %c0_21 = arith.constant 0 : index
    %18 = vector.load %arg8[%c0_20, %c0_21] : memref<256x32xf32, #tpu.memory_space<vmem>>, vector<256x32xf32>
    %cst_22 = arith.constant dense<0.000000e+00> : vector<256x32xf32>
    %19 = tpu.matmul %15, %17, %cst_22 {dimension_numbers = #tpu.dot_dimension_numbers<[1], [0], [0], [1], [0, 0, 1, 1], [], []>} : vector<256x4xf32>, vector<4x32xf32>, vector<256x32xf32> -> vector<256x32xf32>
    %20 = arith.addf %18, %19 : vector<256x32xf32>
    %c0_23 = arith.constant 0 : index
    %c0_24 = arith.constant 0 : index
    %21 = vector.load %arg8[%c0_23, %c0_24] : memref<256x32xf32, #tpu.memory_space<vmem>>, vector<256x32xf32>
    tpu.vector_store %arg8[%c0_23, %c0_24], %20 {strides = array<i32>} : memref<256x32xf32, #tpu.memory_space<vmem>>, vector<256x32xf32>,
    %c0_25 = arith.constant 0 : index
    %c0_26 = arith.constant 0 : index
    %c2 = arith.constant 2 : index
    %c0_27 = arith.constant 0 : index
    %22 = vector.load %arg1[%c0_25, %c0_26, %c2, %c0_27] : memref<1x18x18x4xf32, #tpu.memory_space<vmem>>, vector<1x16x16x4xf32>
    %23 = vector.shape_cast %22 : vector<1x16x16x4xf32> to vector<16x16x4xf32>
    %24 = vector.shape_cast %23 : vector<16x16x4xf32> to vector<256x4xf32>
    %c2_28 = arith.constant 2 : index
    %c0_29 = arith.constant 0 : index
    %c0_30 = arith.constant 0 : index
    %25 = vector.load %arg2[%c2_28, %c0_29, %c0_30] : memref<9x4x32xf32, #tpu.memory_space<vmem>>, vector<1x4x32xf32>
    %26 = vector.shape_cast %25 : vector<1x4x32xf32> to vector<4x32xf32>
    %c0_31 = arith.constant 0 : index
    %c0_32 = arith.constant 0 : index
    %27 = vector.load %arg8[%c0_31, %c0_32] : memref<256x32xf32, #tpu.memory_space<vmem>>, vector<256x32xf32>
    %cst_33 = arith.constant dense<0.000000e+00> : vector<256x32xf32>
    %28 = tpu.matmul %24, %26, %cst_33 {dimension_numbers = #tpu.dot_dimension_numbers<[1], [0], [0], [1], [0, 0, 1, 1], [], []>} : vector<256x4xf32>, vector<4x32xf32>, vector<256x32xf32> -> vector<256x32xf32>
    %29 = arith.addf %27, %28 : vector<256x32xf32>
    %c0_34 = arith.constant 0 : index
    %c0_35 = arith.constant 0 : index
    %30 = vector.load %arg8[%c0_34, %c0_35] : memref<256x32xf32, #tpu.memory_space<vmem>>, vector<256x32xf32>
    tpu.vector_store %arg8[%c0_34, %c0_35], %29 {strides = array<i32>} : memref<256x32xf32, #tpu.memory_space<vmem>>, vector<256x32xf32>,
    %c0_36 = arith.constant 0 : index
    %c1_37 = arith.constant 1 : index
    %c0_38 = arith.constant 0 : index
    %c0_39 = arith.constant 0 : index
    %31 = vector.load %arg1[%c0_36, %c1_37, %c0_38, %c0_39] : memref<1x18x18x4xf32, #tpu.memory_space<vmem>>, vector<1x16x16x4xf32>
    %32 = vector.shape_cast %31 : vector<1x16x16x4xf32> to vector<16x16x4xf32>
    %33 = vector.shape_cast %32 : vector<16x16x4xf32> to vector<256x4xf32>
    %c3 = arith.constant 3 : index
    %c0_40 = arith.constant 0 : index
    %c0_41 = arith.constant 0 : index
    %34 = vector.load %arg2[%c3, %c0_40, %c0_41] : memref<9x4x32xf32, #tpu.memory_space<vmem>>, vector<1x4x32xf32>
    %35 = vector.shape_cast %34 : vector<1x4x32xf32> to vector<4x32xf32>
    %c0_42 = arith.constant 0 : index
    %c0_43 = arith.constant 0 : index
    %36 = vector.load %arg8[%c0_42, %c0_43] : memref<256x32xf32, #tpu.memory_space<vmem>>, vector<256x32xf32>
    %cst_44 = arith.constant dense<0.000000e+00> : vector<256x32xf32>
    %37 = tpu.matmul %33, %35, %cst_44 {dimension_numbers = #tpu.dot_dimension_numbers<[1], [0], [0], [1], [0, 0, 1, 1], [], []>} : vector<256x4xf32>, vector<4x32xf32>, vector<256x32xf32> -> vector<256x32xf32>
    %38 = arith.addf %36, %37 : vector<256x32xf32>
    %c0_45 = arith.constant 0 : index
    %c0_46 = arith.constant 0 : index
    %39 = vector.load %arg8[%c0_45, %c0_46] : memref<256x32xf32, #tpu.memory_space<vmem>>, vector<256x32xf32>
    tpu.vector_store %arg8[%c0_45, %c0_46], %38 {strides = array<i32>} : memref<256x32xf32, #tpu.memory_space<vmem>>, vector<256x32xf32>,
    %c0_47 = arith.constant 0 : index
    %c1_48 = arith.constant 1 : index
    %c1_49 = arith.constant 1 : index
    %c0_50 = arith.constant 0 : index
    %40 = vector.load %arg1[%c0_47, %c1_48, %c1_49, %c0_50] : memref<1x18x18x4xf32, #tpu.memory_space<vmem>>, vector<1x16x16x4xf32>
    %41 = vector.shape_cast %40 : vector<1x16x16x4xf32> to vector<16x16x4xf32>
    %42 = vector.shape_cast %41 : vector<16x16x4xf32> to vector<256x4xf32>
    %c4 = arith.constant 4 : index
    %c0_51 = arith.constant 0 : index
    %c0_52 = arith.constant 0 : index
    %43 = vector.load %arg2[%c4, %c0_51, %c0_52] : memref<9x4x32xf32, #tpu.memory_space<vmem>>, vector<1x4x32xf32>
    %44 = vector.shape_cast %43 : vector<1x4x32xf32> to vector<4x32xf32>
    %c0_53 = arith.constant 0 : index
    %c0_54 = arith.constant 0 : index
    %45 = vector.load %arg8[%c0_53, %c0_54] : memref<256x32xf32, #tpu.memory_space<vmem>>, vector<256x32xf32>
    %cst_55 = arith.constant dense<0.000000e+00> : vector<256x32xf32>
    %46 = tpu.matmul %42, %44, %cst_55 {dimension_numbers = #tpu.dot_dimension_numbers<[1], [0], [0], [1], [0, 0, 1, 1], [], []>} : vector<256x4xf32>, vector<4x32xf32>, vector<256x32xf32> -> vector<256x32xf32>
    %47 = arith.addf %45, %46 : vector<256x32xf32>
    %c0_56 = arith.constant 0 : index
    %c0_57 = arith.constant 0 : index
    %48 = vector.load %arg8[%c0_56, %c0_57] : memref<256x32xf32, #tpu.memory_space<vmem>>, vector<256x32xf32>
    tpu.vector_store %arg8[%c0_56, %c0_57], %47 {strides = array<i32>} : memref<256x32xf32, #tpu.memory_space<vmem>>, vector<256x32xf32>,
    %c0_58 = arith.constant 0 : index
    %c1_59 = arith.constant 1 : index
    %c2_60 = arith.constant 2 : index
    %c0_61 = arith.constant 0 : index
    %49 = vector.load %arg1[%c0_58, %c1_59, %c2_60, %c0_61] : memref<1x18x18x4xf32, #tpu.memory_space<vmem>>, vector<1x16x16x4xf32>
    %50 = vector.shape_cast %49 : vector<1x16x16x4xf32> to vector<16x16x4xf32>
    %51 = vector.shape_cast %50 : vector<16x16x4xf32> to vector<256x4xf32>
    %c5 = arith.constant 5 : index
    %c0_62 = arith.constant 0 : index
    %c0_63 = arith.constant 0 : index
    %52 = vector.load %arg2[%c5, %c0_62, %c0_63] : memref<9x4x32xf32, #tpu.memory_space<vmem>>, vector<1x4x32xf32>
    %53 = vector.shape_cast %52 : vector<1x4x32xf32> to vector<4x32xf32>
    %c0_64 = arith.constant 0 : index
    %c0_65 = arith.constant 0 : index
    %54 = vector.load %arg8[%c0_64, %c0_65] : memref<256x32xf32, #tpu.memory_space<vmem>>, vector<256x32xf32>
    %cst_66 = arith.constant dense<0.000000e+00> : vector<256x32xf32>
    %55 = tpu.matmul %51, %53, %cst_66 {dimension_numbers = #tpu.dot_dimension_numbers<[1], [0], [0], [1], [0, 0, 1, 1], [], []>} : vector<256x4xf32>, vector<4x32xf32>, vector<256x32xf32> -> vector<256x32xf32>
    %56 = arith.addf %54, %55 : vector<256x32xf32>
    %c0_67 = arith.constant 0 : index
    %c0_68 = arith.constant 0 : index
    %57 = vector.load %arg8[%c0_67, %c0_68] : memref<256x32xf32, #tpu.memory_space<vmem>>, vector<256x32xf32>
    tpu.vector_store %arg8[%c0_67, %c0_68], %56 {strides = array<i32>} : memref<256x32xf32, #tpu.memory_space<vmem>>, vector<256x32xf32>,
    %c0_69 = arith.constant 0 : index
    %c2_70 = arith.constant 2 : index
    %c0_71 = arith.constant 0 : index
    %c0_72 = arith.constant 0 : index
    %58 = vector.load %arg1[%c0_69, %c2_70, %c0_71, %c0_72] : memref<1x18x18x4xf32, #tpu.memory_space<vmem>>, vector<1x16x16x4xf32>
    %59 = vector.shape_cast %58 : vector<1x16x16x4xf32> to vector<16x16x4xf32>
    %60 = vector.shape_cast %59 : vector<16x16x4xf32> to vector<256x4xf32>
    %c6 = arith.constant 6 : index
    %c0_73 = arith.constant 0 : index
    %c0_74 = arith.constant 0 : index
    %61 = vector.load %arg2[%c6, %c0_73, %c0_74] : memref<9x4x32xf32, #tpu.memory_space<vmem>>, vector<1x4x32xf32>
    %62 = vector.shape_cast %61 : vector<1x4x32xf32> to vector<4x32xf32>
    %c0_75 = arith.constant 0 : index
    %c0_76 = arith.constant 0 : index
    %63 = vector.load %arg8[%c0_75, %c0_76] : memref<256x32xf32, #tpu.memory_space<vmem>>, vector<256x32xf32>
    %cst_77 = arith.constant dense<0.000000e+00> : vector<256x32xf32>
    %64 = tpu.matmul %60, %62, %cst_77 {dimension_numbers = #tpu.dot_dimension_numbers<[1], [0], [0], [1], [0, 0, 1, 1], [], []>} : vector<256x4xf32>, vector<4x32xf32>, vector<256x32xf32> -> vector<256x32xf32>
    %65 = arith.addf %63, %64 : vector<256x32xf32>
    %c0_78 = arith.constant 0 : index
    %c0_79 = arith.constant 0 : index
    %66 = vector.load %arg8[%c0_78, %c0_79] : memref<256x32xf32, #tpu.memory_space<vmem>>, vector<256x32xf32>
    tpu.vector_store %arg8[%c0_78, %c0_79], %65 {strides = array<i32>} : memref<256x32xf32, #tpu.memory_space<vmem>>, vector<256x32xf32>,
    %c0_80 = arith.constant 0 : index
    %c2_81 = arith.constant 2 : index
    %c1_82 = arith.constant 1 : index
    %c0_83 = arith.constant 0 : index
    %67 = vector.load %arg1[%c0_80, %c2_81, %c1_82, %c0_83] : memref<1x18x18x4xf32, #tpu.memory_space<vmem>>, vector<1x16x16x4xf32>
    %68 = vector.shape_cast %67 : vector<1x16x16x4xf32> to vector<16x16x4xf32>
    %69 = vector.shape_cast %68 : vector<16x16x4xf32> to vector<256x4xf32>
    %c7 = arith.constant 7 : index
    %c0_84 = arith.constant 0 : index
    %c0_85 = arith.constant 0 : index
    %70 = vector.load %arg2[%c7, %c0_84, %c0_85] : memref<9x4x32xf32, #tpu.memory_space<vmem>>, vector<1x4x32xf32>
    %71 = vector.shape_cast %70 : vector<1x4x32xf32> to vector<4x32xf32>
    %c0_86 = arith.constant 0 : index
    %c0_87 = arith.constant 0 : index
    %72 = vector.load %arg8[%c0_86, %c0_87] : memref<256x32xf32, #tpu.memory_space<vmem>>, vector<256x32xf32>
    %cst_88 = arith.constant dense<0.000000e+00> : vector<256x32xf32>
    %73 = tpu.matmul %69, %71, %cst_88 {dimension_numbers = #tpu.dot_dimension_numbers<[1], [0], [0], [1], [0, 0, 1, 1], [], []>} : vector<256x4xf32>, vector<4x32xf32>, vector<256x32xf32> -> vector<256x32xf32>
    %74 = arith.addf %72, %73 : vector<256x32xf32>
    %c0_89 = arith.constant 0 : index
    %c0_90 = arith.constant 0 : index
    %75 = vector.load %arg8[%c0_89, %c0_90] : memref<256x32xf32, #tpu.memory_space<vmem>>, vector<256x32xf32>
    tpu.vector_store %arg8[%c0_89, %c0_90], %74 {strides = array<i32>} : memref<256x32xf32, #tpu.memory_space<vmem>>, vector<256x32xf32>,
    %c0_91 = arith.constant 0 : index
    %c2_92 = arith.constant 2 : index
    %c2_93 = arith.constant 2 : index
    %c0_94 = arith.constant 0 : index
    %76 = vector.load %arg1[%c0_91, %c2_92, %c2_93, %c0_94] : memref<1x18x18x4xf32, #tpu.memory_space<vmem>>, vector<1x16x16x4xf32>
    %77 = vector.shape_cast %76 : vector<1x16x16x4xf32> to vector<16x16x4xf32>
    %78 = vector.shape_cast %77 : vector<16x16x4xf32> to vector<256x4xf32>
    %c8 = arith.constant 8 : index
    %c0_95 = arith.constant 0 : index
    %c0_96 = arith.constant 0 : index
    %79 = vector.load %arg2[%c8, %c0_95, %c0_96] : memref<9x4x32xf32, #tpu.memory_space<vmem>>, vector<1x4x32xf32>
    %80 = vector.shape_cast %79 : vector<1x4x32xf32> to vector<4x32xf32>
    %c0_97 = arith.constant 0 : index
    %c0_98 = arith.constant 0 : index
    %81 = vector.load %arg8[%c0_97, %c0_98] : memref<256x32xf32, #tpu.memory_space<vmem>>, vector<256x32xf32>
    %cst_99 = arith.constant dense<0.000000e+00> : vector<256x32xf32>
    %82 = tpu.matmul %78, %80, %cst_99 {dimension_numbers = #tpu.dot_dimension_numbers<[1], [0], [0], [1], [0, 0, 1, 1], [], []>} : vector<256x4xf32>, vector<4x32xf32>, vector<256x32xf32> -> vector<256x32xf32>
    %83 = arith.addf %81, %82 : vector<256x32xf32>
    %c0_100 = arith.constant 0 : index
    %c0_101 = arith.constant 0 : index
    %84 = vector.load %arg8[%c0_100, %c0_101] : memref<256x32xf32, #tpu.memory_space<vmem>>, vector<256x32xf32>
    tpu.vector_store %arg8[%c0_100, %c0_101], %83 {strides = array<i32>} : memref<256x32xf32, #tpu.memory_space<vmem>>, vector<256x32xf32>,
    %c0_102 = arith.constant 0 : index
    %c0_103 = arith.constant 0 : index
    %85 = vector.load %arg8[%c0_102, %c0_103] : memref<256x32xf32, #tpu.memory_space<vmem>>, vector<256x32xf32>
    %cst_104 = arith.constant 0.000000e+00 : f32
    %86 = vector.broadcast %cst_104 : f32 to vector<256x32xf32>
    %87 = arith.maximumf %85, %86 : vector<256x32xf32>
    %88 = vector.shape_cast %87 : vector<256x32xf32> to vector<16x16x32xf32>
    %cst_105 = arith.constant 0.000000e+00 : f32
    %89 = vector.broadcast %cst_105 : f32 to vector<18x18x32xf32>
    %c0_106 = arith.constant 0 : index
    %c0_107 = arith.constant 0 : index
    %c0_108 = arith.constant 0 : index
    %90 = vector.load %arg7[%c0_106, %c0_107, %c0_108] : memref<18x18x32xf32, #tpu.memory_space<vmem>>, vector<18x18x32xf32>
    tpu.vector_store %arg7[%c0_106, %c0_107, %c0_108], %89 {strides = array<i32>} : memref<18x18x32xf32, #tpu.memory_space<vmem>>, vector<18x18x32xf32>,
    %c1_109 = arith.constant 1 : index
    %c1_110 = arith.constant 1 : index
    %c0_111 = arith.constant 0 : index
    %91 = vector.load %arg7[%c1_109, %c1_110, %c0_111] : memref<18x18x32xf32, #tpu.memory_space<vmem>>, vector<16x16x32xf32>
    tpu.vector_store %arg7[%c1_109, %c1_110, %c0_111], %88 {strides = array<i32>} : memref<18x18x32xf32, #tpu.memory_space<vmem>>, vector<16x16x32xf32>,
    %cst_112 = arith.constant 0.000000e+00 : f32
    %92 = vector.broadcast %cst_112 : f32 to vector<16x16xf32>
    %c0_113 = arith.constant 0 : index
    %c0_114 = arith.constant 0 : index
    %c0_115 = arith.constant 0 : index
    %93 = vector.load %arg7[%c0_113, %c0_114, %c0_115] : memref<18x18x32xf32, #tpu.memory_space<vmem>>, vector<16x16x32xf32>
    %c0_116 = arith.constant 0 : index
    %c0_117 = arith.constant 0 : index
    %c0_118 = arith.constant 0 : index
    %94 = vector.load %arg4[%c0_116, %c0_117, %c0_118] : memref<9x1x32xf32, #tpu.memory_space<vmem>>, vector<1x1x32xf32>
    %95 = vector.shape_cast %94 : vector<1x1x32xf32> to vector<1x32xf32>
    %96 = vector.shape_cast %95 : vector<1x32xf32> to vector<1x1x32xf32>
    %97 = vector.broadcast %96 : vector<1x1x32xf32> to vector<16x16x32xf32>
    %98 = arith.mulf %93, %97 : vector<16x16x32xf32>
    %cst_119 = arith.constant dense<0.000000e+00> : vector<16x16xf32>
    %99 = vector.multi_reduction <add>, %98, %cst_119 [2] : vector<16x16x32xf32> to vector<16x16xf32>
    %100 = arith.addf %92, %99 : vector<16x16xf32>
    %c0_120 = arith.constant 0 : index
    %c1_121 = arith.constant 1 : index
    %c0_122 = arith.constant 0 : index
    %101 = vector.load %arg7[%c0_120, %c1_121, %c0_122] : memref<18x18x32xf32, #tpu.memory_space<vmem>>, vector<16x16x32xf32>
    %c1_123 = arith.constant 1 : index
    %c0_124 = arith.constant 0 : index
    %c0_125 = arith.constant 0 : index
    %102 = vector.load %arg4[%c1_123, %c0_124, %c0_125] : memref<9x1x32xf32, #tpu.memory_space<vmem>>, vector<1x1x32xf32>
    %103 = vector.shape_cast %102 : vector<1x1x32xf32> to vector<1x32xf32>
    %104 = vector.shape_cast %103 : vector<1x32xf32> to vector<1x1x32xf32>
    %105 = vector.broadcast %104 : vector<1x1x32xf32> to vector<16x16x32xf32>
    %106 = arith.mulf %101, %105 : vector<16x16x32xf32>
    %cst_126 = arith.constant dense<0.000000e+00> : vector<16x16xf32>
    %107 = vector.multi_reduction <add>, %106, %cst_126 [2] : vector<16x16x32xf32> to vector<16x16xf32>
    %108 = arith.addf %100, %107 : vector<16x16xf32>
    %c0_127 = arith.constant 0 : index
    %c2_128 = arith.constant 2 : index
    %c0_129 = arith.constant 0 : index
    %109 = vector.load %arg7[%c0_127, %c2_128, %c0_129] : memref<18x18x32xf32, #tpu.memory_space<vmem>>, vector<16x16x32xf32>
    %c2_130 = arith.constant 2 : index
    %c0_131 = arith.constant 0 : index
    %c0_132 = arith.constant 0 : index
    %110 = vector.load %arg4[%c2_130, %c0_131, %c0_132] : memref<9x1x32xf32, #tpu.memory_space<vmem>>, vector<1x1x32xf32>
    %111 = vector.shape_cast %110 : vector<1x1x32xf32> to vector<1x32xf32>
    %112 = vector.shape_cast %111 : vector<1x32xf32> to vector<1x1x32xf32>
    %113 = vector.broadcast %112 : vector<1x1x32xf32> to vector<16x16x32xf32>
    %114 = arith.mulf %109, %113 : vector<16x16x32xf32>
    %cst_133 = arith.constant dense<0.000000e+00> : vector<16x16xf32>
    %115 = vector.multi_reduction <add>, %114, %cst_133 [2] : vector<16x16x32xf32> to vector<16x16xf32>
    %116 = arith.addf %108, %115 : vector<16x16xf32>
    %c1_134 = arith.constant 1 : index
    %c0_135 = arith.constant 0 : index
    %c0_136 = arith.constant 0 : index
    %117 = vector.load %arg7[%c1_134, %c0_135, %c0_136] : memref<18x18x32xf32, #tpu.memory_space<vmem>>, vector<16x16x32xf32>
    %c3_137 = arith.constant 3 : index
    %c0_138 = arith.constant 0 : index
    %c0_139 = arith.constant 0 : index
    %118 = vector.load %arg4[%c3_137, %c0_138, %c0_139] : memref<9x1x32xf32, #tpu.memory_space<vmem>>, vector<1x1x32xf32>
    %119 = vector.shape_cast %118 : vector<1x1x32xf32> to vector<1x32xf32>
    %120 = vector.shape_cast %119 : vector<1x32xf32> to vector<1x1x32xf32>
    %121 = vector.broadcast %120 : vector<1x1x32xf32> to vector<16x16x32xf32>
    %122 = arith.mulf %117, %121 : vector<16x16x32xf32>
    %cst_140 = arith.constant dense<0.000000e+00> : vector<16x16xf32>
    %123 = vector.multi_reduction <add>, %122, %cst_140 [2] : vector<16x16x32xf32> to vector<16x16xf32>
    %124 = arith.addf %116, %123 : vector<16x16xf32>
    %c1_141 = arith.constant 1 : index
    %c1_142 = arith.constant 1 : index
    %c0_143 = arith.constant 0 : index
    %125 = vector.load %arg7[%c1_141, %c1_142, %c0_143] : memref<18x18x32xf32, #tpu.memory_space<vmem>>, vector<16x16x32xf32>
    %c4_144 = arith.constant 4 : index
    %c0_145 = arith.constant 0 : index
    %c0_146 = arith.constant 0 : index
    %126 = vector.load %arg4[%c4_144, %c0_145, %c0_146] : memref<9x1x32xf32, #tpu.memory_space<vmem>>, vector<1x1x32xf32>
    %127 = vector.shape_cast %126 : vector<1x1x32xf32> to vector<1x32xf32>
    %128 = vector.shape_cast %127 : vector<1x32xf32> to vector<1x1x32xf32>
    %129 = vector.broadcast %128 : vector<1x1x32xf32> to vector<16x16x32xf32>
    %130 = arith.mulf %125, %129 : vector<16x16x32xf32>
    %cst_147 = arith.constant dense<0.000000e+00> : vector<16x16xf32>
    %131 = vector.multi_reduction <add>, %130, %cst_147 [2] : vector<16x16x32xf32> to vector<16x16xf32>
    %132 = arith.addf %124, %131 : vector<16x16xf32>
    %c1_148 = arith.constant 1 : index
    %c2_149 = arith.constant 2 : index
    %c0_150 = arith.constant 0 : index
    %133 = vector.load %arg7[%c1_148, %c2_149, %c0_150] : memref<18x18x32xf32, #tpu.memory_space<vmem>>, vector<16x16x32xf32>
    %c5_151 = arith.constant 5 : index
    %c0_152 = arith.constant 0 : index
    %c0_153 = arith.constant 0 : index
    %134 = vector.load %arg4[%c5_151, %c0_152, %c0_153] : memref<9x1x32xf32, #tpu.memory_space<vmem>>, vector<1x1x32xf32>
    %135 = vector.shape_cast %134 : vector<1x1x32xf32> to vector<1x32xf32>
    %136 = vector.shape_cast %135 : vector<1x32xf32> to vector<1x1x32xf32>
    %137 = vector.broadcast %136 : vector<1x1x32xf32> to vector<16x16x32xf32>
    %138 = arith.mulf %133, %137 : vector<16x16x32xf32>
    %cst_154 = arith.constant dense<0.000000e+00> : vector<16x16xf32>
    %139 = vector.multi_reduction <add>, %138, %cst_154 [2] : vector<16x16x32xf32> to vector<16x16xf32>
    %140 = arith.addf %132, %139 : vector<16x16xf32>
    %c2_155 = arith.constant 2 : index
    %c0_156 = arith.constant 0 : index
    %c0_157 = arith.constant 0 : index
    %141 = vector.load %arg7[%c2_155, %c0_156, %c0_157] : memref<18x18x32xf32, #tpu.memory_space<vmem>>, vector<16x16x32xf32>
    %c6_158 = arith.constant 6 : index
    %c0_159 = arith.constant 0 : index
    %c0_160 = arith.constant 0 : index
    %142 = vector.load %arg4[%c6_158, %c0_159, %c0_160] : memref<9x1x32xf32, #tpu.memory_space<vmem>>, vector<1x1x32xf32>
    %143 = vector.shape_cast %142 : vector<1x1x32xf32> to vector<1x32xf32>
    %144 = vector.shape_cast %143 : vector<1x32xf32> to vector<1x1x32xf32>
    %145 = vector.broadcast %144 : vector<1x1x32xf32> to vector<16x16x32xf32>
    %146 = arith.mulf %141, %145 : vector<16x16x32xf32>
    %cst_161 = arith.constant dense<0.000000e+00> : vector<16x16xf32>
    %147 = vector.multi_reduction <add>, %146, %cst_161 [2] : vector<16x16x32xf32> to vector<16x16xf32>
    %148 = arith.addf %140, %147 : vector<16x16xf32>
    %c2_162 = arith.constant 2 : index
    %c1_163 = arith.constant 1 : index
    %c0_164 = arith.constant 0 : index
    %149 = vector.load %arg7[%c2_162, %c1_163, %c0_164] : memref<18x18x32xf32, #tpu.memory_space<vmem>>, vector<16x16x32xf32>
    %c7_165 = arith.constant 7 : index
    %c0_166 = arith.constant 0 : index
    %c0_167 = arith.constant 0 : index
    %150 = vector.load %arg4[%c7_165, %c0_166, %c0_167] : memref<9x1x32xf32, #tpu.memory_space<vmem>>, vector<1x1x32xf32>
    %151 = vector.shape_cast %150 : vector<1x1x32xf32> to vector<1x32xf32>
    %152 = vector.shape_cast %151 : vector<1x32xf32> to vector<1x1x32xf32>
    %153 = vector.broadcast %152 : vector<1x1x32xf32> to vector<16x16x32xf32>
    %154 = arith.mulf %149, %153 : vector<16x16x32xf32>
    %cst_168 = arith.constant dense<0.000000e+00> : vector<16x16xf32>
    %155 = vector.multi_reduction <add>, %154, %cst_168 [2] : vector<16x16x32xf32> to vector<16x16xf32>
    %156 = arith.addf %148, %155 : vector<16x16xf32>
    %c2_169 = arith.constant 2 : index
    %c2_170 = arith.constant 2 : index
    %c0_171 = arith.constant 0 : index
    %157 = vector.load %arg7[%c2_169, %c2_170, %c0_171] : memref<18x18x32xf32, #tpu.memory_space<vmem>>, vector<16x16x32xf32>
    %c8_172 = arith.constant 8 : index
    %c0_173 = arith.constant 0 : index
    %c0_174 = arith.constant 0 : index
    %158 = vector.load %arg4[%c8_172, %c0_173, %c0_174] : memref<9x1x32xf32, #tpu.memory_space<vmem>>, vector<1x1x32xf32>
    %159 = vector.shape_cast %158 : vector<1x1x32xf32> to vector<1x32xf32>
    %160 = vector.shape_cast %159 : vector<1x32xf32> to vector<1x1x32xf32>
    %161 = vector.broadcast %160 : vector<1x1x32xf32> to vector<16x16x32xf32>
    %162 = arith.mulf %157, %161 : vector<16x16x32xf32>
    %cst_175 = arith.constant dense<0.000000e+00> : vector<16x16xf32>
    %163 = vector.multi_reduction <add>, %162, %cst_175 [2] : vector<16x16x32xf32> to vector<16x16xf32>
    %164 = arith.addf %156, %163 : vector<16x16xf32>
    %c0_176 = arith.constant 0 : index
    %c0_177 = arith.constant 0 : index
    %165 = vector.load %arg5[%c0_176, %c0_177] : memref<1x1xf32, #tpu.memory_space<vmem>>, vector<1x1xf32>
    %166 = vector.broadcast %165 : vector<1x1xf32> to vector<16x16xf32>
    %167 = arith.addf %164, %166 : vector<16x16xf32>
    %168 = math.tanh %167 : vector<16x16xf32>
    %c0_178 = arith.constant 0 : index
    %c0_179 = arith.constant 0 : index
    %c0_180 = arith.constant 0 : index
    %169 = vector.load %arg6[%c0_178, %c0_179, %c0_180] : memref<1x16x16xf32, #tpu.memory_space<vmem>>, vector<1x16x16xf32>
    %170 = vector.shape_cast %169 : vector<1x16x16xf32> to vector<16x16xf32>
    %171 = vector.shape_cast %168 : vector<16x16xf32> to vector<1x16x16xf32>
    tpu.vector_store %arg6[%c0_178, %c0_179, %c0_180], %171 {strides = array<i32>} : memref<1x16x16xf32, #tpu.memory_space<vmem>>, vector<1x16x16xf32>,
    return
  }
  func.func @transform_0(%arg0: i32) -> (i32, i32, i32, i32) {
    %c0_i32 = arith.constant 0 : i32
    %c0_i32_0 = arith.constant 0 : i32
    %c0_i32_1 = arith.constant 0 : i32
    %c0_i32_2 = arith.constant 0 : i32
    return %arg0, %c0_i32, %c0_i32_0, %c0_i32_1 : i32, i32, i32, i32
  }
  func.func @transform_1(%arg0: i32) -> (i32, i32, i32) {
    %c0_i32 = arith.constant 0 : i32
    %c0_i32_0 = arith.constant 0 : i32
    %c0_i32_1 = arith.constant 0 : i32
    %c0_i32_2 = arith.constant 0 : i32
    return %c0_i32, %c0_i32_0, %c0_i32_1 : i32, i32, i32
  }
  func.func @transform_2(%arg0: i32) -> (i32, i32) {
    %c0_i32 = arith.constant 0 : i32
    %c0_i32_0 = arith.constant 0 : i32
    %c0_i32_1 = arith.constant 0 : i32
    return %c0_i32, %c0_i32_0 : i32, i32
  }
  func.func @transform_3(%arg0: i32) -> (i32, i32, i32) {
    %c0_i32 = arith.constant 0 : i32
    %c0_i32_0 = arith.constant 0 : i32
    %c0_i32_1 = arith.constant 0 : i32
    %c0_i32_2 = arith.constant 0 : i32
    return %c0_i32, %c0_i32_0, %c0_i32_1 : i32, i32, i32
  }
  func.func @transform_4(%arg0: i32) -> (i32, i32) {
    %c0_i32 = arith.constant 0 : i32
    %c0_i32_0 = arith.constant 0 : i32
    %c0_i32_1 = arith.constant 0 : i32
    return %c0_i32, %c0_i32_0 : i32, i32
  }
  func.func @transform_5(%arg0: i32) -> (i32, i32, i32) {
    %c0_i32 = arith.constant 0 : i32
    %c0_i32_0 = arith.constant 0 : i32
    %c0_i32_1 = arith.constant 0 : i32
    return %arg0, %c0_i32, %c0_i32_0 : i32, i32, i32
  }
}

</mosaic_0001>

<llo_original>
// kernel: spec_dec_forward.1
$region0: #{spec_dec_forward.1}
  #allocation0 [shape = 'u32[]', space=smem, size = 0x4, offset = 0x4, fixed_abs, tag = 'smem constant byte address 0x4 - core index']
  #allocation1 [shape = 'u32[144,128]{1,0:T(1,128)}', space=vmem, size = 0x12000, scoped, tag = 'internal scratch']
  #allocation2 [shape = 'f32[18,18,32]{2,1,0:T(8,128)}', space=vmem, size = 0x36000, scoped, tag = 'scratch operand']
  #allocation3 [shape = 'f32[256,32]{1,0:T(8,128)}', space=vmem, size = 0x20000, scoped, tag = 'scratch operand']
  #allocation4 [shape = 'f32[1,1]{1,0:T(1,128)S(1)}', space=vmem, size = 0x200, scoped, tag = 'scoped memory for spec_dec_forward.1']
  %s0 = inlined_call_operand.vmem [shape: f32[2,18,18,4], index: 0, kind: input, shape index: {}]
  %s1 = inlined_call_operand.vmem [shape: f32[9,4,32], index: 1, kind: input, shape index: {}]
  %s2 = inlined_call_operand.vmem [shape: f32[1,32], index: 2, kind: input, shape index: {}]
  %s3 = inlined_call_operand.vmem [shape: f32[9,1,32], index: 3, kind: input, shape index: {}]
  %s4 = inlined_call_operand.<no memory space> [shape: f32[1,1], index: 4, kind: input, shape index: {}]
  %s5 = inlined_call_operand.hbm [shape: f32[2,16,16], index: 5, kind: output, shape index: {}]
  %s6 = sld [smem:[#allocation0]]
  $region53: #{spec_dec_forward.1} parent=0
    _
  %s8 = ssub.s32 1, %s6
  %s9 = scalar_select 0, %s8, %s6
  %v10 = vstv %s4
  %11 = vst [vmem:[#allocation4] sm:$0x1] %v10
  $region1: #{spec_dec_forward.1} parent=0
    #allocation5 [shape = 'u8[16384]{0}', space=vmem, size = 0x4000, scoped, tag = 'output window, operand 0']
    #allocation6 [shape = 's32[2]{0}', space=sflag, size = 0x8, scoped, tag = 'scoped memory for spec_dec_forward.1']
    %12 = vsyncpa [#allocation6], 0
    %s13 = scalar_lea.sflag [#allocation6], 1
    %14 = vsyncpa %s13, 0
    loop: start=0, step=1, limit=4
    $region2: #{spec_dec_forward.1} parent=1 // loop_pre_header
      _
    $region3: #{spec_dec_forward.1} parent=1 // loop_header
      %s16 = sphi 0, %s20
      %p17 = scmp.ge.s32.totalorder %s16, 4
      %s26 = sphi 0, %s28
      %s29 = sphi 0, %s26
      %s30 = sphi 0, %s29
      %s46 = sphi 0, %s30
      %s50 = sphi 0, %s50
      %s52 = sphi 0, %s50
      %s53 = sphi 0, %s52
      %s67 = sphi 0, %s53
      %s71 = sphi 0, %s71
      %s73 = sphi 0, %s71
      %s74 = sphi 0, %s73
      %s88 = sphi 0, %s74
      %s92 = sphi 0, %s92
      %s94 = sphi 0, %s92
      %s95 = sphi 0, %s94
      %s109 = sphi 0, %s95
      %s113 = sphi 0, %s113
      %s115 = sphi 0, %s113
      %s116 = sphi 0, %s115
      %s130 = sphi 0, %s116
      %s136 = sphi 0, %s138
      %s139 = sphi 0, %s136
      %s140 = sphi 0, %s139
      %s156 = sphi 0, %s140
    $region4: #{spec_dec_forward.1} parent=1 // loop_header_branch
      %19 = sbr.rel (%p17) target = $region8
    $region5: #{spec_dec_forward.1} parent=1 // loop_body
      %s21 = ssub.s32 %s16, 1
      %s22 = ssub.s32 %s16, 2
      %s23 = sadd.s32 %s16, 1
      %s24 = ssub.s32 %s16, %s23
      %p25 = scmp.eq.s32.totalorder %s24, 0
      %s27 = sadd.s32 %s26, 1
      %s28 = scalar_select %p25, %s26, %s27
      %p31 = pneg %p25
      %p32 = scmp.eq.s32.totalorder %s16, 1
      %p33 = por %p31, %p32
      %p34 = scmp.ne.s32.totalorder %s26, %s29
      %p35 = scmp.eq.s32.totalorder %s16, 0
      %p36 = por %p34, %p35
      %p37 = scmp.ne.s32.totalorder %s26, %s29
      %p38 = scmp.eq.s32.totalorder %s21, 1
      %p39 = por %p37, %p38
      %p40 = scmp.ne.s32.totalorder %s29, %s30
      %p41 = scmp.eq.s32.totalorder %s21, 0
      %p42 = por %p40, %p41
      %p43 = scmp.ne.s32.totalorder %s29, %s30
      %p44 = scmp.eq.s32.totalorder %s22, 1
      %p45 = por %p43, %p44
      %p47 = scmp.ne.s32.totalorder %s30, %s46
      %p48 = scmp.eq.s32.totalorder %s22, 0
      %p49 = por %p47, %p48
      %s51 = sadd.s32 %s50, 1
      %p54 = scmp.eq.s32.totalorder %s16, 1
      %p55 = scmp.ne.s32.totalorder %s50, %s52
      %p56 = scmp.eq.s32.totalorder %s16, 0
      %p57 = por %p55, %p56
      %p58 = scmp.ne.s32.totalorder %s50, %s52
      %p59 = scmp.eq.s32.totalorder %s21, 1
      %p60 = por %p58, %p59
      %p61 = scmp.ne.s32.totalorder %s52, %s53
      %p62 = scmp.eq.s32.totalorder %s21, 0
      %p63 = por %p61, %p62
      %p64 = scmp.ne.s32.totalorder %s52, %s53
      %p65 = scmp.eq.s32.totalorder %s22, 1
      %p66 = por %p64, %p65
      %p68 = scmp.ne.s32.totalorder %s53, %s67
      %p69 = scmp.eq.s32.totalorder %s22, 0
      %p70 = por %p68, %p69
      %s72 = sadd.s32 %s71, 1
      %p75 = scmp.eq.s32.totalorder %s16, 1
      %p76 = scmp.ne.s32.totalorder %s71, %s73
      %p77 = scmp.eq.s32.totalorder %s16, 0
      %p78 = por %p76, %p77
      %p79 = scmp.ne.s32.totalorder %s71, %s73
      %p80 = scmp.eq.s32.totalorder %s21, 1
      %p81 = por %p79, %p80
      %p82 = scmp.ne.s32.totalorder %s73, %s74
      %p83 = scmp.eq.s32.totalorder %s21, 0
      %p84 = por %p82, %p83
      %p85 = scmp.ne.s32.totalorder %s73, %s74
      %p86 = scmp.eq.s32.totalorder %s22, 1
      %p87 = por %p85, %p86
      %p89 = scmp.ne.s32.totalorder %s74, %s88
      %p90 = scmp.eq.s32.totalorder %s22, 0
      %p91 = por %p89, %p90
      %s93 = sadd.s32 %s92, 1
      %p96 = scmp.eq.s32.totalorder %s16, 1
      %p97 = scmp.ne.s32.totalorder %s92, %s94
      %p98 = scmp.eq.s32.totalorder %s16, 0
      %p99 = por %p97, %p98
      %p100 = scmp.ne.s32.totalorder %s92, %s94
      %p101 = scmp.eq.s32.totalorder %s21, 1
      %p102 = por %p100, %p101
      %p103 = scmp.ne.s32.totalorder %s94, %s95
      %p104 = scmp.eq.s32.totalorder %s21, 0
      %p105 = por %p103, %p104
      %p106 = scmp.ne.s32.totalorder %s94, %s95
      %p107 = scmp.eq.s32.totalorder %s22, 1
      %p108 = por %p106, %p107
      %p110 = scmp.ne.s32.totalorder %s95, %s109
      %p111 = scmp.eq.s32.totalorder %s22, 0
      %p112 = por %p110, %p111
      %s114 = sadd.s32 %s113, 1
      %p117 = scmp.eq.s32.totalorder %s16, 1
      %p118 = scmp.ne.s32.totalorder %s113, %s115
      %p119 = scmp.eq.s32.totalorder %s16, 0
      %p120 = por %p118, %p119
      %p121 = scmp.ne.s32.totalorder %s113, %s115
      %p122 = scmp.eq.s32.totalorder %s21, 1
      %p123 = por %p121, %p122
      %p124 = scmp.ne.s32.totalorder %s115, %s116
      %p125 = scmp.eq.s32.totalorder %s21, 0
      %p126 = por %p124, %p125
      %p127 = scmp.ne.s32.totalorder %s115, %s116
      %p128 = scmp.eq.s32.totalorder %s22, 1
      %p129 = por %p127, %p128
      %p131 = scmp.ne.s32.totalorder %s116, %s130
      %p132 = scmp.eq.s32.totalorder %s22, 0
      %p133 = por %p131, %p132
      %s134 = ssub.s32 %s16, %s23
      %p135 = scmp.eq.s32.totalorder %s134, 0
      %s137 = sadd.s32 %s136, 1
      %s138 = scalar_select %p135, %s136, %s137
      %p141 = pneg %p135
      %p142 = scmp.eq.s32.totalorder %s16, 1
      %p143 = por %p141, %p142
      %p144 = scmp.ne.s32.totalorder %s136, %s139
      %p145 = scmp.eq.s32.totalorder %s16, 0
      %p146 = por %p144, %p145
      %p147 = scmp.ne.s32.totalorder %s136, %s139
      %p148 = scmp.eq.s32.totalorder %s21, 1
      %p149 = por %p147, %p148
      %p150 = scmp.ne.s32.totalorder %s139, %s140
      %p151 = scmp.eq.s32.totalorder %s21, 0
      %p152 = por %p150, %p151
      %p153 = scmp.ne.s32.totalorder %s139, %s140
      %p154 = scmp.eq.s32.totalorder %s22, 1
      %p155 = por %p153, %p154
      %p157 = scmp.ne.s32.totalorder %s140, %s156
      %p158 = scmp.eq.s32.totalorder %s22, 0
      %p159 = por %p157, %p158
      %p160 = scmp.le.s32.totalorder 1, %s16
      %p161 = scmp.lt.s32.totalorder %s16, 3
      %p162 = pnand %p160, %p161
      %p163 = pneg %p162
      // Predicated region
      $region9: #{spec_dec_forward.1} parent=5 // pred_check
        _
      $region10: #{spec_dec_forward.1} parent=5 // pred_check_branch
        %165 = sbr.rel (%p162) target = $region12
      $region11: #{spec_dec_forward.1} parent=5 // pred_region
        %s166 = ssub.s32 %s16, 1
        // Predicated region
        $region13: #{spec_dec_forward.1} parent=11 // pred_check
          %p167 = pneg %p63
        $region14: #{spec_dec_forward.1} parent=11 // pred_check_branch
          %169 = sbr.rel (%p167) target = $region16
        $region15: #{spec_dec_forward.1} parent=11 // pred_region
          _
        $region16: #{spec_dec_forward.1} parent=11 // pred_fallthru
          _
        // Predicated region
        $region17: #{spec_dec_forward.1} parent=11 // pred_check
          %p170 = pneg %p84
        $region18: #{spec_dec_forward.1} parent=11 // pred_check_branch
          %172 = sbr.rel (%p170) target = $region20
        $region19: #{spec_dec_forward.1} parent=11 // pred_region
          _
        $region20: #{spec_dec_forward.1} parent=11 // pred_fallthru
          _
        // Predicated region
        $region21: #{spec_dec_forward.1} parent=11 // pred_check
          %p173 = pneg %p105
        $region22: #{spec_dec_forward.1} parent=11 // pred_check_branch
          %175 = sbr.rel (%p173) target = $region24
        $region23: #{spec_dec_forward.1} parent=11 // pred_region
          _
        $region24: #{spec_dec_forward.1} parent=11 // pred_fallthru
          _
        // Predicated region
        $region25: #{spec_dec_forward.1} parent=11 // pred_check
          %p176 = pneg %p126
        $region26: #{spec_dec_forward.1} parent=11 // pred_check_branch
          %178 = sbr.rel (%p176) target = $region28
        $region27: #{spec_dec_forward.1} parent=11 // pred_region
          _
        $region28: #{spec_dec_forward.1} parent=11 // pred_fallthru
          _
      $region12: #{spec_dec_forward.1} parent=5 // pred_fallthru
        _
      %p179 = scmp.lt.s32.totalorder %s16, 2
      // Predicated region
      $region29: #{spec_dec_forward.1} parent=5 // pred_check
        %p180 = pneg %p179
      $region30: #{spec_dec_forward.1} parent=5 // pred_check_branch
        %182 = sbr.rel (%p180) target = $region32
      $region31: #{spec_dec_forward.1} parent=5 // pred_region
        // Predicated region
        $region33: #{spec_dec_forward.1} parent=31 // pred_check
          %p183 = pneg %p36
        $region34: #{spec_dec_forward.1} parent=31 // pred_check_branch
          %185 = sbr.rel (%p183) target = $region36
        $region35: #{spec_dec_forward.1} parent=31 // pred_region
          %p186 = scmp.lt.s32.totalorder %s16, 1
          %s187 = scalar_select %p186, %s16, 1
          %s188 = smul.addr %s187, 54
          %s189 = smul.addr %s188, 8
          %s190 = scalar_lea.vmem %s0, %s189
        $region36: #{spec_dec_forward.1} parent=31 // pred_fallthru
          _
      $region32: #{spec_dec_forward.1} parent=5 // pred_fallthru
        _
      %p191 = scmp.le.s32.totalorder 1, %s16
      %p192 = scmp.lt.s32.totalorder %s16, 3
      %p193 = pnand %p191, %p192
      %p194 = pneg %p193
      // Predicated region
      $region37: #{spec_dec_forward.1} parent=5 // pred_check
        _
      $region38: #{spec_dec_forward.1} parent=5 // pred_check_branch
        %196 = sbr.rel (%p193) target = $region40
      $region39: #{spec_dec_forward.1} parent=5 // pred_region
        %s197 = ssub.s32 %s16, 1
        %p198 = scmp.lt.s32.totalorder %s21, 1
        %s199 = scalar_select %p198, %s21, 1
        %s200 = smul.addr %s199, 54
        %s201 = smul.addr %s200, 8
        %s202 = scalar_lea.vmem %s0, %s201
        %p203 = pneg %p42
        %p204 = pneg %p39
        %p205 = pneg %p63
        %p206 = pneg %p60
        %p207 = pneg %p84
        %p208 = pneg %p81
        %p209 = pneg %p105
        %p210 = pneg %p102
        %p211 = pneg %p126
        %p212 = pneg %p123
        %p213 = pneg %p152
        %p214 = pneg %p149
        %s215 = sand.u32 %s139, 1
        %s216 = scalar_lea.sflag [#allocation6], %s215
        %s217 = sand.u32 %s139, 1
        %s218 = smul.addr %s217, 16
        %s219 = scalar_lea.vmem [#allocation5], %s218
        %p220 = scmp.lt.s32.totalorder %s21, 1
        %s221 = scalar_select %p220, %s21, 1
        %s222 = smul.addr %s221, 54
        %s223 = smul.addr %s222, 8
        %s224 = scalar_lea.vmem %s0, %s223
        %v225 = vld [vmem:[%s2] sm:$0x1]
        %v227 = vlaneseq
        %v228 = vshrl.u32 %v227, 7
        %v229 = vsub.s32 0, %v228
        %v230 = vrot.slane %v225, %v229
        %vm232 = vcmask 261120
        %233 = vst.msk [vmem:[#allocation3] sm:$0xff] %vm232, %v230
        %234 = vst.msk [vmem:[#allocation3 + $0x8] sm:$0xff] %vm232, %v230
        %235 = vst.msk [vmem:[#allocation3 + $0x10] sm:$0xff] %vm232, %v230
        %236 = vst.msk [vmem:[#allocation3 + $0x18] sm:$0xff] %vm232, %v230
        %237 = vst.msk [vmem:[#allocation3 + $0x20] sm:$0xff] %vm232, %v230
        %238 = vst.msk [vmem:[#allocation3 + $0x28] sm:$0xff] %vm232, %v230
        %239 = vst.msk [vmem:[#allocation3 + $0x30] sm:$0xff] %vm232, %v230
        %240 = vst.msk [vmem:[#allocation3 + $0x38] sm:$0xff] %vm232, %v230
        %241 = vst.msk [vmem:[#allocation3 + $0x40] sm:$0xff] %vm232, %v230
        %242 = vst.msk [vmem:[#allocation3 + $0x48] sm:$0xff] %vm232, %v230
        %243 = vst.msk [vmem:[#allocation3 + $0x50] sm:$0xff] %vm232, %v230
        %244 = vst.msk [vmem:[#allocation3 + $0x58] sm:$0xff] %vm232, %v230
        %245 = vst.msk [vmem:[#allocation3 + $0x60] sm:$0xff] %vm232, %v230
        %246 = vst.msk [vmem:[#allocation3 + $0x68] sm:$0xff] %vm232, %v230
        %247 = vst.msk [vmem:[#allocation3 + $0x70] sm:$0xff] %vm232, %v230
        %248 = vst.msk [vmem:[#allocation3 + $0x78] sm:$0xff] %vm232, %v230
        %249 = vst.msk [vmem:[#allocation3 + $0x80] sm:$0xff] %vm232, %v230
        %250 = vst.msk [vmem:[#allocation3 + $0x88] sm:$0xff] %vm232, %v230
        %251 = vst.msk [vmem:[#allocation3 + $0x90] sm:$0xff] %vm232, %v230
        %252 = vst.msk [vmem:[#allocation3 + $0x98] sm:$0xff] %vm232, %v230
        %253 = vst.msk [vmem:[#allocation3 + $0xa0] sm:$0xff] %vm232, %v230
        %254 = vst.msk [vmem:[#allocation3 + $0xa8] sm:$0xff] %vm232, %v230
        %255 = vst.msk [vmem:[#allocation3 + $0xb0] sm:$0xff] %vm232, %v230
        %256 = vst.msk [vmem:[#allocation3 + $0xb8] sm:$0xff] %vm232, %v230
        %257 = vst.msk [vmem:[#allocation3 + $0xc0] sm:$0xff] %vm232, %v230
        %258 = vst.msk [vmem:[#allocation3 + $0xc8] sm:$0xff] %vm232, %v230
        %259 = vst.msk [vmem:[#allocation3 + $0xd0] sm:$0xff] %vm232, %v230
        %260 = vst.msk [vmem:[#allocation3 + $0xd8] sm:$0xff] %vm232, %v230
        %261 = vst.msk [vmem:[#allocation3 + $0xe0] sm:$0xff] %vm232, %v230
        %262 = vst.msk [vmem:[#allocation3 + $0xe8] sm:$0xff] %vm232, %v230
        %263 = vst.msk [vmem:[#allocation3 + $0xf0] sm:$0xff] %vm232, %v230
        %264 = vst.msk [vmem:[#allocation3 + $0xf8] sm:$0xff] %vm232, %v230
        %v265 = vld [vmem:[%s224] sm:$0xff]
        %v266 = vld [vmem:[%s224 + $0x8] sm:$0xff]
        %v267 = vld [vmem:[%s224 + $0x18] sm:$0xff]
        %v268 = vld [vmem:[%s224 + $0x20] sm:$0xff]
        %v269 = vld [vmem:[%s224 + $0x30] sm:$0xff]
        %v270 = vld [vmem:[%s224 + $0x38] sm:$0xff]
        %v271 = vld [vmem:[%s224 + $0x48] sm:$0xff]
        %v272 = vld [vmem:[%s224 + $0x50] sm:$0xff]
        %v273 = vld [vmem:[%s224 + $0x60] sm:$0xff]
        %v274 = vld [vmem:[%s224 + $0x68] sm:$0xff]
        %v275 = vld [vmem:[%s224 + $0x78] sm:$0xff]
        %v276 = vld [vmem:[%s224 + $0x80] sm:$0xff]
        %v277 = vld [vmem:[%s224 + $0x90] sm:$0xff]
        %v278 = vld [vmem:[%s224 + $0x98] sm:$0xff]
        %v279 = vld [vmem:[%s224 + $0xa8] sm:$0xff]
        %v280 = vld [vmem:[%s224 + $0xb0] sm:$0xff]
        %v281 = vld [vmem:[%s224 + $0xc0] sm:$0xff]
        %v282 = vld [vmem:[%s224 + $0xc8] sm:$0xff]
        %v283 = vld [vmem:[%s224 + $0xd8] sm:$0xff]
        %v284 = vld [vmem:[%s224 + $0xe0] sm:$0xff]
        %v285 = vld [vmem:[%s224 + $0xf0] sm:$0xff]
        %v286 = vld [vmem:[%s224 + $0xf8] sm:$0xff]
        %v287 = vld [vmem:[%s224 + $0x108] sm:$0xff]
        %v288 = vld [vmem:[%s224 + $0x110] sm:$0xff]
        %v289 = vld [vmem:[%s224 + $0x120] sm:$0xff]
        %v290 = vld [vmem:[%s224 + $0x128] sm:$0xff]
        %v291 = vld [vmem:[%s224 + $0x138] sm:$0xff]
        %v292 = vld [vmem:[%s224 + $0x140] sm:$0xff]
        %v293 = vld [vmem:[%s224 + $0x150] sm:$0xff]
        %v294 = vld [vmem:[%s224 + $0x158] sm:$0xff]
        %v295 = vld [vmem:[%s224 + $0x168] sm:$0xff]
        %v296 = vld [vmem:[%s224 + $0x170] sm:$0xff]
        %v297 = vld [vmem:[%s1] sm:$0xf]
        %v298 = vld [vmem:[#allocation3] sm:$0xff]
        %v299 = vld [vmem:[#allocation3 + $0x8] sm:$0xff]
        %v300 = vld [vmem:[#allocation3 + $0x10] sm:$0xff]
        %v301 = vld [vmem:[#allocation3 + $0x18] sm:$0xff]
        %v302 = vld [vmem:[#allocation3 + $0x20] sm:$0xff]
        %v303 = vld [vmem:[#allocation3 + $0x28] sm:$0xff]
        %v304 = vld [vmem:[#allocation3 + $0x30] sm:$0xff]
        %v305 = vld [vmem:[#allocation3 + $0x38] sm:$0xff]
        %v306 = vld [vmem:[#allocation3 + $0x40] sm:$0xff]
        %v307 = vld [vmem:[#allocation3 + $0x48] sm:$0xff]
        %v308 = vld [vmem:[#allocation3 + $0x50] sm:$0xff]
        %v309 = vld [vmem:[#allocation3 + $0x58] sm:$0xff]
        %v310 = vld [vmem:[#allocation3 + $0x60] sm:$0xff]
        %v311 = vld [vmem:[#allocation3 + $0x68] sm:$0xff]
        %v312 = vld [vmem:[#allocation3 + $0x70] sm:$0xff]
        %v313 = vld [vmem:[#allocation3 + $0x78] sm:$0xff]
        %v314 = vld [vmem:[#allocation3 + $0x80] sm:$0xff]
        %v315 = vld [vmem:[#allocation3 + $0x88] sm:$0xff]
        %v316 = vld [vmem:[#allocation3 + $0x90] sm:$0xff]
        %v317 = vld [vmem:[#allocation3 + $0x98] sm:$0xff]
        %v318 = vld [vmem:[#allocation3 + $0xa0] sm:$0xff]
        %v319 = vld [vmem:[#allocation3 + $0xa8] sm:$0xff]
        %v320 = vld [vmem:[#allocation3 + $0xb0] sm:$0xff]
        %v321 = vld [vmem:[#allocation3 + $0xb8] sm:$0xff]
        %v322 = vld [vmem:[#allocation3 + $0xc0] sm:$0xff]
        %v323 = vld [vmem:[#allocation3 + $0xc8] sm:$0xff]
        %v324 = vld [vmem:[#allocation3 + $0xd0] sm:$0xff]
        %v325 = vld [vmem:[#allocation3 + $0xd8] sm:$0xff]
        %v326 = vld [vmem:[#allocation3 + $0xe0] sm:$0xff]
        %v327 = vld [vmem:[#allocation3 + $0xe8] sm:$0xff]
        %v328 = vld [vmem:[#allocation3 + $0xf0] sm:$0xff]
        %v329 = vld [vmem:[#allocation3 + $0xf8] sm:$0xff]
        %vm330 = vcmask 31744
        %v332 = vsel %vm330, %v265, 0
        %v335 = vsel %vm330, %v266, 0
        %v338 = vsel %vm330, %v267, 0
        %v341 = vsel %vm330, %v268, 0
        %v344 = vsel %vm330, %v269, 0
        %v347 = vsel %vm330, %v270, 0
        %v350 = vsel %vm330, %v271, 0
        %v353 = vsel %vm330, %v272, 0
        %v356 = vsel %vm330, %v273, 0
        %v359 = vsel %vm330, %v274, 0
        %v362 = vsel %vm330, %v275, 0
        %v365 = vsel %vm330, %v276, 0
        %v368 = vsel %vm330, %v277, 0
        %v371 = vsel %vm330, %v278, 0
        %v374 = vsel %vm330, %v279, 0
        %v377 = vsel %vm330, %v280, 0
        %v380 = vsel %vm330, %v281, 0
        %v383 = vsel %vm330, %v282, 0
        %v386 = vsel %vm330, %v283, 0
        %v389 = vsel %vm330, %v284, 0
        %v392 = vsel %vm330, %v285, 0
        %v395 = vsel %vm330, %v286, 0
        %v398 = vsel %vm330, %v287, 0
        %v401 = vsel %vm330, %v288, 0
        %v404 = vsel %vm330, %v289, 0
        %v407 = vsel %vm330, %v290, 0
        %v410 = vsel %vm330, %v291, 0
        %v413 = vsel %vm330, %v292, 0
        %v416 = vsel %vm330, %v293, 0
        %v419 = vsel %vm330, %v294, 0
        %v422 = vsel %vm330, %v295, 0
        %v425 = vsel %vm330, %v296, 0
        %vm427 = vcmask 1043456
        %v429 = vsel %vm427, %v297, 0
        %431 = vmatprep.subr.mxu0 0.0
        %432 = vmatpush1.msra.mxu0 0.0
        %433 = vmatprep.subr.mxu0 0.0
        %434 = vmatpush1.msra.mxu0 0.0
        %435 = vmatprep.subr.mxu0 0.0
        %436 = vmatpush1.msra.mxu0 0.0
        %437 = vmatprep.subr.mxu0 0.0
        %438 = vmatpush1.msra.mxu0 0.0
        %439 = vmatprep.subr.mxu0 0.0
        %440 = vmatpush1.msra.mxu0 0.0
        %441 = vmatprep.subr.mxu0 0.0
        %442 = vmatpush1.msra.mxu0 0.0
        %443 = vmatprep.subr.mxu0 0.0
        %444 = vmatpush1.msra.mxu0 0.0
        %445 = vmatprep.subr.mxu0 0.0
        %446 = vmatpush1.msra.mxu0 0.0
        %447 = vmatprep.subr.mxu0 0.0
        %448 = vmatpush1.msra.mxu0 0.0
        %449 = vmatprep.subr.mxu0 0.0
        %450 = vmatpush1.msra.mxu0 0.0
        %451 = vmatprep.subr.mxu0 0.0
        %452 = vmatpush1.msra.mxu0 0.0
        %453 = vmatprep.subr.mxu0 0.0
        %454 = vmatpush1.msra.mxu0 0.0
        %455 = vmatprep.subr.mxu0 0.0
        %456 = vmatpush1.msra.mxu0 0.0
        %457 = vmatprep.subr.mxu0 0.0
        %458 = vmatpush1.msra.mxu0 0.0
        %459 = vmatprep.subr.mxu0 0.0
        %460 = vmatpush1.msra.mxu0 0.0
        %461 = vmatprep.subr.mxu0 0.0
        %462 = vmatpush1.msra.mxu0 %v429
        %463 = vmatprep.subr.mxu0 0.0
        %464 = vmatpush2.msra.mxu0 0.0
        %465 = vmatprep.subr.mxu0 0.0
        %466 = vmatpush2.msra.mxu0 0.0
        %467 = vmatprep.subr.mxu0 0.0
        %468 = vmatpush2.msra.mxu0 0.0
        %469 = vmatprep.subr.mxu0 0.0
        %470 = vmatpush2.msra.mxu0 0.0
        %471 = vmatprep.subr.mxu0 0.0
        %472 = vmatpush2.msra.mxu0 0.0
        %473 = vmatprep.subr.mxu0 0.0
        %474 = vmatpush2.msra.mxu0 0.0
        %475 = vmatprep.subr.mxu0 0.0
        %476 = vmatpush2.msra.mxu0 0.0
        %477 = vmatprep.subr.mxu0 0.0
        %478 = vmatpush2.msra.mxu0 0.0
        %479 = vmatprep.subr.mxu0 0.0
        %480 = vmatpush2.msra.mxu0 0.0
        %481 = vmatprep.subr.mxu0 0.0
        %482 = vmatpush2.msra.mxu0 0.0
        %483 = vmatprep.subr.mxu0 0.0
        %484 = vmatpush2.msra.mxu0 0.0
        %485 = vmatprep.subr.mxu0 0.0
        %486 = vmatpush2.msra.mxu0 0.0
        %487 = vmatprep.subr.mxu0 0.0
        %488 = vmatpush2.msra.mxu0 0.0
        %489 = vmatprep.subr.mxu0 0.0
        %490 = vmatpush2.msra.mxu0 0.0
        %491 = vmatprep.subr.mxu0 0.0
        %492 = vmatpush2.msra.mxu0 0.0
        %493 = vmatprep.subr.mxu0 0.0
        %494 = vmatpush2.msra.mxu0 0.0
        %495 = vmatprep.mubr.f32.mxu0 0.0
        %496 = vmatmul.mubr.f32.gmra.mxu0 %v332
        %v497 = vpop.f32.mrf.mxu0
        %v498 = vadd.f32 0.0, %v497
        %v499 = vpop.f32.mrf.mxu0
        %500 = vmatprep.mubr.f32.mxu0 0.0
        %501 = vmatmul.mubr.f32.gmra.mxu0 %v335
        %v502 = vpop.f32.mrf.mxu0
        %v503 = vadd.f32 0.0, %v502
        %v504 = vpop.f32.mrf.mxu0
        %505 = vmatprep.mubr.f32.mxu0 0.0
        %506 = vmatmul.mubr.f32.gmra.mxu0 %v338
        %v507 = vpop.f32.mrf.mxu0
        %v508 = vadd.f32 0.0, %v507
        %v509 = vpop.f32.mrf.mxu0
        %510 = vmatprep.mubr.f32.mxu0 0.0
        %511 = vmatmul.mubr.f32.gmra.mxu0 %v341
        %v512 = vpop.f32.mrf.mxu0
        %v513 = vadd.f32 0.0, %v512
        %v514 = vpop.f32.mrf.mxu0
        %515 = vmatprep.mubr.f32.mxu0 0.0
        %516 = vmatmul.mubr.f32.gmra.mxu0 %v344
        %v517 = vpop.f32.mrf.mxu0
        %v518 = vadd.f32 0.0, %v517
        %v519 = vpop.f32.mrf.mxu0
        %520 = vmatprep.mubr.f32.mxu0 0.0
        %521 = vmatmul.mubr.f32.gmra.mxu0 %v347
        %v522 = vpop.f32.mrf.mxu0
        %v523 = vadd.f32 0.0, %v522
        %v524 = vpop.f32.mrf.mxu0
        %525 = vmatprep.mubr.f32.mxu0 0.0
        %526 = vmatmul.mubr.f32.gmra.mxu0 %v350
        %v527 = vpop.f32.mrf.mxu0
        %v528 = vadd.f32 0.0, %v527
        %v529 = vpop.f32.mrf.mxu0
        %530 = vmatprep.mubr.f32.mxu0 0.0
        %531 = vmatmul.mubr.f32.gmra.mxu0 %v353
        %v532 = vpop.f32.mrf.mxu0
        %v533 = vadd.f32 0.0, %v532
        %v534 = vpop.f32.mrf.mxu0
        %535 = vmatprep.mubr.f32.mxu0 0.0
        %536 = vmatmul.mubr.f32.gmra.mxu0 %v356
        %v537 = vpop.f32.mrf.mxu0
        %v538 = vadd.f32 0.0, %v537
        %v539 = vpop.f32.mrf.mxu0
        %540 = vmatprep.mubr.f32.mxu0 0.0
        %541 = vmatmul.mubr.f32.gmra.mxu0 %v359
        %v542 = vpop.f32.mrf.mxu0
        %v543 = vadd.f32 0.0, %v542
        %v544 = vpop.f32.mrf.mxu0
        %545 = vmatprep.mubr.f32.mxu0 0.0
        %546 = vmatmul.mubr.f32.gmra.mxu0 %v362
        %v547 = vpop.f32.mrf.mxu0
        %v548 = vadd.f32 0.0, %v547
        %v549 = vpop.f32.mrf.mxu0
        %550 = vmatprep.mubr.f32.mxu0 0.0
        %551 = vmatmul.mubr.f32.gmra.mxu0 %v365
        %v552 = vpop.f32.mrf.mxu0
        %v553 = vadd.f32 0.0, %v552
        %v554 = vpop.f32.mrf.mxu0
        %555 = vmatprep.mubr.f32.mxu0 0.0
        %556 = vmatmul.mubr.f32.gmra.mxu0 %v368
        %v557 = vpop.f32.mrf.mxu0
        %v558 = vadd.f32 0.0, %v557
        %v559 = vpop.f32.mrf.mxu0
        %560 = vmatprep.mubr.f32.mxu0 0.0
        %561 = vmatmul.mubr.f32.gmra.mxu0 %v371
        %v562 = vpop.f32.mrf.mxu0
        %v563 = vadd.f32 0.0, %v562
        %v564 = vpop.f32.mrf.mxu0
        %565 = vmatprep.mubr.f32.mxu0 0.0
        %566 = vmatmul.mubr.f32.gmra.mxu0 %v374
        %v567 = vpop.f32.mrf.mxu0
        %v568 = vadd.f32 0.0, %v567
        %v569 = vpop.f32.mrf.mxu0
        %570 = vmatprep.mubr.f32.mxu0 0.0
        %571 = vmatmul.mubr.f32.gmra.mxu0 %v377
        %v572 = vpop.f32.mrf.mxu0
        %v573 = vadd.f32 0.0, %v572
        %v574 = vpop.f32.mrf.mxu0
        %575 = vmatprep.mubr.f32.mxu0 0.0
        %576 = vmatmul.mubr.f32.gmra.mxu0 %v380
        %v577 = vpop.f32.mrf.mxu0
        %v578 = vadd.f32 0.0, %v577
        %v579 = vpop.f32.mrf.mxu0
        %580 = vmatprep.mubr.f32.mxu0 0.0
        %581 = vmatmul.mubr.f32.gmra.mxu0 %v383
        %v582 = vpop.f32.mrf.mxu0
        %v583 = vadd.f32 0.0, %v582
        %v584 = vpop.f32.mrf.mxu0
        %585 = vmatprep.mubr.f32.mxu0 0.0
        %586 = vmatmul.mubr.f32.gmra.mxu0 %v386
        %v587 = vpop.f32.mrf.mxu0
        %v588 = vadd.f32 0.0, %v587
        %v589 = vpop.f32.mrf.mxu0
        %590 = vmatprep.mubr.f32.mxu0 0.0
        %591 = vmatmul.mubr.f32.gmra.mxu0 %v389
        %v592 = vpop.f32.mrf.mxu0
        %v593 = vadd.f32 0.0, %v592
        %v594 = vpop.f32.mrf.mxu0
        %595 = vmatprep.mubr.f32.mxu0 0.0
        %596 = vmatmul.mubr.f32.gmra.mxu0 %v392
        %v597 = vpop.f32.mrf.mxu0
        %v598 = vadd.f32 0.0, %v597
        %v599 = vpop.f32.mrf.mxu0
        %600 = vmatprep.mubr.f32.mxu0 0.0
        %601 = vmatmul.mubr.f32.gmra.mxu0 %v395
        %v602 = vpop.f32.mrf.mxu0
        %v603 = vadd.f32 0.0, %v602
        %v604 = vpop.f32.mrf.mxu0
        %605 = vmatprep.mubr.f32.mxu0 0.0
        %606 = vmatmul.mubr.f32.gmra.mxu0 %v398
        %v607 = vpop.f32.mrf.mxu0
        %v608 = vadd.f32 0.0, %v607
        %v609 = vpop.f32.mrf.mxu0
        %610 = vmatprep.mubr.f32.mxu0 0.0
        %611 = vmatmul.mubr.f32.gmra.mxu0 %v401
        %v612 = vpop.f32.mrf.mxu0
        %v613 = vadd.f32 0.0, %v612
        %v614 = vpop.f32.mrf.mxu0
        %615 = vmatprep.mubr.f32.mxu0 0.0
        %616 = vmatmul.mubr.f32.gmra.mxu0 %v404
        %v617 = vpop.f32.mrf.mxu0
        %v618 = vadd.f32 0.0, %v617
        %v619 = vpop.f32.mrf.mxu0
        %620 = vmatprep.mubr.f32.mxu0 0.0
        %621 = vmatmul.mubr.f32.gmra.mxu0 %v407
        %v622 = vpop.f32.mrf.mxu0
        %v623 = vadd.f32 0.0, %v622
        %v624 = vpop.f32.mrf.mxu0
        %625 = vmatprep.mubr.f32.mxu0 0.0
        %626 = vmatmul.mubr.f32.gmra.mxu0 %v410
        %v627 = vpop.f32.mrf.mxu0
        %v628 = vadd.f32 0.0, %v627
        %v629 = vpop.f32.mrf.mxu0
        %630 = vmatprep.mubr.f32.mxu0 0.0
        %631 = vmatmul.mubr.f32.gmra.mxu0 %v413
        %v632 = vpop.f32.mrf.mxu0
        %v633 = vadd.f32 0.0, %v632
        %v634 = vpop.f32.mrf.mxu0
        %635 = vmatprep.mubr.f32.mxu0 0.0
        %636 = vmatmul.mubr.f32.gmra.mxu0 %v416
        %v637 = vpop.f32.mrf.mxu0
        %v638 = vadd.f32 0.0, %v637
        %v639 = vpop.f32.mrf.mxu0
        %640 = vmatprep.mubr.f32.mxu0 0.0
        %641 = vmatmul.mubr.f32.gmra.mxu0 %v419
        %v642 = vpop.f32.mrf.mxu0
        %v643 = vadd.f32 0.0, %v642
        %v644 = vpop.f32.mrf.mxu0
        %645 = vmatprep.mubr.f32.mxu0 0.0
        %646 = vmatmul.mubr.f32.gmra.mxu0 %v422
        %v647 = vpop.f32.mrf.mxu0
        %v648 = vadd.f32 0.0, %v647
        %v649 = vpop.f32.mrf.mxu0
        %650 = vmatprep.mubr.f32.mxu0 0.0
        %651 = vmatmul.mubr.f32.gmra.mxu0 %v425
        %v652 = vpop.f32.mrf.mxu0
        %v653 = vadd.f32 0.0, %v652
        %v654 = vpop.f32.mrf.mxu0
        %655 = vdwg.mxu0
        %v656 = vadd.f32 %v298, %v498
        %v657 = vadd.f32 %v299, %v503
        %v658 = vadd.f32 %v300, %v508
        %v659 = vadd.f32 %v301, %v513
        %v660 = vadd.f32 %v302, %v518
        %v661 = vadd.f32 %v303, %v523
        %v662 = vadd.f32 %v304, %v528
        %v663 = vadd.f32 %v305, %v533
        %v664 = vadd.f32 %v306, %v538
        %v665 = vadd.f32 %v307, %v543
        %v666 = vadd.f32 %v308, %v548
        %v667 = vadd.f32 %v309, %v553
        %v668 = vadd.f32 %v310, %v558
        %v669 = vadd.f32 %v311, %v563
        %v670 = vadd.f32 %v312, %v568
        %v671 = vadd.f32 %v313, %v573
        %v672 = vadd.f32 %v314, %v578
        %v673 = vadd.f32 %v315, %v583
        %v674 = vadd.f32 %v316, %v588
        %v675 = vadd.f32 %v317, %v593
        %v676 = vadd.f32 %v318, %v598
        %v677 = vadd.f32 %v319, %v603
        %v678 = vadd.f32 %v320, %v608
        %v679 = vadd.f32 %v321, %v613
        %v680 = vadd.f32 %v322, %v618
        %v681 = vadd.f32 %v323, %v623
        %v682 = vadd.f32 %v324, %v628
        %v683 = vadd.f32 %v325, %v633
        %v684 = vadd.f32 %v326, %v638
        %v685 = vadd.f32 %v327, %v643
        %v686 = vadd.f32 %v328, %v648
        %v687 = vadd.f32 %v329, %v653
        %688 = vst.msk [vmem:[#allocation3] sm:$0xff] %vm232, %v656
        %689 = vst.msk [vmem:[#allocation3 + $0x8] sm:$0xff] %vm232, %v657
        %690 = vst.msk [vmem:[#allocation3 + $0x10] sm:$0xff] %vm232, %v658
        %691 = vst.msk [vmem:[#allocation3 + $0x18] sm:$0xff] %vm232, %v659
        %692 = vst.msk [vmem:[#allocation3 + $0x20] sm:$0xff] %vm232, %v660
        %693 = vst.msk [vmem:[#allocation3 + $0x28] sm:$0xff] %vm232, %v661
        %694 = vst.msk [vmem:[#allocation3 + $0x30] sm:$0xff] %vm232, %v662
        %695 = vst.msk [vmem:[#allocation3 + $0x38] sm:$0xff] %vm232, %v663
        %696 = vst.msk [vmem:[#allocation3 + $0x40] sm:$0xff] %vm232, %v664
        %697 = vst.msk [vmem:[#allocation3 + $0x48] sm:$0xff] %vm232, %v665
        %698 = vst.msk [vmem:[#allocation3 + $0x50] sm:$0xff] %vm232, %v666
        %699 = vst.msk [vmem:[#allocation3 + $0x58] sm:$0xff] %vm232, %v667
        %700 = vst.msk [vmem:[#allocation3 + $0x60] sm:$0xff] %vm232, %v668
        %701 = vst.msk [vmem:[#allocation3 + $0x68] sm:$0xff] %vm232, %v669
        %702 = vst.msk [vmem:[#allocation3 + $0x70] sm:$0xff] %vm232, %v670
        %703 = vst.msk [vmem:[#allocation3 + $0x78] sm:$0xff] %vm232, %v671
        %704 = vst.msk [vmem:[#allocation3 + $0x80] sm:$0xff] %vm232, %v672
        %705 = vst.msk [vmem:[#allocation3 + $0x88] sm:$0xff] %vm232, %v673
        %706 = vst.msk [vmem:[#allocation3 + $0x90] sm:$0xff] %vm232, %v674
        %707 = vst.msk [vmem:[#allocation3 + $0x98] sm:$0xff] %vm232, %v675
        %708 = vst.msk [vmem:[#allocation3 + $0xa0] sm:$0xff] %vm232, %v676
        %709 = vst.msk [vmem:[#allocation3 + $0xa8] sm:$0xff] %vm232, %v677
        %710 = vst.msk [vmem:[#allocation3 + $0xb0] sm:$0xff] %vm232, %v678
        %711 = vst.msk [vmem:[#allocation3 + $0xb8] sm:$0xff] %vm232, %v679
        %712 = vst.msk [vmem:[#allocation3 + $0xc0] sm:$0xff] %vm232, %v680
        %713 = vst.msk [vmem:[#allocation3 + $0xc8] sm:$0xff] %vm232, %v681
        %714 = vst.msk [vmem:[#allocation3 + $0xd0] sm:$0xff] %vm232, %v682
        %715 = vst.msk [vmem:[#allocation3 + $0xd8] sm:$0xff] %vm232, %v683
        %716 = vst.msk [vmem:[#allocation3 + $0xe0] sm:$0xff] %vm232, %v684
        %717 = vst.msk [vmem:[#allocation3 + $0xe8] sm:$0xff] %vm232, %v685
        %718 = vst.msk [vmem:[#allocation3 + $0xf0] sm:$0xff] %vm232, %v686
        %719 = vst.msk [vmem:[#allocation3 + $0xf8] sm:$0xff] %vm232, %v687
        %v720 = vld [vmem:[%s224 + $0x1] sm:$0xff]
        %v721 = vld [vmem:[%s224 + $0x9] sm:$0xff]
        %v722 = vld [vmem:[%s224 + $0x19] sm:$0xff]
        %v723 = vld [vmem:[%s224 + $0x21] sm:$0xff]
        %v724 = vld [vmem:[%s224 + $0x31] sm:$0xff]
        %v725 = vld [vmem:[%s224 + $0x39] sm:$0xff]
        %v726 = vld [vmem:[%s224 + $0x49] sm:$0xff]
        %v727 = vld [vmem:[%s224 + $0x51] sm:$0xff]
        %v728 = vld [vmem:[%s224 + $0x61] sm:$0xff]
        %v729 = vld [vmem:[%s224 + $0x69] sm:$0xff]
        %v730 = vld [vmem:[%s224 + $0x79] sm:$0xff]
        %v731 = vld [vmem:[%s224 + $0x81] sm:$0xff]
        %v732 = vld [vmem:[%s224 + $0x91] sm:$0xff]
        %v733 = vld [vmem:[%s224 + $0x99] sm:$0xff]
        %v734 = vld [vmem:[%s224 + $0xa9] sm:$0xff]
        %v735 = vld [vmem:[%s224 + $0xb1] sm:$0xff]
        %v736 = vld [vmem:[%s224 + $0xc1] sm:$0xff]
        %v737 = vld [vmem:[%s224 + $0xc9] sm:$0xff]
        %v738 = vld [vmem:[%s224 + $0xd9] sm:$0xff]
        %v739 = vld [vmem:[%s224 + $0xe1] sm:$0xff]
        %v740 = vld [vmem:[%s224 + $0xf1] sm:$0xff]
        %v741 = vld [vmem:[%s224 + $0xf9] sm:$0xff]
        %v742 = vld [vmem:[%s224 + $0x109] sm:$0xff]
        %v743 = vld [vmem:[%s224 + $0x111] sm:$0xff]
        %v744 = vld [vmem:[%s224 + $0x121] sm:$0xff]
        %v745 = vld [vmem:[%s224 + $0x129] sm:$0xff]
        %v746 = vld [vmem:[%s224 + $0x139] sm:$0xff]
        %v747 = vld [vmem:[%s224 + $0x141] sm:$0xff]
        %v748 = vld [vmem:[%s224 + $0x151] sm:$0xff]
        %v749 = vld [vmem:[%s224 + $0x159] sm:$0xff]
        %v750 = vld [vmem:[%s224 + $0x169] sm:$0xff]
        %v751 = vld [vmem:[%s224 + $0x171] sm:$0xff]
        %s752 = scalar_lea.vmem %s1, 4
        %v753 = vld [vmem:[%s752] sm:$0xf]
        %v754 = vld [vmem:[#allocation3] sm:$0xff]
        %v755 = vld [vmem:[#allocation3 + $0x8] sm:$0xff]
        %v756 = vld [vmem:[#allocation3 + $0x10] sm:$0xff]
        %v757 = vld [vmem:[#allocation3 + $0x18] sm:$0xff]
        %v758 = vld [vmem:[#allocation3 + $0x20] sm:$0xff]
        %v759 = vld [vmem:[#allocation3 + $0x28] sm:$0xff]
        %v760 = vld [vmem:[#allocation3 + $0x30] sm:$0xff]
        %v761 = vld [vmem:[#allocation3 + $0x38] sm:$0xff]
        %v762 = vld [vmem:[#allocation3 + $0x40] sm:$0xff]
        %v763 = vld [vmem:[#allocation3 + $0x48] sm:$0xff]
        %v764 = vld [vmem:[#allocation3 + $0x50] sm:$0xff]
        %v765 = vld [vmem:[#allocation3 + $0x58] sm:$0xff]
        %v766 = vld [vmem:[#allocation3 + $0x60] sm:$0xff]
        %v767 = vld [vmem:[#allocation3 + $0x68] sm:$0xff]
        %v768 = vld [vmem:[#allocation3 + $0x70] sm:$0xff]
        %v769 = vld [vmem:[#allocation3 + $0x78] sm:$0xff]
        %v770 = vld [vmem:[#allocation3 + $0x80] sm:$0xff]
        %v771 = vld [vmem:[#allocation3 + $0x88] sm:$0xff]
        %v772 = vld [vmem:[#allocation3 + $0x90] sm:$0xff]
        %v773 = vld [vmem:[#allocation3 + $0x98] sm:$0xff]
        %v774 = vld [vmem:[#allocation3 + $0xa0] sm:$0xff]
        %v775 = vld [vmem:[#allocation3 + $0xa8] sm:$0xff]
        %v776 = vld [vmem:[#allocation3 + $0xb0] sm:$0xff]
        %v777 = vld [vmem:[#allocation3 + $0xb8] sm:$0xff]
        %v778 = vld [vmem:[#allocation3 + $0xc0] sm:$0xff]
        %v779 = vld [vmem:[#allocation3 + $0xc8] sm:$0xff]
        %v780 = vld [vmem:[#allocation3 + $0xd0] sm:$0xff]
        %v781 = vld [vmem:[#allocation3 + $0xd8] sm:$0xff]
        %v782 = vld [vmem:[#allocation3 + $0xe0] sm:$0xff]
        %v783 = vld [vmem:[#allocation3 + $0xe8] sm:$0xff]
        %v784 = vld [vmem:[#allocation3 + $0xf0] sm:$0xff]
        %v785 = vld [vmem:[#allocation3 + $0xf8] sm:$0xff]
        %v787 = vsel %vm330, %v720, 0
        %v790 = vsel %vm330, %v721, 0
        %v793 = vsel %vm330, %v722, 0
        %v796 = vsel %vm330, %v723, 0
        %v799 = vsel %vm330, %v724, 0
        %v802 = vsel %vm330, %v725, 0
        %v805 = vsel %vm330, %v726, 0
        %v808 = vsel %vm330, %v727, 0
        %v811 = vsel %vm330, %v728, 0
        %v814 = vsel %vm330, %v729, 0
        %v817 = vsel %vm330, %v730, 0
        %v820 = vsel %vm330, %v731, 0
        %v823 = vsel %vm330, %v732, 0
        %v826 = vsel %vm330, %v733, 0
        %v829 = vsel %vm330, %v734, 0
        %v832 = vsel %vm330, %v735, 0
        %v835 = vsel %vm330, %v736, 0
        %v838 = vsel %vm330, %v737, 0
        %v841 = vsel %vm330, %v738, 0
        %v844 = vsel %vm330, %v739, 0
        %v847 = vsel %vm330, %v740, 0
        %v850 = vsel %vm330, %v741, 0
        %v853 = vsel %vm330, %v742, 0
        %v856 = vsel %vm330, %v743, 0
        %v859 = vsel %vm330, %v744, 0
        %v862 = vsel %vm330, %v745, 0
        %v865 = vsel %vm330, %v746, 0
        %v868 = vsel %vm330, %v747, 0
        %v871 = vsel %vm330, %v748, 0
        %v874 = vsel %vm330, %v749, 0
        %v877 = vsel %vm330, %v750, 0
        %v880 = vsel %vm330, %v751, 0
        %v883 = vsel %vm427, %v753, 0
        %885 = vmatprep.subr.mxu0 0.0
        %886 = vmatpush1.msra.mxu0 0.0
        %887 = vmatprep.subr.mxu0 0.0
        %888 = vmatpush1.msra.mxu0 0.0
        %889 = vmatprep.subr.mxu0 0.0
        %890 = vmatpush1.msra.mxu0 0.0
        %891 = vmatprep.subr.mxu0 0.0
        %892 = vmatpush1.msra.mxu0 0.0
        %893 = vmatprep.subr.mxu0 0.0
        %894 = vmatpush1.msra.mxu0 0.0
        %895 = vmatprep.subr.mxu0 0.0
        %896 = vmatpush1.msra.mxu0 0.0
        %897 = vmatprep.subr.mxu0 0.0
        %898 = vmatpush1.msra.mxu0 0.0
        %899 = vmatprep.subr.mxu0 0.0
        %900 = vmatpush1.msra.mxu0 0.0
        %901 = vmatprep.subr.mxu0 0.0
        %902 = vmatpush1.msra.mxu0 0.0
        %903 = vmatprep.subr.mxu0 0.0
        %904 = vmatpush1.msra.mxu0 0.0
        %905 = vmatprep.subr.mxu0 0.0
        %906 = vmatpush1.msra.mxu0 0.0
        %907 = vmatprep.subr.mxu0 0.0
        %908 = vmatpush1.msra.mxu0 0.0
        %909 = vmatprep.subr.mxu0 0.0
        %910 = vmatpush1.msra.mxu0 0.0
        %911 = vmatprep.subr.mxu0 0.0
        %912 = vmatpush1.msra.mxu0 0.0
        %913 = vmatprep.subr.mxu0 0.0
        %914 = vmatpush1.msra.mxu0 0.0
        %915 = vmatprep.subr.mxu0 0.0
        %916 = vmatpush1.msra.mxu0 %v883
        %917 = vmatprep.subr.mxu0 0.0
        %918 = vmatpush2.msra.mxu0 0.0
        %919 = vmatprep.subr.mxu0 0.0
        %920 = vmatpush2.msra.mxu0 0.0
        %921 = vmatprep.subr.mxu0 0.0
        %922 = vmatpush2.msra.mxu0 0.0
        %923 = vmatprep.subr.mxu0 0.0
        %924 = vmatpush2.msra.mxu0 0.0
        %925 = vmatprep.subr.mxu0 0.0
        %926 = vmatpush2.msra.mxu0 0.0
        %927 = vmatprep.subr.mxu0 0.0
        %928 = vmatpush2.msra.mxu0 0.0
        %929 = vmatprep.subr.mxu0 0.0
        %930 = vmatpush2.msra.mxu0 0.0
        %931 = vmatprep.subr.mxu0 0.0
        %932 = vmatpush2.msra.mxu0 0.0
        %933 = vmatprep.subr.mxu0 0.0
        %934 = vmatpush2.msra.mxu0 0.0
        %935 = vmatprep.subr.mxu0 0.0
        %936 = vmatpush2.msra.mxu0 0.0
        %937 = vmatprep.subr.mxu0 0.0
        %938 = vmatpush2.msra.mxu0 0.0
        %939 = vmatprep.subr.mxu0 0.0
        %940 = vmatpush2.msra.mxu0 0.0
        %941 = vmatprep.subr.mxu0 0.0
        %942 = vmatpush2.msra.mxu0 0.0
        %943 = vmatprep.subr.mxu0 0.0
        %944 = vmatpush2.msra.mxu0 0.0
        %945 = vmatprep.subr.mxu0 0.0
        %946 = vmatpush2.msra.mxu0 0.0
        %947 = vmatprep.subr.mxu0 0.0
        %948 = vmatpush2.msra.mxu0 0.0
        %949 = vmatprep.mubr.f32.mxu0 0.0
        %950 = vmatmul.mubr.f32.gmra.mxu0 %v787
        %v951 = vpop.f32.mrf.mxu0
        %v952 = vadd.f32 0.0, %v951
        %v953 = vpop.f32.mrf.mxu0
        %954 = vmatprep.mubr.f32.mxu0 0.0
        %955 = vmatmul.mubr.f32.gmra.mxu0 %v790
        %v956 = vpop.f32.mrf.mxu0
        %v957 = vadd.f32 0.0, %v956
        %v958 = vpop.f32.mrf.mxu0
        %959 = vmatprep.mubr.f32.mxu0 0.0
        %960 = vmatmul.mubr.f32.gmra.mxu0 %v793
        %v961 = vpop.f32.mrf.mxu0
        %v962 = vadd.f32 0.0, %v961
        %v963 = vpop.f32.mrf.mxu0
        %964 = vmatprep.mubr.f32.mxu0 0.0
        %965 = vmatmul.mubr.f32.gmra.mxu0 %v796
        %v966 = vpop.f32.mrf.mxu0
        %v967 = vadd.f32 0.0, %v966
        %v968 = vpop.f32.mrf.mxu0
        %969 = vmatprep.mubr.f32.mxu0 0.0
        %970 = vmatmul.mubr.f32.gmra.mxu0 %v799
        %v971 = vpop.f32.mrf.mxu0
        %v972 = vadd.f32 0.0, %v971
        %v973 = vpop.f32.mrf.mxu0
        %974 = vmatprep.mubr.f32.mxu0 0.0
        %975 = vmatmul.mubr.f32.gmra.mxu0 %v802
        %v976 = vpop.f32.mrf.mxu0
        %v977 = vadd.f32 0.0, %v976
        %v978 = vpop.f32.mrf.mxu0
        %979 = vmatprep.mubr.f32.mxu0 0.0
        %980 = vmatmul.mubr.f32.gmra.mxu0 %v805
        %v981 = vpop.f32.mrf.mxu0
        %v982 = vadd.f32 0.0, %v981
        %v983 = vpop.f32.mrf.mxu0
        %984 = vmatprep.mubr.f32.mxu0 0.0
        %985 = vmatmul.mubr.f32.gmra.mxu0 %v808
        %v986 = vpop.f32.mrf.mxu0
        %v987 = vadd.f32 0.0, %v986
        %v988 = vpop.f32.mrf.mxu0
        %989 = vmatprep.mubr.f32.mxu0 0.0
        %990 = vmatmul.mubr.f32.gmra.mxu0 %v811
        %v991 = vpop.f32.mrf.mxu0
        %v992 = vadd.f32 0.0, %v991
        %v993 = vpop.f32.mrf.mxu0
        %994 = vmatprep.mubr.f32.mxu0 0.0
        %995 = vmatmul.mubr.f32.gmra.mxu0 %v814
        %v996 = vpop.f32.mrf.mxu0
        %v997 = vadd.f32 0.0, %v996
        %v998 = vpop.f32.mrf.mxu0
        %999 = vmatprep.mubr.f32.mxu0 0.0
        %1000 = vmatmul.mubr.f32.gmra.mxu0 %v817
        %v1001 = vpop.f32.mrf.mxu0
        %v1002 = vadd.f32 0.0, %v1001
        %v1003 = vpop.f32.mrf.mxu0
        %1004 = vmatprep.mubr.f32.mxu0 0.0
        %1005 = vmatmul.mubr.f32.gmra.mxu0 %v820
        %v1006 = vpop.f32.mrf.mxu0
        %v1007 = vadd.f32 0.0, %v1006
        %v1008 = vpop.f32.mrf.mxu0
        %1009 = vmatprep.mubr.f32.mxu0 0.0
        %1010 = vmatmul.mubr.f32.gmra.mxu0 %v823
        %v1011 = vpop.f32.mrf.mxu0
        %v1012 = vadd.f32 0.0, %v1011
        %v1013 = vpop.f32.mrf.mxu0
        %1014 = vmatprep.mubr.f32.mxu0 0.0
        %1015 = vmatmul.mubr.f32.gmra.mxu0 %v826
        %v1016 = vpop.f32.mrf.mxu0
        %v1017 = vadd.f32 0.0, %v1016
        %v1018 = vpop.f32.mrf.mxu0
        %1019 = vmatprep.mubr.f32.mxu0 0.0
        %1020 = vmatmul.mubr.f32.gmra.mxu0 %v829
        %v1021 = vpop.f32.mrf.mxu0
        %v1022 = vadd.f32 0.0, %v1021
        %v1023 = vpop.f32.mrf.mxu0
        %1024 = vmatprep.mubr.f32.mxu0 0.0
        %1025 = vmatmul.mubr.f32.gmra.mxu0 %v832
        %v1026 = vpop.f32.mrf.mxu0
        %v1027 = vadd.f32 0.0, %v1026
        %v1028 = vpop.f32.mrf.mxu0
        %1029 = vmatprep.mubr.f32.mxu0 0.0
        %1030 = vmatmul.mubr.f32.gmra.mxu0 %v835
        %v1031 = vpop.f32.mrf.mxu0
        %v1032 = vadd.f32 0.0, %v1031
        %v1033 = vpop.f32.mrf.mxu0
        %1034 = vmatprep.mubr.f32.mxu0 0.0
        %1035 = vmatmul.mubr.f32.gmra.mxu0 %v838
        %v1036 = vpop.f32.mrf.mxu0
        %v1037 = vadd.f32 0.0, %v1036
        %v1038 = vpop.f32.mrf.mxu0
        %1039 = vmatprep.mubr.f32.mxu0 0.0
        %1040 = vmatmul.mubr.f32.gmra.mxu0 %v841
        %v1041 = vpop.f32.mrf.mxu0
        %v1042 = vadd.f32 0.0, %v1041
        %v1043 = vpop.f32.mrf.mxu0
        %1044 = vmatprep.mubr.f32.mxu0 0.0
        %1045 = vmatmul.mubr.f32.gmra.mxu0 %v844
        %v1046 = vpop.f32.mrf.mxu0
        %v1047 = vadd.f32 0.0, %v1046
        %v1048 = vpop.f32.mrf.mxu0
        %1049 = vmatprep.mubr.f32.mxu0 0.0
        %1050 = vmatmul.mubr.f32.gmra.mxu0 %v847
        %v1051 = vpop.f32.mrf.mxu0
        %v1052 = vadd.f32 0.0, %v1051
        %v1053 = vpop.f32.mrf.mxu0
        %1054 = vmatprep.mubr.f32.mxu0 0.0
        %1055 = vmatmul.mubr.f32.gmra.mxu0 %v850
        %v1056 = vpop.f32.mrf.mxu0
        %v1057 = vadd.f32 0.0, %v1056
        %v1058 = vpop.f32.mrf.mxu0
        %1059 = vmatprep.mubr.f32.mxu0 0.0
        %1060 = vmatmul.mubr.f32.gmra.mxu0 %v853
        %v1061 = vpop.f32.mrf.mxu0
        %v1062 = vadd.f32 0.0, %v1061
        %v1063 = vpop.f32.mrf.mxu0
        %1064 = vmatprep.mubr.f32.mxu0 0.0
        %1065 = vmatmul.mubr.f32.gmra.mxu0 %v856
        %v1066 = vpop.f32.mrf.mxu0
        %v1067 = vadd.f32 0.0, %v1066
        %v1068 = vpop.f32.mrf.mxu0
        %1069 = vmatprep.mubr.f32.mxu0 0.0
        %1070 = vmatmul.mubr.f32.gmra.mxu0 %v859
        %v1071 = vpop.f32.mrf.mxu0
        %v1072 = vadd.f32 0.0, %v1071
        %v1073 = vpop.f32.mrf.mxu0
        %1074 = vmatprep.mubr.f32.mxu0 0.0
        %1075 = vmatmul.mubr.f32.gmra.mxu0 %v862
        %v1076 = vpop.f32.mrf.mxu0
        %v1077 = vadd.f32 0.0, %v1076
        %v1078 = vpop.f32.mrf.mxu0
        %1079 = vmatprep.mubr.f32.mxu0 0.0
        %1080 = vmatmul.mubr.f32.gmra.mxu0 %v865
        %v1081 = vpop.f32.mrf.mxu0
        %v1082 = vadd.f32 0.0, %v1081
        %v1083 = vpop.f32.mrf.mxu0
        %1084 = vmatprep.mubr.f32.mxu0 0.0
        %1085 = vmatmul.mubr.f32.gmra.mxu0 %v868
        %v1086 = vpop.f32.mrf.mxu0
        %v1087 = vadd.f32 0.0, %v1086
        %v1088 = vpop.f32.mrf.mxu0
        %1089 = vmatprep.mubr.f32.mxu0 0.0
        %1090 = vmatmul.mubr.f32.gmra.mxu0 %v871
        %v1091 = vpop.f32.mrf.mxu0
        %v1092 = vadd.f32 0.0, %v1091
        %v1093 = vpop.f32.mrf.mxu0
        %1094 = vmatprep.mubr.f32.mxu0 0.0
        %1095 = vmatmul.mubr.f32.gmra.mxu0 %v874
        %v1096 = vpop.f32.mrf.mxu0
        %v1097 = vadd.f32 0.0, %v1096
        %v1098 = vpop.f32.mrf.mxu0
        %1099 = vmatprep.mubr.f32.mxu0 0.0
        %1100 = vmatmul.mubr.f32.gmra.mxu0 %v877
        %v1101 = vpop.f32.mrf.mxu0
        %v1102 = vadd.f32 0.0, %v1101
        %v1103 = vpop.f32.mrf.mxu0
        %1104 = vmatprep.mubr.f32.mxu0 0.0
        %1105 = vmatmul.mubr.f32.gmra.mxu0 %v880
        %v1106 = vpop.f32.mrf.mxu0
        %v1107 = vadd.f32 0.0, %v1106
        %v1108 = vpop.f32.mrf.mxu0
        %1109 = vdwg.mxu0
        %v1110 = vadd.f32 %v754, %v952
        %v1111 = vadd.f32 %v755, %v957
        %v1112 = vadd.f32 %v756, %v962
        %v1113 = vadd.f32 %v757, %v967
        %v1114 = vadd.f32 %v758, %v972
        %v1115 = vadd.f32 %v759, %v977
        %v1116 = vadd.f32 %v760, %v982
        %v1117 = vadd.f32 %v761, %v987
        %v1118 = vadd.f32 %v762, %v992
        %v1119 = vadd.f32 %v763, %v997
        %v1120 = vadd.f32 %v764, %v1002
        %v1121 = vadd.f32 %v765, %v1007
        %v1122 = vadd.f32 %v766, %v1012
        %v1123 = vadd.f32 %v767, %v1017
        %v1124 = vadd.f32 %v768, %v1022
        %v1125 = vadd.f32 %v769, %v1027
        %v1126 = vadd.f32 %v770, %v1032
        %v1127 = vadd.f32 %v771, %v1037
        %v1128 = vadd.f32 %v772, %v1042
        %v1129 = vadd.f32 %v773, %v1047
        %v1130 = vadd.f32 %v774, %v1052
        %v1131 = vadd.f32 %v775, %v1057
        %v1132 = vadd.f32 %v776, %v1062
        %v1133 = vadd.f32 %v777, %v1067
        %v1134 = vadd.f32 %v778, %v1072
        %v1135 = vadd.f32 %v779, %v1077
        %v1136 = vadd.f32 %v780, %v1082
        %v1137 = vadd.f32 %v781, %v1087
        %v1138 = vadd.f32 %v782, %v1092
        %v1139 = vadd.f32 %v783, %v1097
        %v1140 = vadd.f32 %v784, %v1102
        %v1141 = vadd.f32 %v785, %v1107
        %1142 = vst.msk [vmem:[#allocation3] sm:$0xff] %vm232, %v1110
        %1143 = vst.msk [vmem:[#allocation3 + $0x8] sm:$0xff] %vm232, %v1111
        %1144 = vst.msk [vmem:[#allocation3 + $0x10] sm:$0xff] %vm232, %v1112
        %1145 = vst.msk [vmem:[#allocation3 + $0x18] sm:$0xff] %vm232, %v1113
        %1146 = vst.msk [vmem:[#allocation3 + $0x20] sm:$0xff] %vm232, %v1114
        %1147 = vst.msk [vmem:[#allocation3 + $0x28] sm:$0xff] %vm232, %v1115
        %1148 = vst.msk [vmem:[#allocation3 + $0x30] sm:$0xff] %vm232, %v1116
        %1149 = vst.msk [vmem:[#allocation3 + $0x38] sm:$0xff] %vm232, %v1117
        %1150 = vst.msk [vmem:[#allocation3 + $0x40] sm:$0xff] %vm232, %v1118
        %1151 = vst.msk [vmem:[#allocation3 + $0x48] sm:$0xff] %vm232, %v1119
        %1152 = vst.msk [vmem:[#allocation3 + $0x50] sm:$0xff] %vm232, %v1120
        %1153 = vst.msk [vmem:[#allocation3 + $0x58] sm:$0xff] %vm232, %v1121
        %1154 = vst.msk [vmem:[#allocation3 + $0x60] sm:$0xff] %vm232, %v1122
        %1155 = vst.msk [vmem:[#allocation3 + $0x68] sm:$0xff] %vm232, %v1123
        %1156 = vst.msk [vmem:[#allocation3 + $0x70] sm:$0xff] %vm232, %v1124
        %1157 = vst.msk [vmem:[#allocation3 + $0x78] sm:$0xff] %vm232, %v1125
        %1158 = vst.msk [vmem:[#allocation3 + $0x80] sm:$0xff] %vm232, %v1126
        %1159 = vst.msk [vmem:[#allocation3 + $0x88] sm:$0xff] %vm232, %v1127
        %1160 = vst.msk [vmem:[#allocation3 + $0x90] sm:$0xff] %vm232, %v1128
        %1161 = vst.msk [vmem:[#allocation3 + $0x98] sm:$0xff] %vm232, %v1129
        %1162 = vst.msk [vmem:[#allocation3 + $0xa0] sm:$0xff] %vm232, %v1130
        %1163 = vst.msk [vmem:[#allocation3 + $0xa8] sm:$0xff] %vm232, %v1131
        %1164 = vst.msk [vmem:[#allocation3 + $0xb0] sm:$0xff] %vm232, %v1132
        %1165 = vst.msk [vmem:[#allocation3 + $0xb8] sm:$0xff] %vm232, %v1133
        %1166 = vst.msk [vmem:[#allocation3 + $0xc0] sm:$0xff] %vm232, %v1134
        %1167 = vst.msk [vmem:[#allocation3 + $0xc8] sm:$0xff] %vm232, %v1135
        %1168 = vst.msk [vmem:[#allocation3 + $0xd0] sm:$0xff] %vm232, %v1136
        %1169 = vst.msk [vmem:[#allocation3 + $0xd8] sm:$0xff] %vm232, %v1137
        %1170 = vst.msk [vmem:[#allocation3 + $0xe0] sm:$0xff] %vm232, %v1138
        %1171 = vst.msk [vmem:[#allocation3 + $0xe8] sm:$0xff] %vm232, %v1139
        %1172 = vst.msk [vmem:[#allocation3 + $0xf0] sm:$0xff] %vm232, %v1140
        %1173 = vst.msk [vmem:[#allocation3 + $0xf8] sm:$0xff] %vm232, %v1141
        %v1174 = vld [vmem:[%s224 + $0x2] sm:$0xff]
        %v1175 = vld [vmem:[%s224 + $0xa] sm:$0xff]
        %v1176 = vld [vmem:[%s224 + $0x1a] sm:$0xff]
        %v1177 = vld [vmem:[%s224 + $0x22] sm:$0xff]
        %v1178 = vld [vmem:[%s224 + $0x32] sm:$0xff]
        %v1179 = vld [vmem:[%s224 + $0x3a] sm:$0xff]
        %v1180 = vld [vmem:[%s224 + $0x4a] sm:$0xff]
        %v1181 = vld [vmem:[%s224 + $0x52] sm:$0xff]
        %v1182 = vld [vmem:[%s224 + $0x62] sm:$0xff]
        %v1183 = vld [vmem:[%s224 + $0x6a] sm:$0xff]
        %v1184 = vld [vmem:[%s224 + $0x7a] sm:$0xff]
        %v1185 = vld [vmem:[%s224 + $0x82] sm:$0xff]
        %v1186 = vld [vmem:[%s224 + $0x92] sm:$0xff]
        %v1187 = vld [vmem:[%s224 + $0x9a] sm:$0xff]
        %v1188 = vld [vmem:[%s224 + $0xaa] sm:$0xff]
        %v1189 = vld [vmem:[%s224 + $0xb2] sm:$0xff]
        %v1190 = vld [vmem:[%s224 + $0xc2] sm:$0xff]
        %v1191 = vld [vmem:[%s224 + $0xca] sm:$0xff]
        %v1192 = vld [vmem:[%s224 + $0xda] sm:$0xff]
        %v1193 = vld [vmem:[%s224 + $0xe2] sm:$0xff]
        %v1194 = vld [vmem:[%s224 + $0xf2] sm:$0xff]
        %v1195 = vld [vmem:[%s224 + $0xfa] sm:$0xff]
        %v1196 = vld [vmem:[%s224 + $0x10a] sm:$0xff]
        %v1197 = vld [vmem:[%s224 + $0x112] sm:$0xff]
        %v1198 = vld [vmem:[%s224 + $0x122] sm:$0xff]
        %v1199 = vld [vmem:[%s224 + $0x12a] sm:$0xff]
        %v1200 = vld [vmem:[%s224 + $0x13a] sm:$0xff]
        %v1201 = vld [vmem:[%s224 + $0x142] sm:$0xff]
        %v1202 = vld [vmem:[%s224 + $0x152] sm:$0xff]
        %v1203 = vld [vmem:[%s224 + $0x15a] sm:$0xff]
        %v1204 = vld [vmem:[%s224 + $0x16a] sm:$0xff]
        %v1205 = vld [vmem:[%s224 + $0x172] sm:$0xff]
        %s1206 = scalar_lea.vmem %s1, 8
        %v1207 = vld [vmem:[%s1206] sm:$0xf]
        %v1208 = vld [vmem:[#allocation3] sm:$0xff]
        %v1209 = vld [vmem:[#allocation3 + $0x8] sm:$0xff]
        %v1210 = vld [vmem:[#allocation3 + $0x10] sm:$0xff]
        %v1211 = vld [vmem:[#allocation3 + $0x18] sm:$0xff]
        %v1212 = vld [vmem:[#allocation3 + $0x20] sm:$0xff]
        %v1213 = vld [vmem:[#allocation3 + $0x28] sm:$0xff]
        %v1214 = vld [vmem:[#allocation3 + $0x30] sm:$0xff]
        %v1215 = vld [vmem:[#allocation3 + $0x38] sm:$0xff]
        %v1216 = vld [vmem:[#allocation3 + $0x40] sm:$0xff]
        %v1217 = vld [vmem:[#allocation3 + $0x48] sm:$0xff]
        %v1218 = vld [vmem:[#allocation3 + $0x50] sm:$0xff]
        %v1219 = vld [vmem:[#allocation3 + $0x58] sm:$0xff]
        %v1220 = vld [vmem:[#allocation3 + $0x60] sm:$0xff]
        %v1221 = vld [vmem:[#allocation3 + $0x68] sm:$0xff]
        %v1222 = vld [vmem:[#allocation3 + $0x70] sm:$0xff]
        %v1223 = vld [vmem:[#allocation3 + $0x78] sm:$0xff]
        %v1224 = vld [vmem:[#allocation3 + $0x80] sm:$0xff]
        %v1225 = vld [vmem:[#allocation3 + $0x88] sm:$0xff]
        %v1226 = vld [vmem:[#allocation3 + $0x90] sm:$0xff]
        %v1227 = vld [vmem:[#allocation3 + $0x98] sm:$0xff]
        %v1228 = vld [vmem:[#allocation3 + $0xa0] sm:$0xff]
        %v1229 = vld [vmem:[#allocation3 + $0xa8] sm:$0xff]
        %v1230 = vld [vmem:[#allocation3 + $0xb0] sm:$0xff]
        %v1231 = vld [vmem:[#allocation3 + $0xb8] sm:$0xff]
        %v1232 = vld [vmem:[#allocation3 + $0xc0] sm:$0xff]
        %v1233 = vld [vmem:[#allocation3 + $0xc8] sm:$0xff]
        %v1234 = vld [vmem:[#allocation3 + $0xd0] sm:$0xff]
        %v1235 = vld [vmem:[#allocation3 + $0xd8] sm:$0xff]
        %v1236 = vld [vmem:[#allocation3 + $0xe0] sm:$0xff]
        %v1237 = vld [vmem:[#allocation3 + $0xe8] sm:$0xff]
        %v1238 = vld [vmem:[#allocation3 + $0xf0] sm:$0xff]
        %v1239 = vld [vmem:[#allocation3 + $0xf8] sm:$0xff]
        %v1241 = vsel %vm330, %v1174, 0
        %v1244 = vsel %vm330, %v1175, 0
        %v1247 = vsel %vm330, %v1176, 0
        %v1250 = vsel %vm330, %v1177, 0
        %v1253 = vsel %vm330, %v1178, 0
        %v1256 = vsel %vm330, %v1179, 0
        %v1259 = vsel %vm330, %v1180, 0
        %v1262 = vsel %vm330, %v1181, 0
        %v1265 = vsel %vm330, %v1182, 0
        %v1268 = vsel %vm330, %v1183, 0
        %v1271 = vsel %vm330, %v1184, 0
        %v1274 = vsel %vm330, %v1185, 0
        %v1277 = vsel %vm330, %v1186, 0
        %v1280 = vsel %vm330, %v1187, 0
        %v1283 = vsel %vm330, %v1188, 0
        %v1286 = vsel %vm330, %v1189, 0
        %v1289 = vsel %vm330, %v1190, 0
        %v1292 = vsel %vm330, %v1191, 0
        %v1295 = vsel %vm330, %v1192, 0
        %v1298 = vsel %vm330, %v1193, 0
        %v1301 = vsel %vm330, %v1194, 0
        %v1304 = vsel %vm330, %v1195, 0
        %v1307 = vsel %vm330, %v1196, 0
        %v1310 = vsel %vm330, %v1197, 0
        %v1313 = vsel %vm330, %v1198, 0
        %v1316 = vsel %vm330, %v1199, 0
        %v1319 = vsel %vm330, %v1200, 0
        %v1322 = vsel %vm330, %v1201, 0
        %v1325 = vsel %vm330, %v1202, 0
        %v1328 = vsel %vm330, %v1203, 0
        %v1331 = vsel %vm330, %v1204, 0
        %v1334 = vsel %vm330, %v1205, 0
        %v1337 = vsel %vm427, %v1207, 0
        %1339 = vmatprep.subr.mxu0 0.0
        %1340 = vmatpush1.msra.mxu0 0.0
        %1341 = vmatprep.subr.mxu0 0.0
        %1342 = vmatpush1.msra.mxu0 0.0
        %1343 = vmatprep.subr.mxu0 0.0
        %1344 = vmatpush1.msra.mxu0 0.0
        %1345 = vmatprep.subr.mxu0 0.0
        %1346 = vmatpush1.msra.mxu0 0.0
        %1347 = vmatprep.subr.mxu0 0.0
        %1348 = vmatpush1.msra.mxu0 0.0
        %1349 = vmatprep.subr.mxu0 0.0
        %1350 = vmatpush1.msra.mxu0 0.0
        %1351 = vmatprep.subr.mxu0 0.0
        %1352 = vmatpush1.msra.mxu0 0.0
        %1353 = vmatprep.subr.mxu0 0.0
        %1354 = vmatpush1.msra.mxu0 0.0
        %1355 = vmatprep.subr.mxu0 0.0
        %1356 = vmatpush1.msra.mxu0 0.0
        %1357 = vmatprep.subr.mxu0 0.0
        %1358 = vmatpush1.msra.mxu0 0.0
        %1359 = vmatprep.subr.mxu0 0.0
        %1360 = vmatpush1.msra.mxu0 0.0
        %1361 = vmatprep.subr.mxu0 0.0
        %1362 = vmatpush1.msra.mxu0 0.0
        %1363 = vmatprep.subr.mxu0 0.0
        %1364 = vmatpush1.msra.mxu0 0.0
        %1365 = vmatprep.subr.mxu0 0.0
        %1366 = vmatpush1.msra.mxu0 0.0
        %1367 = vmatprep.subr.mxu0 0.0
        %1368 = vmatpush1.msra.mxu0 0.0
        %1369 = vmatprep.subr.mxu0 0.0
        %1370 = vmatpush1.msra.mxu0 %v1337
        %1371 = vmatprep.subr.mxu0 0.0
        %1372 = vmatpush2.msra.mxu0 0.0
        %1373 = vmatprep.subr.mxu0 0.0
        %1374 = vmatpush2.msra.mxu0 0.0
        %1375 = vmatprep.subr.mxu0 0.0
        %1376 = vmatpush2.msra.mxu0 0.0
        %1377 = vmatprep.subr.mxu0 0.0
        %1378 = vmatpush2.msra.mxu0 0.0
        %1379 = vmatprep.subr.mxu0 0.0
        %1380 = vmatpush2.msra.mxu0 0.0
        %1381 = vmatprep.subr.mxu0 0.0
        %1382 = vmatpush2.msra.mxu0 0.0
        %1383 = vmatprep.subr.mxu0 0.0
        %1384 = vmatpush2.msra.mxu0 0.0
        %1385 = vmatprep.subr.mxu0 0.0
        %1386 = vmatpush2.msra.mxu0 0.0
        %1387 = vmatprep.subr.mxu0 0.0
        %1388 = vmatpush2.msra.mxu0 0.0
        %1389 = vmatprep.subr.mxu0 0.0
        %1390 = vmatpush2.msra.mxu0 0.0
        %1391 = vmatprep.subr.mxu0 0.0
        %1392 = vmatpush2.msra.mxu0 0.0
        %1393 = vmatprep.subr.mxu0 0.0
        %1394 = vmatpush2.msra.mxu0 0.0
        %1395 = vmatprep.subr.mxu0 0.0
        %1396 = vmatpush2.msra.mxu0 0.0
        %1397 = vmatprep.subr.mxu0 0.0
        %1398 = vmatpush2.msra.mxu0 0.0
        %1399 = vmatprep.subr.mxu0 0.0
        %1400 = vmatpush2.msra.mxu0 0.0
        %1401 = vmatprep.subr.mxu0 0.0
        %1402 = vmatpush2.msra.mxu0 0.0
        %1403 = vmatprep.mubr.f32.mxu0 0.0
        %1404 = vmatmul.mubr.f32.gmra.mxu0 %v1241
        %v1405 = vpop.f32.mrf.mxu0
        %v1406 = vadd.f32 0.0, %v1405
        %v1407 = vpop.f32.mrf.mxu0
        %1408 = vmatprep.mubr.f32.mxu0 0.0
        %1409 = vmatmul.mubr.f32.gmra.mxu0 %v1244
        %v1410 = vpop.f32.mrf.mxu0
        %v1411 = vadd.f32 0.0, %v1410
        %v1412 = vpop.f32.mrf.mxu0
        %1413 = vmatprep.mubr.f32.mxu0 0.0
        %1414 = vmatmul.mubr.f32.gmra.mxu0 %v1247
        %v1415 = vpop.f32.mrf.mxu0
        %v1416 = vadd.f32 0.0, %v1415
        %v1417 = vpop.f32.mrf.mxu0
        %1418 = vmatprep.mubr.f32.mxu0 0.0
        %1419 = vmatmul.mubr.f32.gmra.mxu0 %v1250
        %v1420 = vpop.f32.mrf.mxu0
        %v1421 = vadd.f32 0.0, %v1420
        %v1422 = vpop.f32.mrf.mxu0
        %1423 = vmatprep.mubr.f32.mxu0 0.0
        %1424 = vmatmul.mubr.f32.gmra.mxu0 %v1253
        %v1425 = vpop.f32.mrf.mxu0
        %v1426 = vadd.f32 0.0, %v1425
        %v1427 = vpop.f32.mrf.mxu0
        %1428 = vmatprep.mubr.f32.mxu0 0.0
        %1429 = vmatmul.mubr.f32.gmra.mxu0 %v1256
        %v1430 = vpop.f32.mrf.mxu0
        %v1431 = vadd.f32 0.0, %v1430
        %v1432 = vpop.f32.mrf.mxu0
        %1433 = vmatprep.mubr.f32.mxu0 0.0
        %1434 = vmatmul.mubr.f32.gmra.mxu0 %v1259
        %v1435 = vpop.f32.mrf.mxu0
        %v1436 = vadd.f32 0.0, %v1435
        %v1437 = vpop.f32.mrf.mxu0
        %1438 = vmatprep.mubr.f32.mxu0 0.0
        %1439 = vmatmul.mubr.f32.gmra.mxu0 %v1262
        %v1440 = vpop.f32.mrf.mxu0
        %v1441 = vadd.f32 0.0, %v1440
        %v1442 = vpop.f32.mrf.mxu0
        %1443 = vmatprep.mubr.f32.mxu0 0.0
        %1444 = vmatmul.mubr.f32.gmra.mxu0 %v1265
        %v1445 = vpop.f32.mrf.mxu0
        %v1446 = vadd.f32 0.0, %v1445
        %v1447 = vpop.f32.mrf.mxu0
        %1448 = vmatprep.mubr.f32.mxu0 0.0
        %1449 = vmatmul.mubr.f32.gmra.mxu0 %v1268
        %v1450 = vpop.f32.mrf.mxu0
        %v1451 = vadd.f32 0.0, %v1450
        %v1452 = vpop.f32.mrf.mxu0
        %1453 = vmatprep.mubr.f32.mxu0 0.0
        %1454 = vmatmul.mubr.f32.gmra.mxu0 %v1271
        %v1455 = vpop.f32.mrf.mxu0
        %v1456 = vadd.f32 0.0, %v1455
        %v1457 = vpop.f32.mrf.mxu0
        %1458 = vmatprep.mubr.f32.mxu0 0.0
        %1459 = vmatmul.mubr.f32.gmra.mxu0 %v1274
        %v1460 = vpop.f32.mrf.mxu0
        %v1461 = vadd.f32 0.0, %v1460
        %v1462 = vpop.f32.mrf.mxu0
        %1463 = vmatprep.mubr.f32.mxu0 0.0
        %1464 = vmatmul.mubr.f32.gmra.mxu0 %v1277
        %v1465 = vpop.f32.mrf.mxu0
        %v1466 = vadd.f32 0.0, %v1465
        %v1467 = vpop.f32.mrf.mxu0
        %1468 = vmatprep.mubr.f32.mxu0 0.0
        %1469 = vmatmul.mubr.f32.gmra.mxu0 %v1280
        %v1470 = vpop.f32.mrf.mxu0
        %v1471 = vadd.f32 0.0, %v1470
        %v1472 = vpop.f32.mrf.mxu0
        %1473 = vmatprep.mubr.f32.mxu0 0.0
        %1474 = vmatmul.mubr.f32.gmra.mxu0 %v1283
        %v1475 = vpop.f32.mrf.mxu0
        %v1476 = vadd.f32 0.0, %v1475
        %v1477 = vpop.f32.mrf.mxu0
        %1478 = vmatprep.mubr.f32.mxu0 0.0
        %1479 = vmatmul.mubr.f32.gmra.mxu0 %v1286
        %v1480 = vpop.f32.mrf.mxu0
        %v1481 = vadd.f32 0.0, %v1480
        %v1482 = vpop.f32.mrf.mxu0
        %1483 = vmatprep.mubr.f32.mxu0 0.0
        %1484 = vmatmul.mubr.f32.gmra.mxu0 %v1289
        %v1485 = vpop.f32.mrf.mxu0
        %v1486 = vadd.f32 0.0, %v1485
        %v1487 = vpop.f32.mrf.mxu0
        %1488 = vmatprep.mubr.f32.mxu0 0.0
        %1489 = vmatmul.mubr.f32.gmra.mxu0 %v1292
        %v1490 = vpop.f32.mrf.mxu0
        %v1491 = vadd.f32 0.0, %v1490
        %v1492 = vpop.f32.mrf.mxu0
        %1493 = vmatprep.mubr.f32.mxu0 0.0
        %1494 = vmatmul.mubr.f32.gmra.mxu0 %v1295
        %v1495 = vpop.f32.mrf.mxu0
        %v1496 = vadd.f32 0.0, %v1495
        %v1497 = vpop.f32.mrf.mxu0
        %1498 = vmatprep.mubr.f32.mxu0 0.0
        %1499 = vmatmul.mubr.f32.gmra.mxu0 %v1298
        %v1500 = vpop.f32.mrf.mxu0
        %v1501 = vadd.f32 0.0, %v1500
        %v1502 = vpop.f32.mrf.mxu0
        %1503 = vmatprep.mubr.f32.mxu0 0.0
        %1504 = vmatmul.mubr.f32.gmra.mxu0 %v1301
        %v1505 = vpop.f32.mrf.mxu0
        %v1506 = vadd.f32 0.0, %v1505
        %v1507 = vpop.f32.mrf.mxu0
        %1508 = vmatprep.mubr.f32.mxu0 0.0
        %1509 = vmatmul.mubr.f32.gmra.mxu0 %v1304
        %v1510 = vpop.f32.mrf.mxu0
        %v1511 = vadd.f32 0.0, %v1510
        %v1512 = vpop.f32.mrf.mxu0
        %1513 = vmatprep.mubr.f32.mxu0 0.0
        %1514 = vmatmul.mubr.f32.gmra.mxu0 %v1307
        %v1515 = vpop.f32.mrf.mxu0
        %v1516 = vadd.f32 0.0, %v1515
        %v1517 = vpop.f32.mrf.mxu0
        %1518 = vmatprep.mubr.f32.mxu0 0.0
        %1519 = vmatmul.mubr.f32.gmra.mxu0 %v1310
        %v1520 = vpop.f32.mrf.mxu0
        %v1521 = vadd.f32 0.0, %v1520
        %v1522 = vpop.f32.mrf.mxu0
        %1523 = vmatprep.mubr.f32.mxu0 0.0
        %1524 = vmatmul.mubr.f32.gmra.mxu0 %v1313
        %v1525 = vpop.f32.mrf.mxu0
        %v1526 = vadd.f32 0.0, %v1525
        %v1527 = vpop.f32.mrf.mxu0
        %1528 = vmatprep.mubr.f32.mxu0 0.0
        %1529 = vmatmul.mubr.f32.gmra.mxu0 %v1316
        %v1530 = vpop.f32.mrf.mxu0
        %v1531 = vadd.f32 0.0, %v1530
        %v1532 = vpop.f32.mrf.mxu0
        %1533 = vmatprep.mubr.f32.mxu0 0.0
        %1534 = vmatmul.mubr.f32.gmra.mxu0 %v1319
        %v1535 = vpop.f32.mrf.mxu0
        %v1536 = vadd.f32 0.0, %v1535
        %v1537 = vpop.f32.mrf.mxu0
        %1538 = vmatprep.mubr.f32.mxu0 0.0
        %1539 = vmatmul.mubr.f32.gmra.mxu0 %v1322
        %v1540 = vpop.f32.mrf.mxu0
        %v1541 = vadd.f32 0.0, %v1540
        %v1542 = vpop.f32.mrf.mxu0
        %1543 = vmatprep.mubr.f32.mxu0 0.0
        %1544 = vmatmul.mubr.f32.gmra.mxu0 %v1325
        %v1545 = vpop.f32.mrf.mxu0
        %v1546 = vadd.f32 0.0, %v1545
        %v1547 = vpop.f32.mrf.mxu0
        %1548 = vmatprep.mubr.f32.mxu0 0.0
        %1549 = vmatmul.mubr.f32.gmra.mxu0 %v1328
        %v1550 = vpop.f32.mrf.mxu0
        %v1551 = vadd.f32 0.0, %v1550
        %v1552 = vpop.f32.mrf.mxu0
        %1553 = vmatprep.mubr.f32.mxu0 0.0
        %1554 = vmatmul.mubr.f32.gmra.mxu0 %v1331
        %v1555 = vpop.f32.mrf.mxu0
        %v1556 = vadd.f32 0.0, %v1555
        %v1557 = vpop.f32.mrf.mxu0
        %1558 = vmatprep.mubr.f32.mxu0 0.0
        %1559 = vmatmul.mubr.f32.gmra.mxu0 %v1334
        %v1560 = vpop.f32.mrf.mxu0
        %v1561 = vadd.f32 0.0, %v1560
        %v1562 = vpop.f32.mrf.mxu0
        %1563 = vdwg.mxu0
        %v1564 = vadd.f32 %v1208, %v1406
        %v1565 = vadd.f32 %v1209, %v1411
        %v1566 = vadd.f32 %v1210, %v1416
        %v1567 = vadd.f32 %v1211, %v1421
        %v1568 = vadd.f32 %v1212, %v1426
        %v1569 = vadd.f32 %v1213, %v1431
        %v1570 = vadd.f32 %v1214, %v1436
        %v1571 = vadd.f32 %v1215, %v1441
        %v1572 = vadd.f32 %v1216, %v1446
        %v1573 = vadd.f32 %v1217, %v1451
        %v1574 = vadd.f32 %v1218, %v1456
        %v1575 = vadd.f32 %v1219, %v1461
        %v1576 = vadd.f32 %v1220, %v1466
        %v1577 = vadd.f32 %v1221, %v1471
        %v1578 = vadd.f32 %v1222, %v1476
        %v1579 = vadd.f32 %v1223, %v1481
        %v1580 = vadd.f32 %v1224, %v1486
        %v1581 = vadd.f32 %v1225, %v1491
        %v1582 = vadd.f32 %v1226, %v1496
        %v1583 = vadd.f32 %v1227, %v1501
        %v1584 = vadd.f32 %v1228, %v1506
        %v1585 = vadd.f32 %v1229, %v1511
        %v1586 = vadd.f32 %v1230, %v1516
        %v1587 = vadd.f32 %v1231, %v1521
        %v1588 = vadd.f32 %v1232, %v1526
        %v1589 = vadd.f32 %v1233, %v1531
        %v1590 = vadd.f32 %v1234, %v1536
        %v1591 = vadd.f32 %v1235, %v1541
        %v1592 = vadd.f32 %v1236, %v1546
        %v1593 = vadd.f32 %v1237, %v1551
        %v1594 = vadd.f32 %v1238, %v1556
        %v1595 = vadd.f32 %v1239, %v1561
        %1596 = vst.msk [vmem:[#allocation3] sm:$0xff] %vm232, %v1564
        %1597 = vst.msk [vmem:[#allocation3 + $0x8] sm:$0xff] %vm232, %v1565
        %1598 = vst.msk [vmem:[#allocation3 + $0x10] sm:$0xff] %vm232, %v1566
        %1599 = vst.msk [vmem:[#allocation3 + $0x18] sm:$0xff] %vm232, %v1567
        %1600 = vst.msk [vmem:[#allocation3 + $0x20] sm:$0xff] %vm232, %v1568
        %1601 = vst.msk [vmem:[#allocation3 + $0x28] sm:$0xff] %vm232, %v1569
        %1602 = vst.msk [vmem:[#allocation3 + $0x30] sm:$0xff] %vm232, %v1570
        %1603 = vst.msk [vmem:[#allocation3 + $0x38] sm:$0xff] %vm232, %v1571
        %1604 = vst.msk [vmem:[#allocation3 + $0x40] sm:$0xff] %vm232, %v1572
        %1605 = vst.msk [vmem:[#allocation3 + $0x48] sm:$0xff] %vm232, %v1573
        %1606 = vst.msk [vmem:[#allocation3 + $0x50] sm:$0xff] %vm232, %v1574
        %1607 = vst.msk [vmem:[#allocation3 + $0x58] sm:$0xff] %vm232, %v1575
        %1608 = vst.msk [vmem:[#allocation3 + $0x60] sm:$0xff] %vm232, %v1576
        %1609 = vst.msk [vmem:[#allocation3 + $0x68] sm:$0xff] %vm232, %v1577
        %1610 = vst.msk [vmem:[#allocation3 + $0x70] sm:$0xff] %vm232, %v1578
        %1611 = vst.msk [vmem:[#allocation3 + $0x78] sm:$0xff] %vm232, %v1579
        %1612 = vst.msk [vmem:[#allocation3 + $0x80] sm:$0xff] %vm232, %v1580
        %1613 = vst.msk [vmem:[#allocation3 + $0x88] sm:$0xff] %vm232, %v1581
        %1614 = vst.msk [vmem:[#allocation3 + $0x90] sm:$0xff] %vm232, %v1582
        %1615 = vst.msk [vmem:[#allocation3 + $0x98] sm:$0xff] %vm232, %v1583
        %1616 = vst.msk [vmem:[#allocation3 + $0xa0] sm:$0xff] %vm232, %v1584
        %1617 = vst.msk [vmem:[#allocation3 + $0xa8] sm:$0xff] %vm232, %v1585
        %1618 = vst.msk [vmem:[#allocation3 + $0xb0] sm:$0xff] %vm232, %v1586
        %1619 = vst.msk [vmem:[#allocation3 + $0xb8] sm:$0xff] %vm232, %v1587
        %1620 = vst.msk [vmem:[#allocation3 + $0xc0] sm:$0xff] %vm232, %v1588
        %1621 = vst.msk [vmem:[#allocation3 + $0xc8] sm:$0xff] %vm232, %v1589
        %1622 = vst.msk [vmem:[#allocation3 + $0xd0] sm:$0xff] %vm232, %v1590
        %1623 = vst.msk [vmem:[#allocation3 + $0xd8] sm:$0xff] %vm232, %v1591
        %1624 = vst.msk [vmem:[#allocation3 + $0xe0] sm:$0xff] %vm232, %v1592
        %1625 = vst.msk [vmem:[#allocation3 + $0xe8] sm:$0xff] %vm232, %v1593
        %1626 = vst.msk [vmem:[#allocation3 + $0xf0] sm:$0xff] %vm232, %v1594
        %1627 = vst.msk [vmem:[#allocation3 + $0xf8] sm:$0xff] %vm232, %v1595
        %s1628 = scalar_lea.vmem %s224, 24
        %v1629 = vld [vmem:[%s1628] sm:$0xff]
        %v1630 = vld [vmem:[%s1628 + $0x8] sm:$0xff]
        %v1631 = vld [vmem:[%s1628 + $0x18] sm:$0xff]
        %v1632 = vld [vmem:[%s1628 + $0x20] sm:$0xff]
        %v1633 = vld [vmem:[%s1628 + $0x30] sm:$0xff]
        %v1634 = vld [vmem:[%s1628 + $0x38] sm:$0xff]
        %v1635 = vld [vmem:[%s1628 + $0x48] sm:$0xff]
        %v1636 = vld [vmem:[%s1628 + $0x50] sm:$0xff]
        %v1637 = vld [vmem:[%s1628 + $0x60] sm:$0xff]
        %v1638 = vld [vmem:[%s1628 + $0x68] sm:$0xff]
        %v1639 = vld [vmem:[%s1628 + $0x78] sm:$0xff]
        %v1640 = vld [vmem:[%s1628 + $0x80] sm:$0xff]
        %v1641 = vld [vmem:[%s1628 + $0x90] sm:$0xff]
        %v1642 = vld [vmem:[%s1628 + $0x98] sm:$0xff]
        %v1643 = vld [vmem:[%s1628 + $0xa8] sm:$0xff]
        %v1644 = vld [vmem:[%s1628 + $0xb0] sm:$0xff]
        %v1645 = vld [vmem:[%s1628 + $0xc0] sm:$0xff]
        %v1646 = vld [vmem:[%s1628 + $0xc8] sm:$0xff]
        %v1647 = vld [vmem:[%s1628 + $0xd8] sm:$0xff]
        %v1648 = vld [vmem:[%s1628 + $0xe0] sm:$0xff]
        %v1649 = vld [vmem:[%s1628 + $0xf0] sm:$0xff]
        %v1650 = vld [vmem:[%s1628 + $0xf8] sm:$0xff]
        %v1651 = vld [vmem:[%s1628 + $0x108] sm:$0xff]
        %v1652 = vld [vmem:[%s1628 + $0x110] sm:$0xff]
        %v1653 = vld [vmem:[%s1628 + $0x120] sm:$0xff]
        %v1654 = vld [vmem:[%s1628 + $0x128] sm:$0xff]
        %v1655 = vld [vmem:[%s1628 + $0x138] sm:$0xff]
        %v1656 = vld [vmem:[%s1628 + $0x140] sm:$0xff]
        %v1657 = vld [vmem:[%s1628 + $0x150] sm:$0xff]
        %v1658 = vld [vmem:[%s1628 + $0x158] sm:$0xff]
        %v1659 = vld [vmem:[%s1628 + $0x168] sm:$0xff]
        %v1660 = vld [vmem:[%s1628 + $0x170] sm:$0xff]
        %s1661 = scalar_lea.vmem %s1, 12
        %v1662 = vld [vmem:[%s1661] sm:$0xf]
        %v1663 = vld [vmem:[#allocation3] sm:$0xff]
        %v1664 = vld [vmem:[#allocation3 + $0x8] sm:$0xff]
        %v1665 = vld [vmem:[#allocation3 + $0x10] sm:$0xff]
        %v1666 = vld [vmem:[#allocation3 + $0x18] sm:$0xff]
        %v1667 = vld [vmem:[#allocation3 + $0x20] sm:$0xff]
        %v1668 = vld [vmem:[#allocation3 + $0x28] sm:$0xff]
        %v1669 = vld [vmem:[#allocation3 + $0x30] sm:$0xff]
        %v1670 = vld [vmem:[#allocation3 + $0x38] sm:$0xff]
        %v1671 = vld [vmem:[#allocation3 + $0x40] sm:$0xff]
        %v1672 = vld [vmem:[#allocation3 + $0x48] sm:$0xff]
        %v1673 = vld [vmem:[#allocation3 + $0x50] sm:$0xff]
        %v1674 = vld [vmem:[#allocation3 + $0x58] sm:$0xff]
        %v1675 = vld [vmem:[#allocation3 + $0x60] sm:$0xff]
        %v1676 = vld [vmem:[#allocation3 + $0x68] sm:$0xff]
        %v1677 = vld [vmem:[#allocation3 + $0x70] sm:$0xff]
        %v1678 = vld [vmem:[#allocation3 + $0x78] sm:$0xff]
        %v1679 = vld [vmem:[#allocation3 + $0x80] sm:$0xff]
        %v1680 = vld [vmem:[#allocation3 + $0x88] sm:$0xff]
        %v1681 = vld [vmem:[#allocation3 + $0x90] sm:$0xff]
        %v1682 = vld [vmem:[#allocation3 + $0x98] sm:$0xff]
        %v1683 = vld [vmem:[#allocation3 + $0xa0] sm:$0xff]
        %v1684 = vld [vmem:[#allocation3 + $0xa8] sm:$0xff]
        %v1685 = vld [vmem:[#allocation3 + $0xb0] sm:$0xff]
        %v1686 = vld [vmem:[#allocation3 + $0xb8] sm:$0xff]
        %v1687 = vld [vmem:[#allocation3 + $0xc0] sm:$0xff]
        %v1688 = vld [vmem:[#allocation3 + $0xc8] sm:$0xff]
        %v1689 = vld [vmem:[#allocation3 + $0xd0] sm:$0xff]
        %v1690 = vld [vmem:[#allocation3 + $0xd8] sm:$0xff]
        %v1691 = vld [vmem:[#allocation3 + $0xe0] sm:$0xff]
        %v1692 = vld [vmem:[#allocation3 + $0xe8] sm:$0xff]
        %v1693 = vld [vmem:[#allocation3 + $0xf0] sm:$0xff]
        %v1694 = vld [vmem:[#allocation3 + $0xf8] sm:$0xff]
        %v1696 = vsel %vm330, %v1629, 0
        %v1699 = vsel %vm330, %v1630, 0
        %v1702 = vsel %vm330, %v1631, 0
        %v1705 = vsel %vm330, %v1632, 0
        %v1708 = vsel %vm330, %v1633, 0
        %v1711 = vsel %vm330, %v1634, 0
        %v1714 = vsel %vm330, %v1635, 0
        %v1717 = vsel %vm330, %v1636, 0
        %v1720 = vsel %vm330, %v1637, 0
        %v1723 = vsel %vm330, %v1638, 0
        %v1726 = vsel %vm330, %v1639, 0
        %v1729 = vsel %vm330, %v1640, 0
        %v1732 = vsel %vm330, %v1641, 0
        %v1735 = vsel %vm330, %v1642, 0
        %v1738 = vsel %vm330, %v1643, 0
        %v1741 = vsel %vm330, %v1644, 0
        %v1744 = vsel %vm330, %v1645, 0
        %v1747 = vsel %vm330, %v1646, 0
        %v1750 = vsel %vm330, %v1647, 0
        %v1753 = vsel %vm330, %v1648, 0
        %v1756 = vsel %vm330, %v1649, 0
        %v1759 = vsel %vm330, %v1650, 0
        %v1762 = vsel %vm330, %v1651, 0
        %v1765 = vsel %vm330, %v1652, 0
        %v1768 = vsel %vm330, %v1653, 0
        %v1771 = vsel %vm330, %v1654, 0
        %v1774 = vsel %vm330, %v1655, 0
        %v1777 = vsel %vm330, %v1656, 0
        %v1780 = vsel %vm330, %v1657, 0
        %v1783 = vsel %vm330, %v1658, 0
        %v1786 = vsel %vm330, %v1659, 0
        %v1789 = vsel %vm330, %v1660, 0
        %v1792 = vsel %vm427, %v1662, 0
        %1794 = vmatprep.subr.mxu0 0.0
        %1795 = vmatpush1.msra.mxu0 0.0
        %1796 = vmatprep.subr.mxu0 0.0
        %1797 = vmatpush1.msra.mxu0 0.0
        %1798 = vmatprep.subr.mxu0 0.0
        %1799 = vmatpush1.msra.mxu0 0.0
        %1800 = vmatprep.subr.mxu0 0.0
        %1801 = vmatpush1.msra.mxu0 0.0
        %1802 = vmatprep.subr.mxu0 0.0
        %1803 = vmatpush1.msra.mxu0 0.0
        %1804 = vmatprep.subr.mxu0 0.0
        %1805 = vmatpush1.msra.mxu0 0.0
        %1806 = vmatprep.subr.mxu0 0.0
        %1807 = vmatpush1.msra.mxu0 0.0
        %1808 = vmatprep.subr.mxu0 0.0
        %1809 = vmatpush1.msra.mxu0 0.0
        %1810 = vmatprep.subr.mxu0 0.0
        %1811 = vmatpush1.msra.mxu0 0.0
        %1812 = vmatprep.subr.mxu0 0.0
        %1813 = vmatpush1.msra.mxu0 0.0
        %1814 = vmatprep.subr.mxu0 0.0
        %1815 = vmatpush1.msra.mxu0 0.0
        %1816 = vmatprep.subr.mxu0 0.0
        %1817 = vmatpush1.msra.mxu0 0.0
        %1818 = vmatprep.subr.mxu0 0.0
        %1819 = vmatpush1.msra.mxu0 0.0
        %1820 = vmatprep.subr.mxu0 0.0
        %1821 = vmatpush1.msra.mxu0 0.0
        %1822 = vmatprep.subr.mxu0 0.0
        %1823 = vmatpush1.msra.mxu0 0.0
        %1824 = vmatprep.subr.mxu0 0.0
        %1825 = vmatpush1.msra.mxu0 %v1792
        %1826 = vmatprep.subr.mxu0 0.0
        %1827 = vmatpush2.msra.mxu0 0.0
        %1828 = vmatprep.subr.mxu0 0.0
        %1829 = vmatpush2.msra.mxu0 0.0
        %1830 = vmatprep.subr.mxu0 0.0
        %1831 = vmatpush2.msra.mxu0 0.0
        %1832 = vmatprep.subr.mxu0 0.0
        %1833 = vmatpush2.msra.mxu0 0.0
        %1834 = vmatprep.subr.mxu0 0.0
        %1835 = vmatpush2.msra.mxu0 0.0
        %1836 = vmatprep.subr.mxu0 0.0
        %1837 = vmatpush2.msra.mxu0 0.0
        %1838 = vmatprep.subr.mxu0 0.0
        %1839 = vmatpush2.msra.mxu0 0.0
        %1840 = vmatprep.subr.mxu0 0.0
        %1841 = vmatpush2.msra.mxu0 0.0
        %1842 = vmatprep.subr.mxu0 0.0
        %1843 = vmatpush2.msra.mxu0 0.0
        %1844 = vmatprep.subr.mxu0 0.0
        %1845 = vmatpush2.msra.mxu0 0.0
        %1846 = vmatprep.subr.mxu0 0.0
        %1847 = vmatpush2.msra.mxu0 0.0
        %1848 = vmatprep.subr.mxu0 0.0
        %1849 = vmatpush2.msra.mxu0 0.0
        %1850 = vmatprep.subr.mxu0 0.0
        %1851 = vmatpush2.msra.mxu0 0.0
        %1852 = vmatprep.subr.mxu0 0.0
        %1853 = vmatpush2.msra.mxu0 0.0
        %1854 = vmatprep.subr.mxu0 0.0
        %1855 = vmatpush2.msra.mxu0 0.0
        %1856 = vmatprep.subr.mxu0 0.0
        %1857 = vmatpush2.msra.mxu0 0.0
        %1858 = vmatprep.mubr.f32.mxu0 0.0
        %1859 = vmatmul.mubr.f32.gmra.mxu0 %v1696
        %v1860 = vpop.f32.mrf.mxu0
        %v1861 = vadd.f32 0.0, %v1860
        %v1862 = vpop.f32.mrf.mxu0
        %1863 = vmatprep.mubr.f32.mxu0 0.0
        %1864 = vmatmul.mubr.f32.gmra.mxu0 %v1699
        %v1865 = vpop.f32.mrf.mxu0
        %v1866 = vadd.f32 0.0, %v1865
        %v1867 = vpop.f32.mrf.mxu0
        %1868 = vmatprep.mubr.f32.mxu0 0.0
        %1869 = vmatmul.mubr.f32.gmra.mxu0 %v1702
        %v1870 = vpop.f32.mrf.mxu0
        %v1871 = vadd.f32 0.0, %v1870
        %v1872 = vpop.f32.mrf.mxu0
        %1873 = vmatprep.mubr.f32.mxu0 0.0
        %1874 = vmatmul.mubr.f32.gmra.mxu0 %v1705
        %v1875 = vpop.f32.mrf.mxu0
        %v1876 = vadd.f32 0.0, %v1875
        %v1877 = vpop.f32.mrf.mxu0
        %1878 = vmatprep.mubr.f32.mxu0 0.0
        %1879 = vmatmul.mubr.f32.gmra.mxu0 %v1708
        %v1880 = vpop.f32.mrf.mxu0
        %v1881 = vadd.f32 0.0, %v1880
        %v1882 = vpop.f32.mrf.mxu0
        %1883 = vmatprep.mubr.f32.mxu0 0.0
        %1884 = vmatmul.mubr.f32.gmra.mxu0 %v1711
        %v1885 = vpop.f32.mrf.mxu0
        %v1886 = vadd.f32 0.0, %v1885
        %v1887 = vpop.f32.mrf.mxu0
        %1888 = vmatprep.mubr.f32.mxu0 0.0
        %1889 = vmatmul.mubr.f32.gmra.mxu0 %v1714
        %v1890 = vpop.f32.mrf.mxu0
        %v1891 = vadd.f32 0.0, %v1890
        %v1892 = vpop.f32.mrf.mxu0
        %1893 = vmatprep.mubr.f32.mxu0 0.0
        %1894 = vmatmul.mubr.f32.gmra.mxu0 %v1717
        %v1895 = vpop.f32.mrf.mxu0
        %v1896 = vadd.f32 0.0, %v1895
        %v1897 = vpop.f32.mrf.mxu0
        %1898 = vmatprep.mubr.f32.mxu0 0.0
        %1899 = vmatmul.mubr.f32.gmra.mxu0 %v1720
        %v1900 = vpop.f32.mrf.mxu0
        %v1901 = vadd.f32 0.0, %v1900
        %v1902 = vpop.f32.mrf.mxu0
        %1903 = vmatprep.mubr.f32.mxu0 0.0
        %1904 = vmatmul.mubr.f32.gmra.mxu0 %v1723
        %v1905 = vpop.f32.mrf.mxu0
        %v1906 = vadd.f32 0.0, %v1905
        %v1907 = vpop.f32.mrf.mxu0
        %1908 = vmatprep.mubr.f32.mxu0 0.0
        %1909 = vmatmul.mubr.f32.gmra.mxu0 %v1726
        %v1910 = vpop.f32.mrf.mxu0
        %v1911 = vadd.f32 0.0, %v1910
        %v1912 = vpop.f32.mrf.mxu0
        %1913 = vmatprep.mubr.f32.mxu0 0.0
        %1914 = vmatmul.mubr.f32.gmra.mxu0 %v1729
        %v1915 = vpop.f32.mrf.mxu0
        %v1916 = vadd.f32 0.0, %v1915
        %v1917 = vpop.f32.mrf.mxu0
        %1918 = vmatprep.mubr.f32.mxu0 0.0
        %1919 = vmatmul.mubr.f32.gmra.mxu0 %v1732
        %v1920 = vpop.f32.mrf.mxu0
        %v1921 = vadd.f32 0.0, %v1920
        %v1922 = vpop.f32.mrf.mxu0
        %1923 = vmatprep.mubr.f32.mxu0 0.0
        %1924 = vmatmul.mubr.f32.gmra.mxu0 %v1735
        %v1925 = vpop.f32.mrf.mxu0
        %v1926 = vadd.f32 0.0, %v1925
        %v1927 = vpop.f32.mrf.mxu0
        %1928 = vmatprep.mubr.f32.mxu0 0.0
        %1929 = vmatmul.mubr.f32.gmra.mxu0 %v1738
        %v1930 = vpop.f32.mrf.mxu0
        %v1931 = vadd.f32 0.0, %v1930
        %v1932 = vpop.f32.mrf.mxu0
        %1933 = vmatprep.mubr.f32.mxu0 0.0
        %1934 = vmatmul.mubr.f32.gmra.mxu0 %v1741
        %v1935 = vpop.f32.mrf.mxu0
        %v1936 = vadd.f32 0.0, %v1935
        %v1937 = vpop.f32.mrf.mxu0
        %1938 = vmatprep.mubr.f32.mxu0 0.0
        %1939 = vmatmul.mubr.f32.gmra.mxu0 %v1744
        %v1940 = vpop.f32.mrf.mxu0
        %v1941 = vadd.f32 0.0, %v1940
        %v1942 = vpop.f32.mrf.mxu0
        %1943 = vmatprep.mubr.f32.mxu0 0.0
        %1944 = vmatmul.mubr.f32.gmra.mxu0 %v1747
        %v1945 = vpop.f32.mrf.mxu0
        %v1946 = vadd.f32 0.0, %v1945
        %v1947 = vpop.f32.mrf.mxu0
        %1948 = vmatprep.mubr.f32.mxu0 0.0
        %1949 = vmatmul.mubr.f32.gmra.mxu0 %v1750
        %v1950 = vpop.f32.mrf.mxu0
        %v1951 = vadd.f32 0.0, %v1950
        %v1952 = vpop.f32.mrf.mxu0
        %1953 = vmatprep.mubr.f32.mxu0 0.0
        %1954 = vmatmul.mubr.f32.gmra.mxu0 %v1753
        %v1955 = vpop.f32.mrf.mxu0
        %v1956 = vadd.f32 0.0, %v1955
        %v1957 = vpop.f32.mrf.mxu0
        %1958 = vmatprep.mubr.f32.mxu0 0.0
        %1959 = vmatmul.mubr.f32.gmra.mxu0 %v1756
        %v1960 = vpop.f32.mrf.mxu0
        %v1961 = vadd.f32 0.0, %v1960
        %v1962 = vpop.f32.mrf.mxu0
        %1963 = vmatprep.mubr.f32.mxu0 0.0
        %1964 = vmatmul.mubr.f32.gmra.mxu0 %v1759
        %v1965 = vpop.f32.mrf.mxu0
        %v1966 = vadd.f32 0.0, %v1965
        %v1967 = vpop.f32.mrf.mxu0
        %1968 = vmatprep.mubr.f32.mxu0 0.0
        %1969 = vmatmul.mubr.f32.gmra.mxu0 %v1762
        %v1970 = vpop.f32.mrf.mxu0
        %v1971 = vadd.f32 0.0, %v1970
        %v1972 = vpop.f32.mrf.mxu0
        %1973 = vmatprep.mubr.f32.mxu0 0.0
        %1974 = vmatmul.mubr.f32.gmra.mxu0 %v1765
        %v1975 = vpop.f32.mrf.mxu0
        %v1976 = vadd.f32 0.0, %v1975
        %v1977 = vpop.f32.mrf.mxu0
        %1978 = vmatprep.mubr.f32.mxu0 0.0
        %1979 = vmatmul.mubr.f32.gmra.mxu0 %v1768
        %v1980 = vpop.f32.mrf.mxu0
        %v1981 = vadd.f32 0.0, %v1980
        %v1982 = vpop.f32.mrf.mxu0
        %1983 = vmatprep.mubr.f32.mxu0 0.0
        %1984 = vmatmul.mubr.f32.gmra.mxu0 %v1771
        %v1985 = vpop.f32.mrf.mxu0
        %v1986 = vadd.f32 0.0, %v1985
        %v1987 = vpop.f32.mrf.mxu0
        %1988 = vmatprep.mubr.f32.mxu0 0.0
        %1989 = vmatmul.mubr.f32.gmra.mxu0 %v1774
        %v1990 = vpop.f32.mrf.mxu0
        %v1991 = vadd.f32 0.0, %v1990
        %v1992 = vpop.f32.mrf.mxu0
        %1993 = vmatprep.mubr.f32.mxu0 0.0
        %1994 = vmatmul.mubr.f32.gmra.mxu0 %v1777
        %v1995 = vpop.f32.mrf.mxu0
        %v1996 = vadd.f32 0.0, %v1995
        %v1997 = vpop.f32.mrf.mxu0
        %1998 = vmatprep.mubr.f32.mxu0 0.0
        %1999 = vmatmul.mubr.f32.gmra.mxu0 %v1780
        %v2000 = vpop.f32.mrf.mxu0
        %v2001 = vadd.f32 0.0, %v2000
        %v2002 = vpop.f32.mrf.mxu0
        %2003 = vmatprep.mubr.f32.mxu0 0.0
        %2004 = vmatmul.mubr.f32.gmra.mxu0 %v1783
        %v2005 = vpop.f32.mrf.mxu0
        %v2006 = vadd.f32 0.0, %v2005
        %v2007 = vpop.f32.mrf.mxu0
        %2008 = vmatprep.mubr.f32.mxu0 0.0
        %2009 = vmatmul.mubr.f32.gmra.mxu0 %v1786
        %v2010 = vpop.f32.mrf.mxu0
        %v2011 = vadd.f32 0.0, %v2010
        %v2012 = vpop.f32.mrf.mxu0
        %2013 = vmatprep.mubr.f32.mxu0 0.0
        %2014 = vmatmul.mubr.f32.gmra.mxu0 %v1789
        %v2015 = vpop.f32.mrf.mxu0
        %v2016 = vadd.f32 0.0, %v2015
        %v2017 = vpop.f32.mrf.mxu0
        %2018 = vdwg.mxu0
        %v2019 = vadd.f32 %v1663, %v1861
        %v2020 = vadd.f32 %v1664, %v1866
        %v2021 = vadd.f32 %v1665, %v1871
        %v2022 = vadd.f32 %v1666, %v1876
        %v2023 = vadd.f32 %v1667, %v1881
        %v2024 = vadd.f32 %v1668, %v1886
        %v2025 = vadd.f32 %v1669, %v1891
        %v2026 = vadd.f32 %v1670, %v1896
        %v2027 = vadd.f32 %v1671, %v1901
        %v2028 = vadd.f32 %v1672, %v1906
        %v2029 = vadd.f32 %v1673, %v1911
        %v2030 = vadd.f32 %v1674, %v1916
        %v2031 = vadd.f32 %v1675, %v1921
        %v2032 = vadd.f32 %v1676, %v1926
        %v2033 = vadd.f32 %v1677, %v1931
        %v2034 = vadd.f32 %v1678, %v1936
        %v2035 = vadd.f32 %v1679, %v1941
        %v2036 = vadd.f32 %v1680, %v1946
        %v2037 = vadd.f32 %v1681, %v1951
        %v2038 = vadd.f32 %v1682, %v1956
        %v2039 = vadd.f32 %v1683, %v1961
        %v2040 = vadd.f32 %v1684, %v1966
        %v2041 = vadd.f32 %v1685, %v1971
        %v2042 = vadd.f32 %v1686, %v1976
        %v2043 = vadd.f32 %v1687, %v1981
        %v2044 = vadd.f32 %v1688, %v1986
        %v2045 = vadd.f32 %v1689, %v1991
        %v2046 = vadd.f32 %v1690, %v1996
        %v2047 = vadd.f32 %v1691, %v2001
        %v2048 = vadd.f32 %v1692, %v2006
        %v2049 = vadd.f32 %v1693, %v2011
        %v2050 = vadd.f32 %v1694, %v2016
        %2051 = vst.msk [vmem:[#allocation3] sm:$0xff] %vm232, %v2019
        %2052 = vst.msk [vmem:[#allocation3 + $0x8] sm:$0xff] %vm232, %v2020
        %2053 = vst.msk [vmem:[#allocation3 + $0x10] sm:$0xff] %vm232, %v2021
        %2054 = vst.msk [vmem:[#allocation3 + $0x18] sm:$0xff] %vm232, %v2022
        %2055 = vst.msk [vmem:[#allocation3 + $0x20] sm:$0xff] %vm232, %v2023
        %2056 = vst.msk [vmem:[#allocation3 + $0x28] sm:$0xff] %vm232, %v2024
        %2057 = vst.msk [vmem:[#allocation3 + $0x30] sm:$0xff] %vm232, %v2025
        %2058 = vst.msk [vmem:[#allocation3 + $0x38] sm:$0xff] %vm232, %v2026
        %2059 = vst.msk [vmem:[#allocation3 + $0x40] sm:$0xff] %vm232, %v2027
        %2060 = vst.msk [vmem:[#allocation3 + $0x48] sm:$0xff] %vm232, %v2028
        %2061 = vst.msk [vmem:[#allocation3 + $0x50] sm:$0xff] %vm232, %v2029
        %2062 = vst.msk [vmem:[#allocation3 + $0x58] sm:$0xff] %vm232, %v2030
        %2063 = vst.msk [vmem:[#allocation3 + $0x60] sm:$0xff] %vm232, %v2031
        %2064 = vst.msk [vmem:[#allocation3 + $0x68] sm:$0xff] %vm232, %v2032
        %2065 = vst.msk [vmem:[#allocation3 + $0x70] sm:$0xff] %vm232, %v2033
        %2066 = vst.msk [vmem:[#allocation3 + $0x78] sm:$0xff] %vm232, %v2034
        %2067 = vst.msk [vmem:[#allocation3 + $0x80] sm:$0xff] %vm232, %v2035
        %2068 = vst.msk [vmem:[#allocation3 + $0x88] sm:$0xff] %vm232, %v2036
        %2069 = vst.msk [vmem:[#allocation3 + $0x90] sm:$0xff] %vm232, %v2037
        %2070 = vst.msk [vmem:[#allocation3 + $0x98] sm:$0xff] %vm232, %v2038
        %2071 = vst.msk [vmem:[#allocation3 + $0xa0] sm:$0xff] %vm232, %v2039
        %2072 = vst.msk [vmem:[#allocation3 + $0xa8] sm:$0xff] %vm232, %v2040
        %2073 = vst.msk [vmem:[#allocation3 + $0xb0] sm:$0xff] %vm232, %v2041
        %2074 = vst.msk [vmem:[#allocation3 + $0xb8] sm:$0xff] %vm232, %v2042
        %2075 = vst.msk [vmem:[#allocation3 + $0xc0] sm:$0xff] %vm232, %v2043
        %2076 = vst.msk [vmem:[#allocation3 + $0xc8] sm:$0xff] %vm232, %v2044
        %2077 = vst.msk [vmem:[#allocation3 + $0xd0] sm:$0xff] %vm232, %v2045
        %2078 = vst.msk [vmem:[#allocation3 + $0xd8] sm:$0xff] %vm232, %v2046
        %2079 = vst.msk [vmem:[#allocation3 + $0xe0] sm:$0xff] %vm232, %v2047
        %2080 = vst.msk [vmem:[#allocation3 + $0xe8] sm:$0xff] %vm232, %v2048
        %2081 = vst.msk [vmem:[#allocation3 + $0xf0] sm:$0xff] %vm232, %v2049
        %2082 = vst.msk [vmem:[#allocation3 + $0xf8] sm:$0xff] %vm232, %v2050
        %v2083 = vld [vmem:[%s1628 + $0x1] sm:$0xff]
        %v2084 = vld [vmem:[%s1628 + $0x9] sm:$0xff]
        %v2085 = vld [vmem:[%s1628 + $0x19] sm:$0xff]
        %v2086 = vld [vmem:[%s1628 + $0x21] sm:$0xff]
        %v2087 = vld [vmem:[%s1628 + $0x31] sm:$0xff]
        %v2088 = vld [vmem:[%s1628 + $0x39] sm:$0xff]
        %v2089 = vld [vmem:[%s1628 + $0x49] sm:$0xff]
        %v2090 = vld [vmem:[%s1628 + $0x51] sm:$0xff]
        %v2091 = vld [vmem:[%s1628 + $0x61] sm:$0xff]
        %v2092 = vld [vmem:[%s1628 + $0x69] sm:$0xff]
        %v2093 = vld [vmem:[%s1628 + $0x79] sm:$0xff]
        %v2094 = vld [vmem:[%s1628 + $0x81] sm:$0xff]
        %v2095 = vld [vmem:[%s1628 + $0x91] sm:$0xff]
        %v2096 = vld [vmem:[%s1628 + $0x99] sm:$0xff]
        %v2097 = vld [vmem:[%s1628 + $0xa9] sm:$0xff]
        %v2098 = vld [vmem:[%s1628 + $0xb1] sm:$0xff]
        %v2099 = vld [vmem:[%s1628 + $0xc1] sm:$0xff]
        %v2100 = vld [vmem:[%s1628 + $0xc9] sm:$0xff]
        %v2101 = vld [vmem:[%s1628 + $0xd9] sm:$0xff]
        %v2102 = vld [vmem:[%s1628 + $0xe1] sm:$0xff]
        %v2103 = vld [vmem:[%s1628 + $0xf1] sm:$0xff]
        %v2104 = vld [vmem:[%s1628 + $0xf9] sm:$0xff]
        %v2105 = vld [vmem:[%s1628 + $0x109] sm:$0xff]
        %v2106 = vld [vmem:[%s1628 + $0x111] sm:$0xff]
        %v2107 = vld [vmem:[%s1628 + $0x121] sm:$0xff]
        %v2108 = vld [vmem:[%s1628 + $0x129] sm:$0xff]
        %v2109 = vld [vmem:[%s1628 + $0x139] sm:$0xff]
        %v2110 = vld [vmem:[%s1628 + $0x141] sm:$0xff]
        %v2111 = vld [vmem:[%s1628 + $0x151] sm:$0xff]
        %v2112 = vld [vmem:[%s1628 + $0x159] sm:$0xff]
        %v2113 = vld [vmem:[%s1628 + $0x169] sm:$0xff]
        %v2114 = vld [vmem:[%s1628 + $0x171] sm:$0xff]
        %s2115 = scalar_lea.vmem %s1, 16
        %v2116 = vld [vmem:[%s2115] sm:$0xf]
        %v2117 = vld [vmem:[#allocation3] sm:$0xff]
        %v2118 = vld [vmem:[#allocation3 + $0x8] sm:$0xff]
        %v2119 = vld [vmem:[#allocation3 + $0x10] sm:$0xff]
        %v2120 = vld [vmem:[#allocation3 + $0x18] sm:$0xff]
        %v2121 = vld [vmem:[#allocation3 + $0x20] sm:$0xff]
        %v2122 = vld [vmem:[#allocation3 + $0x28] sm:$0xff]
        %v2123 = vld [vmem:[#allocation3 + $0x30] sm:$0xff]
        %v2124 = vld [vmem:[#allocation3 + $0x38] sm:$0xff]
        %v2125 = vld [vmem:[#allocation3 + $0x40] sm:$0xff]
        %v2126 = vld [vmem:[#allocation3 + $0x48] sm:$0xff]
        %v2127 = vld [vmem:[#allocation3 + $0x50] sm:$0xff]
        %v2128 = vld [vmem:[#allocation3 + $0x58] sm:$0xff]
        %v2129 = vld [vmem:[#allocation3 + $0x60] sm:$0xff]
        %v2130 = vld [vmem:[#allocation3 + $0x68] sm:$0xff]
        %v2131 = vld [vmem:[#allocation3 + $0x70] sm:$0xff]
        %v2132 = vld [vmem:[#allocation3 + $0x78] sm:$0xff]
        %v2133 = vld [vmem:[#allocation3 + $0x80] sm:$0xff]
        %v2134 = vld [vmem:[#allocation3 + $0x88] sm:$0xff]
        %v2135 = vld [vmem:[#allocation3 + $0x90] sm:$0xff]
        %v2136 = vld [vmem:[#allocation3 + $0x98] sm:$0xff]
        %v2137 = vld [vmem:[#allocation3 + $0xa0] sm:$0xff]
        %v2138 = vld [vmem:[#allocation3 + $0xa8] sm:$0xff]
        %v2139 = vld [vmem:[#allocation3 + $0xb0] sm:$0xff]
        %v2140 = vld [vmem:[#allocation3 + $0xb8] sm:$0xff]
        %v2141 = vld [vmem:[#allocation3 + $0xc0] sm:$0xff]
        %v2142 = vld [vmem:[#allocation3 + $0xc8] sm:$0xff]
        %v2143 = vld [vmem:[#allocation3 + $0xd0] sm:$0xff]
        %v2144 = vld [vmem:[#allocation3 + $0xd8] sm:$0xff]
        %v2145 = vld [vmem:[#allocation3 + $0xe0] sm:$0xff]
        %v2146 = vld [vmem:[#allocation3 + $0xe8] sm:$0xff]
        %v2147 = vld [vmem:[#allocation3 + $0xf0] sm:$0xff]
        %v2148 = vld [vmem:[#allocation3 + $0xf8] sm:$0xff]
        %v2150 = vsel %vm330, %v2083, 0
        %v2153 = vsel %vm330, %v2084, 0
        %v2156 = vsel %vm330, %v2085, 0
        %v2159 = vsel %vm330, %v2086, 0
        %v2162 = vsel %vm330, %v2087, 0
        %v2165 = vsel %vm330, %v2088, 0
        %v2168 = vsel %vm330, %v2089, 0
        %v2171 = vsel %vm330, %v2090, 0
        %v2174 = vsel %vm330, %v2091, 0
        %v2177 = vsel %vm330, %v2092, 0
        %v2180 = vsel %vm330, %v2093, 0
        %v2183 = vsel %vm330, %v2094, 0
        %v2186 = vsel %vm330, %v2095, 0
        %v2189 = vsel %vm330, %v2096, 0
        %v2192 = vsel %vm330, %v2097, 0
        %v2195 = vsel %vm330, %v2098, 0
        %v2198 = vsel %vm330, %v2099, 0
        %v2201 = vsel %vm330, %v2100, 0
        %v2204 = vsel %vm330, %v2101, 0
        %v2207 = vsel %vm330, %v2102, 0
        %v2210 = vsel %vm330, %v2103, 0
        %v2213 = vsel %vm330, %v2104, 0
        %v2216 = vsel %vm330, %v2105, 0
        %v2219 = vsel %vm330, %v2106, 0
        %v2222 = vsel %vm330, %v2107, 0
        %v2225 = vsel %vm330, %v2108, 0
        %v2228 = vsel %vm330, %v2109, 0
        %v2231 = vsel %vm330, %v2110, 0
        %v2234 = vsel %vm330, %v2111, 0
        %v2237 = vsel %vm330, %v2112, 0
        %v2240 = vsel %vm330, %v2113, 0
        %v2243 = vsel %vm330, %v2114, 0
        %v2246 = vsel %vm427, %v2116, 0
        %2248 = vmatprep.subr.mxu0 0.0
        %2249 = vmatpush1.msra.mxu0 0.0
        %2250 = vmatprep.subr.mxu0 0.0
        %2251 = vmatpush1.msra.mxu0 0.0
        %2252 = vmatprep.subr.mxu0 0.0
        %2253 = vmatpush1.msra.mxu0 0.0
        %2254 = vmatprep.subr.mxu0 0.0
        %2255 = vmatpush1.msra.mxu0 0.0
        %2256 = vmatprep.subr.mxu0 0.0
        %2257 = vmatpush1.msra.mxu0 0.0
        %2258 = vmatprep.subr.mxu0 0.0
        %2259 = vmatpush1.msra.mxu0 0.0
        %2260 = vmatprep.subr.mxu0 0.0
        %2261 = vmatpush1.msra.mxu0 0.0
        %2262 = vmatprep.subr.mxu0 0.0
        %2263 = vmatpush1.msra.mxu0 0.0
        %2264 = vmatprep.subr.mxu0 0.0
        %2265 = vmatpush1.msra.mxu0 0.0
        %2266 = vmatprep.subr.mxu0 0.0
        %2267 = vmatpush1.msra.mxu0 0.0
        %2268 = vmatprep.subr.mxu0 0.0
        %2269 = vmatpush1.msra.mxu0 0.0
        %2270 = vmatprep.subr.mxu0 0.0
        %2271 = vmatpush1.msra.mxu0 0.0
        %2272 = vmatprep.subr.mxu0 0.0
        %2273 = vmatpush1.msra.mxu0 0.0
        %2274 = vmatprep.subr.mxu0 0.0
        %2275 = vmatpush1.msra.mxu0 0.0
        %2276 = vmatprep.subr.mxu0 0.0
        %2277 = vmatpush1.msra.mxu0 0.0
        %2278 = vmatprep.subr.mxu0 0.0
        %2279 = vmatpush1.msra.mxu0 %v2246
        %2280 = vmatprep.subr.mxu0 0.0
        %2281 = vmatpush2.msra.mxu0 0.0
        %2282 = vmatprep.subr.mxu0 0.0
        %2283 = vmatpush2.msra.mxu0 0.0
        %2284 = vmatprep.subr.mxu0 0.0
        %2285 = vmatpush2.msra.mxu0 0.0
        %2286 = vmatprep.subr.mxu0 0.0
        %2287 = vmatpush2.msra.mxu0 0.0
        %2288 = vmatprep.subr.mxu0 0.0
        %2289 = vmatpush2.msra.mxu0 0.0
        %2290 = vmatprep.subr.mxu0 0.0
        %2291 = vmatpush2.msra.mxu0 0.0
        %2292 = vmatprep.subr.mxu0 0.0
        %2293 = vmatpush2.msra.mxu0 0.0
        %2294 = vmatprep.subr.mxu0 0.0
        %2295 = vmatpush2.msra.mxu0 0.0
        %2296 = vmatprep.subr.mxu0 0.0
        %2297 = vmatpush2.msra.mxu0 0.0
        %2298 = vmatprep.subr.mxu0 0.0
        %2299 = vmatpush2.msra.mxu0 0.0
        %2300 = vmatprep.subr.mxu0 0.0
        %2301 = vmatpush2.msra.mxu0 0.0
        %2302 = vmatprep.subr.mxu0 0.0
        %2303 = vmatpush2.msra.mxu0 0.0
        %2304 = vmatprep.subr.mxu0 0.0
        %2305 = vmatpush2.msra.mxu0 0.0
        %2306 = vmatprep.subr.mxu0 0.0
        %2307 = vmatpush2.msra.mxu0 0.0
        %2308 = vmatprep.subr.mxu0 0.0
        %2309 = vmatpush2.msra.mxu0 0.0
        %2310 = vmatprep.subr.mxu0 0.0
        %2311 = vmatpush2.msra.mxu0 0.0
        %2312 = vmatprep.mubr.f32.mxu0 0.0
        %2313 = vmatmul.mubr.f32.gmra.mxu0 %v2150
        %v2314 = vpop.f32.mrf.mxu0
        %v2315 = vadd.f32 0.0, %v2314
        %v2316 = vpop.f32.mrf.mxu0
        %2317 = vmatprep.mubr.f32.mxu0 0.0
        %2318 = vmatmul.mubr.f32.gmra.mxu0 %v2153
        %v2319 = vpop.f32.mrf.mxu0
        %v2320 = vadd.f32 0.0, %v2319
        %v2321 = vpop.f32.mrf.mxu0
        %2322 = vmatprep.mubr.f32.mxu0 0.0
        %2323 = vmatmul.mubr.f32.gmra.mxu0 %v2156
        %v2324 = vpop.f32.mrf.mxu0
        %v2325 = vadd.f32 0.0, %v2324
        %v2326 = vpop.f32.mrf.mxu0
        %2327 = vmatprep.mubr.f32.mxu0 0.0
        %2328 = vmatmul.mubr.f32.gmra.mxu0 %v2159
        %v2329 = vpop.f32.mrf.mxu0
        %v2330 = vadd.f32 0.0, %v2329
        %v2331 = vpop.f32.mrf.mxu0
        %2332 = vmatprep.mubr.f32.mxu0 0.0
        %2333 = vmatmul.mubr.f32.gmra.mxu0 %v2162
        %v2334 = vpop.f32.mrf.mxu0
        %v2335 = vadd.f32 0.0, %v2334
        %v2336 = vpop.f32.mrf.mxu0
        %2337 = vmatprep.mubr.f32.mxu0 0.0
        %2338 = vmatmul.mubr.f32.gmra.mxu0 %v2165
        %v2339 = vpop.f32.mrf.mxu0
        %v2340 = vadd.f32 0.0, %v2339
        %v2341 = vpop.f32.mrf.mxu0
        %2342 = vmatprep.mubr.f32.mxu0 0.0
        %2343 = vmatmul.mubr.f32.gmra.mxu0 %v2168
        %v2344 = vpop.f32.mrf.mxu0
        %v2345 = vadd.f32 0.0, %v2344
        %v2346 = vpop.f32.mrf.mxu0
        %2347 = vmatprep.mubr.f32.mxu0 0.0
        %2348 = vmatmul.mubr.f32.gmra.mxu0 %v2171
        %v2349 = vpop.f32.mrf.mxu0
        %v2350 = vadd.f32 0.0, %v2349
        %v2351 = vpop.f32.mrf.mxu0
        %2352 = vmatprep.mubr.f32.mxu0 0.0
        %2353 = vmatmul.mubr.f32.gmra.mxu0 %v2174
        %v2354 = vpop.f32.mrf.mxu0
        %v2355 = vadd.f32 0.0, %v2354
        %v2356 = vpop.f32.mrf.mxu0
        %2357 = vmatprep.mubr.f32.mxu0 0.0
        %2358 = vmatmul.mubr.f32.gmra.mxu0 %v2177
        %v2359 = vpop.f32.mrf.mxu0
        %v2360 = vadd.f32 0.0, %v2359
        %v2361 = vpop.f32.mrf.mxu0
        %2362 = vmatprep.mubr.f32.mxu0 0.0
        %2363 = vmatmul.mubr.f32.gmra.mxu0 %v2180
        %v2364 = vpop.f32.mrf.mxu0
        %v2365 = vadd.f32 0.0, %v2364
        %v2366 = vpop.f32.mrf.mxu0
        %2367 = vmatprep.mubr.f32.mxu0 0.0
        %2368 = vmatmul.mubr.f32.gmra.mxu0 %v2183
        %v2369 = vpop.f32.mrf.mxu0
        %v2370 = vadd.f32 0.0, %v2369
        %v2371 = vpop.f32.mrf.mxu0
        %2372 = vmatprep.mubr.f32.mxu0 0.0
        %2373 = vmatmul.mubr.f32.gmra.mxu0 %v2186
        %v2374 = vpop.f32.mrf.mxu0
        %v2375 = vadd.f32 0.0, %v2374
        %v2376 = vpop.f32.mrf.mxu0
        %2377 = vmatprep.mubr.f32.mxu0 0.0
        %2378 = vmatmul.mubr.f32.gmra.mxu0 %v2189
        %v2379 = vpop.f32.mrf.mxu0
        %v2380 = vadd.f32 0.0, %v2379
        %v2381 = vpop.f32.mrf.mxu0
        %2382 = vmatprep.mubr.f32.mxu0 0.0
        %2383 = vmatmul.mubr.f32.gmra.mxu0 %v2192
        %v2384 = vpop.f32.mrf.mxu0
        %v2385 = vadd.f32 0.0, %v2384
        %v2386 = vpop.f32.mrf.mxu0
        %2387 = vmatprep.mubr.f32.mxu0 0.0
        %2388 = vmatmul.mubr.f32.gmra.mxu0 %v2195
        %v2389 = vpop.f32.mrf.mxu0
        %v2390 = vadd.f32 0.0, %v2389
        %v2391 = vpop.f32.mrf.mxu0
        %2392 = vmatprep.mubr.f32.mxu0 0.0
        %2393 = vmatmul.mubr.f32.gmra.mxu0 %v2198
        %v2394 = vpop.f32.mrf.mxu0
        %v2395 = vadd.f32 0.0, %v2394
        %v2396 = vpop.f32.mrf.mxu0
        %2397 = vmatprep.mubr.f32.mxu0 0.0
        %2398 = vmatmul.mubr.f32.gmra.mxu0 %v2201
        %v2399 = vpop.f32.mrf.mxu0
        %v2400 = vadd.f32 0.0, %v2399
        %v2401 = vpop.f32.mrf.mxu0
        %2402 = vmatprep.mubr.f32.mxu0 0.0
        %2403 = vmatmul.mubr.f32.gmra.mxu0 %v2204
        %v2404 = vpop.f32.mrf.mxu0
        %v2405 = vadd.f32 0.0, %v2404
        %v2406 = vpop.f32.mrf.mxu0
        %2407 = vmatprep.mubr.f32.mxu0 0.0
        %2408 = vmatmul.mubr.f32.gmra.mxu0 %v2207
        %v2409 = vpop.f32.mrf.mxu0
        %v2410 = vadd.f32 0.0, %v2409
        %v2411 = vpop.f32.mrf.mxu0
        %2412 = vmatprep.mubr.f32.mxu0 0.0
        %2413 = vmatmul.mubr.f32.gmra.mxu0 %v2210
        %v2414 = vpop.f32.mrf.mxu0
        %v2415 = vadd.f32 0.0, %v2414
        %v2416 = vpop.f32.mrf.mxu0
        %2417 = vmatprep.mubr.f32.mxu0 0.0
        %2418 = vmatmul.mubr.f32.gmra.mxu0 %v2213
        %v2419 = vpop.f32.mrf.mxu0
        %v2420 = vadd.f32 0.0, %v2419
        %v2421 = vpop.f32.mrf.mxu0
        %2422 = vmatprep.mubr.f32.mxu0 0.0
        %2423 = vmatmul.mubr.f32.gmra.mxu0 %v2216
        %v2424 = vpop.f32.mrf.mxu0
        %v2425 = vadd.f32 0.0, %v2424
        %v2426 = vpop.f32.mrf.mxu0
        %2427 = vmatprep.mubr.f32.mxu0 0.0
        %2428 = vmatmul.mubr.f32.gmra.mxu0 %v2219
        %v2429 = vpop.f32.mrf.mxu0
        %v2430 = vadd.f32 0.0, %v2429
        %v2431 = vpop.f32.mrf.mxu0
        %2432 = vmatprep.mubr.f32.mxu0 0.0
        %2433 = vmatmul.mubr.f32.gmra.mxu0 %v2222
        %v2434 = vpop.f32.mrf.mxu0
        %v2435 = vadd.f32 0.0, %v2434
        %v2436 = vpop.f32.mrf.mxu0
        %2437 = vmatprep.mubr.f32.mxu0 0.0
        %2438 = vmatmul.mubr.f32.gmra.mxu0 %v2225
        %v2439 = vpop.f32.mrf.mxu0
        %v2440 = vadd.f32 0.0, %v2439
        %v2441 = vpop.f32.mrf.mxu0
        %2442 = vmatprep.mubr.f32.mxu0 0.0
        %2443 = vmatmul.mubr.f32.gmra.mxu0 %v2228
        %v2444 = vpop.f32.mrf.mxu0
        %v2445 = vadd.f32 0.0, %v2444
        %v2446 = vpop.f32.mrf.mxu0
        %2447 = vmatprep.mubr.f32.mxu0 0.0
        %2448 = vmatmul.mubr.f32.gmra.mxu0 %v2231
        %v2449 = vpop.f32.mrf.mxu0
        %v2450 = vadd.f32 0.0, %v2449
        %v2451 = vpop.f32.mrf.mxu0
        %2452 = vmatprep.mubr.f32.mxu0 0.0
        %2453 = vmatmul.mubr.f32.gmra.mxu0 %v2234
        %v2454 = vpop.f32.mrf.mxu0
        %v2455 = vadd.f32 0.0, %v2454
        %v2456 = vpop.f32.mrf.mxu0
        %2457 = vmatprep.mubr.f32.mxu0 0.0
        %2458 = vmatmul.mubr.f32.gmra.mxu0 %v2237
        %v2459 = vpop.f32.mrf.mxu0
        %v2460 = vadd.f32 0.0, %v2459
        %v2461 = vpop.f32.mrf.mxu0
        %2462 = vmatprep.mubr.f32.mxu0 0.0
        %2463 = vmatmul.mubr.f32.gmra.mxu0 %v2240
        %v2464 = vpop.f32.mrf.mxu0
        %v2465 = vadd.f32 0.0, %v2464
        %v2466 = vpop.f32.mrf.mxu0
        %2467 = vmatprep.mubr.f32.mxu0 0.0
        %2468 = vmatmul.mubr.f32.gmra.mxu0 %v2243
        %v2469 = vpop.f32.mrf.mxu0
        %v2470 = vadd.f32 0.0, %v2469
        %v2471 = vpop.f32.mrf.mxu0
        %2472 = vdwg.mxu0
        %v2473 = vadd.f32 %v2117, %v2315
        %v2474 = vadd.f32 %v2118, %v2320
        %v2475 = vadd.f32 %v2119, %v2325
        %v2476 = vadd.f32 %v2120, %v2330
        %v2477 = vadd.f32 %v2121, %v2335
        %v2478 = vadd.f32 %v2122, %v2340
        %v2479 = vadd.f32 %v2123, %v2345
        %v2480 = vadd.f32 %v2124, %v2350
        %v2481 = vadd.f32 %v2125, %v2355
        %v2482 = vadd.f32 %v2126, %v2360
        %v2483 = vadd.f32 %v2127, %v2365
        %v2484 = vadd.f32 %v2128, %v2370
        %v2485 = vadd.f32 %v2129, %v2375
        %v2486 = vadd.f32 %v2130, %v2380
        %v2487 = vadd.f32 %v2131, %v2385
        %v2488 = vadd.f32 %v2132, %v2390
        %v2489 = vadd.f32 %v2133, %v2395
        %v2490 = vadd.f32 %v2134, %v2400
        %v2491 = vadd.f32 %v2135, %v2405
        %v2492 = vadd.f32 %v2136, %v2410
        %v2493 = vadd.f32 %v2137, %v2415
        %v2494 = vadd.f32 %v2138, %v2420
        %v2495 = vadd.f32 %v2139, %v2425
        %v2496 = vadd.f32 %v2140, %v2430
        %v2497 = vadd.f32 %v2141, %v2435
        %v2498 = vadd.f32 %v2142, %v2440
        %v2499 = vadd.f32 %v2143, %v2445
        %v2500 = vadd.f32 %v2144, %v2450
        %v2501 = vadd.f32 %v2145, %v2455
        %v2502 = vadd.f32 %v2146, %v2460
        %v2503 = vadd.f32 %v2147, %v2465
        %v2504 = vadd.f32 %v2148, %v2470
        %2505 = vst.msk [vmem:[#allocation3] sm:$0xff] %vm232, %v2473
        %2506 = vst.msk [vmem:[#allocation3 + $0x8] sm:$0xff] %vm232, %v2474
        %2507 = vst.msk [vmem:[#allocation3 + $0x10] sm:$0xff] %vm232, %v2475
        %2508 = vst.msk [vmem:[#allocation3 + $0x18] sm:$0xff] %vm232, %v2476
        %2509 = vst.msk [vmem:[#allocation3 + $0x20] sm:$0xff] %vm232, %v2477
        %2510 = vst.msk [vmem:[#allocation3 + $0x28] sm:$0xff] %vm232, %v2478
        %2511 = vst.msk [vmem:[#allocation3 + $0x30] sm:$0xff] %vm232, %v2479
        %2512 = vst.msk [vmem:[#allocation3 + $0x38] sm:$0xff] %vm232, %v2480
        %2513 = vst.msk [vmem:[#allocation3 + $0x40] sm:$0xff] %vm232, %v2481
        %2514 = vst.msk [vmem:[#allocation3 + $0x48] sm:$0xff] %vm232, %v2482
        %2515 = vst.msk [vmem:[#allocation3 + $0x50] sm:$0xff] %vm232, %v2483
        %2516 = vst.msk [vmem:[#allocation3 + $0x58] sm:$0xff] %vm232, %v2484
        %2517 = vst.msk [vmem:[#allocation3 + $0x60] sm:$0xff] %vm232, %v2485
        %2518 = vst.msk [vmem:[#allocation3 + $0x68] sm:$0xff] %vm232, %v2486
        %2519 = vst.msk [vmem:[#allocation3 + $0x70] sm:$0xff] %vm232, %v2487
        %2520 = vst.msk [vmem:[#allocation3 + $0x78] sm:$0xff] %vm232, %v2488
        %2521 = vst.msk [vmem:[#allocation3 + $0x80] sm:$0xff] %vm232, %v2489
        %2522 = vst.msk [vmem:[#allocation3 + $0x88] sm:$0xff] %vm232, %v2490
        %2523 = vst.msk [vmem:[#allocation3 + $0x90] sm:$0xff] %vm232, %v2491
        %2524 = vst.msk [vmem:[#allocation3 + $0x98] sm:$0xff] %vm232, %v2492
        %2525 = vst.msk [vmem:[#allocation3 + $0xa0] sm:$0xff] %vm232, %v2493
        %2526 = vst.msk [vmem:[#allocation3 + $0xa8] sm:$0xff] %vm232, %v2494
        %2527 = vst.msk [vmem:[#allocation3 + $0xb0] sm:$0xff] %vm232, %v2495
        %2528 = vst.msk [vmem:[#allocation3 + $0xb8] sm:$0xff] %vm232, %v2496
        %2529 = vst.msk [vmem:[#allocation3 + $0xc0] sm:$0xff] %vm232, %v2497
        %2530 = vst.msk [vmem:[#allocation3 + $0xc8] sm:$0xff] %vm232, %v2498
        %2531 = vst.msk [vmem:[#allocation3 + $0xd0] sm:$0xff] %vm232, %v2499
        %2532 = vst.msk [vmem:[#allocation3 + $0xd8] sm:$0xff] %vm232, %v2500
        %2533 = vst.msk [vmem:[#allocation3 + $0xe0] sm:$0xff] %vm232, %v2501
        %2534 = vst.msk [vmem:[#allocation3 + $0xe8] sm:$0xff] %vm232, %v2502
        %2535 = vst.msk [vmem:[#allocation3 + $0xf0] sm:$0xff] %vm232, %v2503
        %2536 = vst.msk [vmem:[#allocation3 + $0xf8] sm:$0xff] %vm232, %v2504
        %v2537 = vld [vmem:[%s1628 + $0x2] sm:$0xff]
        %v2538 = vld [vmem:[%s1628 + $0xa] sm:$0xff]
        %v2539 = vld [vmem:[%s1628 + $0x1a] sm:$0xff]
        %v2540 = vld [vmem:[%s1628 + $0x22] sm:$0xff]
        %v2541 = vld [vmem:[%s1628 + $0x32] sm:$0xff]
        %v2542 = vld [vmem:[%s1628 + $0x3a] sm:$0xff]
        %v2543 = vld [vmem:[%s1628 + $0x4a] sm:$0xff]
        %v2544 = vld [vmem:[%s1628 + $0x52] sm:$0xff]
        %v2545 = vld [vmem:[%s1628 + $0x62] sm:$0xff]
        %v2546 = vld [vmem:[%s1628 + $0x6a] sm:$0xff]
        %v2547 = vld [vmem:[%s1628 + $0x7a] sm:$0xff]
        %v2548 = vld [vmem:[%s1628 + $0x82] sm:$0xff]
        %v2549 = vld [vmem:[%s1628 + $0x92] sm:$0xff]
        %v2550 = vld [vmem:[%s1628 + $0x9a] sm:$0xff]
        %v2551 = vld [vmem:[%s1628 + $0xaa] sm:$0xff]
        %v2552 = vld [vmem:[%s1628 + $0xb2] sm:$0xff]
        %v2553 = vld [vmem:[%s1628 + $0xc2] sm:$0xff]
        %v2554 = vld [vmem:[%s1628 + $0xca] sm:$0xff]
        %v2555 = vld [vmem:[%s1628 + $0xda] sm:$0xff]
        %v2556 = vld [vmem:[%s1628 + $0xe2] sm:$0xff]
        %v2557 = vld [vmem:[%s1628 + $0xf2] sm:$0xff]
        %v2558 = vld [vmem:[%s1628 + $0xfa] sm:$0xff]
        %v2559 = vld [vmem:[%s1628 + $0x10a] sm:$0xff]
        %v2560 = vld [vmem:[%s1628 + $0x112] sm:$0xff]
        %v2561 = vld [vmem:[%s1628 + $0x122] sm:$0xff]
        %v2562 = vld [vmem:[%s1628 + $0x12a] sm:$0xff]
        %v2563 = vld [vmem:[%s1628 + $0x13a] sm:$0xff]
        %v2564 = vld [vmem:[%s1628 + $0x142] sm:$0xff]
        %v2565 = vld [vmem:[%s1628 + $0x152] sm:$0xff]
        %v2566 = vld [vmem:[%s1628 + $0x15a] sm:$0xff]
        %v2567 = vld [vmem:[%s1628 + $0x16a] sm:$0xff]
        %v2568 = vld [vmem:[%s1628 + $0x172] sm:$0xff]
        %s2569 = scalar_lea.vmem %s1, 20
        %v2570 = vld [vmem:[%s2569] sm:$0xf]
        %v2571 = vld [vmem:[#allocation3] sm:$0xff]
        %v2572 = vld [vmem:[#allocation3 + $0x8] sm:$0xff]
        %v2573 = vld [vmem:[#allocation3 + $0x10] sm:$0xff]
        %v2574 = vld [vmem:[#allocation3 + $0x18] sm:$0xff]
        %v2575 = vld [vmem:[#allocation3 + $0x20] sm:$0xff]
        %v2576 = vld [vmem:[#allocation3 + $0x28] sm:$0xff]
        %v2577 = vld [vmem:[#allocation3 + $0x30] sm:$0xff]
        %v2578 = vld [vmem:[#allocation3 + $0x38] sm:$0xff]
        %v2579 = vld [vmem:[#allocation3 + $0x40] sm:$0xff]
        %v2580 = vld [vmem:[#allocation3 + $0x48] sm:$0xff]
        %v2581 = vld [vmem:[#allocation3 + $0x50] sm:$0xff]
        %v2582 = vld [vmem:[#allocation3 + $0x58] sm:$0xff]
        %v2583 = vld [vmem:[#allocation3 + $0x60] sm:$0xff]
        %v2584 = vld [vmem:[#allocation3 + $0x68] sm:$0xff]
        %v2585 = vld [vmem:[#allocation3 + $0x70] sm:$0xff]
        %v2586 = vld [vmem:[#allocation3 + $0x78] sm:$0xff]
        %v2587 = vld [vmem:[#allocation3 + $0x80] sm:$0xff]
        %v2588 = vld [vmem:[#allocation3 + $0x88] sm:$0xff]
        %v2589 = vld [vmem:[#allocation3 + $0x90] sm:$0xff]
        %v2590 = vld [vmem:[#allocation3 + $0x98] sm:$0xff]
        %v2591 = vld [vmem:[#allocation3 + $0xa0] sm:$0xff]
        %v2592 = vld [vmem:[#allocation3 + $0xa8] sm:$0xff]
        %v2593 = vld [vmem:[#allocation3 + $0xb0] sm:$0xff]
        %v2594 = vld [vmem:[#allocation3 + $0xb8] sm:$0xff]
        %v2595 = vld [vmem:[#allocation3 + $0xc0] sm:$0xff]
        %v2596 = vld [vmem:[#allocation3 + $0xc8] sm:$0xff]
        %v2597 = vld [vmem:[#allocation3 + $0xd0] sm:$0xff]
        %v2598 = vld [vmem:[#allocation3 + $0xd8] sm:$0xff]
        %v2599 = vld [vmem:[#allocation3 + $0xe0] sm:$0xff]
        %v2600 = vld [vmem:[#allocation3 + $0xe8] sm:$0xff]
        %v2601 = vld [vmem:[#allocation3 + $0xf0] sm:$0xff]
        %v2602 = vld [vmem:[#allocation3 + $0xf8] sm:$0xff]
        %v2604 = vsel %vm330, %v2537, 0
        %v2607 = vsel %vm330, %v2538, 0
        %v2610 = vsel %vm330, %v2539, 0
        %v2613 = vsel %vm330, %v2540, 0
        %v2616 = vsel %vm330, %v2541, 0
        %v2619 = vsel %vm330, %v2542, 0
        %v2622 = vsel %vm330, %v2543, 0
        %v2625 = vsel %vm330, %v2544, 0
        %v2628 = vsel %vm330, %v2545, 0
        %v2631 = vsel %vm330, %v2546, 0
        %v2634 = vsel %vm330, %v2547, 0
        %v2637 = vsel %vm330, %v2548, 0
        %v2640 = vsel %vm330, %v2549, 0
        %v2643 = vsel %vm330, %v2550, 0
        %v2646 = vsel %vm330, %v2551, 0
        %v2649 = vsel %vm330, %v2552, 0
        %v2652 = vsel %vm330, %v2553, 0
        %v2655 = vsel %vm330, %v2554, 0
        %v2658 = vsel %vm330, %v2555, 0
        %v2661 = vsel %vm330, %v2556, 0
        %v2664 = vsel %vm330, %v2557, 0
        %v2667 = vsel %vm330, %v2558, 0
        %v2670 = vsel %vm330, %v2559, 0
        %v2673 = vsel %vm330, %v2560, 0
        %v2676 = vsel %vm330, %v2561, 0
        %v2679 = vsel %vm330, %v2562, 0
        %v2682 = vsel %vm330, %v2563, 0
        %v2685 = vsel %vm330, %v2564, 0
        %v2688 = vsel %vm330, %v2565, 0
        %v2691 = vsel %vm330, %v2566, 0
        %v2694 = vsel %vm330, %v2567, 0
        %v2697 = vsel %vm330, %v2568, 0
        %v2700 = vsel %vm427, %v2570, 0
        %2702 = vmatprep.subr.mxu0 0.0
        %2703 = vmatpush1.msra.mxu0 0.0
        %2704 = vmatprep.subr.mxu0 0.0
        %2705 = vmatpush1.msra.mxu0 0.0
        %2706 = vmatprep.subr.mxu0 0.0
        %2707 = vmatpush1.msra.mxu0 0.0
        %2708 = vmatprep.subr.mxu0 0.0
        %2709 = vmatpush1.msra.mxu0 0.0
        %2710 = vmatprep.subr.mxu0 0.0
        %2711 = vmatpush1.msra.mxu0 0.0
        %2712 = vmatprep.subr.mxu0 0.0
        %2713 = vmatpush1.msra.mxu0 0.0
        %2714 = vmatprep.subr.mxu0 0.0
        %2715 = vmatpush1.msra.mxu0 0.0
        %2716 = vmatprep.subr.mxu0 0.0
        %2717 = vmatpush1.msra.mxu0 0.0
        %2718 = vmatprep.subr.mxu0 0.0
        %2719 = vmatpush1.msra.mxu0 0.0
        %2720 = vmatprep.subr.mxu0 0.0
        %2721 = vmatpush1.msra.mxu0 0.0
        %2722 = vmatprep.subr.mxu0 0.0
        %2723 = vmatpush1.msra.mxu0 0.0
        %2724 = vmatprep.subr.mxu0 0.0
        %2725 = vmatpush1.msra.mxu0 0.0
        %2726 = vmatprep.subr.mxu0 0.0
        %2727 = vmatpush1.msra.mxu0 0.0
        %2728 = vmatprep.subr.mxu0 0.0
        %2729 = vmatpush1.msra.mxu0 0.0
        %2730 = vmatprep.subr.mxu0 0.0
        %2731 = vmatpush1.msra.mxu0 0.0
        %2732 = vmatprep.subr.mxu0 0.0
        %2733 = vmatpush1.msra.mxu0 %v2700
        %2734 = vmatprep.subr.mxu0 0.0
        %2735 = vmatpush2.msra.mxu0 0.0
        %2736 = vmatprep.subr.mxu0 0.0
        %2737 = vmatpush2.msra.mxu0 0.0
        %2738 = vmatprep.subr.mxu0 0.0
        %2739 = vmatpush2.msra.mxu0 0.0
        %2740 = vmatprep.subr.mxu0 0.0
        %2741 = vmatpush2.msra.mxu0 0.0
        %2742 = vmatprep.subr.mxu0 0.0
        %2743 = vmatpush2.msra.mxu0 0.0
        %2744 = vmatprep.subr.mxu0 0.0
        %2745 = vmatpush2.msra.mxu0 0.0
        %2746 = vmatprep.subr.mxu0 0.0
        %2747 = vmatpush2.msra.mxu0 0.0
        %2748 = vmatprep.subr.mxu0 0.0
        %2749 = vmatpush2.msra.mxu0 0.0
        %2750 = vmatprep.subr.mxu0 0.0
        %2751 = vmatpush2.msra.mxu0 0.0
        %2752 = vmatprep.subr.mxu0 0.0
        %2753 = vmatpush2.msra.mxu0 0.0
        %2754 = vmatprep.subr.mxu0 0.0
        %2755 = vmatpush2.msra.mxu0 0.0
        %2756 = vmatprep.subr.mxu0 0.0
        %2757 = vmatpush2.msra.mxu0 0.0
        %2758 = vmatprep.subr.mxu0 0.0
        %2759 = vmatpush2.msra.mxu0 0.0
        %2760 = vmatprep.subr.mxu0 0.0
        %2761 = vmatpush2.msra.mxu0 0.0
        %2762 = vmatprep.subr.mxu0 0.0
        %2763 = vmatpush2.msra.mxu0 0.0
        %2764 = vmatprep.subr.mxu0 0.0
        %2765 = vmatpush2.msra.mxu0 0.0
        %2766 = vmatprep.mubr.f32.mxu0 0.0
        %2767 = vmatmul.mubr.f32.gmra.mxu0 %v2604
        %v2768 = vpop.f32.mrf.mxu0
        %v2769 = vadd.f32 0.0, %v2768
        %v2770 = vpop.f32.mrf.mxu0
        %2771 = vmatprep.mubr.f32.mxu0 0.0
        %2772 = vmatmul.mubr.f32.gmra.mxu0 %v2607
        %v2773 = vpop.f32.mrf.mxu0
        %v2774 = vadd.f32 0.0, %v2773
        %v2775 = vpop.f32.mrf.mxu0
        %2776 = vmatprep.mubr.f32.mxu0 0.0
        %2777 = vmatmul.mubr.f32.gmra.mxu0 %v2610
        %v2778 = vpop.f32.mrf.mxu0
        %v2779 = vadd.f32 0.0, %v2778
        %v2780 = vpop.f32.mrf.mxu0
        %2781 = vmatprep.mubr.f32.mxu0 0.0
        %2782 = vmatmul.mubr.f32.gmra.mxu0 %v2613
        %v2783 = vpop.f32.mrf.mxu0
        %v2784 = vadd.f32 0.0, %v2783
        %v2785 = vpop.f32.mrf.mxu0
        %2786 = vmatprep.mubr.f32.mxu0 0.0
        %2787 = vmatmul.mubr.f32.gmra.mxu0 %v2616
        %v2788 = vpop.f32.mrf.mxu0
        %v2789 = vadd.f32 0.0, %v2788
        %v2790 = vpop.f32.mrf.mxu0
        %2791 = vmatprep.mubr.f32.mxu0 0.0
        %2792 = vmatmul.mubr.f32.gmra.mxu0 %v2619
        %v2793 = vpop.f32.mrf.mxu0
        %v2794 = vadd.f32 0.0, %v2793
        %v2795 = vpop.f32.mrf.mxu0
        %2796 = vmatprep.mubr.f32.mxu0 0.0
        %2797 = vmatmul.mubr.f32.gmra.mxu0 %v2622
        %v2798 = vpop.f32.mrf.mxu0
        %v2799 = vadd.f32 0.0, %v2798
        %v2800 = vpop.f32.mrf.mxu0
        %2801 = vmatprep.mubr.f32.mxu0 0.0
        %2802 = vmatmul.mubr.f32.gmra.mxu0 %v2625
        %v2803 = vpop.f32.mrf.mxu0
        %v2804 = vadd.f32 0.0, %v2803
        %v2805 = vpop.f32.mrf.mxu0
        %2806 = vmatprep.mubr.f32.mxu0 0.0
        %2807 = vmatmul.mubr.f32.gmra.mxu0 %v2628
        %v2808 = vpop.f32.mrf.mxu0
        %v2809 = vadd.f32 0.0, %v2808
        %v2810 = vpop.f32.mrf.mxu0
        %2811 = vmatprep.mubr.f32.mxu0 0.0
        %2812 = vmatmul.mubr.f32.gmra.mxu0 %v2631
        %v2813 = vpop.f32.mrf.mxu0
        %v2814 = vadd.f32 0.0, %v2813
        %v2815 = vpop.f32.mrf.mxu0
        %2816 = vmatprep.mubr.f32.mxu0 0.0
        %2817 = vmatmul.mubr.f32.gmra.mxu0 %v2634
        %v2818 = vpop.f32.mrf.mxu0
        %v2819 = vadd.f32 0.0, %v2818
        %v2820 = vpop.f32.mrf.mxu0
        %2821 = vmatprep.mubr.f32.mxu0 0.0
        %2822 = vmatmul.mubr.f32.gmra.mxu0 %v2637
        %v2823 = vpop.f32.mrf.mxu0
        %v2824 = vadd.f32 0.0, %v2823
        %v2825 = vpop.f32.mrf.mxu0
        %2826 = vmatprep.mubr.f32.mxu0 0.0
        %2827 = vmatmul.mubr.f32.gmra.mxu0 %v2640
        %v2828 = vpop.f32.mrf.mxu0
        %v2829 = vadd.f32 0.0, %v2828
        %v2830 = vpop.f32.mrf.mxu0
        %2831 = vmatprep.mubr.f32.mxu0 0.0
        %2832 = vmatmul.mubr.f32.gmra.mxu0 %v2643
        %v2833 = vpop.f32.mrf.mxu0
        %v2834 = vadd.f32 0.0, %v2833
        %v2835 = vpop.f32.mrf.mxu0
        %2836 = vmatprep.mubr.f32.mxu0 0.0
        %2837 = vmatmul.mubr.f32.gmra.mxu0 %v2646
        %v2838 = vpop.f32.mrf.mxu0
        %v2839 = vadd.f32 0.0, %v2838
        %v2840 = vpop.f32.mrf.mxu0
        %2841 = vmatprep.mubr.f32.mxu0 0.0
        %2842 = vmatmul.mubr.f32.gmra.mxu0 %v2649
        %v2843 = vpop.f32.mrf.mxu0
        %v2844 = vadd.f32 0.0, %v2843
        %v2845 = vpop.f32.mrf.mxu0
        %2846 = vmatprep.mubr.f32.mxu0 0.0
        %2847 = vmatmul.mubr.f32.gmra.mxu0 %v2652
        %v2848 = vpop.f32.mrf.mxu0
        %v2849 = vadd.f32 0.0, %v2848
        %v2850 = vpop.f32.mrf.mxu0
        %2851 = vmatprep.mubr.f32.mxu0 0.0
        %2852 = vmatmul.mubr.f32.gmra.mxu0 %v2655
        %v2853 = vpop.f32.mrf.mxu0
        %v2854 = vadd.f32 0.0, %v2853
        %v2855 = vpop.f32.mrf.mxu0
        %2856 = vmatprep.mubr.f32.mxu0 0.0
        %2857 = vmatmul.mubr.f32.gmra.mxu0 %v2658
        %v2858 = vpop.f32.mrf.mxu0
        %v2859 = vadd.f32 0.0, %v2858
        %v2860 = vpop.f32.mrf.mxu0
        %2861 = vmatprep.mubr.f32.mxu0 0.0
        %2862 = vmatmul.mubr.f32.gmra.mxu0 %v2661
        %v2863 = vpop.f32.mrf.mxu0
        %v2864 = vadd.f32 0.0, %v2863
        %v2865 = vpop.f32.mrf.mxu0
        %2866 = vmatprep.mubr.f32.mxu0 0.0
        %2867 = vmatmul.mubr.f32.gmra.mxu0 %v2664
        %v2868 = vpop.f32.mrf.mxu0
        %v2869 = vadd.f32 0.0, %v2868
        %v2870 = vpop.f32.mrf.mxu0
        %2871 = vmatprep.mubr.f32.mxu0 0.0
        %2872 = vmatmul.mubr.f32.gmra.mxu0 %v2667
        %v2873 = vpop.f32.mrf.mxu0
        %v2874 = vadd.f32 0.0, %v2873
        %v2875 = vpop.f32.mrf.mxu0
        %2876 = vmatprep.mubr.f32.mxu0 0.0
        %2877 = vmatmul.mubr.f32.gmra.mxu0 %v2670
        %v2878 = vpop.f32.mrf.mxu0
        %v2879 = vadd.f32 0.0, %v2878
        %v2880 = vpop.f32.mrf.mxu0
        %2881 = vmatprep.mubr.f32.mxu0 0.0
        %2882 = vmatmul.mubr.f32.gmra.mxu0 %v2673
        %v2883 = vpop.f32.mrf.mxu0
        %v2884 = vadd.f32 0.0, %v2883
        %v2885 = vpop.f32.mrf.mxu0
        %2886 = vmatprep.mubr.f32.mxu0 0.0
        %2887 = vmatmul.mubr.f32.gmra.mxu0 %v2676
        %v2888 = vpop.f32.mrf.mxu0
        %v2889 = vadd.f32 0.0, %v2888
        %v2890 = vpop.f32.mrf.mxu0
        %2891 = vmatprep.mubr.f32.mxu0 0.0
        %2892 = vmatmul.mubr.f32.gmra.mxu0 %v2679
        %v2893 = vpop.f32.mrf.mxu0
        %v2894 = vadd.f32 0.0, %v2893
        %v2895 = vpop.f32.mrf.mxu0
        %2896 = vmatprep.mubr.f32.mxu0 0.0
        %2897 = vmatmul.mubr.f32.gmra.mxu0 %v2682
        %v2898 = vpop.f32.mrf.mxu0
        %v2899 = vadd.f32 0.0, %v2898
        %v2900 = vpop.f32.mrf.mxu0
        %2901 = vmatprep.mubr.f32.mxu0 0.0
        %2902 = vmatmul.mubr.f32.gmra.mxu0 %v2685
        %v2903 = vpop.f32.mrf.mxu0
        %v2904 = vadd.f32 0.0, %v2903
        %v2905 = vpop.f32.mrf.mxu0
        %2906 = vmatprep.mubr.f32.mxu0 0.0
        %2907 = vmatmul.mubr.f32.gmra.mxu0 %v2688
        %v2908 = vpop.f32.mrf.mxu0
        %v2909 = vadd.f32 0.0, %v2908
        %v2910 = vpop.f32.mrf.mxu0
        %2911 = vmatprep.mubr.f32.mxu0 0.0
        %2912 = vmatmul.mubr.f32.gmra.mxu0 %v2691
        %v2913 = vpop.f32.mrf.mxu0
        %v2914 = vadd.f32 0.0, %v2913
        %v2915 = vpop.f32.mrf.mxu0
        %2916 = vmatprep.mubr.f32.mxu0 0.0
        %2917 = vmatmul.mubr.f32.gmra.mxu0 %v2694
        %v2918 = vpop.f32.mrf.mxu0
        %v2919 = vadd.f32 0.0, %v2918
        %v2920 = vpop.f32.mrf.mxu0
        %2921 = vmatprep.mubr.f32.mxu0 0.0
        %2922 = vmatmul.mubr.f32.gmra.mxu0 %v2697
        %v2923 = vpop.f32.mrf.mxu0
        %v2924 = vadd.f32 0.0, %v2923
        %v2925 = vpop.f32.mrf.mxu0
        %2926 = vdwg.mxu0
        %v2927 = vadd.f32 %v2571, %v2769
        %v2928 = vadd.f32 %v2572, %v2774
        %v2929 = vadd.f32 %v2573, %v2779
        %v2930 = vadd.f32 %v2574, %v2784
        %v2931 = vadd.f32 %v2575, %v2789
        %v2932 = vadd.f32 %v2576, %v2794
        %v2933 = vadd.f32 %v2577, %v2799
        %v2934 = vadd.f32 %v2578, %v2804
        %v2935 = vadd.f32 %v2579, %v2809
        %v2936 = vadd.f32 %v2580, %v2814
        %v2937 = vadd.f32 %v2581, %v2819
        %v2938 = vadd.f32 %v2582, %v2824
        %v2939 = vadd.f32 %v2583, %v2829
        %v2940 = vadd.f32 %v2584, %v2834
        %v2941 = vadd.f32 %v2585, %v2839
        %v2942 = vadd.f32 %v2586, %v2844
        %v2943 = vadd.f32 %v2587, %v2849
        %v2944 = vadd.f32 %v2588, %v2854
        %v2945 = vadd.f32 %v2589, %v2859
        %v2946 = vadd.f32 %v2590, %v2864
        %v2947 = vadd.f32 %v2591, %v2869
        %v2948 = vadd.f32 %v2592, %v2874
        %v2949 = vadd.f32 %v2593, %v2879
        %v2950 = vadd.f32 %v2594, %v2884
        %v2951 = vadd.f32 %v2595, %v2889
        %v2952 = vadd.f32 %v2596, %v2894
        %v2953 = vadd.f32 %v2597, %v2899
        %v2954 = vadd.f32 %v2598, %v2904
        %v2955 = vadd.f32 %v2599, %v2909
        %v2956 = vadd.f32 %v2600, %v2914
        %v2957 = vadd.f32 %v2601, %v2919
        %v2958 = vadd.f32 %v2602, %v2924
        %2959 = vst.msk [vmem:[#allocation3] sm:$0xff] %vm232, %v2927
        %2960 = vst.msk [vmem:[#allocation3 + $0x8] sm:$0xff] %vm232, %v2928
        %2961 = vst.msk [vmem:[#allocation3 + $0x10] sm:$0xff] %vm232, %v2929
        %2962 = vst.msk [vmem:[#allocation3 + $0x18] sm:$0xff] %vm232, %v2930
        %2963 = vst.msk [vmem:[#allocation3 + $0x20] sm:$0xff] %vm232, %v2931
        %2964 = vst.msk [vmem:[#allocation3 + $0x28] sm:$0xff] %vm232, %v2932
        %2965 = vst.msk [vmem:[#allocation3 + $0x30] sm:$0xff] %vm232, %v2933
        %2966 = vst.msk [vmem:[#allocation3 + $0x38] sm:$0xff] %vm232, %v2934
        %2967 = vst.msk [vmem:[#allocation3 + $0x40] sm:$0xff] %vm232, %v2935
        %2968 = vst.msk [vmem:[#allocation3 + $0x48] sm:$0xff] %vm232, %v2936
        %2969 = vst.msk [vmem:[#allocation3 + $0x50] sm:$0xff] %vm232, %v2937
        %2970 = vst.msk [vmem:[#allocation3 + $0x58] sm:$0xff] %vm232, %v2938
        %2971 = vst.msk [vmem:[#allocation3 + $0x60] sm:$0xff] %vm232, %v2939
        %2972 = vst.msk [vmem:[#allocation3 + $0x68] sm:$0xff] %vm232, %v2940
        %2973 = vst.msk [vmem:[#allocation3 + $0x70] sm:$0xff] %vm232, %v2941
        %2974 = vst.msk [vmem:[#allocation3 + $0x78] sm:$0xff] %vm232, %v2942
        %2975 = vst.msk [vmem:[#allocation3 + $0x80] sm:$0xff] %vm232, %v2943
        %2976 = vst.msk [vmem:[#allocation3 + $0x88] sm:$0xff] %vm232, %v2944
        %2977 = vst.msk [vmem:[#allocation3 + $0x90] sm:$0xff] %vm232, %v2945
        %2978 = vst.msk [vmem:[#allocation3 + $0x98] sm:$0xff] %vm232, %v2946
        %2979 = vst.msk [vmem:[#allocation3 + $0xa0] sm:$0xff] %vm232, %v2947
        %2980 = vst.msk [vmem:[#allocation3 + $0xa8] sm:$0xff] %vm232, %v2948
        %2981 = vst.msk [vmem:[#allocation3 + $0xb0] sm:$0xff] %vm232, %v2949
        %2982 = vst.msk [vmem:[#allocation3 + $0xb8] sm:$0xff] %vm232, %v2950
        %2983 = vst.msk [vmem:[#allocation3 + $0xc0] sm:$0xff] %vm232, %v2951
        %2984 = vst.msk [vmem:[#allocation3 + $0xc8] sm:$0xff] %vm232, %v2952
        %2985 = vst.msk [vmem:[#allocation3 + $0xd0] sm:$0xff] %vm232, %v2953
        %2986 = vst.msk [vmem:[#allocation3 + $0xd8] sm:$0xff] %vm232, %v2954
        %2987 = vst.msk [vmem:[#allocation3 + $0xe0] sm:$0xff] %vm232, %v2955
        %2988 = vst.msk [vmem:[#allocation3 + $0xe8] sm:$0xff] %vm232, %v2956
        %2989 = vst.msk [vmem:[#allocation3 + $0xf0] sm:$0xff] %vm232, %v2957
        %2990 = vst.msk [vmem:[#allocation3 + $0xf8] sm:$0xff] %vm232, %v2958
        %s2991 = scalar_lea.vmem %s224, 48
        %v2992 = vld [vmem:[%s2991] sm:$0xff]
        %v2993 = vld [vmem:[%s2991 + $0x8] sm:$0xff]
        %v2994 = vld [vmem:[%s2991 + $0x18] sm:$0xff]
        %v2995 = vld [vmem:[%s2991 + $0x20] sm:$0xff]
        %v2996 = vld [vmem:[%s2991 + $0x30] sm:$0xff]
        %v2997 = vld [vmem:[%s2991 + $0x38] sm:$0xff]
        %v2998 = vld [vmem:[%s2991 + $0x48] sm:$0xff]
        %v2999 = vld [vmem:[%s2991 + $0x50] sm:$0xff]
        %v3000 = vld [vmem:[%s2991 + $0x60] sm:$0xff]
        %v3001 = vld [vmem:[%s2991 + $0x68] sm:$0xff]
        %v3002 = vld [vmem:[%s2991 + $0x78] sm:$0xff]
        %v3003 = vld [vmem:[%s2991 + $0x80] sm:$0xff]
        %v3004 = vld [vmem:[%s2991 + $0x90] sm:$0xff]
        %v3005 = vld [vmem:[%s2991 + $0x98] sm:$0xff]
        %v3006 = vld [vmem:[%s2991 + $0xa8] sm:$0xff]
        %v3007 = vld [vmem:[%s2991 + $0xb0] sm:$0xff]
        %v3008 = vld [vmem:[%s2991 + $0xc0] sm:$0xff]
        %v3009 = vld [vmem:[%s2991 + $0xc8] sm:$0xff]
        %v3010 = vld [vmem:[%s2991 + $0xd8] sm:$0xff]
        %v3011 = vld [vmem:[%s2991 + $0xe0] sm:$0xff]
        %v3012 = vld [vmem:[%s2991 + $0xf0] sm:$0xff]
        %v3013 = vld [vmem:[%s2991 + $0xf8] sm:$0xff]
        %v3014 = vld [vmem:[%s2991 + $0x108] sm:$0xff]
        %v3015 = vld [vmem:[%s2991 + $0x110] sm:$0xff]
        %v3016 = vld [vmem:[%s2991 + $0x120] sm:$0xff]
        %v3017 = vld [vmem:[%s2991 + $0x128] sm:$0xff]
        %v3018 = vld [vmem:[%s2991 + $0x138] sm:$0xff]
        %v3019 = vld [vmem:[%s2991 + $0x140] sm:$0xff]
        %v3020 = vld [vmem:[%s2991 + $0x150] sm:$0xff]
        %v3021 = vld [vmem:[%s2991 + $0x158] sm:$0xff]
        %v3022 = vld [vmem:[%s2991 + $0x168] sm:$0xff]
        %v3023 = vld [vmem:[%s2991 + $0x170] sm:$0xff]
        %s3024 = scalar_lea.vmem %s1, 24
        %v3025 = vld [vmem:[%s3024] sm:$0xf]
        %v3026 = vld [vmem:[#allocation3] sm:$0xff]
        %v3027 = vld [vmem:[#allocation3 + $0x8] sm:$0xff]
        %v3028 = vld [vmem:[#allocation3 + $0x10] sm:$0xff]
        %v3029 = vld [vmem:[#allocation3 + $0x18] sm:$0xff]
        %v3030 = vld [vmem:[#allocation3 + $0x20] sm:$0xff]
        %v3031 = vld [vmem:[#allocation3 + $0x28] sm:$0xff]
        %v3032 = vld [vmem:[#allocation3 + $0x30] sm:$0xff]
        %v3033 = vld [vmem:[#allocation3 + $0x38] sm:$0xff]
        %v3034 = vld [vmem:[#allocation3 + $0x40] sm:$0xff]
        %v3035 = vld [vmem:[#allocation3 + $0x48] sm:$0xff]
        %v3036 = vld [vmem:[#allocation3 + $0x50] sm:$0xff]
        %v3037 = vld [vmem:[#allocation3 + $0x58] sm:$0xff]
        %v3038 = vld [vmem:[#allocation3 + $0x60] sm:$0xff]
        %v3039 = vld [vmem:[#allocation3 + $0x68] sm:$0xff]
        %v3040 = vld [vmem:[#allocation3 + $0x70] sm:$0xff]
        %v3041 = vld [vmem:[#allocation3 + $0x78] sm:$0xff]
        %v3042 = vld [vmem:[#allocation3 + $0x80] sm:$0xff]
        %v3043 = vld [vmem:[#allocation3 + $0x88] sm:$0xff]
        %v3044 = vld [vmem:[#allocation3 + $0x90] sm:$0xff]
        %v3045 = vld [vmem:[#allocation3 + $0x98] sm:$0xff]
        %v3046 = vld [vmem:[#allocation3 + $0xa0] sm:$0xff]
        %v3047 = vld [vmem:[#allocation3 + $0xa8] sm:$0xff]
        %v3048 = vld [vmem:[#allocation3 + $0xb0] sm:$0xff]
        %v3049 = vld [vmem:[#allocation3 + $0xb8] sm:$0xff]
        %v3050 = vld [vmem:[#allocation3 + $0xc0] sm:$0xff]
        %v3051 = vld [vmem:[#allocation3 + $0xc8] sm:$0xff]
        %v3052 = vld [vmem:[#allocation3 + $0xd0] sm:$0xff]
        %v3053 = vld [vmem:[#allocation3 + $0xd8] sm:$0xff]
        %v3054 = vld [vmem:[#allocation3 + $0xe0] sm:$0xff]
        %v3055 = vld [vmem:[#allocation3 + $0xe8] sm:$0xff]
        %v3056 = vld [vmem:[#allocation3 + $0xf0] sm:$0xff]
        %v3057 = vld [vmem:[#allocation3 + $0xf8] sm:$0xff]
        %v3059 = vsel %vm330, %v2992, 0
        %v3062 = vsel %vm330, %v2993, 0
        %v3065 = vsel %vm330, %v2994, 0
        %v3068 = vsel %vm330, %v2995, 0
        %v3071 = vsel %vm330, %v2996, 0
        %v3074 = vsel %vm330, %v2997, 0
        %v3077 = vsel %vm330, %v2998, 0
        %v3080 = vsel %vm330, %v2999, 0
        %v3083 = vsel %vm330, %v3000, 0
        %v3086 = vsel %vm330, %v3001, 0
        %v3089 = vsel %vm330, %v3002, 0
        %v3092 = vsel %vm330, %v3003, 0
        %v3095 = vsel %vm330, %v3004, 0
        %v3098 = vsel %vm330, %v3005, 0
        %v3101 = vsel %vm330, %v3006, 0
        %v3104 = vsel %vm330, %v3007, 0
        %v3107 = vsel %vm330, %v3008, 0
        %v3110 = vsel %vm330, %v3009, 0
        %v3113 = vsel %vm330, %v3010, 0
        %v3116 = vsel %vm330, %v3011, 0
        %v3119 = vsel %vm330, %v3012, 0
        %v3122 = vsel %vm330, %v3013, 0
        %v3125 = vsel %vm330, %v3014, 0
        %v3128 = vsel %vm330, %v3015, 0
        %v3131 = vsel %vm330, %v3016, 0
        %v3134 = vsel %vm330, %v3017, 0
        %v3137 = vsel %vm330, %v3018, 0
        %v3140 = vsel %vm330, %v3019, 0
        %v3143 = vsel %vm330, %v3020, 0
        %v3146 = vsel %vm330, %v3021, 0
        %v3149 = vsel %vm330, %v3022, 0
        %v3152 = vsel %vm330, %v3023, 0
        %v3155 = vsel %vm427, %v3025, 0
        %3157 = vmatprep.subr.mxu0 0.0
        %3158 = vmatpush1.msra.mxu0 0.0
        %3159 = vmatprep.subr.mxu0 0.0
        %3160 = vmatpush1.msra.mxu0 0.0
        %3161 = vmatprep.subr.mxu0 0.0
        %3162 = vmatpush1.msra.mxu0 0.0
        %3163 = vmatprep.subr.mxu0 0.0
        %3164 = vmatpush1.msra.mxu0 0.0
        %3165 = vmatprep.subr.mxu0 0.0
        %3166 = vmatpush1.msra.mxu0 0.0
        %3167 = vmatprep.subr.mxu0 0.0
        %3168 = vmatpush1.msra.mxu0 0.0
        %3169 = vmatprep.subr.mxu0 0.0
        %3170 = vmatpush1.msra.mxu0 0.0
        %3171 = vmatprep.subr.mxu0 0.0
        %3172 = vmatpush1.msra.mxu0 0.0
        %3173 = vmatprep.subr.mxu0 0.0
        %3174 = vmatpush1.msra.mxu0 0.0
        %3175 = vmatprep.subr.mxu0 0.0
        %3176 = vmatpush1.msra.mxu0 0.0
        %3177 = vmatprep.subr.mxu0 0.0
        %3178 = vmatpush1.msra.mxu0 0.0
        %3179 = vmatprep.subr.mxu0 0.0
        %3180 = vmatpush1.msra.mxu0 0.0
        %3181 = vmatprep.subr.mxu0 0.0
        %3182 = vmatpush1.msra.mxu0 0.0
        %3183 = vmatprep.subr.mxu0 0.0
        %3184 = vmatpush1.msra.mxu0 0.0
        %3185 = vmatprep.subr.mxu0 0.0
        %3186 = vmatpush1.msra.mxu0 0.0
        %3187 = vmatprep.subr.mxu0 0.0
        %3188 = vmatpush1.msra.mxu0 %v3155
        %3189 = vmatprep.subr.mxu0 0.0
        %3190 = vmatpush2.msra.mxu0 0.0
        %3191 = vmatprep.subr.mxu0 0.0
        %3192 = vmatpush2.msra.mxu0 0.0
        %3193 = vmatprep.subr.mxu0 0.0
        %3194 = vmatpush2.msra.mxu0 0.0
        %3195 = vmatprep.subr.mxu0 0.0
        %3196 = vmatpush2.msra.mxu0 0.0
        %3197 = vmatprep.subr.mxu0 0.0
        %3198 = vmatpush2.msra.mxu0 0.0
        %3199 = vmatprep.subr.mxu0 0.0
        %3200 = vmatpush2.msra.mxu0 0.0
        %3201 = vmatprep.subr.mxu0 0.0
        %3202 = vmatpush2.msra.mxu0 0.0
        %3203 = vmatprep.subr.mxu0 0.0
        %3204 = vmatpush2.msra.mxu0 0.0
        %3205 = vmatprep.subr.mxu0 0.0
        %3206 = vmatpush2.msra.mxu0 0.0
        %3207 = vmatprep.subr.mxu0 0.0
        %3208 = vmatpush2.msra.mxu0 0.0
        %3209 = vmatprep.subr.mxu0 0.0
        %3210 = vmatpush2.msra.mxu0 0.0
        %3211 = vmatprep.subr.mxu0 0.0
        %3212 = vmatpush2.msra.mxu0 0.0
        %3213 = vmatprep.subr.mxu0 0.0
        %3214 = vmatpush2.msra.mxu0 0.0
        %3215 = vmatprep.subr.mxu0 0.0
        %3216 = vmatpush2.msra.mxu0 0.0
        %3217 = vmatprep.subr.mxu0 0.0
        %3218 = vmatpush2.msra.mxu0 0.0
        %3219 = vmatprep.subr.mxu0 0.0
        %3220 = vmatpush2.msra.mxu0 0.0
        %3221 = vmatprep.mubr.f32.mxu0 0.0
        %3222 = vmatmul.mubr.f32.gmra.mxu0 %v3059
        %v3223 = vpop.f32.mrf.mxu0
        %v3224 = vadd.f32 0.0, %v3223
        %v3225 = vpop.f32.mrf.mxu0
        %3226 = vmatprep.mubr.f32.mxu0 0.0
        %3227 = vmatmul.mubr.f32.gmra.mxu0 %v3062
        %v3228 = vpop.f32.mrf.mxu0
        %v3229 = vadd.f32 0.0, %v3228
        %v3230 = vpop.f32.mrf.mxu0
        %3231 = vmatprep.mubr.f32.mxu0 0.0
        %3232 = vmatmul.mubr.f32.gmra.mxu0 %v3065
        %v3233 = vpop.f32.mrf.mxu0
        %v3234 = vadd.f32 0.0, %v3233
        %v3235 = vpop.f32.mrf.mxu0
        %3236 = vmatprep.mubr.f32.mxu0 0.0
        %3237 = vmatmul.mubr.f32.gmra.mxu0 %v3068
        %v3238 = vpop.f32.mrf.mxu0
        %v3239 = vadd.f32 0.0, %v3238
        %v3240 = vpop.f32.mrf.mxu0
        %3241 = vmatprep.mubr.f32.mxu0 0.0
        %3242 = vmatmul.mubr.f32.gmra.mxu0 %v3071
        %v3243 = vpop.f32.mrf.mxu0
        %v3244 = vadd.f32 0.0, %v3243
        %v3245 = vpop.f32.mrf.mxu0
        %3246 = vmatprep.mubr.f32.mxu0 0.0
        %3247 = vmatmul.mubr.f32.gmra.mxu0 %v3074
        %v3248 = vpop.f32.mrf.mxu0
        %v3249 = vadd.f32 0.0, %v3248
        %v3250 = vpop.f32.mrf.mxu0
        %3251 = vmatprep.mubr.f32.mxu0 0.0
        %3252 = vmatmul.mubr.f32.gmra.mxu0 %v3077
        %v3253 = vpop.f32.mrf.mxu0
        %v3254 = vadd.f32 0.0, %v3253
        %v3255 = vpop.f32.mrf.mxu0
        %3256 = vmatprep.mubr.f32.mxu0 0.0
        %3257 = vmatmul.mubr.f32.gmra.mxu0 %v3080
        %v3258 = vpop.f32.mrf.mxu0
        %v3259 = vadd.f32 0.0, %v3258
        %v3260 = vpop.f32.mrf.mxu0
        %3261 = vmatprep.mubr.f32.mxu0 0.0
        %3262 = vmatmul.mubr.f32.gmra.mxu0 %v3083
        %v3263 = vpop.f32.mrf.mxu0
        %v3264 = vadd.f32 0.0, %v3263
        %v3265 = vpop.f32.mrf.mxu0
        %3266 = vmatprep.mubr.f32.mxu0 0.0
        %3267 = vmatmul.mubr.f32.gmra.mxu0 %v3086
        %v3268 = vpop.f32.mrf.mxu0
        %v3269 = vadd.f32 0.0, %v3268
        %v3270 = vpop.f32.mrf.mxu0
        %3271 = vmatprep.mubr.f32.mxu0 0.0
        %3272 = vmatmul.mubr.f32.gmra.mxu0 %v3089
        %v3273 = vpop.f32.mrf.mxu0
        %v3274 = vadd.f32 0.0, %v3273
        %v3275 = vpop.f32.mrf.mxu0
        %3276 = vmatprep.mubr.f32.mxu0 0.0
        %3277 = vmatmul.mubr.f32.gmra.mxu0 %v3092
        %v3278 = vpop.f32.mrf.mxu0
        %v3279 = vadd.f32 0.0, %v3278
        %v3280 = vpop.f32.mrf.mxu0
        %3281 = vmatprep.mubr.f32.mxu0 0.0
        %3282 = vmatmul.mubr.f32.gmra.mxu0 %v3095
        %v3283 = vpop.f32.mrf.mxu0
        %v3284 = vadd.f32 0.0, %v3283
        %v3285 = vpop.f32.mrf.mxu0
        %3286 = vmatprep.mubr.f32.mxu0 0.0
        %3287 = vmatmul.mubr.f32.gmra.mxu0 %v3098
        %v3288 = vpop.f32.mrf.mxu0
        %v3289 = vadd.f32 0.0, %v3288
        %v3290 = vpop.f32.mrf.mxu0
        %3291 = vmatprep.mubr.f32.mxu0 0.0
        %3292 = vmatmul.mubr.f32.gmra.mxu0 %v3101
        %v3293 = vpop.f32.mrf.mxu0
        %v3294 = vadd.f32 0.0, %v3293
        %v3295 = vpop.f32.mrf.mxu0
        %3296 = vmatprep.mubr.f32.mxu0 0.0
        %3297 = vmatmul.mubr.f32.gmra.mxu0 %v3104
        %v3298 = vpop.f32.mrf.mxu0
        %v3299 = vadd.f32 0.0, %v3298
        %v3300 = vpop.f32.mrf.mxu0
        %3301 = vmatprep.mubr.f32.mxu0 0.0
        %3302 = vmatmul.mubr.f32.gmra.mxu0 %v3107
        %v3303 = vpop.f32.mrf.mxu0
        %v3304 = vadd.f32 0.0, %v3303
        %v3305 = vpop.f32.mrf.mxu0
        %3306 = vmatprep.mubr.f32.mxu0 0.0
        %3307 = vmatmul.mubr.f32.gmra.mxu0 %v3110
        %v3308 = vpop.f32.mrf.mxu0
        %v3309 = vadd.f32 0.0, %v3308
        %v3310 = vpop.f32.mrf.mxu0
        %3311 = vmatprep.mubr.f32.mxu0 0.0
        %3312 = vmatmul.mubr.f32.gmra.mxu0 %v3113
        %v3313 = vpop.f32.mrf.mxu0
        %v3314 = vadd.f32 0.0, %v3313
        %v3315 = vpop.f32.mrf.mxu0
        %3316 = vmatprep.mubr.f32.mxu0 0.0
        %3317 = vmatmul.mubr.f32.gmra.mxu0 %v3116
        %v3318 = vpop.f32.mrf.mxu0
        %v3319 = vadd.f32 0.0, %v3318
        %v3320 = vpop.f32.mrf.mxu0
        %3321 = vmatprep.mubr.f32.mxu0 0.0
        %3322 = vmatmul.mubr.f32.gmra.mxu0 %v3119
        %v3323 = vpop.f32.mrf.mxu0
        %v3324 = vadd.f32 0.0, %v3323
        %v3325 = vpop.f32.mrf.mxu0
        %3326 = vmatprep.mubr.f32.mxu0 0.0
        %3327 = vmatmul.mubr.f32.gmra.mxu0 %v3122
        %v3328 = vpop.f32.mrf.mxu0
        %v3329 = vadd.f32 0.0, %v3328
        %v3330 = vpop.f32.mrf.mxu0
        %3331 = vmatprep.mubr.f32.mxu0 0.0
        %3332 = vmatmul.mubr.f32.gmra.mxu0 %v3125
        %v3333 = vpop.f32.mrf.mxu0
        %v3334 = vadd.f32 0.0, %v3333
        %v3335 = vpop.f32.mrf.mxu0
        %3336 = vmatprep.mubr.f32.mxu0 0.0
        %3337 = vmatmul.mubr.f32.gmra.mxu0 %v3128
        %v3338 = vpop.f32.mrf.mxu0
        %v3339 = vadd.f32 0.0, %v3338
        %v3340 = vpop.f32.mrf.mxu0
        %3341 = vmatprep.mubr.f32.mxu0 0.0
        %3342 = vmatmul.mubr.f32.gmra.mxu0 %v3131
        %v3343 = vpop.f32.mrf.mxu0
        %v3344 = vadd.f32 0.0, %v3343
        %v3345 = vpop.f32.mrf.mxu0
        %3346 = vmatprep.mubr.f32.mxu0 0.0
        %3347 = vmatmul.mubr.f32.gmra.mxu0 %v3134
        %v3348 = vpop.f32.mrf.mxu0
        %v3349 = vadd.f32 0.0, %v3348
        %v3350 = vpop.f32.mrf.mxu0
        %3351 = vmatprep.mubr.f32.mxu0 0.0
        %3352 = vmatmul.mubr.f32.gmra.mxu0 %v3137
        %v3353 = vpop.f32.mrf.mxu0
        %v3354 = vadd.f32 0.0, %v3353
        %v3355 = vpop.f32.mrf.mxu0
        %3356 = vmatprep.mubr.f32.mxu0 0.0
        %3357 = vmatmul.mubr.f32.gmra.mxu0 %v3140
        %v3358 = vpop.f32.mrf.mxu0
        %v3359 = vadd.f32 0.0, %v3358
        %v3360 = vpop.f32.mrf.mxu0
        %3361 = vmatprep.mubr.f32.mxu0 0.0
        %3362 = vmatmul.mubr.f32.gmra.mxu0 %v3143
        %v3363 = vpop.f32.mrf.mxu0
        %v3364 = vadd.f32 0.0, %v3363
        %v3365 = vpop.f32.mrf.mxu0
        %3366 = vmatprep.mubr.f32.mxu0 0.0
        %3367 = vmatmul.mubr.f32.gmra.mxu0 %v3146
        %v3368 = vpop.f32.mrf.mxu0
        %v3369 = vadd.f32 0.0, %v3368
        %v3370 = vpop.f32.mrf.mxu0
        %3371 = vmatprep.mubr.f32.mxu0 0.0
        %3372 = vmatmul.mubr.f32.gmra.mxu0 %v3149
        %v3373 = vpop.f32.mrf.mxu0
        %v3374 = vadd.f32 0.0, %v3373
        %v3375 = vpop.f32.mrf.mxu0
        %3376 = vmatprep.mubr.f32.mxu0 0.0
        %3377 = vmatmul.mubr.f32.gmra.mxu0 %v3152
        %v3378 = vpop.f32.mrf.mxu0
        %v3379 = vadd.f32 0.0, %v3378
        %v3380 = vpop.f32.mrf.mxu0
        %3381 = vdwg.mxu0
        %v3382 = vadd.f32 %v3026, %v3224
        %v3383 = vadd.f32 %v3027, %v3229
        %v3384 = vadd.f32 %v3028, %v3234
        %v3385 = vadd.f32 %v3029, %v3239
        %v3386 = vadd.f32 %v3030, %v3244
        %v3387 = vadd.f32 %v3031, %v3249
        %v3388 = vadd.f32 %v3032, %v3254
        %v3389 = vadd.f32 %v3033, %v3259
        %v3390 = vadd.f32 %v3034, %v3264
        %v3391 = vadd.f32 %v3035, %v3269
        %v3392 = vadd.f32 %v3036, %v3274
        %v3393 = vadd.f32 %v3037, %v3279
        %v3394 = vadd.f32 %v3038, %v3284
        %v3395 = vadd.f32 %v3039, %v3289
        %v3396 = vadd.f32 %v3040, %v3294
        %v3397 = vadd.f32 %v3041, %v3299
        %v3398 = vadd.f32 %v3042, %v3304
        %v3399 = vadd.f32 %v3043, %v3309
        %v3400 = vadd.f32 %v3044, %v3314
        %v3401 = vadd.f32 %v3045, %v3319
        %v3402 = vadd.f32 %v3046, %v3324
        %v3403 = vadd.f32 %v3047, %v3329
        %v3404 = vadd.f32 %v3048, %v3334
        %v3405 = vadd.f32 %v3049, %v3339
        %v3406 = vadd.f32 %v3050, %v3344
        %v3407 = vadd.f32 %v3051, %v3349
        %v3408 = vadd.f32 %v3052, %v3354
        %v3409 = vadd.f32 %v3053, %v3359
        %v3410 = vadd.f32 %v3054, %v3364
        %v3411 = vadd.f32 %v3055, %v3369
        %v3412 = vadd.f32 %v3056, %v3374
        %v3413 = vadd.f32 %v3057, %v3379
        %3414 = vst.msk [vmem:[#allocation3] sm:$0xff] %vm232, %v3382
        %3415 = vst.msk [vmem:[#allocation3 + $0x8] sm:$0xff] %vm232, %v3383
        %3416 = vst.msk [vmem:[#allocation3 + $0x10] sm:$0xff] %vm232, %v3384
        %3417 = vst.msk [vmem:[#allocation3 + $0x18] sm:$0xff] %vm232, %v3385
        %3418 = vst.msk [vmem:[#allocation3 + $0x20] sm:$0xff] %vm232, %v3386
        %3419 = vst.msk [vmem:[#allocation3 + $0x28] sm:$0xff] %vm232, %v3387
        %3420 = vst.msk [vmem:[#allocation3 + $0x30] sm:$0xff] %vm232, %v3388
        %3421 = vst.msk [vmem:[#allocation3 + $0x38] sm:$0xff] %vm232, %v3389
        %3422 = vst.msk [vmem:[#allocation3 + $0x40] sm:$0xff] %vm232, %v3390
        %3423 = vst.msk [vmem:[#allocation3 + $0x48] sm:$0xff] %vm232, %v3391
        %3424 = vst.msk [vmem:[#allocation3 + $0x50] sm:$0xff] %vm232, %v3392
        %3425 = vst.msk [vmem:[#allocation3 + $0x58] sm:$0xff] %vm232, %v3393
        %3426 = vst.msk [vmem:[#allocation3 + $0x60] sm:$0xff] %vm232, %v3394
        %3427 = vst.msk [vmem:[#allocation3 + $0x68] sm:$0xff] %vm232, %v3395
        %3428 = vst.msk [vmem:[#allocation3 + $0x70] sm:$0xff] %vm232, %v3396
        %3429 = vst.msk [vmem:[#allocation3 + $0x78] sm:$0xff] %vm232, %v3397
        %3430 = vst.msk [vmem:[#allocation3 + $0x80] sm:$0xff] %vm232, %v3398
        %3431 = vst.msk [vmem:[#allocation3 + $0x88] sm:$0xff] %vm232, %v3399
        %3432 = vst.msk [vmem:[#allocation3 + $0x90] sm:$0xff] %vm232, %v3400
        %3433 = vst.msk [vmem:[#allocation3 + $0x98] sm:$0xff] %vm232, %v3401
        %3434 = vst.msk [vmem:[#allocation3 + $0xa0] sm:$0xff] %vm232, %v3402
        %3435 = vst.msk [vmem:[#allocation3 + $0xa8] sm:$0xff] %vm232, %v3403
        %3436 = vst.msk [vmem:[#allocation3 + $0xb0] sm:$0xff] %vm232, %v3404
        %3437 = vst.msk [vmem:[#allocation3 + $0xb8] sm:$0xff] %vm232, %v3405
        %3438 = vst.msk [vmem:[#allocation3 + $0xc0] sm:$0xff] %vm232, %v3406
        %3439 = vst.msk [vmem:[#allocation3 + $0xc8] sm:$0xff] %vm232, %v3407
        %3440 = vst.msk [vmem:[#allocation3 + $0xd0] sm:$0xff] %vm232, %v3408
        %3441 = vst.msk [vmem:[#allocation3 + $0xd8] sm:$0xff] %vm232, %v3409
        %3442 = vst.msk [vmem:[#allocation3 + $0xe0] sm:$0xff] %vm232, %v3410
        %3443 = vst.msk [vmem:[#allocation3 + $0xe8] sm:$0xff] %vm232, %v3411
        %3444 = vst.msk [vmem:[#allocation3 + $0xf0] sm:$0xff] %vm232, %v3412
        %3445 = vst.msk [vmem:[#allocation3 + $0xf8] sm:$0xff] %vm232, %v3413
        %v3446 = vld [vmem:[%s2991 + $0x1] sm:$0xff]
        %v3447 = vld [vmem:[%s2991 + $0x9] sm:$0xff]
        %v3448 = vld [vmem:[%s2991 + $0x19] sm:$0xff]
        %v3449 = vld [vmem:[%s2991 + $0x21] sm:$0xff]
        %v3450 = vld [vmem:[%s2991 + $0x31] sm:$0xff]
        %v3451 = vld [vmem:[%s2991 + $0x39] sm:$0xff]
        %v3452 = vld [vmem:[%s2991 + $0x49] sm:$0xff]
        %v3453 = vld [vmem:[%s2991 + $0x51] sm:$0xff]
        %v3454 = vld [vmem:[%s2991 + $0x61] sm:$0xff]
        %v3455 = vld [vmem:[%s2991 + $0x69] sm:$0xff]
        %v3456 = vld [vmem:[%s2991 + $0x79] sm:$0xff]
        %v3457 = vld [vmem:[%s2991 + $0x81] sm:$0xff]
        %v3458 = vld [vmem:[%s2991 + $0x91] sm:$0xff]
        %v3459 = vld [vmem:[%s2991 + $0x99] sm:$0xff]
        %v3460 = vld [vmem:[%s2991 + $0xa9] sm:$0xff]
        %v3461 = vld [vmem:[%s2991 + $0xb1] sm:$0xff]
        %v3462 = vld [vmem:[%s2991 + $0xc1] sm:$0xff]
        %v3463 = vld [vmem:[%s2991 + $0xc9] sm:$0xff]
        %v3464 = vld [vmem:[%s2991 + $0xd9] sm:$0xff]
        %v3465 = vld [vmem:[%s2991 + $0xe1] sm:$0xff]
        %v3466 = vld [vmem:[%s2991 + $0xf1] sm:$0xff]
        %v3467 = vld [vmem:[%s2991 + $0xf9] sm:$0xff]
        %v3468 = vld [vmem:[%s2991 + $0x109] sm:$0xff]
        %v3469 = vld [vmem:[%s2991 + $0x111] sm:$0xff]
        %v3470 = vld [vmem:[%s2991 + $0x121] sm:$0xff]
        %v3471 = vld [vmem:[%s2991 + $0x129] sm:$0xff]
        %v3472 = vld [vmem:[%s2991 + $0x139] sm:$0xff]
        %v3473 = vld [vmem:[%s2991 + $0x141] sm:$0xff]
        %v3474 = vld [vmem:[%s2991 + $0x151] sm:$0xff]
        %v3475 = vld [vmem:[%s2991 + $0x159] sm:$0xff]
        %v3476 = vld [vmem:[%s2991 + $0x169] sm:$0xff]
        %v3477 = vld [vmem:[%s2991 + $0x171] sm:$0xff]
        %s3478 = scalar_lea.vmem %s1, 28
        %v3479 = vld [vmem:[%s3478] sm:$0xf]
        %v3480 = vld [vmem:[#allocation3] sm:$0xff]
        %v3481 = vld [vmem:[#allocation3 + $0x8] sm:$0xff]
        %v3482 = vld [vmem:[#allocation3 + $0x10] sm:$0xff]
        %v3483 = vld [vmem:[#allocation3 + $0x18] sm:$0xff]
        %v3484 = vld [vmem:[#allocation3 + $0x20] sm:$0xff]
        %v3485 = vld [vmem:[#allocation3 + $0x28] sm:$0xff]
        %v3486 = vld [vmem:[#allocation3 + $0x30] sm:$0xff]
        %v3487 = vld [vmem:[#allocation3 + $0x38] sm:$0xff]
        %v3488 = vld [vmem:[#allocation3 + $0x40] sm:$0xff]
        %v3489 = vld [vmem:[#allocation3 + $0x48] sm:$0xff]
        %v3490 = vld [vmem:[#allocation3 + $0x50] sm:$0xff]
        %v3491 = vld [vmem:[#allocation3 + $0x58] sm:$0xff]
        %v3492 = vld [vmem:[#allocation3 + $0x60] sm:$0xff]
        %v3493 = vld [vmem:[#allocation3 + $0x68] sm:$0xff]
        %v3494 = vld [vmem:[#allocation3 + $0x70] sm:$0xff]
        %v3495 = vld [vmem:[#allocation3 + $0x78] sm:$0xff]
        %v3496 = vld [vmem:[#allocation3 + $0x80] sm:$0xff]
        %v3497 = vld [vmem:[#allocation3 + $0x88] sm:$0xff]
        %v3498 = vld [vmem:[#allocation3 + $0x90] sm:$0xff]
        %v3499 = vld [vmem:[#allocation3 + $0x98] sm:$0xff]
        %v3500 = vld [vmem:[#allocation3 + $0xa0] sm:$0xff]
        %v3501 = vld [vmem:[#allocation3 + $0xa8] sm:$0xff]
        %v3502 = vld [vmem:[#allocation3 + $0xb0] sm:$0xff]
        %v3503 = vld [vmem:[#allocation3 + $0xb8] sm:$0xff]
        %v3504 = vld [vmem:[#allocation3 + $0xc0] sm:$0xff]
        %v3505 = vld [vmem:[#allocation3 + $0xc8] sm:$0xff]
        %v3506 = vld [vmem:[#allocation3 + $0xd0] sm:$0xff]
        %v3507 = vld [vmem:[#allocation3 + $0xd8] sm:$0xff]
        %v3508 = vld [vmem:[#allocation3 + $0xe0] sm:$0xff]
        %v3509 = vld [vmem:[#allocation3 + $0xe8] sm:$0xff]
        %v3510 = vld [vmem:[#allocation3 + $0xf0] sm:$0xff]
        %v3511 = vld [vmem:[#allocation3 + $0xf8] sm:$0xff]
        %v3513 = vsel %vm330, %v3446, 0
        %v3516 = vsel %vm330, %v3447, 0
        %v3519 = vsel %vm330, %v3448, 0
        %v3522 = vsel %vm330, %v3449, 0
        %v3525 = vsel %vm330, %v3450, 0
        %v3528 = vsel %vm330, %v3451, 0
        %v3531 = vsel %vm330, %v3452, 0
        %v3534 = vsel %vm330, %v3453, 0
        %v3537 = vsel %vm330, %v3454, 0
        %v3540 = vsel %vm330, %v3455, 0
        %v3543 = vsel %vm330, %v3456, 0
        %v3546 = vsel %vm330, %v3457, 0
        %v3549 = vsel %vm330, %v3458, 0
        %v3552 = vsel %vm330, %v3459, 0
        %v3555 = vsel %vm330, %v3460, 0
        %v3558 = vsel %vm330, %v3461, 0
        %v3561 = vsel %vm330, %v3462, 0
        %v3564 = vsel %vm330, %v3463, 0
        %v3567 = vsel %vm330, %v3464, 0
        %v3570 = vsel %vm330, %v3465, 0
        %v3573 = vsel %vm330, %v3466, 0
        %v3576 = vsel %vm330, %v3467, 0
        %v3579 = vsel %vm330, %v3468, 0
        %v3582 = vsel %vm330, %v3469, 0
        %v3585 = vsel %vm330, %v3470, 0
        %v3588 = vsel %vm330, %v3471, 0
        %v3591 = vsel %vm330, %v3472, 0
        %v3594 = vsel %vm330, %v3473, 0
        %v3597 = vsel %vm330, %v3474, 0
        %v3600 = vsel %vm330, %v3475, 0
        %v3603 = vsel %vm330, %v3476, 0
        %v3606 = vsel %vm330, %v3477, 0
        %v3609 = vsel %vm427, %v3479, 0
        %3611 = vmatprep.subr.mxu0 0.0
        %3612 = vmatpush1.msra.mxu0 0.0
        %3613 = vmatprep.subr.mxu0 0.0
        %3614 = vmatpush1.msra.mxu0 0.0
        %3615 = vmatprep.subr.mxu0 0.0
        %3616 = vmatpush1.msra.mxu0 0.0
        %3617 = vmatprep.subr.mxu0 0.0
        %3618 = vmatpush1.msra.mxu0 0.0
        %3619 = vmatprep.subr.mxu0 0.0
        %3620 = vmatpush1.msra.mxu0 0.0
        %3621 = vmatprep.subr.mxu0 0.0
        %3622 = vmatpush1.msra.mxu0 0.0
        %3623 = vmatprep.subr.mxu0 0.0
        %3624 = vmatpush1.msra.mxu0 0.0
        %3625 = vmatprep.subr.mxu0 0.0
        %3626 = vmatpush1.msra.mxu0 0.0
        %3627 = vmatprep.subr.mxu0 0.0
        %3628 = vmatpush1.msra.mxu0 0.0
        %3629 = vmatprep.subr.mxu0 0.0
        %3630 = vmatpush1.msra.mxu0 0.0
        %3631 = vmatprep.subr.mxu0 0.0
        %3632 = vmatpush1.msra.mxu0 0.0
        %3633 = vmatprep.subr.mxu0 0.0
        %3634 = vmatpush1.msra.mxu0 0.0
        %3635 = vmatprep.subr.mxu0 0.0
        %3636 = vmatpush1.msra.mxu0 0.0
        %3637 = vmatprep.subr.mxu0 0.0
        %3638 = vmatpush1.msra.mxu0 0.0
        %3639 = vmatprep.subr.mxu0 0.0
        %3640 = vmatpush1.msra.mxu0 0.0
        %3641 = vmatprep.subr.mxu0 0.0
        %3642 = vmatpush1.msra.mxu0 %v3609
        %3643 = vmatprep.subr.mxu0 0.0
        %3644 = vmatpush2.msra.mxu0 0.0
        %3645 = vmatprep.subr.mxu0 0.0
        %3646 = vmatpush2.msra.mxu0 0.0
        %3647 = vmatprep.subr.mxu0 0.0
        %3648 = vmatpush2.msra.mxu0 0.0
        %3649 = vmatprep.subr.mxu0 0.0
        %3650 = vmatpush2.msra.mxu0 0.0
        %3651 = vmatprep.subr.mxu0 0.0
        %3652 = vmatpush2.msra.mxu0 0.0
        %3653 = vmatprep.subr.mxu0 0.0
        %3654 = vmatpush2.msra.mxu0 0.0
        %3655 = vmatprep.subr.mxu0 0.0
        %3656 = vmatpush2.msra.mxu0 0.0
        %3657 = vmatprep.subr.mxu0 0.0
        %3658 = vmatpush2.msra.mxu0 0.0
        %3659 = vmatprep.subr.mxu0 0.0
        %3660 = vmatpush2.msra.mxu0 0.0
        %3661 = vmatprep.subr.mxu0 0.0
        %3662 = vmatpush2.msra.mxu0 0.0
        %3663 = vmatprep.subr.mxu0 0.0
        %3664 = vmatpush2.msra.mxu0 0.0
        %3665 = vmatprep.subr.mxu0 0.0
        %3666 = vmatpush2.msra.mxu0 0.0
        %3667 = vmatprep.subr.mxu0 0.0
        %3668 = vmatpush2.msra.mxu0 0.0
        %3669 = vmatprep.subr.mxu0 0.0
        %3670 = vmatpush2.msra.mxu0 0.0
        %3671 = vmatprep.subr.mxu0 0.0
        %3672 = vmatpush2.msra.mxu0 0.0
        %3673 = vmatprep.subr.mxu0 0.0
        %3674 = vmatpush2.msra.mxu0 0.0
        %3675 = vmatprep.mubr.f32.mxu0 0.0
        %3676 = vmatmul.mubr.f32.gmra.mxu0 %v3513
        %v3677 = vpop.f32.mrf.mxu0
        %v3678 = vadd.f32 0.0, %v3677
        %v3679 = vpop.f32.mrf.mxu0
        %3680 = vmatprep.mubr.f32.mxu0 0.0
        %3681 = vmatmul.mubr.f32.gmra.mxu0 %v3516
        %v3682 = vpop.f32.mrf.mxu0
        %v3683 = vadd.f32 0.0, %v3682
        %v3684 = vpop.f32.mrf.mxu0
        %3685 = vmatprep.mubr.f32.mxu0 0.0
        %3686 = vmatmul.mubr.f32.gmra.mxu0 %v3519
        %v3687 = vpop.f32.mrf.mxu0
        %v3688 = vadd.f32 0.0, %v3687
        %v3689 = vpop.f32.mrf.mxu0
        %3690 = vmatprep.mubr.f32.mxu0 0.0
        %3691 = vmatmul.mubr.f32.gmra.mxu0 %v3522
        %v3692 = vpop.f32.mrf.mxu0
        %v3693 = vadd.f32 0.0, %v3692
        %v3694 = vpop.f32.mrf.mxu0
        %3695 = vmatprep.mubr.f32.mxu0 0.0
        %3696 = vmatmul.mubr.f32.gmra.mxu0 %v3525
        %v3697 = vpop.f32.mrf.mxu0
        %v3698 = vadd.f32 0.0, %v3697
        %v3699 = vpop.f32.mrf.mxu0
        %3700 = vmatprep.mubr.f32.mxu0 0.0
        %3701 = vmatmul.mubr.f32.gmra.mxu0 %v3528
        %v3702 = vpop.f32.mrf.mxu0
        %v3703 = vadd.f32 0.0, %v3702
        %v3704 = vpop.f32.mrf.mxu0
        %3705 = vmatprep.mubr.f32.mxu0 0.0
        %3706 = vmatmul.mubr.f32.gmra.mxu0 %v3531
        %v3707 = vpop.f32.mrf.mxu0
        %v3708 = vadd.f32 0.0, %v3707
        %v3709 = vpop.f32.mrf.mxu0
        %3710 = vmatprep.mubr.f32.mxu0 0.0
        %3711 = vmatmul.mubr.f32.gmra.mxu0 %v3534
        %v3712 = vpop.f32.mrf.mxu0
        %v3713 = vadd.f32 0.0, %v3712
        %v3714 = vpop.f32.mrf.mxu0
        %3715 = vmatprep.mubr.f32.mxu0 0.0
        %3716 = vmatmul.mubr.f32.gmra.mxu0 %v3537
        %v3717 = vpop.f32.mrf.mxu0
        %v3718 = vadd.f32 0.0, %v3717
        %v3719 = vpop.f32.mrf.mxu0
        %3720 = vmatprep.mubr.f32.mxu0 0.0
        %3721 = vmatmul.mubr.f32.gmra.mxu0 %v3540
        %v3722 = vpop.f32.mrf.mxu0
        %v3723 = vadd.f32 0.0, %v3722
        %v3724 = vpop.f32.mrf.mxu0
        %3725 = vmatprep.mubr.f32.mxu0 0.0
        %3726 = vmatmul.mubr.f32.gmra.mxu0 %v3543
        %v3727 = vpop.f32.mrf.mxu0
        %v3728 = vadd.f32 0.0, %v3727
        %v3729 = vpop.f32.mrf.mxu0
        %3730 = vmatprep.mubr.f32.mxu0 0.0
        %3731 = vmatmul.mubr.f32.gmra.mxu0 %v3546
        %v3732 = vpop.f32.mrf.mxu0
        %v3733 = vadd.f32 0.0, %v3732
        %v3734 = vpop.f32.mrf.mxu0
        %3735 = vmatprep.mubr.f32.mxu0 0.0
        %3736 = vmatmul.mubr.f32.gmra.mxu0 %v3549
        %v3737 = vpop.f32.mrf.mxu0
        %v3738 = vadd.f32 0.0, %v3737
        %v3739 = vpop.f32.mrf.mxu0
        %3740 = vmatprep.mubr.f32.mxu0 0.0
        %3741 = vmatmul.mubr.f32.gmra.mxu0 %v3552
        %v3742 = vpop.f32.mrf.mxu0
        %v3743 = vadd.f32 0.0, %v3742
        %v3744 = vpop.f32.mrf.mxu0
        %3745 = vmatprep.mubr.f32.mxu0 0.0
        %3746 = vmatmul.mubr.f32.gmra.mxu0 %v3555
        %v3747 = vpop.f32.mrf.mxu0
        %v3748 = vadd.f32 0.0, %v3747
        %v3749 = vpop.f32.mrf.mxu0
        %3750 = vmatprep.mubr.f32.mxu0 0.0
        %3751 = vmatmul.mubr.f32.gmra.mxu0 %v3558
        %v3752 = vpop.f32.mrf.mxu0
        %v3753 = vadd.f32 0.0, %v3752
        %v3754 = vpop.f32.mrf.mxu0
        %3755 = vmatprep.mubr.f32.mxu0 0.0
        %3756 = vmatmul.mubr.f32.gmra.mxu0 %v3561
        %v3757 = vpop.f32.mrf.mxu0
        %v3758 = vadd.f32 0.0, %v3757
        %v3759 = vpop.f32.mrf.mxu0
        %3760 = vmatprep.mubr.f32.mxu0 0.0
        %3761 = vmatmul.mubr.f32.gmra.mxu0 %v3564
        %v3762 = vpop.f32.mrf.mxu0
        %v3763 = vadd.f32 0.0, %v3762
        %v3764 = vpop.f32.mrf.mxu0
        %3765 = vmatprep.mubr.f32.mxu0 0.0
        %3766 = vmatmul.mubr.f32.gmra.mxu0 %v3567
        %v3767 = vpop.f32.mrf.mxu0
        %v3768 = vadd.f32 0.0, %v3767
        %v3769 = vpop.f32.mrf.mxu0
        %3770 = vmatprep.mubr.f32.mxu0 0.0
        %3771 = vmatmul.mubr.f32.gmra.mxu0 %v3570
        %v3772 = vpop.f32.mrf.mxu0
        %v3773 = vadd.f32 0.0, %v3772
        %v3774 = vpop.f32.mrf.mxu0
        %3775 = vmatprep.mubr.f32.mxu0 0.0
        %3776 = vmatmul.mubr.f32.gmra.mxu0 %v3573
        %v3777 = vpop.f32.mrf.mxu0
        %v3778 = vadd.f32 0.0, %v3777
        %v3779 = vpop.f32.mrf.mxu0
        %3780 = vmatprep.mubr.f32.mxu0 0.0
        %3781 = vmatmul.mubr.f32.gmra.mxu0 %v3576
        %v3782 = vpop.f32.mrf.mxu0
        %v3783 = vadd.f32 0.0, %v3782
        %v3784 = vpop.f32.mrf.mxu0
        %3785 = vmatprep.mubr.f32.mxu0 0.0
        %3786 = vmatmul.mubr.f32.gmra.mxu0 %v3579
        %v3787 = vpop.f32.mrf.mxu0
        %v3788 = vadd.f32 0.0, %v3787
        %v3789 = vpop.f32.mrf.mxu0
        %3790 = vmatprep.mubr.f32.mxu0 0.0
        %3791 = vmatmul.mubr.f32.gmra.mxu0 %v3582
        %v3792 = vpop.f32.mrf.mxu0
        %v3793 = vadd.f32 0.0, %v3792
        %v3794 = vpop.f32.mrf.mxu0
        %3795 = vmatprep.mubr.f32.mxu0 0.0
        %3796 = vmatmul.mubr.f32.gmra.mxu0 %v3585
        %v3797 = vpop.f32.mrf.mxu0
        %v3798 = vadd.f32 0.0, %v3797
        %v3799 = vpop.f32.mrf.mxu0
        %3800 = vmatprep.mubr.f32.mxu0 0.0
        %3801 = vmatmul.mubr.f32.gmra.mxu0 %v3588
        %v3802 = vpop.f32.mrf.mxu0
        %v3803 = vadd.f32 0.0, %v3802
        %v3804 = vpop.f32.mrf.mxu0
        %3805 = vmatprep.mubr.f32.mxu0 0.0
        %3806 = vmatmul.mubr.f32.gmra.mxu0 %v3591
        %v3807 = vpop.f32.mrf.mxu0
        %v3808 = vadd.f32 0.0, %v3807
        %v3809 = vpop.f32.mrf.mxu0
        %3810 = vmatprep.mubr.f32.mxu0 0.0
        %3811 = vmatmul.mubr.f32.gmra.mxu0 %v3594
        %v3812 = vpop.f32.mrf.mxu0
        %v3813 = vadd.f32 0.0, %v3812
        %v3814 = vpop.f32.mrf.mxu0
        %3815 = vmatprep.mubr.f32.mxu0 0.0
        %3816 = vmatmul.mubr.f32.gmra.mxu0 %v3597
        %v3817 = vpop.f32.mrf.mxu0
        %v3818 = vadd.f32 0.0, %v3817
        %v3819 = vpop.f32.mrf.mxu0
        %3820 = vmatprep.mubr.f32.mxu0 0.0
        %3821 = vmatmul.mubr.f32.gmra.mxu0 %v3600
        %v3822 = vpop.f32.mrf.mxu0
        %v3823 = vadd.f32 0.0, %v3822
        %v3824 = vpop.f32.mrf.mxu0
        %3825 = vmatprep.mubr.f32.mxu0 0.0
        %3826 = vmatmul.mubr.f32.gmra.mxu0 %v3603
        %v3827 = vpop.f32.mrf.mxu0
        %v3828 = vadd.f32 0.0, %v3827
        %v3829 = vpop.f32.mrf.mxu0
        %3830 = vmatprep.mubr.f32.mxu0 0.0
        %3831 = vmatmul.mubr.f32.gmra.mxu0 %v3606
        %v3832 = vpop.f32.mrf.mxu0
        %v3833 = vadd.f32 0.0, %v3832
        %v3834 = vpop.f32.mrf.mxu0
        %3835 = vdwg.mxu0
        %v3836 = vadd.f32 %v3480, %v3678
        %v3837 = vadd.f32 %v3481, %v3683
        %v3838 = vadd.f32 %v3482, %v3688
        %v3839 = vadd.f32 %v3483, %v3693
        %v3840 = vadd.f32 %v3484, %v3698
        %v3841 = vadd.f32 %v3485, %v3703
        %v3842 = vadd.f32 %v3486, %v3708
        %v3843 = vadd.f32 %v3487, %v3713
        %v3844 = vadd.f32 %v3488, %v3718
        %v3845 = vadd.f32 %v3489, %v3723
        %v3846 = vadd.f32 %v3490, %v3728
        %v3847 = vadd.f32 %v3491, %v3733
        %v3848 = vadd.f32 %v3492, %v3738
        %v3849 = vadd.f32 %v3493, %v3743
        %v3850 = vadd.f32 %v3494, %v3748
        %v3851 = vadd.f32 %v3495, %v3753
        %v3852 = vadd.f32 %v3496, %v3758
        %v3853 = vadd.f32 %v3497, %v3763
        %v3854 = vadd.f32 %v3498, %v3768
        %v3855 = vadd.f32 %v3499, %v3773
        %v3856 = vadd.f32 %v3500, %v3778
        %v3857 = vadd.f32 %v3501, %v3783
        %v3858 = vadd.f32 %v3502, %v3788
        %v3859 = vadd.f32 %v3503, %v3793
        %v3860 = vadd.f32 %v3504, %v3798
        %v3861 = vadd.f32 %v3505, %v3803
        %v3862 = vadd.f32 %v3506, %v3808
        %v3863 = vadd.f32 %v3507, %v3813
        %v3864 = vadd.f32 %v3508, %v3818
        %v3865 = vadd.f32 %v3509, %v3823
        %v3866 = vadd.f32 %v3510, %v3828
        %v3867 = vadd.f32 %v3511, %v3833
        %3868 = vst.msk [vmem:[#allocation3] sm:$0xff] %vm232, %v3836
        %3869 = vst.msk [vmem:[#allocation3 + $0x8] sm:$0xff] %vm232, %v3837
        %3870 = vst.msk [vmem:[#allocation3 + $0x10] sm:$0xff] %vm232, %v3838
        %3871 = vst.msk [vmem:[#allocation3 + $0x18] sm:$0xff] %vm232, %v3839
        %3872 = vst.msk [vmem:[#allocation3 + $0x20] sm:$0xff] %vm232, %v3840
        %3873 = vst.msk [vmem:[#allocation3 + $0x28] sm:$0xff] %vm232, %v3841
        %3874 = vst.msk [vmem:[#allocation3 + $0x30] sm:$0xff] %vm232, %v3842
        %3875 = vst.msk [vmem:[#allocation3 + $0x38] sm:$0xff] %vm232, %v3843
        %3876 = vst.msk [vmem:[#allocation3 + $0x40] sm:$0xff] %vm232, %v3844
        %3877 = vst.msk [vmem:[#allocation3 + $0x48] sm:$0xff] %vm232, %v3845
        %3878 = vst.msk [vmem:[#allocation3 + $0x50] sm:$0xff] %vm232, %v3846
        %3879 = vst.msk [vmem:[#allocation3 + $0x58] sm:$0xff] %vm232, %v3847
        %3880 = vst.msk [vmem:[#allocation3 + $0x60] sm:$0xff] %vm232, %v3848
        %3881 = vst.msk [vmem:[#allocation3 + $0x68] sm:$0xff] %vm232, %v3849
        %3882 = vst.msk [vmem:[#allocation3 + $0x70] sm:$0xff] %vm232, %v3850
        %3883 = vst.msk [vmem:[#allocation3 + $0x78] sm:$0xff] %vm232, %v3851
        %3884 = vst.msk [vmem:[#allocation3 + $0x80] sm:$0xff] %vm232, %v3852
        %3885 = vst.msk [vmem:[#allocation3 + $0x88] sm:$0xff] %vm232, %v3853
        %3886 = vst.msk [vmem:[#allocation3 + $0x90] sm:$0xff] %vm232, %v3854
        %3887 = vst.msk [vmem:[#allocation3 + $0x98] sm:$0xff] %vm232, %v3855
        %3888 = vst.msk [vmem:[#allocation3 + $0xa0] sm:$0xff] %vm232, %v3856
        %3889 = vst.msk [vmem:[#allocation3 + $0xa8] sm:$0xff] %vm232, %v3857
        %3890 = vst.msk [vmem:[#allocation3 + $0xb0] sm:$0xff] %vm232, %v3858
        %3891 = vst.msk [vmem:[#allocation3 + $0xb8] sm:$0xff] %vm232, %v3859
        %3892 = vst.msk [vmem:[#allocation3 + $0xc0] sm:$0xff] %vm232, %v3860
        %3893 = vst.msk [vmem:[#allocation3 + $0xc8] sm:$0xff] %vm232, %v3861
        %3894 = vst.msk [vmem:[#allocation3 + $0xd0] sm:$0xff] %vm232, %v3862
        %3895 = vst.msk [vmem:[#allocation3 + $0xd8] sm:$0xff] %vm232, %v3863
        %3896 = vst.msk [vmem:[#allocation3 + $0xe0] sm:$0xff] %vm232, %v3864
        %3897 = vst.msk [vmem:[#allocation3 + $0xe8] sm:$0xff] %vm232, %v3865
        %3898 = vst.msk [vmem:[#allocation3 + $0xf0] sm:$0xff] %vm232, %v3866
        %3899 = vst.msk [vmem:[#allocation3 + $0xf8] sm:$0xff] %vm232, %v3867
        %v3900 = vld [vmem:[%s2991 + $0x2] sm:$0xff]
        %v3901 = vld [vmem:[%s2991 + $0xa] sm:$0xff]
        %v3902 = vld [vmem:[%s2991 + $0x1a] sm:$0xff]
        %v3903 = vld [vmem:[%s2991 + $0x22] sm:$0xff]
        %v3904 = vld [vmem:[%s2991 + $0x32] sm:$0xff]
        %v3905 = vld [vmem:[%s2991 + $0x3a] sm:$0xff]
        %v3906 = vld [vmem:[%s2991 + $0x4a] sm:$0xff]
        %v3907 = vld [vmem:[%s2991 + $0x52] sm:$0xff]
        %v3908 = vld [vmem:[%s2991 + $0x62] sm:$0xff]
        %v3909 = vld [vmem:[%s2991 + $0x6a] sm:$0xff]
        %v3910 = vld [vmem:[%s2991 + $0x7a] sm:$0xff]
        %v3911 = vld [vmem:[%s2991 + $0x82] sm:$0xff]
        %v3912 = vld [vmem:[%s2991 + $0x92] sm:$0xff]
        %v3913 = vld [vmem:[%s2991 + $0x9a] sm:$0xff]
        %v3914 = vld [vmem:[%s2991 + $0xaa] sm:$0xff]
        %v3915 = vld [vmem:[%s2991 + $0xb2] sm:$0xff]
        %v3916 = vld [vmem:[%s2991 + $0xc2] sm:$0xff]
        %v3917 = vld [vmem:[%s2991 + $0xca] sm:$0xff]
        %v3918 = vld [vmem:[%s2991 + $0xda] sm:$0xff]
        %v3919 = vld [vmem:[%s2991 + $0xe2] sm:$0xff]
        %v3920 = vld [vmem:[%s2991 + $0xf2] sm:$0xff]
        %v3921 = vld [vmem:[%s2991 + $0xfa] sm:$0xff]
        %v3922 = vld [vmem:[%s2991 + $0x10a] sm:$0xff]
        %v3923 = vld [vmem:[%s2991 + $0x112] sm:$0xff]
        %v3924 = vld [vmem:[%s2991 + $0x122] sm:$0xff]
        %v3925 = vld [vmem:[%s2991 + $0x12a] sm:$0xff]
        %v3926 = vld [vmem:[%s2991 + $0x13a] sm:$0xff]
        %v3927 = vld [vmem:[%s2991 + $0x142] sm:$0xff]
        %v3928 = vld [vmem:[%s2991 + $0x152] sm:$0xff]
        %v3929 = vld [vmem:[%s2991 + $0x15a] sm:$0xff]
        %v3930 = vld [vmem:[%s2991 + $0x16a] sm:$0xff]
        %v3931 = vld [vmem:[%s2991 + $0x172] sm:$0xff]
        %s3932 = scalar_lea.vmem %s1, 32
        %v3933 = vld [vmem:[%s3932] sm:$0xf]
        %v3934 = vld [vmem:[#allocation3] sm:$0xff]
        %v3935 = vld [vmem:[#allocation3 + $0x8] sm:$0xff]
        %v3936 = vld [vmem:[#allocation3 + $0x10] sm:$0xff]
        %v3937 = vld [vmem:[#allocation3 + $0x18] sm:$0xff]
        %v3938 = vld [vmem:[#allocation3 + $0x20] sm:$0xff]
        %v3939 = vld [vmem:[#allocation3 + $0x28] sm:$0xff]
        %v3940 = vld [vmem:[#allocation3 + $0x30] sm:$0xff]
        %v3941 = vld [vmem:[#allocation3 + $0x38] sm:$0xff]
        %v3942 = vld [vmem:[#allocation3 + $0x40] sm:$0xff]
        %v3943 = vld [vmem:[#allocation3 + $0x48] sm:$0xff]
        %v3944 = vld [vmem:[#allocation3 + $0x50] sm:$0xff]
        %v3945 = vld [vmem:[#allocation3 + $0x58] sm:$0xff]
        %v3946 = vld [vmem:[#allocation3 + $0x60] sm:$0xff]
        %v3947 = vld [vmem:[#allocation3 + $0x68] sm:$0xff]
        %v3948 = vld [vmem:[#allocation3 + $0x70] sm:$0xff]
        %v3949 = vld [vmem:[#allocation3 + $0x78] sm:$0xff]
        %v3950 = vld [vmem:[#allocation3 + $0x80] sm:$0xff]
        %v3951 = vld [vmem:[#allocation3 + $0x88] sm:$0xff]
        %v3952 = vld [vmem:[#allocation3 + $0x90] sm:$0xff]
        %v3953 = vld [vmem:[#allocation3 + $0x98] sm:$0xff]
        %v3954 = vld [vmem:[#allocation3 + $0xa0] sm:$0xff]
        %v3955 = vld [vmem:[#allocation3 + $0xa8] sm:$0xff]
        %v3956 = vld [vmem:[#allocation3 + $0xb0] sm:$0xff]
        %v3957 = vld [vmem:[#allocation3 + $0xb8] sm:$0xff]
        %v3958 = vld [vmem:[#allocation3 + $0xc0] sm:$0xff]
        %v3959 = vld [vmem:[#allocation3 + $0xc8] sm:$0xff]
        %v3960 = vld [vmem:[#allocation3 + $0xd0] sm:$0xff]
        %v3961 = vld [vmem:[#allocation3 + $0xd8] sm:$0xff]
        %v3962 = vld [vmem:[#allocation3 + $0xe0] sm:$0xff]
        %v3963 = vld [vmem:[#allocation3 + $0xe8] sm:$0xff]
        %v3964 = vld [vmem:[#allocation3 + $0xf0] sm:$0xff]
        %v3965 = vld [vmem:[#allocation3 + $0xf8] sm:$0xff]
        %v3967 = vsel %vm330, %v3900, 0
        %v3970 = vsel %vm330, %v3901, 0
        %v3973 = vsel %vm330, %v3902, 0
        %v3976 = vsel %vm330, %v3903, 0
        %v3979 = vsel %vm330, %v3904, 0
        %v3982 = vsel %vm330, %v3905, 0
        %v3985 = vsel %vm330, %v3906, 0
        %v3988 = vsel %vm330, %v3907, 0
        %v3991 = vsel %vm330, %v3908, 0
        %v3994 = vsel %vm330, %v3909, 0
        %v3997 = vsel %vm330, %v3910, 0
        %v4000 = vsel %vm330, %v3911, 0
        %v4003 = vsel %vm330, %v3912, 0
        %v4006 = vsel %vm330, %v3913, 0
        %v4009 = vsel %vm330, %v3914, 0
        %v4012 = vsel %vm330, %v3915, 0
        %v4015 = vsel %vm330, %v3916, 0
        %v4018 = vsel %vm330, %v3917, 0
        %v4021 = vsel %vm330, %v3918, 0
        %v4024 = vsel %vm330, %v3919, 0
        %v4027 = vsel %vm330, %v3920, 0
        %v4030 = vsel %vm330, %v3921, 0
        %v4033 = vsel %vm330, %v3922, 0
        %v4036 = vsel %vm330, %v3923, 0
        %v4039 = vsel %vm330, %v3924, 0
        %v4042 = vsel %vm330, %v3925, 0
        %v4045 = vsel %vm330, %v3926, 0
        %v4048 = vsel %vm330, %v3927, 0
        %v4051 = vsel %vm330, %v3928, 0
        %v4054 = vsel %vm330, %v3929, 0
        %v4057 = vsel %vm330, %v3930, 0
        %v4060 = vsel %vm330, %v3931, 0
        %v4063 = vsel %vm427, %v3933, 0
        %4065 = vmatprep.subr.mxu0 0.0
        %4066 = vmatpush1.msra.mxu0 0.0
        %4067 = vmatprep.subr.mxu0 0.0
        %4068 = vmatpush1.msra.mxu0 0.0
        %4069 = vmatprep.subr.mxu0 0.0
        %4070 = vmatpush1.msra.mxu0 0.0
        %4071 = vmatprep.subr.mxu0 0.0
        %4072 = vmatpush1.msra.mxu0 0.0
        %4073 = vmatprep.subr.mxu0 0.0
        %4074 = vmatpush1.msra.mxu0 0.0
        %4075 = vmatprep.subr.mxu0 0.0
        %4076 = vmatpush1.msra.mxu0 0.0
        %4077 = vmatprep.subr.mxu0 0.0
        %4078 = vmatpush1.msra.mxu0 0.0
        %4079 = vmatprep.subr.mxu0 0.0
        %4080 = vmatpush1.msra.mxu0 0.0
        %4081 = vmatprep.subr.mxu0 0.0
        %4082 = vmatpush1.msra.mxu0 0.0
        %4083 = vmatprep.subr.mxu0 0.0
        %4084 = vmatpush1.msra.mxu0 0.0
        %4085 = vmatprep.subr.mxu0 0.0
        %4086 = vmatpush1.msra.mxu0 0.0
        %4087 = vmatprep.subr.mxu0 0.0
        %4088 = vmatpush1.msra.mxu0 0.0
        %4089 = vmatprep.subr.mxu0 0.0
        %4090 = vmatpush1.msra.mxu0 0.0
        %4091 = vmatprep.subr.mxu0 0.0
        %4092 = vmatpush1.msra.mxu0 0.0
        %4093 = vmatprep.subr.mxu0 0.0
        %4094 = vmatpush1.msra.mxu0 0.0
        %4095 = vmatprep.subr.mxu0 0.0
        %4096 = vmatpush1.msra.mxu0 %v4063
        %4097 = vmatprep.subr.mxu0 0.0
        %4098 = vmatpush2.msra.mxu0 0.0
        %4099 = vmatprep.subr.mxu0 0.0
        %4100 = vmatpush2.msra.mxu0 0.0
        %4101 = vmatprep.subr.mxu0 0.0
        %4102 = vmatpush2.msra.mxu0 0.0
        %4103 = vmatprep.subr.mxu0 0.0
        %4104 = vmatpush2.msra.mxu0 0.0
        %4105 = vmatprep.subr.mxu0 0.0
        %4106 = vmatpush2.msra.mxu0 0.0
        %4107 = vmatprep.subr.mxu0 0.0
        %4108 = vmatpush2.msra.mxu0 0.0
        %4109 = vmatprep.subr.mxu0 0.0
        %4110 = vmatpush2.msra.mxu0 0.0
        %4111 = vmatprep.subr.mxu0 0.0
        %4112 = vmatpush2.msra.mxu0 0.0
        %4113 = vmatprep.subr.mxu0 0.0
        %4114 = vmatpush2.msra.mxu0 0.0
        %4115 = vmatprep.subr.mxu0 0.0
        %4116 = vmatpush2.msra.mxu0 0.0
        %4117 = vmatprep.subr.mxu0 0.0
        %4118 = vmatpush2.msra.mxu0 0.0
        %4119 = vmatprep.subr.mxu0 0.0
        %4120 = vmatpush2.msra.mxu0 0.0
        %4121 = vmatprep.subr.mxu0 0.0
        %4122 = vmatpush2.msra.mxu0 0.0
        %4123 = vmatprep.subr.mxu0 0.0
        %4124 = vmatpush2.msra.mxu0 0.0
        %4125 = vmatprep.subr.mxu0 0.0
        %4126 = vmatpush2.msra.mxu0 0.0
        %4127 = vmatprep.subr.mxu0 0.0
        %4128 = vmatpush2.msra.mxu0 0.0
        %4129 = vmatprep.mubr.f32.mxu0 0.0
        %4130 = vmatmul.mubr.f32.gmra.mxu0 %v3967
        %v4131 = vpop.f32.mrf.mxu0
        %v4132 = vadd.f32 0.0, %v4131
        %v4133 = vpop.f32.mrf.mxu0
        %4134 = vmatprep.mubr.f32.mxu0 0.0
        %4135 = vmatmul.mubr.f32.gmra.mxu0 %v3970
        %v4136 = vpop.f32.mrf.mxu0
        %v4137 = vadd.f32 0.0, %v4136
        %v4138 = vpop.f32.mrf.mxu0
        %4139 = vmatprep.mubr.f32.mxu0 0.0
        %4140 = vmatmul.mubr.f32.gmra.mxu0 %v3973
        %v4141 = vpop.f32.mrf.mxu0
        %v4142 = vadd.f32 0.0, %v4141
        %v4143 = vpop.f32.mrf.mxu0
        %4144 = vmatprep.mubr.f32.mxu0 0.0
        %4145 = vmatmul.mubr.f32.gmra.mxu0 %v3976
        %v4146 = vpop.f32.mrf.mxu0
        %v4147 = vadd.f32 0.0, %v4146
        %v4148 = vpop.f32.mrf.mxu0
        %4149 = vmatprep.mubr.f32.mxu0 0.0
        %4150 = vmatmul.mubr.f32.gmra.mxu0 %v3979
        %v4151 = vpop.f32.mrf.mxu0
        %v4152 = vadd.f32 0.0, %v4151
        %v4153 = vpop.f32.mrf.mxu0
        %4154 = vmatprep.mubr.f32.mxu0 0.0
        %4155 = vmatmul.mubr.f32.gmra.mxu0 %v3982
        %v4156 = vpop.f32.mrf.mxu0
        %v4157 = vadd.f32 0.0, %v4156
        %v4158 = vpop.f32.mrf.mxu0
        %4159 = vmatprep.mubr.f32.mxu0 0.0
        %4160 = vmatmul.mubr.f32.gmra.mxu0 %v3985
        %v4161 = vpop.f32.mrf.mxu0
        %v4162 = vadd.f32 0.0, %v4161
        %v4163 = vpop.f32.mrf.mxu0
        %4164 = vmatprep.mubr.f32.mxu0 0.0
        %4165 = vmatmul.mubr.f32.gmra.mxu0 %v3988
        %v4166 = vpop.f32.mrf.mxu0
        %v4167 = vadd.f32 0.0, %v4166
        %v4168 = vpop.f32.mrf.mxu0
        %4169 = vmatprep.mubr.f32.mxu0 0.0
        %4170 = vmatmul.mubr.f32.gmra.mxu0 %v3991
        %v4171 = vpop.f32.mrf.mxu0
        %v4172 = vadd.f32 0.0, %v4171
        %v4173 = vpop.f32.mrf.mxu0
        %4174 = vmatprep.mubr.f32.mxu0 0.0
        %4175 = vmatmul.mubr.f32.gmra.mxu0 %v3994
        %v4176 = vpop.f32.mrf.mxu0
        %v4177 = vadd.f32 0.0, %v4176
        %v4178 = vpop.f32.mrf.mxu0
        %4179 = vmatprep.mubr.f32.mxu0 0.0
        %4180 = vmatmul.mubr.f32.gmra.mxu0 %v3997
        %v4181 = vpop.f32.mrf.mxu0
        %v4182 = vadd.f32 0.0, %v4181
        %v4183 = vpop.f32.mrf.mxu0
        %4184 = vmatprep.mubr.f32.mxu0 0.0
        %4185 = vmatmul.mubr.f32.gmra.mxu0 %v4000
        %v4186 = vpop.f32.mrf.mxu0
        %v4187 = vadd.f32 0.0, %v4186
        %v4188 = vpop.f32.mrf.mxu0
        %4189 = vmatprep.mubr.f32.mxu0 0.0
        %4190 = vmatmul.mubr.f32.gmra.mxu0 %v4003
        %v4191 = vpop.f32.mrf.mxu0
        %v4192 = vadd.f32 0.0, %v4191
        %v4193 = vpop.f32.mrf.mxu0
        %4194 = vmatprep.mubr.f32.mxu0 0.0
        %4195 = vmatmul.mubr.f32.gmra.mxu0 %v4006
        %v4196 = vpop.f32.mrf.mxu0
        %v4197 = vadd.f32 0.0, %v4196
        %v4198 = vpop.f32.mrf.mxu0
        %4199 = vmatprep.mubr.f32.mxu0 0.0
        %4200 = vmatmul.mubr.f32.gmra.mxu0 %v4009
        %v4201 = vpop.f32.mrf.mxu0
        %v4202 = vadd.f32 0.0, %v4201
        %v4203 = vpop.f32.mrf.mxu0
        %4204 = vmatprep.mubr.f32.mxu0 0.0
        %4205 = vmatmul.mubr.f32.gmra.mxu0 %v4012
        %v4206 = vpop.f32.mrf.mxu0
        %v4207 = vadd.f32 0.0, %v4206
        %v4208 = vpop.f32.mrf.mxu0
        %4209 = vmatprep.mubr.f32.mxu0 0.0
        %4210 = vmatmul.mubr.f32.gmra.mxu0 %v4015
        %v4211 = vpop.f32.mrf.mxu0
        %v4212 = vadd.f32 0.0, %v4211
        %v4213 = vpop.f32.mrf.mxu0
        %4214 = vmatprep.mubr.f32.mxu0 0.0
        %4215 = vmatmul.mubr.f32.gmra.mxu0 %v4018
        %v4216 = vpop.f32.mrf.mxu0
        %v4217 = vadd.f32 0.0, %v4216
        %v4218 = vpop.f32.mrf.mxu0
        %4219 = vmatprep.mubr.f32.mxu0 0.0
        %4220 = vmatmul.mubr.f32.gmra.mxu0 %v4021
        %v4221 = vpop.f32.mrf.mxu0
        %v4222 = vadd.f32 0.0, %v4221
        %v4223 = vpop.f32.mrf.mxu0
        %4224 = vmatprep.mubr.f32.mxu0 0.0
        %4225 = vmatmul.mubr.f32.gmra.mxu0 %v4024
        %v4226 = vpop.f32.mrf.mxu0
        %v4227 = vadd.f32 0.0, %v4226
        %v4228 = vpop.f32.mrf.mxu0
        %4229 = vmatprep.mubr.f32.mxu0 0.0
        %4230 = vmatmul.mubr.f32.gmra.mxu0 %v4027
        %v4231 = vpop.f32.mrf.mxu0
        %v4232 = vadd.f32 0.0, %v4231
        %v4233 = vpop.f32.mrf.mxu0
        %4234 = vmatprep.mubr.f32.mxu0 0.0
        %4235 = vmatmul.mubr.f32.gmra.mxu0 %v4030
        %v4236 = vpop.f32.mrf.mxu0
        %v4237 = vadd.f32 0.0, %v4236
        %v4238 = vpop.f32.mrf.mxu0
        %4239 = vmatprep.mubr.f32.mxu0 0.0
        %4240 = vmatmul.mubr.f32.gmra.mxu0 %v4033
        %v4241 = vpop.f32.mrf.mxu0
        %v4242 = vadd.f32 0.0, %v4241
        %v4243 = vpop.f32.mrf.mxu0
        %4244 = vmatprep.mubr.f32.mxu0 0.0
        %4245 = vmatmul.mubr.f32.gmra.mxu0 %v4036
        %v4246 = vpop.f32.mrf.mxu0
        %v4247 = vadd.f32 0.0, %v4246
        %v4248 = vpop.f32.mrf.mxu0
        %4249 = vmatprep.mubr.f32.mxu0 0.0
        %4250 = vmatmul.mubr.f32.gmra.mxu0 %v4039
        %v4251 = vpop.f32.mrf.mxu0
        %v4252 = vadd.f32 0.0, %v4251
        %v4253 = vpop.f32.mrf.mxu0
        %4254 = vmatprep.mubr.f32.mxu0 0.0
        %4255 = vmatmul.mubr.f32.gmra.mxu0 %v4042
        %v4256 = vpop.f32.mrf.mxu0
        %v4257 = vadd.f32 0.0, %v4256
        %v4258 = vpop.f32.mrf.mxu0
        %4259 = vmatprep.mubr.f32.mxu0 0.0
        %4260 = vmatmul.mubr.f32.gmra.mxu0 %v4045
        %v4261 = vpop.f32.mrf.mxu0
        %v4262 = vadd.f32 0.0, %v4261
        %v4263 = vpop.f32.mrf.mxu0
        %4264 = vmatprep.mubr.f32.mxu0 0.0
        %4265 = vmatmul.mubr.f32.gmra.mxu0 %v4048
        %v4266 = vpop.f32.mrf.mxu0
        %v4267 = vadd.f32 0.0, %v4266
        %v4268 = vpop.f32.mrf.mxu0
        %4269 = vmatprep.mubr.f32.mxu0 0.0
        %4270 = vmatmul.mubr.f32.gmra.mxu0 %v4051
        %v4271 = vpop.f32.mrf.mxu0
        %v4272 = vadd.f32 0.0, %v4271
        %v4273 = vpop.f32.mrf.mxu0
        %4274 = vmatprep.mubr.f32.mxu0 0.0
        %4275 = vmatmul.mubr.f32.gmra.mxu0 %v4054
        %v4276 = vpop.f32.mrf.mxu0
        %v4277 = vadd.f32 0.0, %v4276
        %v4278 = vpop.f32.mrf.mxu0
        %4279 = vmatprep.mubr.f32.mxu0 0.0
        %4280 = vmatmul.mubr.f32.gmra.mxu0 %v4057
        %v4281 = vpop.f32.mrf.mxu0
        %v4282 = vadd.f32 0.0, %v4281
        %v4283 = vpop.f32.mrf.mxu0
        %4284 = vmatprep.mubr.f32.mxu0 0.0
        %4285 = vmatmul.mubr.f32.gmra.mxu0 %v4060
        %v4286 = vpop.f32.mrf.mxu0
        %v4287 = vadd.f32 0.0, %v4286
        %v4288 = vpop.f32.mrf.mxu0
        %4289 = vdwg.mxu0
        %v4290 = vadd.f32 %v3934, %v4132
        %v4291 = vadd.f32 %v3935, %v4137
        %v4292 = vadd.f32 %v3936, %v4142
        %v4293 = vadd.f32 %v3937, %v4147
        %v4294 = vadd.f32 %v3938, %v4152
        %v4295 = vadd.f32 %v3939, %v4157
        %v4296 = vadd.f32 %v3940, %v4162
        %v4297 = vadd.f32 %v3941, %v4167
        %v4298 = vadd.f32 %v3942, %v4172
        %v4299 = vadd.f32 %v3943, %v4177
        %v4300 = vadd.f32 %v3944, %v4182
        %v4301 = vadd.f32 %v3945, %v4187
        %v4302 = vadd.f32 %v3946, %v4192
        %v4303 = vadd.f32 %v3947, %v4197
        %v4304 = vadd.f32 %v3948, %v4202
        %v4305 = vadd.f32 %v3949, %v4207
        %v4306 = vadd.f32 %v3950, %v4212
        %v4307 = vadd.f32 %v3951, %v4217
        %v4308 = vadd.f32 %v3952, %v4222
        %v4309 = vadd.f32 %v3953, %v4227
        %v4310 = vadd.f32 %v3954, %v4232
        %v4311 = vadd.f32 %v3955, %v4237
        %v4312 = vadd.f32 %v3956, %v4242
        %v4313 = vadd.f32 %v3957, %v4247
        %v4314 = vadd.f32 %v3958, %v4252
        %v4315 = vadd.f32 %v3959, %v4257
        %v4316 = vadd.f32 %v3960, %v4262
        %v4317 = vadd.f32 %v3961, %v4267
        %v4318 = vadd.f32 %v3962, %v4272
        %v4319 = vadd.f32 %v3963, %v4277
        %v4320 = vadd.f32 %v3964, %v4282
        %v4321 = vadd.f32 %v3965, %v4287
        %4322 = vst.msk [vmem:[#allocation3] sm:$0xff] %vm232, %v4290
        %4323 = vst.msk [vmem:[#allocation3 + $0x8] sm:$0xff] %vm232, %v4291
        %4324 = vst.msk [vmem:[#allocation3 + $0x10] sm:$0xff] %vm232, %v4292
        %4325 = vst.msk [vmem:[#allocation3 + $0x18] sm:$0xff] %vm232, %v4293
        %4326 = vst.msk [vmem:[#allocation3 + $0x20] sm:$0xff] %vm232, %v4294
        %4327 = vst.msk [vmem:[#allocation3 + $0x28] sm:$0xff] %vm232, %v4295
        %4328 = vst.msk [vmem:[#allocation3 + $0x30] sm:$0xff] %vm232, %v4296
        %4329 = vst.msk [vmem:[#allocation3 + $0x38] sm:$0xff] %vm232, %v4297
        %4330 = vst.msk [vmem:[#allocation3 + $0x40] sm:$0xff] %vm232, %v4298
        %4331 = vst.msk [vmem:[#allocation3 + $0x48] sm:$0xff] %vm232, %v4299
        %4332 = vst.msk [vmem:[#allocation3 + $0x50] sm:$0xff] %vm232, %v4300
        %4333 = vst.msk [vmem:[#allocation3 + $0x58] sm:$0xff] %vm232, %v4301
        %4334 = vst.msk [vmem:[#allocation3 + $0x60] sm:$0xff] %vm232, %v4302
        %4335 = vst.msk [vmem:[#allocation3 + $0x68] sm:$0xff] %vm232, %v4303
        %4336 = vst.msk [vmem:[#allocation3 + $0x70] sm:$0xff] %vm232, %v4304
        %4337 = vst.msk [vmem:[#allocation3 + $0x78] sm:$0xff] %vm232, %v4305
        %4338 = vst.msk [vmem:[#allocation3 + $0x80] sm:$0xff] %vm232, %v4306
        %4339 = vst.msk [vmem:[#allocation3 + $0x88] sm:$0xff] %vm232, %v4307
        %4340 = vst.msk [vmem:[#allocation3 + $0x90] sm:$0xff] %vm232, %v4308
        %4341 = vst.msk [vmem:[#allocation3 + $0x98] sm:$0xff] %vm232, %v4309
        %4342 = vst.msk [vmem:[#allocation3 + $0xa0] sm:$0xff] %vm232, %v4310
        %4343 = vst.msk [vmem:[#allocation3 + $0xa8] sm:$0xff] %vm232, %v4311
        %4344 = vst.msk [vmem:[#allocation3 + $0xb0] sm:$0xff] %vm232, %v4312
        %4345 = vst.msk [vmem:[#allocation3 + $0xb8] sm:$0xff] %vm232, %v4313
        %4346 = vst.msk [vmem:[#allocation3 + $0xc0] sm:$0xff] %vm232, %v4314
        %4347 = vst.msk [vmem:[#allocation3 + $0xc8] sm:$0xff] %vm232, %v4315
        %4348 = vst.msk [vmem:[#allocation3 + $0xd0] sm:$0xff] %vm232, %v4316
        %4349 = vst.msk [vmem:[#allocation3 + $0xd8] sm:$0xff] %vm232, %v4317
        %4350 = vst.msk [vmem:[#allocation3 + $0xe0] sm:$0xff] %vm232, %v4318
        %4351 = vst.msk [vmem:[#allocation3 + $0xe8] sm:$0xff] %vm232, %v4319
        %4352 = vst.msk [vmem:[#allocation3 + $0xf0] sm:$0xff] %vm232, %v4320
        %4353 = vst.msk [vmem:[#allocation3 + $0xf8] sm:$0xff] %vm232, %v4321
        %v4354 = vld [vmem:[#allocation3] sm:$0xff]
        %v4355 = vld [vmem:[#allocation3 + $0x8] sm:$0xff]
        %v4356 = vld [vmem:[#allocation3 + $0x10] sm:$0xff]
        %v4357 = vld [vmem:[#allocation3 + $0x18] sm:$0xff]
        %v4358 = vld [vmem:[#allocation3 + $0x20] sm:$0xff]
        %v4359 = vld [vmem:[#allocation3 + $0x28] sm:$0xff]
        %v4360 = vld [vmem:[#allocation3 + $0x30] sm:$0xff]
        %v4361 = vld [vmem:[#allocation3 + $0x38] sm:$0xff]
        %v4362 = vld [vmem:[#allocation3 + $0x40] sm:$0xff]
        %v4363 = vld [vmem:[#allocation3 + $0x48] sm:$0xff]
        %v4364 = vld [vmem:[#allocation3 + $0x50] sm:$0xff]
        %v4365 = vld [vmem:[#allocation3 + $0x58] sm:$0xff]
        %v4366 = vld [vmem:[#allocation3 + $0x60] sm:$0xff]
        %v4367 = vld [vmem:[#allocation3 + $0x68] sm:$0xff]
        %v4368 = vld [vmem:[#allocation3 + $0x70] sm:$0xff]
        %v4369 = vld [vmem:[#allocation3 + $0x78] sm:$0xff]
        %v4370 = vld [vmem:[#allocation3 + $0x80] sm:$0xff]
        %v4371 = vld [vmem:[#allocation3 + $0x88] sm:$0xff]
        %v4372 = vld [vmem:[#allocation3 + $0x90] sm:$0xff]
        %v4373 = vld [vmem:[#allocation3 + $0x98] sm:$0xff]
        %v4374 = vld [vmem:[#allocation3 + $0xa0] sm:$0xff]
        %v4375 = vld [vmem:[#allocation3 + $0xa8] sm:$0xff]
        %v4376 = vld [vmem:[#allocation3 + $0xb0] sm:$0xff]
        %v4377 = vld [vmem:[#allocation3 + $0xb8] sm:$0xff]
        %v4378 = vld [vmem:[#allocation3 + $0xc0] sm:$0xff]
        %v4379 = vld [vmem:[#allocation3 + $0xc8] sm:$0xff]
        %v4380 = vld [vmem:[#allocation3 + $0xd0] sm:$0xff]
        %v4381 = vld [vmem:[#allocation3 + $0xd8] sm:$0xff]
        %v4382 = vld [vmem:[#allocation3 + $0xe0] sm:$0xff]
        %v4383 = vld [vmem:[#allocation3 + $0xe8] sm:$0xff]
        %v4384 = vld [vmem:[#allocation3 + $0xf0] sm:$0xff]
        %v4385 = vld [vmem:[#allocation3 + $0xf8] sm:$0xff]
        %v4386 = vmax.f32 %v4354, 0.0
        %v4387 = vmax.f32 %v4355, 0.0
        %v4388 = vmax.f32 %v4356, 0.0
        %v4389 = vmax.f32 %v4357, 0.0
        %v4390 = vmax.f32 %v4358, 0.0
        %v4391 = vmax.f32 %v4359, 0.0
        %v4392 = vmax.f32 %v4360, 0.0
        %v4393 = vmax.f32 %v4361, 0.0
        %v4394 = vmax.f32 %v4362, 0.0
        %v4395 = vmax.f32 %v4363, 0.0
        %v4396 = vmax.f32 %v4364, 0.0
        %v4397 = vmax.f32 %v4365, 0.0
        %v4398 = vmax.f32 %v4366, 0.0
        %v4399 = vmax.f32 %v4367, 0.0
        %v4400 = vmax.f32 %v4368, 0.0
        %v4401 = vmax.f32 %v4369, 0.0
        %v4402 = vmax.f32 %v4370, 0.0
        %v4403 = vmax.f32 %v4371, 0.0
        %v4404 = vmax.f32 %v4372, 0.0
        %v4405 = vmax.f32 %v4373, 0.0
        %v4406 = vmax.f32 %v4374, 0.0
        %v4407 = vmax.f32 %v4375, 0.0
        %v4408 = vmax.f32 %v4376, 0.0
        %v4409 = vmax.f32 %v4377, 0.0
        %v4410 = vmax.f32 %v4378, 0.0
        %v4411 = vmax.f32 %v4379, 0.0
        %v4412 = vmax.f32 %v4380, 0.0
        %v4413 = vmax.f32 %v4381, 0.0
        %v4414 = vmax.f32 %v4382, 0.0
        %v4415 = vmax.f32 %v4383, 0.0
        %v4416 = vmax.f32 %v4384, 0.0
        %v4417 = vmax.f32 %v4385, 0.0
        %4418 = vst.msk [vmem:[#allocation2] sm:$0xff] %vm232, 0.0
        %4419 = vst.msk [vmem:[#allocation2 + $0x8] sm:$0xff] %vm232, 0.0
        %vm4420 = vcmask 254976
        %4421 = vst.msk [vmem:[#allocation2 + $0x10] sm:$0x3] %vm4420, 0.0
        %4422 = vst.msk [vmem:[#allocation2 + $0x18] sm:$0xff] %vm232, 0.0
        %4423 = vst.msk [vmem:[#allocation2 + $0x20] sm:$0xff] %vm232, 0.0
        %4424 = vst.msk [vmem:[#allocation2 + $0x28] sm:$0x3] %vm4420, 0.0
        %4425 = vst.msk [vmem:[#allocation2 + $0x30] sm:$0xff] %vm232, 0.0
        %4426 = vst.msk [vmem:[#allocation2 + $0x38] sm:$0xff] %vm232, 0.0
        %4427 = vst.msk [vmem:[#allocation2 + $0x40] sm:$0x3] %vm4420, 0.0
        %4428 = vst.msk [vmem:[#allocation2 + $0x48] sm:$0xff] %vm232, 0.0
        %4429 = vst.msk [vmem:[#allocation2 + $0x50] sm:$0xff] %vm232, 0.0
        %4430 = vst.msk [vmem:[#allocation2 + $0x58] sm:$0x3] %vm4420, 0.0
        %4431 = vst.msk [vmem:[#allocation2 + $0x60] sm:$0xff] %vm232, 0.0
        %4432 = vst.msk [vmem:[#allocation2 + $0x68] sm:$0xff] %vm232, 0.0
        %4433 = vst.msk [vmem:[#allocation2 + $0x70] sm:$0x3] %vm4420, 0.0
        %4434 = vst.msk [vmem:[#allocation2 + $0x78] sm:$0xff] %vm232, 0.0
        %4435 = vst.msk [vmem:[#allocation2 + $0x80] sm:$0xff] %vm232, 0.0
        %4436 = vst.msk [vmem:[#allocation2 + $0x88] sm:$0x3] %vm4420, 0.0
        %4437 = vst.msk [vmem:[#allocation2 + $0x90] sm:$0xff] %vm232, 0.0
        %4438 = vst.msk [vmem:[#allocation2 + $0x98] sm:$0xff] %vm232, 0.0
        %4439 = vst.msk [vmem:[#allocation2 + $0xa0] sm:$0x3] %vm4420, 0.0
        %4440 = vst.msk [vmem:[#allocation2 + $0xa8] sm:$0xff] %vm232, 0.0
        %4441 = vst.msk [vmem:[#allocation2 + $0xb0] sm:$0xff] %vm232, 0.0
        %4442 = vst.msk [vmem:[#allocation2 + $0xb8] sm:$0x3] %vm4420, 0.0
        %4443 = vst.msk [vmem:[#allocation2 + $0xc0] sm:$0xff] %vm232, 0.0
        %4444 = vst.msk [vmem:[#allocation2 + $0xc8] sm:$0xff] %vm232, 0.0
        %4445 = vst.msk [vmem:[#allocation2 + $0xd0] sm:$0x3] %vm4420, 0.0
        %4446 = vst.msk [vmem:[#allocation2 + $0xd8] sm:$0xff] %vm232, 0.0
        %4447 = vst.msk [vmem:[#allocation2 + $0xe0] sm:$0xff] %vm232, 0.0
        %4448 = vst.msk [vmem:[#allocation2 + $0xe8] sm:$0x3] %vm4420, 0.0
        %4449 = vst.msk [vmem:[#allocation2 + $0xf0] sm:$0xff] %vm232, 0.0
        %4450 = vst.msk [vmem:[#allocation2 + $0xf8] sm:$0xff] %vm232, 0.0
        %4451 = vst.msk [vmem:[#allocation2 + $0x100] sm:$0x3] %vm4420, 0.0
        %4452 = vst.msk [vmem:[#allocation2 + $0x108] sm:$0xff] %vm232, 0.0
        %4453 = vst.msk [vmem:[#allocation2 + $0x110] sm:$0xff] %vm232, 0.0
        %4454 = vst.msk [vmem:[#allocation2 + $0x118] sm:$0x3] %vm4420, 0.0
        %4455 = vst.msk [vmem:[#allocation2 + $0x120] sm:$0xff] %vm232, 0.0
        %4456 = vst.msk [vmem:[#allocation2 + $0x128] sm:$0xff] %vm232, 0.0
        %4457 = vst.msk [vmem:[#allocation2 + $0x130] sm:$0x3] %vm4420, 0.0
        %4458 = vst.msk [vmem:[#allocation2 + $0x138] sm:$0xff] %vm232, 0.0
        %4459 = vst.msk [vmem:[#allocation2 + $0x140] sm:$0xff] %vm232, 0.0
        %4460 = vst.msk [vmem:[#allocation2 + $0x148] sm:$0x3] %vm4420, 0.0
        %4461 = vst.msk [vmem:[#allocation2 + $0x150] sm:$0xff] %vm232, 0.0
        %4462 = vst.msk [vmem:[#allocation2 + $0x158] sm:$0xff] %vm232, 0.0
        %4463 = vst.msk [vmem:[#allocation2 + $0x160] sm:$0x3] %vm4420, 0.0
        %4464 = vst.msk [vmem:[#allocation2 + $0x168] sm:$0xff] %vm232, 0.0
        %4465 = vst.msk [vmem:[#allocation2 + $0x170] sm:$0xff] %vm232, 0.0
        %4466 = vst.msk [vmem:[#allocation2 + $0x178] sm:$0x3] %vm4420, 0.0
        %4467 = vst.msk [vmem:[#allocation2 + $0x180] sm:$0xff] %vm232, 0.0
        %4468 = vst.msk [vmem:[#allocation2 + $0x188] sm:$0xff] %vm232, 0.0
        %4469 = vst.msk [vmem:[#allocation2 + $0x190] sm:$0x3] %vm4420, 0.0
        %4470 = vst.msk [vmem:[#allocation2 + $0x198] sm:$0xff] %vm232, 0.0
        %4471 = vst.msk [vmem:[#allocation2 + $0x1a0] sm:$0xff] %vm232, 0.0
        %4472 = vst.msk [vmem:[#allocation2 + $0x1a8] sm:$0x3] %vm4420, 0.0
        %s4473 = scalar_lea.vmem [#allocation2], 24
        %4474 = vst.msk [vmem:[%s4473 + $0x1] sm:$0xff] %vm232, %v4386
        %4475 = vst.msk [vmem:[%s4473 + $0x9] sm:$0xff] %vm232, %v4387
        %4476 = vst.msk [vmem:[%s4473 + $0x19] sm:$0xff] %vm232, %v4388
        %4477 = vst.msk [vmem:[%s4473 + $0x21] sm:$0xff] %vm232, %v4389
        %4478 = vst.msk [vmem:[%s4473 + $0x31] sm:$0xff] %vm232, %v4390
        %4479 = vst.msk [vmem:[%s4473 + $0x39] sm:$0xff] %vm232, %v4391
        %4480 = vst.msk [vmem:[%s4473 + $0x49] sm:$0xff] %vm232, %v4392
        %4481 = vst.msk [vmem:[%s4473 + $0x51] sm:$0xff] %vm232, %v4393
        %4482 = vst.msk [vmem:[%s4473 + $0x61] sm:$0xff] %vm232, %v4394
        %4483 = vst.msk [vmem:[%s4473 + $0x69] sm:$0xff] %vm232, %v4395
        %4484 = vst.msk [vmem:[%s4473 + $0x79] sm:$0xff] %vm232, %v4396
        %4485 = vst.msk [vmem:[%s4473 + $0x81] sm:$0xff] %vm232, %v4397
        %4486 = vst.msk [vmem:[%s4473 + $0x91] sm:$0xff] %vm232, %v4398
        %4487 = vst.msk [vmem:[%s4473 + $0x99] sm:$0xff] %vm232, %v4399
        %4488 = vst.msk [vmem:[%s4473 + $0xa9] sm:$0xff] %vm232, %v4400
        %4489 = vst.msk [vmem:[%s4473 + $0xb1] sm:$0xff] %vm232, %v4401
        %4490 = vst.msk [vmem:[%s4473 + $0xc1] sm:$0xff] %vm232, %v4402
        %4491 = vst.msk [vmem:[%s4473 + $0xc9] sm:$0xff] %vm232, %v4403
        %4492 = vst.msk [vmem:[%s4473 + $0xd9] sm:$0xff] %vm232, %v4404
        %4493 = vst.msk [vmem:[%s4473 + $0xe1] sm:$0xff] %vm232, %v4405
        %4494 = vst.msk [vmem:[%s4473 + $0xf1] sm:$0xff] %vm232, %v4406
        %4495 = vst.msk [vmem:[%s4473 + $0xf9] sm:$0xff] %vm232, %v4407
        %4496 = vst.msk [vmem:[%s4473 + $0x109] sm:$0xff] %vm232, %v4408
        %4497 = vst.msk [vmem:[%s4473 + $0x111] sm:$0xff] %vm232, %v4409
        %4498 = vst.msk [vmem:[%s4473 + $0x121] sm:$0xff] %vm232, %v4410
        %4499 = vst.msk [vmem:[%s4473 + $0x129] sm:$0xff] %vm232, %v4411
        %4500 = vst.msk [vmem:[%s4473 + $0x139] sm:$0xff] %vm232, %v4412
        %4501 = vst.msk [vmem:[%s4473 + $0x141] sm:$0xff] %vm232, %v4413
        %4502 = vst.msk [vmem:[%s4473 + $0x151] sm:$0xff] %vm232, %v4414
        %4503 = vst.msk [vmem:[%s4473 + $0x159] sm:$0xff] %vm232, %v4415
        %4504 = vst.msk [vmem:[%s4473 + $0x169] sm:$0xff] %vm232, %v4416
        %4505 = vst.msk [vmem:[%s4473 + $0x171] sm:$0xff] %vm232, %v4417
        %v4506 = vld [vmem:[#allocation2] sm:$0xff]
        %v4507 = vld [vmem:[#allocation2 + $0x8] sm:$0xff]
        %v4508 = vld [vmem:[#allocation2 + $0x18] sm:$0xff]
        %v4509 = vld [vmem:[#allocation2 + $0x20] sm:$0xff]
        %v4510 = vld [vmem:[#allocation2 + $0x30] sm:$0xff]
        %v4511 = vld [vmem:[#allocation2 + $0x38] sm:$0xff]
        %v4512 = vld [vmem:[#allocation2 + $0x48] sm:$0xff]
        %v4513 = vld [vmem:[#allocation2 + $0x50] sm:$0xff]
        %v4514 = vld [vmem:[#allocation2 + $0x60] sm:$0xff]
        %v4515 = vld [vmem:[#allocation2 + $0x68] sm:$0xff]
        %v4516 = vld [vmem:[#allocation2 + $0x78] sm:$0xff]
        %v4517 = vld [vmem:[#allocation2 + $0x80] sm:$0xff]
        %v4518 = vld [vmem:[#allocation2 + $0x90] sm:$0xff]
        %v4519 = vld [vmem:[#allocation2 + $0x98] sm:$0xff]
        %v4520 = vld [vmem:[#allocation2 + $0xa8] sm:$0xff]
        %v4521 = vld [vmem:[#allocation2 + $0xb0] sm:$0xff]
        %v4522 = vld [vmem:[#allocation2 + $0xc0] sm:$0xff]
        %v4523 = vld [vmem:[#allocation2 + $0xc8] sm:$0xff]
        %v4524 = vld [vmem:[#allocation2 + $0xd8] sm:$0xff]
        %v4525 = vld [vmem:[#allocation2 + $0xe0] sm:$0xff]
        %v4526 = vld [vmem:[#allocation2 + $0xf0] sm:$0xff]
        %v4527 = vld [vmem:[#allocation2 + $0xf8] sm:$0xff]
        %v4528 = vld [vmem:[#allocation2 + $0x108] sm:$0xff]
        %v4529 = vld [vmem:[#allocation2 + $0x110] sm:$0xff]
        %v4530 = vld [vmem:[#allocation2 + $0x120] sm:$0xff]
        %v4531 = vld [vmem:[#allocation2 + $0x128] sm:$0xff]
        %v4532 = vld [vmem:[#allocation2 + $0x138] sm:$0xff]
        %v4533 = vld [vmem:[#allocation2 + $0x140] sm:$0xff]
        %v4534 = vld [vmem:[#allocation2 + $0x150] sm:$0xff]
        %v4535 = vld [vmem:[#allocation2 + $0x158] sm:$0xff]
        %v4536 = vld [vmem:[#allocation2 + $0x168] sm:$0xff]
        %v4537 = vld [vmem:[#allocation2 + $0x170] sm:$0xff]
        %v4538 = vld [vmem:[%s3] sm:$0x1]
        %v4540 = vlaneseq
        %v4541 = vshrl.u32 %v4540, 7
        %v4542 = vsub.s32 0, %v4541
        %v4543 = vrot.slane %v4538, %v4542
        %v4545 = vmul.f32 %v4506, %v4543
        %v4546 = vmul.f32 %v4507, %v4543
        %v4547 = vmul.f32 %v4508, %v4543
        %v4548 = vmul.f32 %v4509, %v4543
        %v4549 = vmul.f32 %v4510, %v4543
        %v4550 = vmul.f32 %v4511, %v4543
        %v4551 = vmul.f32 %v4512, %v4543
        %v4552 = vmul.f32 %v4513, %v4543
        %v4553 = vmul.f32 %v4514, %v4543
        %v4554 = vmul.f32 %v4515, %v4543
        %v4555 = vmul.f32 %v4516, %v4543
        %v4556 = vmul.f32 %v4517, %v4543
        %v4557 = vmul.f32 %v4518, %v4543
        %v4558 = vmul.f32 %v4519, %v4543
        %v4559 = vmul.f32 %v4520, %v4543
        %v4560 = vmul.f32 %v4521, %v4543
        %v4561 = vmul.f32 %v4522, %v4543
        %v4562 = vmul.f32 %v4523, %v4543
        %v4563 = vmul.f32 %v4524, %v4543
        %v4564 = vmul.f32 %v4525, %v4543
        %v4565 = vmul.f32 %v4526, %v4543
        %v4566 = vmul.f32 %v4527, %v4543
        %v4567 = vmul.f32 %v4528, %v4543
        %v4568 = vmul.f32 %v4529, %v4543
        %v4569 = vmul.f32 %v4530, %v4543
        %v4570 = vmul.f32 %v4531, %v4543
        %v4571 = vmul.f32 %v4532, %v4543
        %v4572 = vmul.f32 %v4533, %v4543
        %v4573 = vmul.f32 %v4534, %v4543
        %v4574 = vmul.f32 %v4535, %v4543
        %v4575 = vmul.f32 %v4536, %v4543
        %v4576 = vmul.f32 %v4537, %v4543
        %v4577 = vsel %vm232, %v4545, 0.0
        %4578 = vadd.xlane.f32.xlu0 %v4577
        %v4579 = vpop.xlane.xlu0 %4578
        %v4580 = vsel %vm232, %v4546, 0.0
        %4581 = vadd.xlane.f32.xlu0 %v4580
        %v4582 = vpop.xlane.xlu0 %4581
        %v4583 = vsel %vm232, %v4547, 0.0
        %4584 = vadd.xlane.f32.xlu0 %v4583
        %v4585 = vpop.xlane.xlu0 %4584
        %v4586 = vsel %vm232, %v4548, 0.0
        %4587 = vadd.xlane.f32.xlu0 %v4586
        %v4588 = vpop.xlane.xlu0 %4587
        %v4589 = vsel %vm232, %v4549, 0.0
        %4590 = vadd.xlane.f32.xlu0 %v4589
        %v4591 = vpop.xlane.xlu0 %4590
        %v4592 = vsel %vm232, %v4550, 0.0
        %4593 = vadd.xlane.f32.xlu0 %v4592
        %v4594 = vpop.xlane.xlu0 %4593
        %v4595 = vsel %vm232, %v4551, 0.0
        %4596 = vadd.xlane.f32.xlu0 %v4595
        %v4597 = vpop.xlane.xlu0 %4596
        %v4598 = vsel %vm232, %v4552, 0.0
        %4599 = vadd.xlane.f32.xlu0 %v4598
        %v4600 = vpop.xlane.xlu0 %4599
        %v4601 = vsel %vm232, %v4553, 0.0
        %4602 = vadd.xlane.f32.xlu0 %v4601
        %v4603 = vpop.xlane.xlu0 %4602
        %v4604 = vsel %vm232, %v4554, 0.0
        %4605 = vadd.xlane.f32.xlu0 %v4604
        %v4606 = vpop.xlane.xlu0 %4605
        %v4607 = vsel %vm232, %v4555, 0.0
        %4608 = vadd.xlane.f32.xlu0 %v4607
        %v4609 = vpop.xlane.xlu0 %4608
        %v4610 = vsel %vm232, %v4556, 0.0
        %4611 = vadd.xlane.f32.xlu0 %v4610
        %v4612 = vpop.xlane.xlu0 %4611
        %v4613 = vsel %vm232, %v4557, 0.0
        %4614 = vadd.xlane.f32.xlu0 %v4613
        %v4615 = vpop.xlane.xlu0 %4614
        %v4616 = vsel %vm232, %v4558, 0.0
        %4617 = vadd.xlane.f32.xlu0 %v4616
        %v4618 = vpop.xlane.xlu0 %4617
        %v4619 = vsel %vm232, %v4559, 0.0
        %4620 = vadd.xlane.f32.xlu0 %v4619
        %v4621 = vpop.xlane.xlu0 %4620
        %v4622 = vsel %vm232, %v4560, 0.0
        %4623 = vadd.xlane.f32.xlu0 %v4622
        %v4624 = vpop.xlane.xlu0 %4623
        %v4625 = vsel %vm232, %v4561, 0.0
        %4626 = vadd.xlane.f32.xlu0 %v4625
        %v4627 = vpop.xlane.xlu0 %4626
        %v4628 = vsel %vm232, %v4562, 0.0
        %4629 = vadd.xlane.f32.xlu0 %v4628
        %v4630 = vpop.xlane.xlu0 %4629
        %v4631 = vsel %vm232, %v4563, 0.0
        %4632 = vadd.xlane.f32.xlu0 %v4631
        %v4633 = vpop.xlane.xlu0 %4632
        %v4634 = vsel %vm232, %v4564, 0.0
        %4635 = vadd.xlane.f32.xlu0 %v4634
        %v4636 = vpop.xlane.xlu0 %4635
        %v4637 = vsel %vm232, %v4565, 0.0
        %4638 = vadd.xlane.f32.xlu0 %v4637
        %v4639 = vpop.xlane.xlu0 %4638
        %v4640 = vsel %vm232, %v4566, 0.0
        %4641 = vadd.xlane.f32.xlu0 %v4640
        %v4642 = vpop.xlane.xlu0 %4641
        %v4643 = vsel %vm232, %v4567, 0.0
        %4644 = vadd.xlane.f32.xlu0 %v4643
        %v4645 = vpop.xlane.xlu0 %4644
        %v4646 = vsel %vm232, %v4568, 0.0
        %4647 = vadd.xlane.f32.xlu0 %v4646
        %v4648 = vpop.xlane.xlu0 %4647
        %v4649 = vsel %vm232, %v4569, 0.0
        %4650 = vadd.xlane.f32.xlu0 %v4649
        %v4651 = vpop.xlane.xlu0 %4650
        %v4652 = vsel %vm232, %v4570, 0.0
        %4653 = vadd.xlane.f32.xlu0 %v4652
        %v4654 = vpop.xlane.xlu0 %4653
        %v4655 = vsel %vm232, %v4571, 0.0
        %4656 = vadd.xlane.f32.xlu0 %v4655
        %v4657 = vpop.xlane.xlu0 %4656
        %v4658 = vsel %vm232, %v4572, 0.0
        %4659 = vadd.xlane.f32.xlu0 %v4658
        %v4660 = vpop.xlane.xlu0 %4659
        %v4661 = vsel %vm232, %v4573, 0.0
        %4662 = vadd.xlane.f32.xlu0 %v4661
        %v4663 = vpop.xlane.xlu0 %4662
        %v4664 = vsel %vm232, %v4574, 0.0
        %4665 = vadd.xlane.f32.xlu0 %v4664
        %v4666 = vpop.xlane.xlu0 %4665
        %v4667 = vsel %vm232, %v4575, 0.0
        %4668 = vadd.xlane.f32.xlu0 %v4667
        %v4669 = vpop.xlane.xlu0 %4668
        %v4670 = vsel %vm232, %v4576, 0.0
        %4671 = vadd.xlane.f32.xlu0 %v4670
        %v4672 = vpop.xlane.xlu0 %4671
        %v4673 = vadd.f32 %v4579, 0.0
        %v4674 = vadd.f32 %v4582, 0.0
        %v4675 = vadd.f32 %v4585, 0.0
        %v4676 = vadd.f32 %v4588, 0.0
        %v4677 = vadd.f32 %v4591, 0.0
        %v4678 = vadd.f32 %v4594, 0.0
        %v4679 = vadd.f32 %v4597, 0.0
        %v4680 = vadd.f32 %v4600, 0.0
        %v4681 = vadd.f32 %v4603, 0.0
        %v4682 = vadd.f32 %v4606, 0.0
        %v4683 = vadd.f32 %v4609, 0.0
        %v4684 = vadd.f32 %v4612, 0.0
        %v4685 = vadd.f32 %v4615, 0.0
        %v4686 = vadd.f32 %v4618, 0.0
        %v4687 = vadd.f32 %v4621, 0.0
        %v4688 = vadd.f32 %v4624, 0.0
        %v4689 = vadd.f32 %v4627, 0.0
        %v4690 = vadd.f32 %v4630, 0.0
        %v4691 = vadd.f32 %v4633, 0.0
        %v4692 = vadd.f32 %v4636, 0.0
        %v4693 = vadd.f32 %v4639, 0.0
        %v4694 = vadd.f32 %v4642, 0.0
        %v4695 = vadd.f32 %v4645, 0.0
        %v4696 = vadd.f32 %v4648, 0.0
        %v4697 = vadd.f32 %v4651, 0.0
        %v4698 = vadd.f32 %v4654, 0.0
        %v4699 = vadd.f32 %v4657, 0.0
        %v4700 = vadd.f32 %v4660, 0.0
        %v4701 = vadd.f32 %v4663, 0.0
        %v4702 = vadd.f32 %v4666, 0.0
        %v4703 = vadd.f32 %v4669, 0.0
        %v4704 = vadd.f32 %v4672, 0.0
        %v4705 = vld [vmem:[#allocation2 + $0x1] sm:$0xff]
        %v4706 = vld [vmem:[#allocation2 + $0x9] sm:$0xff]
        %v4707 = vld [vmem:[#allocation2 + $0x19] sm:$0xff]
        %v4708 = vld [vmem:[#allocation2 + $0x21] sm:$0xff]
        %v4709 = vld [vmem:[#allocation2 + $0x31] sm:$0xff]
        %v4710 = vld [vmem:[#allocation2 + $0x39] sm:$0xff]
        %v4711 = vld [vmem:[#allocation2 + $0x49] sm:$0xff]
        %v4712 = vld [vmem:[#allocation2 + $0x51] sm:$0xff]
        %v4713 = vld [vmem:[#allocation2 + $0x61] sm:$0xff]
        %v4714 = vld [vmem:[#allocation2 + $0x69] sm:$0xff]
        %v4715 = vld [vmem:[#allocation2 + $0x79] sm:$0xff]
        %v4716 = vld [vmem:[#allocation2 + $0x81] sm:$0xff]
        %v4717 = vld [vmem:[#allocation2 + $0x91] sm:$0xff]
        %v4718 = vld [vmem:[#allocation2 + $0x99] sm:$0xff]
        %v4719 = vld [vmem:[#allocation2 + $0xa9] sm:$0xff]
        %v4720 = vld [vmem:[#allocation2 + $0xb1] sm:$0xff]
        %v4721 = vld [vmem:[#allocation2 + $0xc1] sm:$0xff]
        %v4722 = vld [vmem:[#allocation2 + $0xc9] sm:$0xff]
        %v4723 = vld [vmem:[#allocation2 + $0xd9] sm:$0xff]
        %v4724 = vld [vmem:[#allocation2 + $0xe1] sm:$0xff]
        %v4725 = vld [vmem:[#allocation2 + $0xf1] sm:$0xff]
        %v4726 = vld [vmem:[#allocation2 + $0xf9] sm:$0xff]
        %v4727 = vld [vmem:[#allocation2 + $0x109] sm:$0xff]
        %v4728 = vld [vmem:[#allocation2 + $0x111] sm:$0xff]
        %v4729 = vld [vmem:[#allocation2 + $0x121] sm:$0xff]
        %v4730 = vld [vmem:[#allocation2 + $0x129] sm:$0xff]
        %v4731 = vld [vmem:[#allocation2 + $0x139] sm:$0xff]
        %v4732 = vld [vmem:[#allocation2 + $0x141] sm:$0xff]
        %v4733 = vld [vmem:[#allocation2 + $0x151] sm:$0xff]
        %v4734 = vld [vmem:[#allocation2 + $0x159] sm:$0xff]
        %v4735 = vld [vmem:[#allocation2 + $0x169] sm:$0xff]
        %v4736 = vld [vmem:[#allocation2 + $0x171] sm:$0xff]
        %s4737 = scalar_lea.vmem %s3, 1
        %v4738 = vld [vmem:[%s4737] sm:$0x1]
        %v4740 = vlaneseq
        %v4741 = vshrl.u32 %v4740, 7
        %v4742 = vsub.s32 0, %v4741
        %v4743 = vrot.slane %v4738, %v4742
        %v4745 = vmul.f32 %v4705, %v4743
        %v4746 = vmul.f32 %v4706, %v4743
        %v4747 = vmul.f32 %v4707, %v4743
        %v4748 = vmul.f32 %v4708, %v4743
        %v4749 = vmul.f32 %v4709, %v4743
        %v4750 = vmul.f32 %v4710, %v4743
        %v4751 = vmul.f32 %v4711, %v4743
        %v4752 = vmul.f32 %v4712, %v4743
        %v4753 = vmul.f32 %v4713, %v4743
        %v4754 = vmul.f32 %v4714, %v4743
        %v4755 = vmul.f32 %v4715, %v4743
        %v4756 = vmul.f32 %v4716, %v4743
        %v4757 = vmul.f32 %v4717, %v4743
        %v4758 = vmul.f32 %v4718, %v4743
        %v4759 = vmul.f32 %v4719, %v4743
        %v4760 = vmul.f32 %v4720, %v4743
        %v4761 = vmul.f32 %v4721, %v4743
        %v4762 = vmul.f32 %v4722, %v4743
        %v4763 = vmul.f32 %v4723, %v4743
        %v4764 = vmul.f32 %v4724, %v4743
        %v4765 = vmul.f32 %v4725, %v4743
        %v4766 = vmul.f32 %v4726, %v4743
        %v4767 = vmul.f32 %v4727, %v4743
        %v4768 = vmul.f32 %v4728, %v4743
        %v4769 = vmul.f32 %v4729, %v4743
        %v4770 = vmul.f32 %v4730, %v4743
        %v4771 = vmul.f32 %v4731, %v4743
        %v4772 = vmul.f32 %v4732, %v4743
        %v4773 = vmul.f32 %v4733, %v4743
        %v4774 = vmul.f32 %v4734, %v4743
        %v4775 = vmul.f32 %v4735, %v4743
        %v4776 = vmul.f32 %v4736, %v4743
        %v4777 = vsel %vm232, %v4745, 0.0
        %4778 = vadd.xlane.f32.xlu0 %v4777
        %v4779 = vpop.xlane.xlu0 %4778
        %v4780 = vsel %vm232, %v4746, 0.0
        %4781 = vadd.xlane.f32.xlu0 %v4780
        %v4782 = vpop.xlane.xlu0 %4781
        %v4783 = vsel %vm232, %v4747, 0.0
        %4784 = vadd.xlane.f32.xlu0 %v4783
        %v4785 = vpop.xlane.xlu0 %4784
        %v4786 = vsel %vm232, %v4748, 0.0
        %4787 = vadd.xlane.f32.xlu0 %v4786
        %v4788 = vpop.xlane.xlu0 %4787
        %v4789 = vsel %vm232, %v4749, 0.0
        %4790 = vadd.xlane.f32.xlu0 %v4789
        %v4791 = vpop.xlane.xlu0 %4790
        %v4792 = vsel %vm232, %v4750, 0.0
        %4793 = vadd.xlane.f32.xlu0 %v4792
        %v4794 = vpop.xlane.xlu0 %4793
        %v4795 = vsel %vm232, %v4751, 0.0
        %4796 = vadd.xlane.f32.xlu0 %v4795
        %v4797 = vpop.xlane.xlu0 %4796
        %v4798 = vsel %vm232, %v4752, 0.0
        %4799 = vadd.xlane.f32.xlu0 %v4798
        %v4800 = vpop.xlane.xlu0 %4799
        %v4801 = vsel %vm232, %v4753, 0.0
        %4802 = vadd.xlane.f32.xlu0 %v4801
        %v4803 = vpop.xlane.xlu0 %4802
        %v4804 = vsel %vm232, %v4754, 0.0
        %4805 = vadd.xlane.f32.xlu0 %v4804
        %v4806 = vpop.xlane.xlu0 %4805
        %v4807 = vsel %vm232, %v4755, 0.0
        %4808 = vadd.xlane.f32.xlu0 %v4807
        %v4809 = vpop.xlane.xlu0 %4808
        %v4810 = vsel %vm232, %v4756, 0.0
        %4811 = vadd.xlane.f32.xlu0 %v4810
        %v4812 = vpop.xlane.xlu0 %4811
        %v4813 = vsel %vm232, %v4757, 0.0
        %4814 = vadd.xlane.f32.xlu0 %v4813
        %v4815 = vpop.xlane.xlu0 %4814
        %v4816 = vsel %vm232, %v4758, 0.0
        %4817 = vadd.xlane.f32.xlu0 %v4816
        %v4818 = vpop.xlane.xlu0 %4817
        %v4819 = vsel %vm232, %v4759, 0.0
        %4820 = vadd.xlane.f32.xlu0 %v4819
        %v4821 = vpop.xlane.xlu0 %4820
        %v4822 = vsel %vm232, %v4760, 0.0
        %4823 = vadd.xlane.f32.xlu0 %v4822
        %v4824 = vpop.xlane.xlu0 %4823
        %v4825 = vsel %vm232, %v4761, 0.0
        %4826 = vadd.xlane.f32.xlu0 %v4825
        %v4827 = vpop.xlane.xlu0 %4826
        %v4828 = vsel %vm232, %v4762, 0.0
        %4829 = vadd.xlane.f32.xlu0 %v4828
        %v4830 = vpop.xlane.xlu0 %4829
        %v4831 = vsel %vm232, %v4763, 0.0
        %4832 = vadd.xlane.f32.xlu0 %v4831
        %v4833 = vpop.xlane.xlu0 %4832
        %v4834 = vsel %vm232, %v4764, 0.0
        %4835 = vadd.xlane.f32.xlu0 %v4834
        %v4836 = vpop.xlane.xlu0 %4835
        %v4837 = vsel %vm232, %v4765, 0.0
        %4838 = vadd.xlane.f32.xlu0 %v4837
        %v4839 = vpop.xlane.xlu0 %4838
        %v4840 = vsel %vm232, %v4766, 0.0
        %4841 = vadd.xlane.f32.xlu0 %v4840
        %v4842 = vpop.xlane.xlu0 %4841
        %v4843 = vsel %vm232, %v4767, 0.0
        %4844 = vadd.xlane.f32.xlu0 %v4843
        %v4845 = vpop.xlane.xlu0 %4844
        %v4846 = vsel %vm232, %v4768, 0.0
        %4847 = vadd.xlane.f32.xlu0 %v4846
        %v4848 = vpop.xlane.xlu0 %4847
        %v4849 = vsel %vm232, %v4769, 0.0
        %4850 = vadd.xlane.f32.xlu0 %v4849
        %v4851 = vpop.xlane.xlu0 %4850
        %v4852 = vsel %vm232, %v4770, 0.0
        %4853 = vadd.xlane.f32.xlu0 %v4852
        %v4854 = vpop.xlane.xlu0 %4853
        %v4855 = vsel %vm232, %v4771, 0.0
        %4856 = vadd.xlane.f32.xlu0 %v4855
        %v4857 = vpop.xlane.xlu0 %4856
        %v4858 = vsel %vm232, %v4772, 0.0
        %4859 = vadd.xlane.f32.xlu0 %v4858
        %v4860 = vpop.xlane.xlu0 %4859
        %v4861 = vsel %vm232, %v4773, 0.0
        %4862 = vadd.xlane.f32.xlu0 %v4861
        %v4863 = vpop.xlane.xlu0 %4862
        %v4864 = vsel %vm232, %v4774, 0.0
        %4865 = vadd.xlane.f32.xlu0 %v4864
        %v4866 = vpop.xlane.xlu0 %4865
        %v4867 = vsel %vm232, %v4775, 0.0
        %4868 = vadd.xlane.f32.xlu0 %v4867
        %v4869 = vpop.xlane.xlu0 %4868
        %v4870 = vsel %vm232, %v4776, 0.0
        %4871 = vadd.xlane.f32.xlu0 %v4870
        %v4872 = vpop.xlane.xlu0 %4871
        %v4873 = vadd.f32 %v4673, %v4779
        %v4874 = vadd.f32 %v4674, %v4782
        %v4875 = vadd.f32 %v4675, %v4785
        %v4876 = vadd.f32 %v4676, %v4788
        %v4877 = vadd.f32 %v4677, %v4791
        %v4878 = vadd.f32 %v4678, %v4794
        %v4879 = vadd.f32 %v4679, %v4797
        %v4880 = vadd.f32 %v4680, %v4800
        %v4881 = vadd.f32 %v4681, %v4803
        %v4882 = vadd.f32 %v4682, %v4806
        %v4883 = vadd.f32 %v4683, %v4809
        %v4884 = vadd.f32 %v4684, %v4812
        %v4885 = vadd.f32 %v4685, %v4815
        %v4886 = vadd.f32 %v4686, %v4818
        %v4887 = vadd.f32 %v4687, %v4821
        %v4888 = vadd.f32 %v4688, %v4824
        %v4889 = vadd.f32 %v4689, %v4827
        %v4890 = vadd.f32 %v4690, %v4830
        %v4891 = vadd.f32 %v4691, %v4833
        %v4892 = vadd.f32 %v4692, %v4836
        %v4893 = vadd.f32 %v4693, %v4839
        %v4894 = vadd.f32 %v4694, %v4842
        %v4895 = vadd.f32 %v4695, %v4845
        %v4896 = vadd.f32 %v4696, %v4848
        %v4897 = vadd.f32 %v4697, %v4851
        %v4898 = vadd.f32 %v4698, %v4854
        %v4899 = vadd.f32 %v4699, %v4857
        %v4900 = vadd.f32 %v4700, %v4860
        %v4901 = vadd.f32 %v4701, %v4863
        %v4902 = vadd.f32 %v4702, %v4866
        %v4903 = vadd.f32 %v4703, %v4869
        %v4904 = vadd.f32 %v4704, %v4872
        %v4905 = vld [vmem:[#allocation2 + $0x2] sm:$0xff]
        %v4906 = vld [vmem:[#allocation2 + $0xa] sm:$0xff]
        %v4907 = vld [vmem:[#allocation2 + $0x1a] sm:$0xff]
        %v4908 = vld [vmem:[#allocation2 + $0x22] sm:$0xff]
        %v4909 = vld [vmem:[#allocation2 + $0x32] sm:$0xff]
        %v4910 = vld [vmem:[#allocation2 + $0x3a] sm:$0xff]
        %v4911 = vld [vmem:[#allocation2 + $0x4a] sm:$0xff]
        %v4912 = vld [vmem:[#allocation2 + $0x52] sm:$0xff]
        %v4913 = vld [vmem:[#allocation2 + $0x62] sm:$0xff]
        %v4914 = vld [vmem:[#allocation2 + $0x6a] sm:$0xff]
        %v4915 = vld [vmem:[#allocation2 + $0x7a] sm:$0xff]
        %v4916 = vld [vmem:[#allocation2 + $0x82] sm:$0xff]
        %v4917 = vld [vmem:[#allocation2 + $0x92] sm:$0xff]
        %v4918 = vld [vmem:[#allocation2 + $0x9a] sm:$0xff]
        %v4919 = vld [vmem:[#allocation2 + $0xaa] sm:$0xff]
        %v4920 = vld [vmem:[#allocation2 + $0xb2] sm:$0xff]
        %v4921 = vld [vmem:[#allocation2 + $0xc2] sm:$0xff]
        %v4922 = vld [vmem:[#allocation2 + $0xca] sm:$0xff]
        %v4923 = vld [vmem:[#allocation2 + $0xda] sm:$0xff]
        %v4924 = vld [vmem:[#allocation2 + $0xe2] sm:$0xff]
        %v4925 = vld [vmem:[#allocation2 + $0xf2] sm:$0xff]
        %v4926 = vld [vmem:[#allocation2 + $0xfa] sm:$0xff]
        %v4927 = vld [vmem:[#allocation2 + $0x10a] sm:$0xff]
        %v4928 = vld [vmem:[#allocation2 + $0x112] sm:$0xff]
        %v4929 = vld [vmem:[#allocation2 + $0x122] sm:$0xff]
        %v4930 = vld [vmem:[#allocation2 + $0x12a] sm:$0xff]
        %v4931 = vld [vmem:[#allocation2 + $0x13a] sm:$0xff]
        %v4932 = vld [vmem:[#allocation2 + $0x142] sm:$0xff]
        %v4933 = vld [vmem:[#allocation2 + $0x152] sm:$0xff]
        %v4934 = vld [vmem:[#allocation2 + $0x15a] sm:$0xff]
        %v4935 = vld [vmem:[#allocation2 + $0x16a] sm:$0xff]
        %v4936 = vld [vmem:[#allocation2 + $0x172] sm:$0xff]
        %s4937 = scalar_lea.vmem %s3, 2
        %v4938 = vld [vmem:[%s4937] sm:$0x1]
        %v4940 = vlaneseq
        %v4941 = vshrl.u32 %v4940, 7
        %v4942 = vsub.s32 0, %v4941
        %v4943 = vrot.slane %v4938, %v4942
        %v4945 = vmul.f32 %v4905, %v4943
        %v4946 = vmul.f32 %v4906, %v4943
        %v4947 = vmul.f32 %v4907, %v4943
        %v4948 = vmul.f32 %v4908, %v4943
        %v4949 = vmul.f32 %v4909, %v4943
        %v4950 = vmul.f32 %v4910, %v4943
        %v4951 = vmul.f32 %v4911, %v4943
        %v4952 = vmul.f32 %v4912, %v4943
        %v4953 = vmul.f32 %v4913, %v4943
        %v4954 = vmul.f32 %v4914, %v4943
        %v4955 = vmul.f32 %v4915, %v4943
        %v4956 = vmul.f32 %v4916, %v4943
        %v4957 = vmul.f32 %v4917, %v4943
        %v4958 = vmul.f32 %v4918, %v4943
        %v4959 = vmul.f32 %v4919, %v4943
        %v4960 = vmul.f32 %v4920, %v4943
        %v4961 = vmul.f32 %v4921, %v4943
        %v4962 = vmul.f32 %v4922, %v4943
        %v4963 = vmul.f32 %v4923, %v4943
        %v4964 = vmul.f32 %v4924, %v4943
        %v4965 = vmul.f32 %v4925, %v4943
        %v4966 = vmul.f32 %v4926, %v4943
        %v4967 = vmul.f32 %v4927, %v4943
        %v4968 = vmul.f32 %v4928, %v4943
        %v4969 = vmul.f32 %v4929, %v4943
        %v4970 = vmul.f32 %v4930, %v4943
        %v4971 = vmul.f32 %v4931, %v4943
        %v4972 = vmul.f32 %v4932, %v4943
        %v4973 = vmul.f32 %v4933, %v4943
        %v4974 = vmul.f32 %v4934, %v4943
        %v4975 = vmul.f32 %v4935, %v4943
        %v4976 = vmul.f32 %v4936, %v4943
        %v4977 = vsel %vm232, %v4945, 0.0
        %4978 = vadd.xlane.f32.xlu0 %v4977
        %v4979 = vpop.xlane.xlu0 %4978
        %v4980 = vsel %vm232, %v4946, 0.0
        %4981 = vadd.xlane.f32.xlu0 %v4980
        %v4982 = vpop.xlane.xlu0 %4981
        %v4983 = vsel %vm232, %v4947, 0.0
        %4984 = vadd.xlane.f32.xlu0 %v4983
        %v4985 = vpop.xlane.xlu0 %4984
        %v4986 = vsel %vm232, %v4948, 0.0
        %4987 = vadd.xlane.f32.xlu0 %v4986
        %v4988 = vpop.xlane.xlu0 %4987
        %v4989 = vsel %vm232, %v4949, 0.0
        %4990 = vadd.xlane.f32.xlu0 %v4989
        %v4991 = vpop.xlane.xlu0 %4990
        %v4992 = vsel %vm232, %v4950, 0.0
        %4993 = vadd.xlane.f32.xlu0 %v4992
        %v4994 = vpop.xlane.xlu0 %4993
        %v4995 = vsel %vm232, %v4951, 0.0
        %4996 = vadd.xlane.f32.xlu0 %v4995
        %v4997 = vpop.xlane.xlu0 %4996
        %v4998 = vsel %vm232, %v4952, 0.0
        %4999 = vadd.xlane.f32.xlu0 %v4998
        %v5000 = vpop.xlane.xlu0 %4999
        %v5001 = vsel %vm232, %v4953, 0.0
        %5002 = vadd.xlane.f32.xlu0 %v5001
        %v5003 = vpop.xlane.xlu0 %5002
        %v5004 = vsel %vm232, %v4954, 0.0
        %5005 = vadd.xlane.f32.xlu0 %v5004
        %v5006 = vpop.xlane.xlu0 %5005
        %v5007 = vsel %vm232, %v4955, 0.0
        %5008 = vadd.xlane.f32.xlu0 %v5007
        %v5009 = vpop.xlane.xlu0 %5008
        %v5010 = vsel %vm232, %v4956, 0.0
        %5011 = vadd.xlane.f32.xlu0 %v5010
        %v5012 = vpop.xlane.xlu0 %5011
        %v5013 = vsel %vm232, %v4957, 0.0
        %5014 = vadd.xlane.f32.xlu0 %v5013
        %v5015 = vpop.xlane.xlu0 %5014
        %v5016 = vsel %vm232, %v4958, 0.0
        %5017 = vadd.xlane.f32.xlu0 %v5016
        %v5018 = vpop.xlane.xlu0 %5017
        %v5019 = vsel %vm232, %v4959, 0.0
        %5020 = vadd.xlane.f32.xlu0 %v5019
        %v5021 = vpop.xlane.xlu0 %5020
        %v5022 = vsel %vm232, %v4960, 0.0
        %5023 = vadd.xlane.f32.xlu0 %v5022
        %v5024 = vpop.xlane.xlu0 %5023
        %v5025 = vsel %vm232, %v4961, 0.0
        %5026 = vadd.xlane.f32.xlu0 %v5025
        %v5027 = vpop.xlane.xlu0 %5026
        %v5028 = vsel %vm232, %v4962, 0.0
        %5029 = vadd.xlane.f32.xlu0 %v5028
        %v5030 = vpop.xlane.xlu0 %5029
        %v5031 = vsel %vm232, %v4963, 0.0
        %5032 = vadd.xlane.f32.xlu0 %v5031
        %v5033 = vpop.xlane.xlu0 %5032
        %v5034 = vsel %vm232, %v4964, 0.0
        %5035 = vadd.xlane.f32.xlu0 %v5034
        %v5036 = vpop.xlane.xlu0 %5035
        %v5037 = vsel %vm232, %v4965, 0.0
        %5038 = vadd.xlane.f32.xlu0 %v5037
        %v5039 = vpop.xlane.xlu0 %5038
        %v5040 = vsel %vm232, %v4966, 0.0
        %5041 = vadd.xlane.f32.xlu0 %v5040
        %v5042 = vpop.xlane.xlu0 %5041
        %v5043 = vsel %vm232, %v4967, 0.0
        %5044 = vadd.xlane.f32.xlu0 %v5043
        %v5045 = vpop.xlane.xlu0 %5044
        %v5046 = vsel %vm232, %v4968, 0.0
        %5047 = vadd.xlane.f32.xlu0 %v5046
        %v5048 = vpop.xlane.xlu0 %5047
        %v5049 = vsel %vm232, %v4969, 0.0
        %5050 = vadd.xlane.f32.xlu0 %v5049
        %v5051 = vpop.xlane.xlu0 %5050
        %v5052 = vsel %vm232, %v4970, 0.0
        %5053 = vadd.xlane.f32.xlu0 %v5052
        %v5054 = vpop.xlane.xlu0 %5053
        %v5055 = vsel %vm232, %v4971, 0.0
        %5056 = vadd.xlane.f32.xlu0 %v5055
        %v5057 = vpop.xlane.xlu0 %5056
        %v5058 = vsel %vm232, %v4972, 0.0
        %5059 = vadd.xlane.f32.xlu0 %v5058
        %v5060 = vpop.xlane.xlu0 %5059
        %v5061 = vsel %vm232, %v4973, 0.0
        %5062 = vadd.xlane.f32.xlu0 %v5061
        %v5063 = vpop.xlane.xlu0 %5062
        %v5064 = vsel %vm232, %v4974, 0.0
        %5065 = vadd.xlane.f32.xlu0 %v5064
        %v5066 = vpop.xlane.xlu0 %5065
        %v5067 = vsel %vm232, %v4975, 0.0
        %5068 = vadd.xlane.f32.xlu0 %v5067
        %v5069 = vpop.xlane.xlu0 %5068
        %v5070 = vsel %vm232, %v4976, 0.0
        %5071 = vadd.xlane.f32.xlu0 %v5070
        %v5072 = vpop.xlane.xlu0 %5071
        %v5073 = vadd.f32 %v4873, %v4979
        %v5074 = vadd.f32 %v4874, %v4982
        %v5075 = vadd.f32 %v4875, %v4985
        %v5076 = vadd.f32 %v4876, %v4988
        %v5077 = vadd.f32 %v4877, %v4991
        %v5078 = vadd.f32 %v4878, %v4994
        %v5079 = vadd.f32 %v4879, %v4997
        %v5080 = vadd.f32 %v4880, %v5000
        %v5081 = vadd.f32 %v4881, %v5003
        %v5082 = vadd.f32 %v4882, %v5006
        %v5083 = vadd.f32 %v4883, %v5009
        %v5084 = vadd.f32 %v4884, %v5012
        %v5085 = vadd.f32 %v4885, %v5015
        %v5086 = vadd.f32 %v4886, %v5018
        %v5087 = vadd.f32 %v4887, %v5021
        %v5088 = vadd.f32 %v4888, %v5024
        %v5089 = vadd.f32 %v4889, %v5027
        %v5090 = vadd.f32 %v4890, %v5030
        %v5091 = vadd.f32 %v4891, %v5033
        %v5092 = vadd.f32 %v4892, %v5036
        %v5093 = vadd.f32 %v4893, %v5039
        %v5094 = vadd.f32 %v4894, %v5042
        %v5095 = vadd.f32 %v4895, %v5045
        %v5096 = vadd.f32 %v4896, %v5048
        %v5097 = vadd.f32 %v4897, %v5051
        %v5098 = vadd.f32 %v4898, %v5054
        %v5099 = vadd.f32 %v4899, %v5057
        %v5100 = vadd.f32 %v4900, %v5060
        %v5101 = vadd.f32 %v4901, %v5063
        %v5102 = vadd.f32 %v4902, %v5066
        %v5103 = vadd.f32 %v4903, %v5069
        %v5104 = vadd.f32 %v4904, %v5072
        %v5105 = vld [vmem:[%s4473] sm:$0xff]
        %v5106 = vld [vmem:[%s4473 + $0x8] sm:$0xff]
        %v5107 = vld [vmem:[%s4473 + $0x18] sm:$0xff]
        %v5108 = vld [vmem:[%s4473 + $0x20] sm:$0xff]
        %v5109 = vld [vmem:[%s4473 + $0x30] sm:$0xff]
        %v5110 = vld [vmem:[%s4473 + $0x38] sm:$0xff]
        %v5111 = vld [vmem:[%s4473 + $0x48] sm:$0xff]
        %v5112 = vld [vmem:[%s4473 + $0x50] sm:$0xff]
        %v5113 = vld [vmem:[%s4473 + $0x60] sm:$0xff]
        %v5114 = vld [vmem:[%s4473 + $0x68] sm:$0xff]
        %v5115 = vld [vmem:[%s4473 + $0x78] sm:$0xff]
        %v5116 = vld [vmem:[%s4473 + $0x80] sm:$0xff]
        %v5117 = vld [vmem:[%s4473 + $0x90] sm:$0xff]
        %v5118 = vld [vmem:[%s4473 + $0x98] sm:$0xff]
        %v5119 = vld [vmem:[%s4473 + $0xa8] sm:$0xff]
        %v5120 = vld [vmem:[%s4473 + $0xb0] sm:$0xff]
        %v5121 = vld [vmem:[%s4473 + $0xc0] sm:$0xff]
        %v5122 = vld [vmem:[%s4473 + $0xc8] sm:$0xff]
        %v5123 = vld [vmem:[%s4473 + $0xd8] sm:$0xff]
        %v5124 = vld [vmem:[%s4473 + $0xe0] sm:$0xff]
        %v5125 = vld [vmem:[%s4473 + $0xf0] sm:$0xff]
        %v5126 = vld [vmem:[%s4473 + $0xf8] sm:$0xff]
        %v5127 = vld [vmem:[%s4473 + $0x108] sm:$0xff]
        %v5128 = vld [vmem:[%s4473 + $0x110] sm:$0xff]
        %v5129 = vld [vmem:[%s4473 + $0x120] sm:$0xff]
        %v5130 = vld [vmem:[%s4473 + $0x128] sm:$0xff]
        %v5131 = vld [vmem:[%s4473 + $0x138] sm:$0xff]
        %v5132 = vld [vmem:[%s4473 + $0x140] sm:$0xff]
        %v5133 = vld [vmem:[%s4473 + $0x150] sm:$0xff]
        %v5134 = vld [vmem:[%s4473 + $0x158] sm:$0xff]
        %v5135 = vld [vmem:[%s4473 + $0x168] sm:$0xff]
        %v5136 = vld [vmem:[%s4473 + $0x170] sm:$0xff]
        %s5137 = scalar_lea.vmem %s3, 3
        %v5138 = vld [vmem:[%s5137] sm:$0x1]
        %v5140 = vlaneseq
        %v5141 = vshrl.u32 %v5140, 7
        %v5142 = vsub.s32 0, %v5141
        %v5143 = vrot.slane %v5138, %v5142
        %v5145 = vmul.f32 %v5105, %v5143
        %v5146 = vmul.f32 %v5106, %v5143
        %v5147 = vmul.f32 %v5107, %v5143
        %v5148 = vmul.f32 %v5108, %v5143
        %v5149 = vmul.f32 %v5109, %v5143
        %v5150 = vmul.f32 %v5110, %v5143
        %v5151 = vmul.f32 %v5111, %v5143
        %v5152 = vmul.f32 %v5112, %v5143
        %v5153 = vmul.f32 %v5113, %v5143
        %v5154 = vmul.f32 %v5114, %v5143
        %v5155 = vmul.f32 %v5115, %v5143
        %v5156 = vmul.f32 %v5116, %v5143
        %v5157 = vmul.f32 %v5117, %v5143
        %v5158 = vmul.f32 %v5118, %v5143
        %v5159 = vmul.f32 %v5119, %v5143
        %v5160 = vmul.f32 %v5120, %v5143
        %v5161 = vmul.f32 %v5121, %v5143
        %v5162 = vmul.f32 %v5122, %v5143
        %v5163 = vmul.f32 %v5123, %v5143
        %v5164 = vmul.f32 %v5124, %v5143
        %v5165 = vmul.f32 %v5125, %v5143
        %v5166 = vmul.f32 %v5126, %v5143
        %v5167 = vmul.f32 %v5127, %v5143
        %v5168 = vmul.f32 %v5128, %v5143
        %v5169 = vmul.f32 %v5129, %v5143
        %v5170 = vmul.f32 %v5130, %v5143
        %v5171 = vmul.f32 %v5131, %v5143
        %v5172 = vmul.f32 %v5132, %v5143
        %v5173 = vmul.f32 %v5133, %v5143
        %v5174 = vmul.f32 %v5134, %v5143
        %v5175 = vmul.f32 %v5135, %v5143
        %v5176 = vmul.f32 %v5136, %v5143
        %v5177 = vsel %vm232, %v5145, 0.0
        %5178 = vadd.xlane.f32.xlu0 %v5177
        %v5179 = vpop.xlane.xlu0 %5178
        %v5180 = vsel %vm232, %v5146, 0.0
        %5181 = vadd.xlane.f32.xlu0 %v5180
        %v5182 = vpop.xlane.xlu0 %5181
        %v5183 = vsel %vm232, %v5147, 0.0
        %5184 = vadd.xlane.f32.xlu0 %v5183
        %v5185 = vpop.xlane.xlu0 %5184
        %v5186 = vsel %vm232, %v5148, 0.0
        %5187 = vadd.xlane.f32.xlu0 %v5186
        %v5188 = vpop.xlane.xlu0 %5187
        %v5189 = vsel %vm232, %v5149, 0.0
        %5190 = vadd.xlane.f32.xlu0 %v5189
        %v5191 = vpop.xlane.xlu0 %5190
        %v5192 = vsel %vm232, %v5150, 0.0
        %5193 = vadd.xlane.f32.xlu0 %v5192
        %v5194 = vpop.xlane.xlu0 %5193
        %v5195 = vsel %vm232, %v5151, 0.0
        %5196 = vadd.xlane.f32.xlu0 %v5195
        %v5197 = vpop.xlane.xlu0 %5196
        %v5198 = vsel %vm232, %v5152, 0.0
        %5199 = vadd.xlane.f32.xlu0 %v5198
        %v5200 = vpop.xlane.xlu0 %5199
        %v5201 = vsel %vm232, %v5153, 0.0
        %5202 = vadd.xlane.f32.xlu0 %v5201
        %v5203 = vpop.xlane.xlu0 %5202
        %v5204 = vsel %vm232, %v5154, 0.0
        %5205 = vadd.xlane.f32.xlu0 %v5204
        %v5206 = vpop.xlane.xlu0 %5205
        %v5207 = vsel %vm232, %v5155, 0.0
        %5208 = vadd.xlane.f32.xlu0 %v5207
        %v5209 = vpop.xlane.xlu0 %5208
        %v5210 = vsel %vm232, %v5156, 0.0
        %5211 = vadd.xlane.f32.xlu0 %v5210
        %v5212 = vpop.xlane.xlu0 %5211
        %v5213 = vsel %vm232, %v5157, 0.0
        %5214 = vadd.xlane.f32.xlu0 %v5213
        %v5215 = vpop.xlane.xlu0 %5214
        %v5216 = vsel %vm232, %v5158, 0.0
        %5217 = vadd.xlane.f32.xlu0 %v5216
        %v5218 = vpop.xlane.xlu0 %5217
        %v5219 = vsel %vm232, %v5159, 0.0
        %5220 = vadd.xlane.f32.xlu0 %v5219
        %v5221 = vpop.xlane.xlu0 %5220
        %v5222 = vsel %vm232, %v5160, 0.0
        %5223 = vadd.xlane.f32.xlu0 %v5222
        %v5224 = vpop.xlane.xlu0 %5223
        %v5225 = vsel %vm232, %v5161, 0.0
        %5226 = vadd.xlane.f32.xlu0 %v5225
        %v5227 = vpop.xlane.xlu0 %5226
        %v5228 = vsel %vm232, %v5162, 0.0
        %5229 = vadd.xlane.f32.xlu0 %v5228
        %v5230 = vpop.xlane.xlu0 %5229
        %v5231 = vsel %vm232, %v5163, 0.0
        %5232 = vadd.xlane.f32.xlu0 %v5231
        %v5233 = vpop.xlane.xlu0 %5232
        %v5234 = vsel %vm232, %v5164, 0.0
        %5235 = vadd.xlane.f32.xlu0 %v5234
        %v5236 = vpop.xlane.xlu0 %5235
        %v5237 = vsel %vm232, %v5165, 0.0
        %5238 = vadd.xlane.f32.xlu0 %v5237
        %v5239 = vpop.xlane.xlu0 %5238
        %v5240 = vsel %vm232, %v5166, 0.0
        %5241 = vadd.xlane.f32.xlu0 %v5240
        %v5242 = vpop.xlane.xlu0 %5241
        %v5243 = vsel %vm232, %v5167, 0.0
        %5244 = vadd.xlane.f32.xlu0 %v5243
        %v5245 = vpop.xlane.xlu0 %5244
        %v5246 = vsel %vm232, %v5168, 0.0
        %5247 = vadd.xlane.f32.xlu0 %v5246
        %v5248 = vpop.xlane.xlu0 %5247
        %v5249 = vsel %vm232, %v5169, 0.0
        %5250 = vadd.xlane.f32.xlu0 %v5249
        %v5251 = vpop.xlane.xlu0 %5250
        %v5252 = vsel %vm232, %v5170, 0.0
        %5253 = vadd.xlane.f32.xlu0 %v5252
        %v5254 = vpop.xlane.xlu0 %5253
        %v5255 = vsel %vm232, %v5171, 0.0
        %5256 = vadd.xlane.f32.xlu0 %v5255
        %v5257 = vpop.xlane.xlu0 %5256
        %v5258 = vsel %vm232, %v5172, 0.0
        %5259 = vadd.xlane.f32.xlu0 %v5258
        %v5260 = vpop.xlane.xlu0 %5259
        %v5261 = vsel %vm232, %v5173, 0.0
        %5262 = vadd.xlane.f32.xlu0 %v5261
        %v5263 = vpop.xlane.xlu0 %5262
        %v5264 = vsel %vm232, %v5174, 0.0
        %5265 = vadd.xlane.f32.xlu0 %v5264
        %v5266 = vpop.xlane.xlu0 %5265
        %v5267 = vsel %vm232, %v5175, 0.0
        %5268 = vadd.xlane.f32.xlu0 %v5267
        %v5269 = vpop.xlane.xlu0 %5268
        %v5270 = vsel %vm232, %v5176, 0.0
        %5271 = vadd.xlane.f32.xlu0 %v5270
        %v5272 = vpop.xlane.xlu0 %5271
        %v5273 = vadd.f32 %v5073, %v5179
        %v5274 = vadd.f32 %v5074, %v5182
        %v5275 = vadd.f32 %v5075, %v5185
        %v5276 = vadd.f32 %v5076, %v5188
        %v5277 = vadd.f32 %v5077, %v5191
        %v5278 = vadd.f32 %v5078, %v5194
        %v5279 = vadd.f32 %v5079, %v5197
        %v5280 = vadd.f32 %v5080, %v5200
        %v5281 = vadd.f32 %v5081, %v5203
        %v5282 = vadd.f32 %v5082, %v5206
        %v5283 = vadd.f32 %v5083, %v5209
        %v5284 = vadd.f32 %v5084, %v5212
        %v5285 = vadd.f32 %v5085, %v5215
        %v5286 = vadd.f32 %v5086, %v5218
        %v5287 = vadd.f32 %v5087, %v5221
        %v5288 = vadd.f32 %v5088, %v5224
        %v5289 = vadd.f32 %v5089, %v5227
        %v5290 = vadd.f32 %v5090, %v5230
        %v5291 = vadd.f32 %v5091, %v5233
        %v5292 = vadd.f32 %v5092, %v5236
        %v5293 = vadd.f32 %v5093, %v5239
        %v5294 = vadd.f32 %v5094, %v5242
        %v5295 = vadd.f32 %v5095, %v5245
        %v5296 = vadd.f32 %v5096, %v5248
        %v5297 = vadd.f32 %v5097, %v5251
        %v5298 = vadd.f32 %v5098, %v5254
        %v5299 = vadd.f32 %v5099, %v5257
        %v5300 = vadd.f32 %v5100, %v5260
        %v5301 = vadd.f32 %v5101, %v5263
        %v5302 = vadd.f32 %v5102, %v5266
        %v5303 = vadd.f32 %v5103, %v5269
        %v5304 = vadd.f32 %v5104, %v5272
        %v5305 = vld [vmem:[%s4473 + $0x1] sm:$0xff]
        %v5306 = vld [vmem:[%s4473 + $0x9] sm:$0xff]
        %v5307 = vld [vmem:[%s4473 + $0x19] sm:$0xff]
        %v5308 = vld [vmem:[%s4473 + $0x21] sm:$0xff]
        %v5309 = vld [vmem:[%s4473 + $0x31] sm:$0xff]
        %v5310 = vld [vmem:[%s4473 + $0x39] sm:$0xff]
        %v5311 = vld [vmem:[%s4473 + $0x49] sm:$0xff]
        %v5312 = vld [vmem:[%s4473 + $0x51] sm:$0xff]
        %v5313 = vld [vmem:[%s4473 + $0x61] sm:$0xff]
        %v5314 = vld [vmem:[%s4473 + $0x69] sm:$0xff]
        %v5315 = vld [vmem:[%s4473 + $0x79] sm:$0xff]
        %v5316 = vld [vmem:[%s4473 + $0x81] sm:$0xff]
        %v5317 = vld [vmem:[%s4473 + $0x91] sm:$0xff]
        %v5318 = vld [vmem:[%s4473 + $0x99] sm:$0xff]
        %v5319 = vld [vmem:[%s4473 + $0xa9] sm:$0xff]
        %v5320 = vld [vmem:[%s4473 + $0xb1] sm:$0xff]
        %v5321 = vld [vmem:[%s4473 + $0xc1] sm:$0xff]
        %v5322 = vld [vmem:[%s4473 + $0xc9] sm:$0xff]
        %v5323 = vld [vmem:[%s4473 + $0xd9] sm:$0xff]
        %v5324 = vld [vmem:[%s4473 + $0xe1] sm:$0xff]
        %v5325 = vld [vmem:[%s4473 + $0xf1] sm:$0xff]
        %v5326 = vld [vmem:[%s4473 + $0xf9] sm:$0xff]
        %v5327 = vld [vmem:[%s4473 + $0x109] sm:$0xff]
        %v5328 = vld [vmem:[%s4473 + $0x111] sm:$0xff]
        %v5329 = vld [vmem:[%s4473 + $0x121] sm:$0xff]
        %v5330 = vld [vmem:[%s4473 + $0x129] sm:$0xff]
        %v5331 = vld [vmem:[%s4473 + $0x139] sm:$0xff]
        %v5332 = vld [vmem:[%s4473 + $0x141] sm:$0xff]
        %v5333 = vld [vmem:[%s4473 + $0x151] sm:$0xff]
        %v5334 = vld [vmem:[%s4473 + $0x159] sm:$0xff]
        %v5335 = vld [vmem:[%s4473 + $0x169] sm:$0xff]
        %v5336 = vld [vmem:[%s4473 + $0x171] sm:$0xff]
        %s5337 = scalar_lea.vmem %s3, 4
        %v5338 = vld [vmem:[%s5337] sm:$0x1]
        %v5340 = vlaneseq
        %v5341 = vshrl.u32 %v5340, 7
        %v5342 = vsub.s32 0, %v5341
        %v5343 = vrot.slane %v5338, %v5342
        %v5345 = vmul.f32 %v5305, %v5343
        %v5346 = vmul.f32 %v5306, %v5343
        %v5347 = vmul.f32 %v5307, %v5343
        %v5348 = vmul.f32 %v5308, %v5343
        %v5349 = vmul.f32 %v5309, %v5343
        %v5350 = vmul.f32 %v5310, %v5343
        %v5351 = vmul.f32 %v5311, %v5343
        %v5352 = vmul.f32 %v5312, %v5343
        %v5353 = vmul.f32 %v5313, %v5343
        %v5354 = vmul.f32 %v5314, %v5343
        %v5355 = vmul.f32 %v5315, %v5343
        %v5356 = vmul.f32 %v5316, %v5343
        %v5357 = vmul.f32 %v5317, %v5343
        %v5358 = vmul.f32 %v5318, %v5343
        %v5359 = vmul.f32 %v5319, %v5343
        %v5360 = vmul.f32 %v5320, %v5343
        %v5361 = vmul.f32 %v5321, %v5343
        %v5362 = vmul.f32 %v5322, %v5343
        %v5363 = vmul.f32 %v5323, %v5343
        %v5364 = vmul.f32 %v5324, %v5343
        %v5365 = vmul.f32 %v5325, %v5343
        %v5366 = vmul.f32 %v5326, %v5343
        %v5367 = vmul.f32 %v5327, %v5343
        %v5368 = vmul.f32 %v5328, %v5343
        %v5369 = vmul.f32 %v5329, %v5343
        %v5370 = vmul.f32 %v5330, %v5343
        %v5371 = vmul.f32 %v5331, %v5343
        %v5372 = vmul.f32 %v5332, %v5343
        %v5373 = vmul.f32 %v5333, %v5343
        %v5374 = vmul.f32 %v5334, %v5343
        %v5375 = vmul.f32 %v5335, %v5343
        %v5376 = vmul.f32 %v5336, %v5343
        %v5377 = vsel %vm232, %v5345, 0.0
        %5378 = vadd.xlane.f32.xlu0 %v5377
        %v5379 = vpop.xlane.xlu0 %5378
        %v5380 = vsel %vm232, %v5346, 0.0
        %5381 = vadd.xlane.f32.xlu0 %v5380
        %v5382 = vpop.xlane.xlu0 %5381
        %v5383 = vsel %vm232, %v5347, 0.0
        %5384 = vadd.xlane.f32.xlu0 %v5383
        %v5385 = vpop.xlane.xlu0 %5384
        %v5386 = vsel %vm232, %v5348, 0.0
        %5387 = vadd.xlane.f32.xlu0 %v5386
        %v5388 = vpop.xlane.xlu0 %5387
        %v5389 = vsel %vm232, %v5349, 0.0
        %5390 = vadd.xlane.f32.xlu0 %v5389
        %v5391 = vpop.xlane.xlu0 %5390
        %v5392 = vsel %vm232, %v5350, 0.0
        %5393 = vadd.xlane.f32.xlu0 %v5392
        %v5394 = vpop.xlane.xlu0 %5393
        %v5395 = vsel %vm232, %v5351, 0.0
        %5396 = vadd.xlane.f32.xlu0 %v5395
        %v5397 = vpop.xlane.xlu0 %5396
        %v5398 = vsel %vm232, %v5352, 0.0
        %5399 = vadd.xlane.f32.xlu0 %v5398
        %v5400 = vpop.xlane.xlu0 %5399
        %v5401 = vsel %vm232, %v5353, 0.0
        %5402 = vadd.xlane.f32.xlu0 %v5401
        %v5403 = vpop.xlane.xlu0 %5402
        %v5404 = vsel %vm232, %v5354, 0.0
        %5405 = vadd.xlane.f32.xlu0 %v5404
        %v5406 = vpop.xlane.xlu0 %5405
        %v5407 = vsel %vm232, %v5355, 0.0
        %5408 = vadd.xlane.f32.xlu0 %v5407
        %v5409 = vpop.xlane.xlu0 %5408
        %v5410 = vsel %vm232, %v5356, 0.0
        %5411 = vadd.xlane.f32.xlu0 %v5410
        %v5412 = vpop.xlane.xlu0 %5411
        %v5413 = vsel %vm232, %v5357, 0.0
        %5414 = vadd.xlane.f32.xlu0 %v5413
        %v5415 = vpop.xlane.xlu0 %5414
        %v5416 = vsel %vm232, %v5358, 0.0
        %5417 = vadd.xlane.f32.xlu0 %v5416
        %v5418 = vpop.xlane.xlu0 %5417
        %v5419 = vsel %vm232, %v5359, 0.0
        %5420 = vadd.xlane.f32.xlu0 %v5419
        %v5421 = vpop.xlane.xlu0 %5420
        %v5422 = vsel %vm232, %v5360, 0.0
        %5423 = vadd.xlane.f32.xlu0 %v5422
        %v5424 = vpop.xlane.xlu0 %5423
        %v5425 = vsel %vm232, %v5361, 0.0
        %5426 = vadd.xlane.f32.xlu0 %v5425
        %v5427 = vpop.xlane.xlu0 %5426
        %v5428 = vsel %vm232, %v5362, 0.0
        %5429 = vadd.xlane.f32.xlu0 %v5428
        %v5430 = vpop.xlane.xlu0 %5429
        %v5431 = vsel %vm232, %v5363, 0.0
        %5432 = vadd.xlane.f32.xlu0 %v5431
        %v5433 = vpop.xlane.xlu0 %5432
        %v5434 = vsel %vm232, %v5364, 0.0
        %5435 = vadd.xlane.f32.xlu0 %v5434
        %v5436 = vpop.xlane.xlu0 %5435
        %v5437 = vsel %vm232, %v5365, 0.0
        %5438 = vadd.xlane.f32.xlu0 %v5437
        %v5439 = vpop.xlane.xlu0 %5438
        %v5440 = vsel %vm232, %v5366, 0.0
        %5441 = vadd.xlane.f32.xlu0 %v5440
        %v5442 = vpop.xlane.xlu0 %5441
        %v5443 = vsel %vm232, %v5367, 0.0
        %5444 = vadd.xlane.f32.xlu0 %v5443
        %v5445 = vpop.xlane.xlu0 %5444
        %v5446 = vsel %vm232, %v5368, 0.0
        %5447 = vadd.xlane.f32.xlu0 %v5446
        %v5448 = vpop.xlane.xlu0 %5447
        %v5449 = vsel %vm232, %v5369, 0.0
        %5450 = vadd.xlane.f32.xlu0 %v5449
        %v5451 = vpop.xlane.xlu0 %5450
        %v5452 = vsel %vm232, %v5370, 0.0
        %5453 = vadd.xlane.f32.xlu0 %v5452
        %v5454 = vpop.xlane.xlu0 %5453
        %v5455 = vsel %vm232, %v5371, 0.0
        %5456 = vadd.xlane.f32.xlu0 %v5455
        %v5457 = vpop.xlane.xlu0 %5456
        %v5458 = vsel %vm232, %v5372, 0.0
        %5459 = vadd.xlane.f32.xlu0 %v5458
        %v5460 = vpop.xlane.xlu0 %5459
        %v5461 = vsel %vm232, %v5373, 0.0
        %5462 = vadd.xlane.f32.xlu0 %v5461
        %v5463 = vpop.xlane.xlu0 %5462
        %v5464 = vsel %vm232, %v5374, 0.0
        %5465 = vadd.xlane.f32.xlu0 %v5464
        %v5466 = vpop.xlane.xlu0 %5465
        %v5467 = vsel %vm232, %v5375, 0.0
        %5468 = vadd.xlane.f32.xlu0 %v5467
        %v5469 = vpop.xlane.xlu0 %5468
        %v5470 = vsel %vm232, %v5376, 0.0
        %5471 = vadd.xlane.f32.xlu0 %v5470
        %v5472 = vpop.xlane.xlu0 %5471
        %v5473 = vadd.f32 %v5273, %v5379
        %v5474 = vadd.f32 %v5274, %v5382
        %v5475 = vadd.f32 %v5275, %v5385
        %v5476 = vadd.f32 %v5276, %v5388
        %v5477 = vadd.f32 %v5277, %v5391
        %v5478 = vadd.f32 %v5278, %v5394
        %v5479 = vadd.f32 %v5279, %v5397
        %v5480 = vadd.f32 %v5280, %v5400
        %v5481 = vadd.f32 %v5281, %v5403
        %v5482 = vadd.f32 %v5282, %v5406
        %v5483 = vadd.f32 %v5283, %v5409
        %v5484 = vadd.f32 %v5284, %v5412
        %v5485 = vadd.f32 %v5285, %v5415
        %v5486 = vadd.f32 %v5286, %v5418
        %v5487 = vadd.f32 %v5287, %v5421
        %v5488 = vadd.f32 %v5288, %v5424
        %v5489 = vadd.f32 %v5289, %v5427
        %v5490 = vadd.f32 %v5290, %v5430
        %v5491 = vadd.f32 %v5291, %v5433
        %v5492 = vadd.f32 %v5292, %v5436
        %v5493 = vadd.f32 %v5293, %v5439
        %v5494 = vadd.f32 %v5294, %v5442
        %v5495 = vadd.f32 %v5295, %v5445
        %v5496 = vadd.f32 %v5296, %v5448
        %v5497 = vadd.f32 %v5297, %v5451
        %v5498 = vadd.f32 %v5298, %v5454
        %v5499 = vadd.f32 %v5299, %v5457
        %v5500 = vadd.f32 %v5300, %v5460
        %v5501 = vadd.f32 %v5301, %v5463
        %v5502 = vadd.f32 %v5302, %v5466
        %v5503 = vadd.f32 %v5303, %v5469
        %v5504 = vadd.f32 %v5304, %v5472
        %v5505 = vld [vmem:[%s4473 + $0x2] sm:$0xff]
        %v5506 = vld [vmem:[%s4473 + $0xa] sm:$0xff]
        %v5507 = vld [vmem:[%s4473 + $0x1a] sm:$0xff]
        %v5508 = vld [vmem:[%s4473 + $0x22] sm:$0xff]
        %v5509 = vld [vmem:[%s4473 + $0x32] sm:$0xff]
        %v5510 = vld [vmem:[%s4473 + $0x3a] sm:$0xff]
        %v5511 = vld [vmem:[%s4473 + $0x4a] sm:$0xff]
        %v5512 = vld [vmem:[%s4473 + $0x52] sm:$0xff]
        %v5513 = vld [vmem:[%s4473 + $0x62] sm:$0xff]
        %v5514 = vld [vmem:[%s4473 + $0x6a] sm:$0xff]
        %v5515 = vld [vmem:[%s4473 + $0x7a] sm:$0xff]
        %v5516 = vld [vmem:[%s4473 + $0x82] sm:$0xff]
        %v5517 = vld [vmem:[%s4473 + $0x92] sm:$0xff]
        %v5518 = vld [vmem:[%s4473 + $0x9a] sm:$0xff]
        %v5519 = vld [vmem:[%s4473 + $0xaa] sm:$0xff]
        %v5520 = vld [vmem:[%s4473 + $0xb2] sm:$0xff]
        %v5521 = vld [vmem:[%s4473 + $0xc2] sm:$0xff]
        %v5522 = vld [vmem:[%s4473 + $0xca] sm:$0xff]
        %v5523 = vld [vmem:[%s4473 + $0xda] sm:$0xff]
        %v5524 = vld [vmem:[%s4473 + $0xe2] sm:$0xff]
        %v5525 = vld [vmem:[%s4473 + $0xf2] sm:$0xff]
        %v5526 = vld [vmem:[%s4473 + $0xfa] sm:$0xff]
        %v5527 = vld [vmem:[%s4473 + $0x10a] sm:$0xff]
        %v5528 = vld [vmem:[%s4473 + $0x112] sm:$0xff]
        %v5529 = vld [vmem:[%s4473 + $0x122] sm:$0xff]
        %v5530 = vld [vmem:[%s4473 + $0x12a] sm:$0xff]
        %v5531 = vld [vmem:[%s4473 + $0x13a] sm:$0xff]
        %v5532 = vld [vmem:[%s4473 + $0x142] sm:$0xff]
        %v5533 = vld [vmem:[%s4473 + $0x152] sm:$0xff]
        %v5534 = vld [vmem:[%s4473 + $0x15a] sm:$0xff]
        %v5535 = vld [vmem:[%s4473 + $0x16a] sm:$0xff]
        %v5536 = vld [vmem:[%s4473 + $0x172] sm:$0xff]
        %s5537 = scalar_lea.vmem %s3, 5
        %v5538 = vld [vmem:[%s5537] sm:$0x1]
        %v5540 = vlaneseq
        %v5541 = vshrl.u32 %v5540, 7
        %v5542 = vsub.s32 0, %v5541
        %v5543 = vrot.slane %v5538, %v5542
        %v5545 = vmul.f32 %v5505, %v5543
        %v5546 = vmul.f32 %v5506, %v5543
        %v5547 = vmul.f32 %v5507, %v5543
        %v5548 = vmul.f32 %v5508, %v5543
        %v5549 = vmul.f32 %v5509, %v5543
        %v5550 = vmul.f32 %v5510, %v5543
        %v5551 = vmul.f32 %v5511, %v5543
        %v5552 = vmul.f32 %v5512, %v5543
        %v5553 = vmul.f32 %v5513, %v5543
        %v5554 = vmul.f32 %v5514, %v5543
        %v5555 = vmul.f32 %v5515, %v5543
        %v5556 = vmul.f32 %v5516, %v5543
        %v5557 = vmul.f32 %v5517, %v5543
        %v5558 = vmul.f32 %v5518, %v5543
        %v5559 = vmul.f32 %v5519, %v5543
        %v5560 = vmul.f32 %v5520, %v5543
        %v5561 = vmul.f32 %v5521, %v5543
        %v5562 = vmul.f32 %v5522, %v5543
        %v5563 = vmul.f32 %v5523, %v5543
        %v5564 = vmul.f32 %v5524, %v5543
        %v5565 = vmul.f32 %v5525, %v5543
        %v5566 = vmul.f32 %v5526, %v5543
        %v5567 = vmul.f32 %v5527, %v5543
        %v5568 = vmul.f32 %v5528, %v5543
        %v5569 = vmul.f32 %v5529, %v5543
        %v5570 = vmul.f32 %v5530, %v5543
        %v5571 = vmul.f32 %v5531, %v5543
        %v5572 = vmul.f32 %v5532, %v5543
        %v5573 = vmul.f32 %v5533, %v5543
        %v5574 = vmul.f32 %v5534, %v5543
        %v5575 = vmul.f32 %v5535, %v5543
        %v5576 = vmul.f32 %v5536, %v5543
        %v5577 = vsel %vm232, %v5545, 0.0
        %5578 = vadd.xlane.f32.xlu0 %v5577
        %v5579 = vpop.xlane.xlu0 %5578
        %v5580 = vsel %vm232, %v5546, 0.0
        %5581 = vadd.xlane.f32.xlu0 %v5580
        %v5582 = vpop.xlane.xlu0 %5581
        %v5583 = vsel %vm232, %v5547, 0.0
        %5584 = vadd.xlane.f32.xlu0 %v5583
        %v5585 = vpop.xlane.xlu0 %5584
        %v5586 = vsel %vm232, %v5548, 0.0
        %5587 = vadd.xlane.f32.xlu0 %v5586
        %v5588 = vpop.xlane.xlu0 %5587
        %v5589 = vsel %vm232, %v5549, 0.0
        %5590 = vadd.xlane.f32.xlu0 %v5589
        %v5591 = vpop.xlane.xlu0 %5590
        %v5592 = vsel %vm232, %v5550, 0.0
        %5593 = vadd.xlane.f32.xlu0 %v5592
        %v5594 = vpop.xlane.xlu0 %5593
        %v5595 = vsel %vm232, %v5551, 0.0
        %5596 = vadd.xlane.f32.xlu0 %v5595
        %v5597 = vpop.xlane.xlu0 %5596
        %v5598 = vsel %vm232, %v5552, 0.0
        %5599 = vadd.xlane.f32.xlu0 %v5598
        %v5600 = vpop.xlane.xlu0 %5599
        %v5601 = vsel %vm232, %v5553, 0.0
        %5602 = vadd.xlane.f32.xlu0 %v5601
        %v5603 = vpop.xlane.xlu0 %5602
        %v5604 = vsel %vm232, %v5554, 0.0
        %5605 = vadd.xlane.f32.xlu0 %v5604
        %v5606 = vpop.xlane.xlu0 %5605
        %v5607 = vsel %vm232, %v5555, 0.0
        %5608 = vadd.xlane.f32.xlu0 %v5607
        %v5609 = vpop.xlane.xlu0 %5608
        %v5610 = vsel %vm232, %v5556, 0.0
        %5611 = vadd.xlane.f32.xlu0 %v5610
        %v5612 = vpop.xlane.xlu0 %5611
        %v5613 = vsel %vm232, %v5557, 0.0
        %5614 = vadd.xlane.f32.xlu0 %v5613
        %v5615 = vpop.xlane.xlu0 %5614
        %v5616 = vsel %vm232, %v5558, 0.0
        %5617 = vadd.xlane.f32.xlu0 %v5616
        %v5618 = vpop.xlane.xlu0 %5617
        %v5619 = vsel %vm232, %v5559, 0.0
        %5620 = vadd.xlane.f32.xlu0 %v5619
        %v5621 = vpop.xlane.xlu0 %5620
        %v5622 = vsel %vm232, %v5560, 0.0
        %5623 = vadd.xlane.f32.xlu0 %v5622
        %v5624 = vpop.xlane.xlu0 %5623
        %v5625 = vsel %vm232, %v5561, 0.0
        %5626 = vadd.xlane.f32.xlu0 %v5625
        %v5627 = vpop.xlane.xlu0 %5626
        %v5628 = vsel %vm232, %v5562, 0.0
        %5629 = vadd.xlane.f32.xlu0 %v5628
        %v5630 = vpop.xlane.xlu0 %5629
        %v5631 = vsel %vm232, %v5563, 0.0
        %5632 = vadd.xlane.f32.xlu0 %v5631
        %v5633 = vpop.xlane.xlu0 %5632
        %v5634 = vsel %vm232, %v5564, 0.0
        %5635 = vadd.xlane.f32.xlu0 %v5634
        %v5636 = vpop.xlane.xlu0 %5635
        %v5637 = vsel %vm232, %v5565, 0.0
        %5638 = vadd.xlane.f32.xlu0 %v5637
        %v5639 = vpop.xlane.xlu0 %5638
        %v5640 = vsel %vm232, %v5566, 0.0
        %5641 = vadd.xlane.f32.xlu0 %v5640
        %v5642 = vpop.xlane.xlu0 %5641
        %v5643 = vsel %vm232, %v5567, 0.0
        %5644 = vadd.xlane.f32.xlu0 %v5643
        %v5645 = vpop.xlane.xlu0 %5644
        %v5646 = vsel %vm232, %v5568, 0.0
        %5647 = vadd.xlane.f32.xlu0 %v5646
        %v5648 = vpop.xlane.xlu0 %5647
        %v5649 = vsel %vm232, %v5569, 0.0
        %5650 = vadd.xlane.f32.xlu0 %v5649
        %v5651 = vpop.xlane.xlu0 %5650
        %v5652 = vsel %vm232, %v5570, 0.0
        %5653 = vadd.xlane.f32.xlu0 %v5652
        %v5654 = vpop.xlane.xlu0 %5653
        %v5655 = vsel %vm232, %v5571, 0.0
        %5656 = vadd.xlane.f32.xlu0 %v5655
        %v5657 = vpop.xlane.xlu0 %5656
        %v5658 = vsel %vm232, %v5572, 0.0
        %5659 = vadd.xlane.f32.xlu0 %v5658
        %v5660 = vpop.xlane.xlu0 %5659
        %v5661 = vsel %vm232, %v5573, 0.0
        %5662 = vadd.xlane.f32.xlu0 %v5661
        %v5663 = vpop.xlane.xlu0 %5662
        %v5664 = vsel %vm232, %v5574, 0.0
        %5665 = vadd.xlane.f32.xlu0 %v5664
        %v5666 = vpop.xlane.xlu0 %5665
        %v5667 = vsel %vm232, %v5575, 0.0
        %5668 = vadd.xlane.f32.xlu0 %v5667
        %v5669 = vpop.xlane.xlu0 %5668
        %v5670 = vsel %vm232, %v5576, 0.0
        %5671 = vadd.xlane.f32.xlu0 %v5670
        %v5672 = vpop.xlane.xlu0 %5671
        %v5673 = vadd.f32 %v5473, %v5579
        %v5674 = vadd.f32 %v5474, %v5582
        %v5675 = vadd.f32 %v5475, %v5585
        %v5676 = vadd.f32 %v5476, %v5588
        %v5677 = vadd.f32 %v5477, %v5591
        %v5678 = vadd.f32 %v5478, %v5594
        %v5679 = vadd.f32 %v5479, %v5597
        %v5680 = vadd.f32 %v5480, %v5600
        %v5681 = vadd.f32 %v5481, %v5603
        %v5682 = vadd.f32 %v5482, %v5606
        %v5683 = vadd.f32 %v5483, %v5609
        %v5684 = vadd.f32 %v5484, %v5612
        %v5685 = vadd.f32 %v5485, %v5615
        %v5686 = vadd.f32 %v5486, %v5618
        %v5687 = vadd.f32 %v5487, %v5621
        %v5688 = vadd.f32 %v5488, %v5624
        %v5689 = vadd.f32 %v5489, %v5627
        %v5690 = vadd.f32 %v5490, %v5630
        %v5691 = vadd.f32 %v5491, %v5633
        %v5692 = vadd.f32 %v5492, %v5636
        %v5693 = vadd.f32 %v5493, %v5639
        %v5694 = vadd.f32 %v5494, %v5642
        %v5695 = vadd.f32 %v5495, %v5645
        %v5696 = vadd.f32 %v5496, %v5648
        %v5697 = vadd.f32 %v5497, %v5651
        %v5698 = vadd.f32 %v5498, %v5654
        %v5699 = vadd.f32 %v5499, %v5657
        %v5700 = vadd.f32 %v5500, %v5660
        %v5701 = vadd.f32 %v5501, %v5663
        %v5702 = vadd.f32 %v5502, %v5666
        %v5703 = vadd.f32 %v5503, %v5669
        %v5704 = vadd.f32 %v5504, %v5672
        %s5705 = scalar_lea.vmem [#allocation2], 48
        %v5706 = vld [vmem:[%s5705] sm:$0xff]
        %v5707 = vld [vmem:[%s5705 + $0x8] sm:$0xff]
        %v5708 = vld [vmem:[%s5705 + $0x18] sm:$0xff]
        %v5709 = vld [vmem:[%s5705 + $0x20] sm:$0xff]
        %v5710 = vld [vmem:[%s5705 + $0x30] sm:$0xff]
        %v5711 = vld [vmem:[%s5705 + $0x38] sm:$0xff]
        %v5712 = vld [vmem:[%s5705 + $0x48] sm:$0xff]
        %v5713 = vld [vmem:[%s5705 + $0x50] sm:$0xff]
        %v5714 = vld [vmem:[%s5705 + $0x60] sm:$0xff]
        %v5715 = vld [vmem:[%s5705 + $0x68] sm:$0xff]
        %v5716 = vld [vmem:[%s5705 + $0x78] sm:$0xff]
        %v5717 = vld [vmem:[%s5705 + $0x80] sm:$0xff]
        %v5718 = vld [vmem:[%s5705 + $0x90] sm:$0xff]
        %v5719 = vld [vmem:[%s5705 + $0x98] sm:$0xff]
        %v5720 = vld [vmem:[%s5705 + $0xa8] sm:$0xff]
        %v5721 = vld [vmem:[%s5705 + $0xb0] sm:$0xff]
        %v5722 = vld [vmem:[%s5705 + $0xc0] sm:$0xff]
        %v5723 = vld [vmem:[%s5705 + $0xc8] sm:$0xff]
        %v5724 = vld [vmem:[%s5705 + $0xd8] sm:$0xff]
        %v5725 = vld [vmem:[%s5705 + $0xe0] sm:$0xff]
        %v5726 = vld [vmem:[%s5705 + $0xf0] sm:$0xff]
        %v5727 = vld [vmem:[%s5705 + $0xf8] sm:$0xff]
        %v5728 = vld [vmem:[%s5705 + $0x108] sm:$0xff]
        %v5729 = vld [vmem:[%s5705 + $0x110] sm:$0xff]
        %v5730 = vld [vmem:[%s5705 + $0x120] sm:$0xff]
        %v5731 = vld [vmem:[%s5705 + $0x128] sm:$0xff]
        %v5732 = vld [vmem:[%s5705 + $0x138] sm:$0xff]
        %v5733 = vld [vmem:[%s5705 + $0x140] sm:$0xff]
        %v5734 = vld [vmem:[%s5705 + $0x150] sm:$0xff]
        %v5735 = vld [vmem:[%s5705 + $0x158] sm:$0xff]
        %v5736 = vld [vmem:[%s5705 + $0x168] sm:$0xff]
        %v5737 = vld [vmem:[%s5705 + $0x170] sm:$0xff]
        %s5738 = scalar_lea.vmem %s3, 6
        %v5739 = vld [vmem:[%s5738] sm:$0x1]
        %v5741 = vlaneseq
        %v5742 = vshrl.u32 %v5741, 7
        %v5743 = vsub.s32 0, %v5742
        %v5744 = vrot.slane %v5739, %v5743
        %v5746 = vmul.f32 %v5706, %v5744
        %v5747 = vmul.f32 %v5707, %v5744
        %v5748 = vmul.f32 %v5708, %v5744
        %v5749 = vmul.f32 %v5709, %v5744
        %v5750 = vmul.f32 %v5710, %v5744
        %v5751 = vmul.f32 %v5711, %v5744
        %v5752 = vmul.f32 %v5712, %v5744
        %v5753 = vmul.f32 %v5713, %v5744
        %v5754 = vmul.f32 %v5714, %v5744
        %v5755 = vmul.f32 %v5715, %v5744
        %v5756 = vmul.f32 %v5716, %v5744
        %v5757 = vmul.f32 %v5717, %v5744
        %v5758 = vmul.f32 %v5718, %v5744
        %v5759 = vmul.f32 %v5719, %v5744
        %v5760 = vmul.f32 %v5720, %v5744
        %v5761 = vmul.f32 %v5721, %v5744
        %v5762 = vmul.f32 %v5722, %v5744
        %v5763 = vmul.f32 %v5723, %v5744
        %v5764 = vmul.f32 %v5724, %v5744
        %v5765 = vmul.f32 %v5725, %v5744
        %v5766 = vmul.f32 %v5726, %v5744
        %v5767 = vmul.f32 %v5727, %v5744
        %v5768 = vmul.f32 %v5728, %v5744
        %v5769 = vmul.f32 %v5729, %v5744
        %v5770 = vmul.f32 %v5730, %v5744
        %v5771 = vmul.f32 %v5731, %v5744
        %v5772 = vmul.f32 %v5732, %v5744
        %v5773 = vmul.f32 %v5733, %v5744
        %v5774 = vmul.f32 %v5734, %v5744
        %v5775 = vmul.f32 %v5735, %v5744
        %v5776 = vmul.f32 %v5736, %v5744
        %v5777 = vmul.f32 %v5737, %v5744
        %v5778 = vsel %vm232, %v5746, 0.0
        %5779 = vadd.xlane.f32.xlu0 %v5778
        %v5780 = vpop.xlane.xlu0 %5779
        %v5781 = vsel %vm232, %v5747, 0.0
        %5782 = vadd.xlane.f32.xlu0 %v5781
        %v5783 = vpop.xlane.xlu0 %5782
        %v5784 = vsel %vm232, %v5748, 0.0
        %5785 = vadd.xlane.f32.xlu0 %v5784
        %v5786 = vpop.xlane.xlu0 %5785
        %v5787 = vsel %vm232, %v5749, 0.0
        %5788 = vadd.xlane.f32.xlu0 %v5787
        %v5789 = vpop.xlane.xlu0 %5788
        %v5790 = vsel %vm232, %v5750, 0.0
        %5791 = vadd.xlane.f32.xlu0 %v5790
        %v5792 = vpop.xlane.xlu0 %5791
        %v5793 = vsel %vm232, %v5751, 0.0
        %5794 = vadd.xlane.f32.xlu0 %v5793
        %v5795 = vpop.xlane.xlu0 %5794
        %v5796 = vsel %vm232, %v5752, 0.0
        %5797 = vadd.xlane.f32.xlu0 %v5796
        %v5798 = vpop.xlane.xlu0 %5797
        %v5799 = vsel %vm232, %v5753, 0.0
        %5800 = vadd.xlane.f32.xlu0 %v5799
        %v5801 = vpop.xlane.xlu0 %5800
        %v5802 = vsel %vm232, %v5754, 0.0
        %5803 = vadd.xlane.f32.xlu0 %v5802
        %v5804 = vpop.xlane.xlu0 %5803
        %v5805 = vsel %vm232, %v5755, 0.0
        %5806 = vadd.xlane.f32.xlu0 %v5805
        %v5807 = vpop.xlane.xlu0 %5806
        %v5808 = vsel %vm232, %v5756, 0.0
        %5809 = vadd.xlane.f32.xlu0 %v5808
        %v5810 = vpop.xlane.xlu0 %5809
        %v5811 = vsel %vm232, %v5757, 0.0
        %5812 = vadd.xlane.f32.xlu0 %v5811
        %v5813 = vpop.xlane.xlu0 %5812
        %v5814 = vsel %vm232, %v5758, 0.0
        %5815 = vadd.xlane.f32.xlu0 %v5814
        %v5816 = vpop.xlane.xlu0 %5815
        %v5817 = vsel %vm232, %v5759, 0.0
        %5818 = vadd.xlane.f32.xlu0 %v5817
        %v5819 = vpop.xlane.xlu0 %5818
        %v5820 = vsel %vm232, %v5760, 0.0
        %5821 = vadd.xlane.f32.xlu0 %v5820
        %v5822 = vpop.xlane.xlu0 %5821
        %v5823 = vsel %vm232, %v5761, 0.0
        %5824 = vadd.xlane.f32.xlu0 %v5823
        %v5825 = vpop.xlane.xlu0 %5824
        %v5826 = vsel %vm232, %v5762, 0.0
        %5827 = vadd.xlane.f32.xlu0 %v5826
        %v5828 = vpop.xlane.xlu0 %5827
        %v5829 = vsel %vm232, %v5763, 0.0
        %5830 = vadd.xlane.f32.xlu0 %v5829
        %v5831 = vpop.xlane.xlu0 %5830
        %v5832 = vsel %vm232, %v5764, 0.0
        %5833 = vadd.xlane.f32.xlu0 %v5832
        %v5834 = vpop.xlane.xlu0 %5833
        %v5835 = vsel %vm232, %v5765, 0.0
        %5836 = vadd.xlane.f32.xlu0 %v5835
        %v5837 = vpop.xlane.xlu0 %5836
        %v5838 = vsel %vm232, %v5766, 0.0
        %5839 = vadd.xlane.f32.xlu0 %v5838
        %v5840 = vpop.xlane.xlu0 %5839
        %v5841 = vsel %vm232, %v5767, 0.0
        %5842 = vadd.xlane.f32.xlu0 %v5841
        %v5843 = vpop.xlane.xlu0 %5842
        %v5844 = vsel %vm232, %v5768, 0.0
        %5845 = vadd.xlane.f32.xlu0 %v5844
        %v5846 = vpop.xlane.xlu0 %5845
        %v5847 = vsel %vm232, %v5769, 0.0
        %5848 = vadd.xlane.f32.xlu0 %v5847
        %v5849 = vpop.xlane.xlu0 %5848
        %v5850 = vsel %vm232, %v5770, 0.0
        %5851 = vadd.xlane.f32.xlu0 %v5850
        %v5852 = vpop.xlane.xlu0 %5851
        %v5853 = vsel %vm232, %v5771, 0.0
        %5854 = vadd.xlane.f32.xlu0 %v5853
        %v5855 = vpop.xlane.xlu0 %5854
        %v5856 = vsel %vm232, %v5772, 0.0
        %5857 = vadd.xlane.f32.xlu0 %v5856
        %v5858 = vpop.xlane.xlu0 %5857
        %v5859 = vsel %vm232, %v5773, 0.0
        %5860 = vadd.xlane.f32.xlu0 %v5859
        %v5861 = vpop.xlane.xlu0 %5860
        %v5862 = vsel %vm232, %v5774, 0.0
        %5863 = vadd.xlane.f32.xlu0 %v5862
        %v5864 = vpop.xlane.xlu0 %5863
        %v5865 = vsel %vm232, %v5775, 0.0
        %5866 = vadd.xlane.f32.xlu0 %v5865
        %v5867 = vpop.xlane.xlu0 %5866
        %v5868 = vsel %vm232, %v5776, 0.0
        %5869 = vadd.xlane.f32.xlu0 %v5868
        %v5870 = vpop.xlane.xlu0 %5869
        %v5871 = vsel %vm232, %v5777, 0.0
        %5872 = vadd.xlane.f32.xlu0 %v5871
        %v5873 = vpop.xlane.xlu0 %5872
        %v5874 = vadd.f32 %v5673, %v5780
        %v5875 = vadd.f32 %v5674, %v5783
        %v5876 = vadd.f32 %v5675, %v5786
        %v5877 = vadd.f32 %v5676, %v5789
        %v5878 = vadd.f32 %v5677, %v5792
        %v5879 = vadd.f32 %v5678, %v5795
        %v5880 = vadd.f32 %v5679, %v5798
        %v5881 = vadd.f32 %v5680, %v5801
        %v5882 = vadd.f32 %v5681, %v5804
        %v5883 = vadd.f32 %v5682, %v5807
        %v5884 = vadd.f32 %v5683, %v5810
        %v5885 = vadd.f32 %v5684, %v5813
        %v5886 = vadd.f32 %v5685, %v5816
        %v5887 = vadd.f32 %v5686, %v5819
        %v5888 = vadd.f32 %v5687, %v5822
        %v5889 = vadd.f32 %v5688, %v5825
        %v5890 = vadd.f32 %v5689, %v5828
        %v5891 = vadd.f32 %v5690, %v5831
        %v5892 = vadd.f32 %v5691, %v5834
        %v5893 = vadd.f32 %v5692, %v5837
        %v5894 = vadd.f32 %v5693, %v5840
        %v5895 = vadd.f32 %v5694, %v5843
        %v5896 = vadd.f32 %v5695, %v5846
        %v5897 = vadd.f32 %v5696, %v5849
        %v5898 = vadd.f32 %v5697, %v5852
        %v5899 = vadd.f32 %v5698, %v5855
        %v5900 = vadd.f32 %v5699, %v5858
        %v5901 = vadd.f32 %v5700, %v5861
        %v5902 = vadd.f32 %v5701, %v5864
        %v5903 = vadd.f32 %v5702, %v5867
        %v5904 = vadd.f32 %v5703, %v5870
        %v5905 = vadd.f32 %v5704, %v5873
        %v5906 = vld [vmem:[%s5705 + $0x1] sm:$0xff]
        %v5907 = vld [vmem:[%s5705 + $0x9] sm:$0xff]
        %v5908 = vld [vmem:[%s5705 + $0x19] sm:$0xff]
        %v5909 = vld [vmem:[%s5705 + $0x21] sm:$0xff]
        %v5910 = vld [vmem:[%s5705 + $0x31] sm:$0xff]
        %v5911 = vld [vmem:[%s5705 + $0x39] sm:$0xff]
        %v5912 = vld [vmem:[%s5705 + $0x49] sm:$0xff]
        %v5913 = vld [vmem:[%s5705 + $0x51] sm:$0xff]
        %v5914 = vld [vmem:[%s5705 + $0x61] sm:$0xff]
        %v5915 = vld [vmem:[%s5705 + $0x69] sm:$0xff]
        %v5916 = vld [vmem:[%s5705 + $0x79] sm:$0xff]
        %v5917 = vld [vmem:[%s5705 + $0x81] sm:$0xff]
        %v5918 = vld [vmem:[%s5705 + $0x91] sm:$0xff]
        %v5919 = vld [vmem:[%s5705 + $0x99] sm:$0xff]
        %v5920 = vld [vmem:[%s5705 + $0xa9] sm:$0xff]
        %v5921 = vld [vmem:[%s5705 + $0xb1] sm:$0xff]
        %v5922 = vld [vmem:[%s5705 + $0xc1] sm:$0xff]
        %v5923 = vld [vmem:[%s5705 + $0xc9] sm:$0xff]
        %v5924 = vld [vmem:[%s5705 + $0xd9] sm:$0xff]
        %v5925 = vld [vmem:[%s5705 + $0xe1] sm:$0xff]
        %v5926 = vld [vmem:[%s5705 + $0xf1] sm:$0xff]
        %v5927 = vld [vmem:[%s5705 + $0xf9] sm:$0xff]
        %v5928 = vld [vmem:[%s5705 + $0x109] sm:$0xff]
        %v5929 = vld [vmem:[%s5705 + $0x111] sm:$0xff]
        %v5930 = vld [vmem:[%s5705 + $0x121] sm:$0xff]
        %v5931 = vld [vmem:[%s5705 + $0x129] sm:$0xff]
        %v5932 = vld [vmem:[%s5705 + $0x139] sm:$0xff]
        %v5933 = vld [vmem:[%s5705 + $0x141] sm:$0xff]
        %v5934 = vld [vmem:[%s5705 + $0x151] sm:$0xff]
        %v5935 = vld [vmem:[%s5705 + $0x159] sm:$0xff]
        %v5936 = vld [vmem:[%s5705 + $0x169] sm:$0xff]
        %v5937 = vld [vmem:[%s5705 + $0x171] sm:$0xff]
        %s5938 = scalar_lea.vmem %s3, 7
        %v5939 = vld [vmem:[%s5938] sm:$0x1]
        %v5941 = vlaneseq
        %v5942 = vshrl.u32 %v5941, 7
        %v5943 = vsub.s32 0, %v5942
        %v5944 = vrot.slane %v5939, %v5943
        %v5946 = vmul.f32 %v5906, %v5944
        %v5947 = vmul.f32 %v5907, %v5944
        %v5948 = vmul.f32 %v5908, %v5944
        %v5949 = vmul.f32 %v5909, %v5944
        %v5950 = vmul.f32 %v5910, %v5944
        %v5951 = vmul.f32 %v5911, %v5944
        %v5952 = vmul.f32 %v5912, %v5944
        %v5953 = vmul.f32 %v5913, %v5944
        %v5954 = vmul.f32 %v5914, %v5944
        %v5955 = vmul.f32 %v5915, %v5944
        %v5956 = vmul.f32 %v5916, %v5944
        %v5957 = vmul.f32 %v5917, %v5944
        %v5958 = vmul.f32 %v5918, %v5944
        %v5959 = vmul.f32 %v5919, %v5944
        %v5960 = vmul.f32 %v5920, %v5944
        %v5961 = vmul.f32 %v5921, %v5944
        %v5962 = vmul.f32 %v5922, %v5944
        %v5963 = vmul.f32 %v5923, %v5944
        %v5964 = vmul.f32 %v5924, %v5944
        %v5965 = vmul.f32 %v5925, %v5944
        %v5966 = vmul.f32 %v5926, %v5944
        %v5967 = vmul.f32 %v5927, %v5944
        %v5968 = vmul.f32 %v5928, %v5944
        %v5969 = vmul.f32 %v5929, %v5944
        %v5970 = vmul.f32 %v5930, %v5944
        %v5971 = vmul.f32 %v5931, %v5944
        %v5972 = vmul.f32 %v5932, %v5944
        %v5973 = vmul.f32 %v5933, %v5944
        %v5974 = vmul.f32 %v5934, %v5944
        %v5975 = vmul.f32 %v5935, %v5944
        %v5976 = vmul.f32 %v5936, %v5944
        %v5977 = vmul.f32 %v5937, %v5944
        %v5978 = vsel %vm232, %v5946, 0.0
        %5979 = vadd.xlane.f32.xlu0 %v5978
        %v5980 = vpop.xlane.xlu0 %5979
        %v5981 = vsel %vm232, %v5947, 0.0
        %5982 = vadd.xlane.f32.xlu0 %v5981
        %v5983 = vpop.xlane.xlu0 %5982
        %v5984 = vsel %vm232, %v5948, 0.0
        %5985 = vadd.xlane.f32.xlu0 %v5984
        %v5986 = vpop.xlane.xlu0 %5985
        %v5987 = vsel %vm232, %v5949, 0.0
        %5988 = vadd.xlane.f32.xlu0 %v5987
        %v5989 = vpop.xlane.xlu0 %5988
        %v5990 = vsel %vm232, %v5950, 0.0
        %5991 = vadd.xlane.f32.xlu0 %v5990
        %v5992 = vpop.xlane.xlu0 %5991
        %v5993 = vsel %vm232, %v5951, 0.0
        %5994 = vadd.xlane.f32.xlu0 %v5993
        %v5995 = vpop.xlane.xlu0 %5994
        %v5996 = vsel %vm232, %v5952, 0.0
        %5997 = vadd.xlane.f32.xlu0 %v5996
        %v5998 = vpop.xlane.xlu0 %5997
        %v5999 = vsel %vm232, %v5953, 0.0
        %6000 = vadd.xlane.f32.xlu0 %v5999
        %v6001 = vpop.xlane.xlu0 %6000
        %v6002 = vsel %vm232, %v5954, 0.0
        %6003 = vadd.xlane.f32.xlu0 %v6002
        %v6004 = vpop.xlane.xlu0 %6003
        %v6005 = vsel %vm232, %v5955, 0.0
        %6006 = vadd.xlane.f32.xlu0 %v6005
        %v6007 = vpop.xlane.xlu0 %6006
        %v6008 = vsel %vm232, %v5956, 0.0
        %6009 = vadd.xlane.f32.xlu0 %v6008
        %v6010 = vpop.xlane.xlu0 %6009
        %v6011 = vsel %vm232, %v5957, 0.0
        %6012 = vadd.xlane.f32.xlu0 %v6011
        %v6013 = vpop.xlane.xlu0 %6012
        %v6014 = vsel %vm232, %v5958, 0.0
        %6015 = vadd.xlane.f32.xlu0 %v6014
        %v6016 = vpop.xlane.xlu0 %6015
        %v6017 = vsel %vm232, %v5959, 0.0
        %6018 = vadd.xlane.f32.xlu0 %v6017
        %v6019 = vpop.xlane.xlu0 %6018
        %v6020 = vsel %vm232, %v5960, 0.0
        %6021 = vadd.xlane.f32.xlu0 %v6020
        %v6022 = vpop.xlane.xlu0 %6021
        %v6023 = vsel %vm232, %v5961, 0.0
        %6024 = vadd.xlane.f32.xlu0 %v6023
        %v6025 = vpop.xlane.xlu0 %6024
        %v6026 = vsel %vm232, %v5962, 0.0
        %6027 = vadd.xlane.f32.xlu0 %v6026
        %v6028 = vpop.xlane.xlu0 %6027
        %v6029 = vsel %vm232, %v5963, 0.0
        %6030 = vadd.xlane.f32.xlu0 %v6029
        %v6031 = vpop.xlane.xlu0 %6030
        %v6032 = vsel %vm232, %v5964, 0.0
        %6033 = vadd.xlane.f32.xlu0 %v6032
        %v6034 = vpop.xlane.xlu0 %6033
        %v6035 = vsel %vm232, %v5965, 0.0
        %6036 = vadd.xlane.f32.xlu0 %v6035
        %v6037 = vpop.xlane.xlu0 %6036
        %v6038 = vsel %vm232, %v5966, 0.0
        %6039 = vadd.xlane.f32.xlu0 %v6038
        %v6040 = vpop.xlane.xlu0 %6039
        %v6041 = vsel %vm232, %v5967, 0.0
        %6042 = vadd.xlane.f32.xlu0 %v6041
        %v6043 = vpop.xlane.xlu0 %6042
        %v6044 = vsel %vm232, %v5968, 0.0
        %6045 = vadd.xlane.f32.xlu0 %v6044
        %v6046 = vpop.xlane.xlu0 %6045
        %v6047 = vsel %vm232, %v5969, 0.0
        %6048 = vadd.xlane.f32.xlu0 %v6047
        %v6049 = vpop.xlane.xlu0 %6048
        %v6050 = vsel %vm232, %v5970, 0.0
        %6051 = vadd.xlane.f32.xlu0 %v6050
        %v6052 = vpop.xlane.xlu0 %6051
        %v6053 = vsel %vm232, %v5971, 0.0
        %6054 = vadd.xlane.f32.xlu0 %v6053
        %v6055 = vpop.xlane.xlu0 %6054
        %v6056 = vsel %vm232, %v5972, 0.0
        %6057 = vadd.xlane.f32.xlu0 %v6056
        %v6058 = vpop.xlane.xlu0 %6057
        %v6059 = vsel %vm232, %v5973, 0.0
        %6060 = vadd.xlane.f32.xlu0 %v6059
        %v6061 = vpop.xlane.xlu0 %6060
        %v6062 = vsel %vm232, %v5974, 0.0
        %6063 = vadd.xlane.f32.xlu0 %v6062
        %v6064 = vpop.xlane.xlu0 %6063
        %v6065 = vsel %vm232, %v5975, 0.0
        %6066 = vadd.xlane.f32.xlu0 %v6065
        %v6067 = vpop.xlane.xlu0 %6066
        %v6068 = vsel %vm232, %v5976, 0.0
        %6069 = vadd.xlane.f32.xlu0 %v6068
        %v6070 = vpop.xlane.xlu0 %6069
        %v6071 = vsel %vm232, %v5977, 0.0
        %6072 = vadd.xlane.f32.xlu0 %v6071
        %v6073 = vpop.xlane.xlu0 %6072
        %v6074 = vadd.f32 %v5874, %v5980
        %v6075 = vadd.f32 %v5875, %v5983
        %v6076 = vadd.f32 %v5876, %v5986
        %v6077 = vadd.f32 %v5877, %v5989
        %v6078 = vadd.f32 %v5878, %v5992
        %v6079 = vadd.f32 %v5879, %v5995
        %v6080 = vadd.f32 %v5880, %v5998
        %v6081 = vadd.f32 %v5881, %v6001
        %v6082 = vadd.f32 %v5882, %v6004
        %v6083 = vadd.f32 %v5883, %v6007
        %v6084 = vadd.f32 %v5884, %v6010
        %v6085 = vadd.f32 %v5885, %v6013
        %v6086 = vadd.f32 %v5886, %v6016
        %v6087 = vadd.f32 %v5887, %v6019
        %v6088 = vadd.f32 %v5888, %v6022
        %v6089 = vadd.f32 %v5889, %v6025
        %v6090 = vadd.f32 %v5890, %v6028
        %v6091 = vadd.f32 %v5891, %v6031
        %v6092 = vadd.f32 %v5892, %v6034
        %v6093 = vadd.f32 %v5893, %v6037
        %v6094 = vadd.f32 %v5894, %v6040
        %v6095 = vadd.f32 %v5895, %v6043
        %v6096 = vadd.f32 %v5896, %v6046
        %v6097 = vadd.f32 %v5897, %v6049
        %v6098 = vadd.f32 %v5898, %v6052
        %v6099 = vadd.f32 %v5899, %v6055
        %v6100 = vadd.f32 %v5900, %v6058
        %v6101 = vadd.f32 %v5901, %v6061
        %v6102 = vadd.f32 %v5902, %v6064
        %v6103 = vadd.f32 %v5903, %v6067
        %v6104 = vadd.f32 %v5904, %v6070
        %v6105 = vadd.f32 %v5905, %v6073
        %v6106 = vld [vmem:[%s5705 + $0x2] sm:$0xff]
        %v6107 = vld [vmem:[%s5705 + $0xa] sm:$0xff]
        %v6108 = vld [vmem:[%s5705 + $0x1a] sm:$0xff]
        %v6109 = vld [vmem:[%s5705 + $0x22] sm:$0xff]
        %v6110 = vld [vmem:[%s5705 + $0x32] sm:$0xff]
        %v6111 = vld [vmem:[%s5705 + $0x3a] sm:$0xff]
        %v6112 = vld [vmem:[%s5705 + $0x4a] sm:$0xff]
        %v6113 = vld [vmem:[%s5705 + $0x52] sm:$0xff]
        %v6114 = vld [vmem:[%s5705 + $0x62] sm:$0xff]
        %v6115 = vld [vmem:[%s5705 + $0x6a] sm:$0xff]
        %v6116 = vld [vmem:[%s5705 + $0x7a] sm:$0xff]
        %v6117 = vld [vmem:[%s5705 + $0x82] sm:$0xff]
        %v6118 = vld [vmem:[%s5705 + $0x92] sm:$0xff]
        %v6119 = vld [vmem:[%s5705 + $0x9a] sm:$0xff]
        %v6120 = vld [vmem:[%s5705 + $0xaa] sm:$0xff]
        %v6121 = vld [vmem:[%s5705 + $0xb2] sm:$0xff]
        %v6122 = vld [vmem:[%s5705 + $0xc2] sm:$0xff]
        %v6123 = vld [vmem:[%s5705 + $0xca] sm:$0xff]
        %v6124 = vld [vmem:[%s5705 + $0xda] sm:$0xff]
        %v6125 = vld [vmem:[%s5705 + $0xe2] sm:$0xff]
        %v6126 = vld [vmem:[%s5705 + $0xf2] sm:$0xff]
        %v6127 = vld [vmem:[%s5705 + $0xfa] sm:$0xff]
        %v6128 = vld [vmem:[%s5705 + $0x10a] sm:$0xff]
        %v6129 = vld [vmem:[%s5705 + $0x112] sm:$0xff]
        %v6130 = vld [vmem:[%s5705 + $0x122] sm:$0xff]
        %v6131 = vld [vmem:[%s5705 + $0x12a] sm:$0xff]
        %v6132 = vld [vmem:[%s5705 + $0x13a] sm:$0xff]
        %v6133 = vld [vmem:[%s5705 + $0x142] sm:$0xff]
        %v6134 = vld [vmem:[%s5705 + $0x152] sm:$0xff]
        %v6135 = vld [vmem:[%s5705 + $0x15a] sm:$0xff]
        %v6136 = vld [vmem:[%s5705 + $0x16a] sm:$0xff]
        %v6137 = vld [vmem:[%s5705 + $0x172] sm:$0xff]
        %s6138 = scalar_lea.vmem %s3, 8
        %v6139 = vld [vmem:[%s6138] sm:$0x1]
        %v6141 = vlaneseq
        %v6142 = vshrl.u32 %v6141, 7
        %v6143 = vsub.s32 0, %v6142
        %v6144 = vrot.slane %v6139, %v6143
        %v6146 = vmul.f32 %v6106, %v6144
        %v6147 = vmul.f32 %v6107, %v6144
        %v6148 = vmul.f32 %v6108, %v6144
        %v6149 = vmul.f32 %v6109, %v6144
        %v6150 = vmul.f32 %v6110, %v6144
        %v6151 = vmul.f32 %v6111, %v6144
        %v6152 = vmul.f32 %v6112, %v6144
        %v6153 = vmul.f32 %v6113, %v6144
        %v6154 = vmul.f32 %v6114, %v6144
        %v6155 = vmul.f32 %v6115, %v6144
        %v6156 = vmul.f32 %v6116, %v6144
        %v6157 = vmul.f32 %v6117, %v6144
        %v6158 = vmul.f32 %v6118, %v6144
        %v6159 = vmul.f32 %v6119, %v6144
        %v6160 = vmul.f32 %v6120, %v6144
        %v6161 = vmul.f32 %v6121, %v6144
        %v6162 = vmul.f32 %v6122, %v6144
        %v6163 = vmul.f32 %v6123, %v6144
        %v6164 = vmul.f32 %v6124, %v6144
        %v6165 = vmul.f32 %v6125, %v6144
        %v6166 = vmul.f32 %v6126, %v6144
        %v6167 = vmul.f32 %v6127, %v6144
        %v6168 = vmul.f32 %v6128, %v6144
        %v6169 = vmul.f32 %v6129, %v6144
        %v6170 = vmul.f32 %v6130, %v6144
        %v6171 = vmul.f32 %v6131, %v6144
        %v6172 = vmul.f32 %v6132, %v6144
        %v6173 = vmul.f32 %v6133, %v6144
        %v6174 = vmul.f32 %v6134, %v6144
        %v6175 = vmul.f32 %v6135, %v6144
        %v6176 = vmul.f32 %v6136, %v6144
        %v6177 = vmul.f32 %v6137, %v6144
        %v6178 = vsel %vm232, %v6146, 0.0
        %6179 = vadd.xlane.f32.xlu0 %v6178
        %v6180 = vpop.xlane.xlu0 %6179
        %v6181 = vsel %vm232, %v6147, 0.0
        %6182 = vadd.xlane.f32.xlu0 %v6181
        %v6183 = vpop.xlane.xlu0 %6182
        %v6184 = vsel %vm232, %v6148, 0.0
        %6185 = vadd.xlane.f32.xlu0 %v6184
        %v6186 = vpop.xlane.xlu0 %6185
        %v6187 = vsel %vm232, %v6149, 0.0
        %6188 = vadd.xlane.f32.xlu0 %v6187
        %v6189 = vpop.xlane.xlu0 %6188
        %v6190 = vsel %vm232, %v6150, 0.0
        %6191 = vadd.xlane.f32.xlu0 %v6190
        %v6192 = vpop.xlane.xlu0 %6191
        %v6193 = vsel %vm232, %v6151, 0.0
        %6194 = vadd.xlane.f32.xlu0 %v6193
        %v6195 = vpop.xlane.xlu0 %6194
        %v6196 = vsel %vm232, %v6152, 0.0
        %6197 = vadd.xlane.f32.xlu0 %v6196
        %v6198 = vpop.xlane.xlu0 %6197
        %v6199 = vsel %vm232, %v6153, 0.0
        %6200 = vadd.xlane.f32.xlu0 %v6199
        %v6201 = vpop.xlane.xlu0 %6200
        %v6202 = vsel %vm232, %v6154, 0.0
        %6203 = vadd.xlane.f32.xlu0 %v6202
        %v6204 = vpop.xlane.xlu0 %6203
        %v6205 = vsel %vm232, %v6155, 0.0
        %6206 = vadd.xlane.f32.xlu0 %v6205
        %v6207 = vpop.xlane.xlu0 %6206
        %v6208 = vsel %vm232, %v6156, 0.0
        %6209 = vadd.xlane.f32.xlu0 %v6208
        %v6210 = vpop.xlane.xlu0 %6209
        %v6211 = vsel %vm232, %v6157, 0.0
        %6212 = vadd.xlane.f32.xlu0 %v6211
        %v6213 = vpop.xlane.xlu0 %6212
        %v6214 = vsel %vm232, %v6158, 0.0
        %6215 = vadd.xlane.f32.xlu0 %v6214
        %v6216 = vpop.xlane.xlu0 %6215
        %v6217 = vsel %vm232, %v6159, 0.0
        %6218 = vadd.xlane.f32.xlu0 %v6217
        %v6219 = vpop.xlane.xlu0 %6218
        %v6220 = vsel %vm232, %v6160, 0.0
        %6221 = vadd.xlane.f32.xlu0 %v6220
        %v6222 = vpop.xlane.xlu0 %6221
        %v6223 = vsel %vm232, %v6161, 0.0
        %6224 = vadd.xlane.f32.xlu0 %v6223
        %v6225 = vpop.xlane.xlu0 %6224
        %v6226 = vsel %vm232, %v6162, 0.0
        %6227 = vadd.xlane.f32.xlu0 %v6226
        %v6228 = vpop.xlane.xlu0 %6227
        %v6229 = vsel %vm232, %v6163, 0.0
        %6230 = vadd.xlane.f32.xlu0 %v6229
        %v6231 = vpop.xlane.xlu0 %6230
        %v6232 = vsel %vm232, %v6164, 0.0
        %6233 = vadd.xlane.f32.xlu0 %v6232
        %v6234 = vpop.xlane.xlu0 %6233
        %v6235 = vsel %vm232, %v6165, 0.0
        %6236 = vadd.xlane.f32.xlu0 %v6235
        %v6237 = vpop.xlane.xlu0 %6236
        %v6238 = vsel %vm232, %v6166, 0.0
        %6239 = vadd.xlane.f32.xlu0 %v6238
        %v6240 = vpop.xlane.xlu0 %6239
        %v6241 = vsel %vm232, %v6167, 0.0
        %6242 = vadd.xlane.f32.xlu0 %v6241
        %v6243 = vpop.xlane.xlu0 %6242
        %v6244 = vsel %vm232, %v6168, 0.0
        %6245 = vadd.xlane.f32.xlu0 %v6244
        %v6246 = vpop.xlane.xlu0 %6245
        %v6247 = vsel %vm232, %v6169, 0.0
        %6248 = vadd.xlane.f32.xlu0 %v6247
        %v6249 = vpop.xlane.xlu0 %6248
        %v6250 = vsel %vm232, %v6170, 0.0
        %6251 = vadd.xlane.f32.xlu0 %v6250
        %v6252 = vpop.xlane.xlu0 %6251
        %v6253 = vsel %vm232, %v6171, 0.0
        %6254 = vadd.xlane.f32.xlu0 %v6253
        %v6255 = vpop.xlane.xlu0 %6254
        %v6256 = vsel %vm232, %v6172, 0.0
        %6257 = vadd.xlane.f32.xlu0 %v6256
        %v6258 = vpop.xlane.xlu0 %6257
        %v6259 = vsel %vm232, %v6173, 0.0
        %6260 = vadd.xlane.f32.xlu0 %v6259
        %v6261 = vpop.xlane.xlu0 %6260
        %v6262 = vsel %vm232, %v6174, 0.0
        %6263 = vadd.xlane.f32.xlu0 %v6262
        %v6264 = vpop.xlane.xlu0 %6263
        %v6265 = vsel %vm232, %v6175, 0.0
        %6266 = vadd.xlane.f32.xlu0 %v6265
        %v6267 = vpop.xlane.xlu0 %6266
        %v6268 = vsel %vm232, %v6176, 0.0
        %6269 = vadd.xlane.f32.xlu0 %v6268
        %v6270 = vpop.xlane.xlu0 %6269
        %v6271 = vsel %vm232, %v6177, 0.0
        %6272 = vadd.xlane.f32.xlu0 %v6271
        %v6273 = vpop.xlane.xlu0 %6272
        %v6274 = vadd.f32 %v6074, %v6180
        %v6275 = vadd.f32 %v6075, %v6183
        %v6276 = vadd.f32 %v6076, %v6186
        %v6277 = vadd.f32 %v6077, %v6189
        %v6278 = vadd.f32 %v6078, %v6192
        %v6279 = vadd.f32 %v6079, %v6195
        %v6280 = vadd.f32 %v6080, %v6198
        %v6281 = vadd.f32 %v6081, %v6201
        %v6282 = vadd.f32 %v6082, %v6204
        %v6283 = vadd.f32 %v6083, %v6207
        %v6284 = vadd.f32 %v6084, %v6210
        %v6285 = vadd.f32 %v6085, %v6213
        %v6286 = vadd.f32 %v6086, %v6216
        %v6287 = vadd.f32 %v6087, %v6219
        %v6288 = vadd.f32 %v6088, %v6222
        %v6289 = vadd.f32 %v6089, %v6225
        %v6290 = vadd.f32 %v6090, %v6228
        %v6291 = vadd.f32 %v6091, %v6231
        %v6292 = vadd.f32 %v6092, %v6234
        %v6293 = vadd.f32 %v6093, %v6237
        %v6294 = vadd.f32 %v6094, %v6240
        %v6295 = vadd.f32 %v6095, %v6243
        %v6296 = vadd.f32 %v6096, %v6246
        %v6297 = vadd.f32 %v6097, %v6249
        %v6298 = vadd.f32 %v6098, %v6252
        %v6299 = vadd.f32 %v6099, %v6255
        %v6300 = vadd.f32 %v6100, %v6258
        %v6301 = vadd.f32 %v6101, %v6261
        %v6302 = vadd.f32 %v6102, %v6264
        %v6303 = vadd.f32 %v6103, %v6267
        %v6304 = vadd.f32 %v6104, %v6270
        %v6305 = vadd.f32 %v6105, %v6273
        %v6306 = vld [vmem:[#allocation4] sm:$0x1]
        %v6308 = vlaneseq
        %v6309 = vshrl.u32 %v6308, 7
        %v6310 = vsub.s32 0, %v6309
        %v6311 = vrot.slane %v6306, %v6310
        %6312 = vset.pattern.permute.xlu0 0
        %6313 = vperm.xlu0 %6312, %v6311
        %v6314 = vpop.permute.xlu0 %6313
        %v6316 = vadd.f32 %v6274, %v6314
        %v6317 = vadd.f32 %v6275, %v6314
        %v6318 = vadd.f32 %v6276, %v6314
        %v6319 = vadd.f32 %v6277, %v6314
        %v6320 = vadd.f32 %v6278, %v6314
        %v6321 = vadd.f32 %v6279, %v6314
        %v6322 = vadd.f32 %v6280, %v6314
        %v6323 = vadd.f32 %v6281, %v6314
        %v6324 = vadd.f32 %v6282, %v6314
        %v6325 = vadd.f32 %v6283, %v6314
        %v6326 = vadd.f32 %v6284, %v6314
        %v6327 = vadd.f32 %v6285, %v6314
        %v6328 = vadd.f32 %v6286, %v6314
        %v6329 = vadd.f32 %v6287, %v6314
        %v6330 = vadd.f32 %v6288, %v6314
        %v6331 = vadd.f32 %v6289, %v6314
        %v6332 = vadd.f32 %v6290, %v6314
        %v6333 = vadd.f32 %v6291, %v6314
        %v6334 = vadd.f32 %v6292, %v6314
        %v6335 = vadd.f32 %v6293, %v6314
        %v6336 = vadd.f32 %v6294, %v6314
        %v6337 = vadd.f32 %v6295, %v6314
        %v6338 = vadd.f32 %v6296, %v6314
        %v6339 = vadd.f32 %v6297, %v6314
        %v6340 = vadd.f32 %v6298, %v6314
        %v6341 = vadd.f32 %v6299, %v6314
        %v6342 = vadd.f32 %v6300, %v6314
        %v6343 = vadd.f32 %v6301, %v6314
        %v6344 = vadd.f32 %v6302, %v6314
        %v6345 = vadd.f32 %v6303, %v6314
        %v6346 = vadd.f32 %v6304, %v6314
        %v6347 = vadd.f32 %v6305, %v6314
        %v6348 = vtanh.pop %v6316
        %v6349 = vtanh.pop %v6317
        %v6350 = vtanh.pop %v6318
        %v6351 = vtanh.pop %v6319
        %v6352 = vtanh.pop %v6320
        %v6353 = vtanh.pop %v6321
        %v6354 = vtanh.pop %v6322
        %v6355 = vtanh.pop %v6323
        %v6356 = vtanh.pop %v6324
        %v6357 = vtanh.pop %v6325
        %v6358 = vtanh.pop %v6326
        %v6359 = vtanh.pop %v6327
        %v6360 = vtanh.pop %v6328
        %v6361 = vtanh.pop %v6329
        %v6362 = vtanh.pop %v6330
        %v6363 = vtanh.pop %v6331
        %v6364 = vtanh.pop %v6332
        %v6365 = vtanh.pop %v6333
        %v6366 = vtanh.pop %v6334
        %v6367 = vtanh.pop %v6335
        %v6368 = vtanh.pop %v6336
        %v6369 = vtanh.pop %v6337
        %v6370 = vtanh.pop %v6338
        %v6371 = vtanh.pop %v6339
        %v6372 = vtanh.pop %v6340
        %v6373 = vtanh.pop %v6341
        %v6374 = vtanh.pop %v6342
        %v6375 = vtanh.pop %v6343
        %v6376 = vtanh.pop %v6344
        %v6377 = vtanh.pop %v6345
        %v6378 = vtanh.pop %v6346
        %v6379 = vtanh.pop %v6347
        %v6412 = vlaneseq
        %v6413 = vand.u32 %v6412, 127
        %v6414 = vlaneseq
        %v6415 = vshrl.u32 %v6414, 7
        %v6416 = vsub.s32 %v6413, %v6415
        %v6417 = vrot.slane %v6348, %v6416
        %v6418 = vadd.s32 %v6413, 4294967288
        %v6419 = vlaneseq
        %v6420 = vshrl.u32 %v6419, 7
        %v6421 = vsub.s32 %v6418, %v6420
        %v6422 = vrot.slane %v6349, %v6421
        %vm6423 = vcmask 130112
        %v6424 = vsel %vm6423, %v6422, %v6417
        %v6425 = vlaneseq
        %v6426 = vshrl.u32 %v6425, 7
        %v6427 = vsub.s32 %v6413, %v6426
        %v6428 = vrot.slane %v6350, %v6427
        %v6429 = vlaneseq
        %v6430 = vshrl.u32 %v6429, 7
        %v6431 = vsub.s32 %v6418, %v6430
        %v6432 = vrot.slane %v6351, %v6431
        %v6433 = vsel %vm6423, %v6432, %v6428
        %v6434 = vlaneseq
        %v6435 = vshrl.u32 %v6434, 7
        %v6436 = vsub.s32 %v6413, %v6435
        %v6437 = vrot.slane %v6352, %v6436
        %v6438 = vlaneseq
        %v6439 = vshrl.u32 %v6438, 7
        %v6440 = vsub.s32 %v6418, %v6439
        %v6441 = vrot.slane %v6353, %v6440
        %v6442 = vsel %vm6423, %v6441, %v6437
        %v6443 = vlaneseq
        %v6444 = vshrl.u32 %v6443, 7
        %v6445 = vsub.s32 %v6413, %v6444
        %v6446 = vrot.slane %v6354, %v6445
        %v6447 = vlaneseq
        %v6448 = vshrl.u32 %v6447, 7
        %v6449 = vsub.s32 %v6418, %v6448
        %v6450 = vrot.slane %v6355, %v6449
        %v6451 = vsel %vm6423, %v6450, %v6446
        %v6452 = vlaneseq
        %v6453 = vshrl.u32 %v6452, 7
        %v6454 = vsub.s32 %v6413, %v6453
        %v6455 = vrot.slane %v6356, %v6454
        %v6456 = vlaneseq
        %v6457 = vshrl.u32 %v6456, 7
        %v6458 = vsub.s32 %v6418, %v6457
        %v6459 = vrot.slane %v6357, %v6458
        %v6460 = vsel %vm6423, %v6459, %v6455
        %v6461 = vlaneseq
        %v6462 = vshrl.u32 %v6461, 7
        %v6463 = vsub.s32 %v6413, %v6462
        %v6464 = vrot.slane %v6358, %v6463
        %v6465 = vlaneseq
        %v6466 = vshrl.u32 %v6465, 7
        %v6467 = vsub.s32 %v6418, %v6466
        %v6468 = vrot.slane %v6359, %v6467
        %v6469 = vsel %vm6423, %v6468, %v6464
        %v6470 = vlaneseq
        %v6471 = vshrl.u32 %v6470, 7
        %v6472 = vsub.s32 %v6413, %v6471
        %v6473 = vrot.slane %v6360, %v6472
        %v6474 = vlaneseq
        %v6475 = vshrl.u32 %v6474, 7
        %v6476 = vsub.s32 %v6418, %v6475
        %v6477 = vrot.slane %v6361, %v6476
        %v6478 = vsel %vm6423, %v6477, %v6473
        %v6479 = vlaneseq
        %v6480 = vshrl.u32 %v6479, 7
        %v6481 = vsub.s32 %v6413, %v6480
        %v6482 = vrot.slane %v6362, %v6481
        %v6483 = vlaneseq
        %v6484 = vshrl.u32 %v6483, 7
        %v6485 = vsub.s32 %v6418, %v6484
        %v6486 = vrot.slane %v6363, %v6485
        %v6487 = vsel %vm6423, %v6486, %v6482
        %v6488 = vlaneseq
        %v6489 = vshrl.u32 %v6488, 7
        %v6490 = vsub.s32 %v6413, %v6489
        %v6491 = vrot.slane %v6364, %v6490
        %v6492 = vlaneseq
        %v6493 = vshrl.u32 %v6492, 7
        %v6494 = vsub.s32 %v6418, %v6493
        %v6495 = vrot.slane %v6365, %v6494
        %v6496 = vsel %vm6423, %v6495, %v6491
        %v6497 = vlaneseq
        %v6498 = vshrl.u32 %v6497, 7
        %v6499 = vsub.s32 %v6413, %v6498
        %v6500 = vrot.slane %v6366, %v6499
        %v6501 = vlaneseq
        %v6502 = vshrl.u32 %v6501, 7
        %v6503 = vsub.s32 %v6418, %v6502
        %v6504 = vrot.slane %v6367, %v6503
        %v6505 = vsel %vm6423, %v6504, %v6500
        %v6506 = vlaneseq
        %v6507 = vshrl.u32 %v6506, 7
        %v6508 = vsub.s32 %v6413, %v6507
        %v6509 = vrot.slane %v6368, %v6508
        %v6510 = vlaneseq
        %v6511 = vshrl.u32 %v6510, 7
        %v6512 = vsub.s32 %v6418, %v6511
        %v6513 = vrot.slane %v6369, %v6512
        %v6514 = vsel %vm6423, %v6513, %v6509
        %v6515 = vlaneseq
        %v6516 = vshrl.u32 %v6515, 7
        %v6517 = vsub.s32 %v6413, %v6516
        %v6518 = vrot.slane %v6370, %v6517
        %v6519 = vlaneseq
        %v6520 = vshrl.u32 %v6519, 7
        %v6521 = vsub.s32 %v6418, %v6520
        %v6522 = vrot.slane %v6371, %v6521
        %v6523 = vsel %vm6423, %v6522, %v6518
        %v6524 = vlaneseq
        %v6525 = vshrl.u32 %v6524, 7
        %v6526 = vsub.s32 %v6413, %v6525
        %v6527 = vrot.slane %v6372, %v6526
        %v6528 = vlaneseq
        %v6529 = vshrl.u32 %v6528, 7
        %v6530 = vsub.s32 %v6418, %v6529
        %v6531 = vrot.slane %v6373, %v6530
        %v6532 = vsel %vm6423, %v6531, %v6527
        %v6533 = vlaneseq
        %v6534 = vshrl.u32 %v6533, 7
        %v6535 = vsub.s32 %v6413, %v6534
        %v6536 = vrot.slane %v6374, %v6535
        %v6537 = vlaneseq
        %v6538 = vshrl.u32 %v6537, 7
        %v6539 = vsub.s32 %v6418, %v6538
        %v6540 = vrot.slane %v6375, %v6539
        %v6541 = vsel %vm6423, %v6540, %v6536
        %v6542 = vlaneseq
        %v6543 = vshrl.u32 %v6542, 7
        %v6544 = vsub.s32 %v6413, %v6543
        %v6545 = vrot.slane %v6376, %v6544
        %v6546 = vlaneseq
        %v6547 = vshrl.u32 %v6546, 7
        %v6548 = vsub.s32 %v6418, %v6547
        %v6549 = vrot.slane %v6377, %v6548
        %v6550 = vsel %vm6423, %v6549, %v6545
        %v6551 = vlaneseq
        %v6552 = vshrl.u32 %v6551, 7
        %v6553 = vsub.s32 %v6413, %v6552
        %v6554 = vrot.slane %v6378, %v6553
        %v6555 = vlaneseq
        %v6556 = vshrl.u32 %v6555, 7
        %v6557 = vsub.s32 %v6418, %v6556
        %v6558 = vrot.slane %v6379, %v6557
        %v6559 = vsel %vm6423, %v6558, %v6554
        %vm6560 = vcmask 1041409
        %v6561 = vsel %vm6560, %v6433, %v6424
        %vm6562 = vcmask 1042434
        %v6563 = vsel %vm6562, %v6442, %v6561
        %vm6564 = vcmask 1043459
        %v6565 = vsel %vm6564, %v6451, %v6563
        %vm6566 = vcmask 1044484
        %v6567 = vsel %vm6566, %v6460, %v6565
        %vm6568 = vcmask 1045509
        %v6569 = vsel %vm6568, %v6469, %v6567
        %vm6570 = vcmask 1046534
        %v6571 = vsel %vm6570, %v6478, %v6569
        %vm6572 = vcmask 1047559
        %v6573 = vsel %vm6572, %v6487, %v6571
        %v6574 = vsel %vm6560, %v6505, %v6496
        %v6575 = vsel %vm6562, %v6514, %v6574
        %v6576 = vsel %vm6564, %v6523, %v6575
        %v6577 = vsel %vm6566, %v6532, %v6576
        %v6578 = vsel %vm6568, %v6541, %v6577
        %v6579 = vsel %vm6570, %v6550, %v6578
        %v6580 = vsel %vm6572, %v6559, %v6579
        %vm6583 = vcmask 130048
        %6584 = vst.msk [vmem:[%s219] sm:$0xff] %vm6583, %v6573
        %6585 = vst.msk [vmem:[%s219 + $0x8] sm:$0xff] %vm6583, %v6580
        %s6586 = sand.u32 %s139, 1
        %s6587 = scalar_lea.sflag [#allocation6], %s6586
        %s6588 = sand.u32 %s139, 1
        %s6589 = smul.addr %s6588, 16
        %s6590 = scalar_lea.vmem [#allocation5], %s6589
        // Predicated region
        $region41: #{spec_dec_forward.1} parent=39 // pred_check
          %p6591 = pneg %p149
        $region42: #{spec_dec_forward.1} parent=39 // pred_check_branch
          %6593 = sbr.rel (%p6591) target = $region44
        $region43: #{spec_dec_forward.1} parent=39 // pred_region
          %s6595 = ssub.s32 256, 256
          %6596 = vsyncadd %s6587, %s6595
          %s6597 = smul.addr %s21, 2
          %s6598 = smul.addr %s6597, 128
          %s6599 = scalar_lea.hbm %s5, %s6598
          %s6600 = sshll.u32 %s6590, 4
          %s6601 = int_to_ptr.vmem [resolvable:$true] %s6600
          %6606 = dma.vmem_to_hbm [thread:$0]  %s6601, 256, %s6599, %s6587, 128, 128, 8
        $region44: #{spec_dec_forward.1} parent=39 // pred_fallthru
          _
      $region40: #{spec_dec_forward.1} parent=5 // pred_fallthru
        _
      %p6607 = scmp.le.s32.totalorder 2, %s16
      // Predicated region
      $region45: #{spec_dec_forward.1} parent=5 // pred_check
        %p6608 = pneg %p6607
      $region46: #{spec_dec_forward.1} parent=5 // pred_check_branch
        %6610 = sbr.rel (%p6608) target = $region48
      $region47: #{spec_dec_forward.1} parent=5 // pred_region
        %s6611 = ssub.s32 %s16, 2
        // Predicated region
        $region49: #{spec_dec_forward.1} parent=47 // pred_check
          %p6612 = pneg %p155
        $region50: #{spec_dec_forward.1} parent=47 // pred_check_branch
          %6614 = sbr.rel (%p6612) target = $region52
        $region51: #{spec_dec_forward.1} parent=47 // pred_region
          %s6615 = sand.u32 %s140, 1
          %s6616 = scalar_lea.sflag [#allocation6], %s6615
          %s6617 = sand.u32 %s140, 1
          %s6618 = smul.addr %s6617, 16
          %s6619 = scalar_lea.vmem [#allocation5], %s6618
          %6620 = dma.done %s6616, 256
        $region52: #{spec_dec_forward.1} parent=47 // pred_fallthru
          _
      $region48: #{spec_dec_forward.1} parent=5 // pred_fallthru
        _
    $region6: #{spec_dec_forward.1} parent=1 // loop_footer
      %s20 = sadd.s32 1, %s16
    $region7: #{spec_dec_forward.1} parent=1 // loop_footer_branch
      %15 = sbr.rel target = $region3
    $region8: #{spec_dec_forward.1} parent=1 // loop_exit
      _
    %6621 = vsyncpa [#allocation6], 1
    %s6622 = scalar_lea.sflag [#allocation6], 1
    %6623 = vsyncpa %s6622, 1

</llo_original>
